<compile_context>
chip_gen: v6e
topology: v6e:2x2x1
jax: 0.10.0
libtpu: 0.0.40
codegen_flags: <defaults>
</compile_context>

<pallas_src>
import functools

import jax
import jax.numpy as jnp
import numpy as np
from jax import lax
from jax.experimental import pallas as pl
from jax.experimental.pallas import tpu as pltpu

NUM_BINS = 255          # torch.histc(bins=255, min=0, max=1)
PAD_BINS = 256          # sublane-friendly padded bin count
LANES = 128             # TPU lane width
MAX_TILE_ROWS = 1024    # rows of 128 pixel-means per grid step (512 KiB f32)
INVALID_IDX = 512.0     # > 255 and exactly representable in bf16 -> never counted


def _round_up(x, m):
    return ((x + m - 1) // m) * m


def _hist_prior_loss_kernel(step_ref, m_ref, bins_ref, out_ref, psedo_ref,
                            total_ref, idx_ref, cdf_ref, *, lambda_smooth,
                            n_batch):
    # step_ref  : (1,)              i32 SMEM  (scalar prefetch)
    # m_ref     : (TILE_R, 128)     f32 VMEM  per-pixel channel means, pad = -1.0
    # bins_ref  : (256, 128)        bf16 VMEM row b filled with value b (resident)
    # out_ref   : (256, B)          f32 VMEM  predicted curve, transposed + padded
    # psedo_ref : (256, B)          f32 VMEM  pseudo curve,    transposed + padded
    # total_ref : (1, 1)            f32 SMEM  scalar loss
    # idx_ref   : (TILE_R, 128)     f32 VMEM  scratch: per-pixel bin index
    # cdf_ref   : (256, 1)          f32 VMEM  scratch: inclusive CDF accumulator
    pid = pl.program_id(0)
    last = pl.num_programs(0) - 1
    tile_rows = m_ref.shape[0]

    @pl.when(pid == 0)
    def _init():
        cdf_ref[...] = jnp.zeros_like(cdf_ref)

    # ---- per-tile bin index (full-vreg pass, once per tile) -----------------
    m = m_ref[...]                                            # (TILE_R, 128)
    valid = jnp.logical_and(m >= 0.0, m <= 1.0)               # histc ignores out-of-range
    idx = jnp.minimum(jnp.floor(m * NUM_BINS), NUM_BINS - 1.0)
    idx_ref[...] = jnp.where(valid, idx, INVALID_IDX)         # pad/invalid -> 512

    bins = bins_ref[...]                                      # (256, 128) bf16
    ones_rhs = jnp.ones((LANES, 1), jnp.bfloat16)

    # ---- CDF accumulation on the MXU ----------------------------------------
    # Per 128-pixel row:  C[b, p] = (idx_p <= b) in bf16 (exact integer compare),
    # then cdf(256,1) += C @ ones(128,1).  The per-bin reduction runs on the MXU
    # instead of the VALU; no masked stores, no cross-sublane reductions.
    def group_body(g, carry):
        base = pl.multiple_of(g * 8, 8)
        for u in range(8):                                    # static unroll by 8
            row = idx_ref[pl.ds(base + u, 1), :].astype(jnp.bfloat16)   # (1, 128)
            c = (row <= bins).astype(jnp.bfloat16)                      # (256, 128)
            cdf_ref[...] += jnp.dot(c, ones_rhs,
                                    preferred_element_type=jnp.float32)
        return carry

    lax.fori_loop(0, tile_rows // 8, group_body, 0)

    # ---- epilogue: prior + loss terms ---------------------------------------
    @pl.when(pid == last)
    def _finalize():
        cdf = cdf_ref[...]                                   # (256, 1) inclusive CDF
        total_cnt = jnp.max(cdf)                             # == #valid pixels (cdf[-1])
        # NOTE: like PyTorch, NaN if no pixel mean lands in [0, 1].
        prior = cdf / total_cnt                              # (256, 1)

        out_t = out_ref[...]                                 # (256, B)
        psedo_t = psedo_ref[...]

        rows = lax.broadcasted_iota(jnp.int32, out_t.shape, 0)
        mask255 = (rows < NUM_BINS).astype(jnp.float32)      # real bins 0..254

        n255 = float(n_batch * NUM_BINS)
        n254 = float(n_batch * (NUM_BINS - 1))

        d_cl = (out_t - prior) * mask255
        cl = jnp.sum(d_cl * d_cl) / n255

        d_p1 = (psedo_t - out_t) * mask255
        d_p2 = (psedo_t - prior) * mask255
        psedo_loss = (jnp.sum(d_p1 * d_p1) + 0.01 * jnp.sum(d_p2 * d_p2)) / n255

        # smoothness: output[:, 1:] - output[:, :-1]  (bins are on sublanes here).
        d_sm = (out_ref[pl.ds(1, NUM_BINS - 1), :]
                - out_ref[pl.ds(0, NUM_BINS - 1), :])
        smooth = jnp.sum(d_sm * d_sm) / n254

        step = step_ref[0]
        cl_coef = jnp.where(step >= 3000, 0.1, 1.0)
        total_ref[0, 0] = cl_coef * cl + lambda_smooth * smooth + 0.5 * psedo_loss


@functools.partial(jax.jit, static_argnames=("lambda_smooth", "max_tile_rows"))
def histogram_prior_loss(output, inp, psedo_curve, step, lambda_smooth=0.1,
                         max_tile_rows=MAX_TILE_ROWS):
    """output, psedo_curve: (B, 255); inp: NHWC (B, H, W, C); step: int scalar."""
    B, H, W, C = inp.shape
    Ho, Wo = int(H * 0.25), int(W * 0.25)

    # nearest-neighbour 0.25x down-sample (F.interpolate mode='nearest').
    if H == 4 * Ho and W == 4 * Wo:
        small = inp[:, ::4, ::4, :]                       # cheap strided slice
    else:
        r = (jnp.arange(Ho) * H) // Ho
        c = (jnp.arange(Wo) * W) // Wo
        small = inp[:, r][:, :, c]

    # Channel mean in the (jitted, fused) wrapper -> kernel gets a lane-dense stream.
    m = jnp.mean(small.astype(jnp.float32), axis=-1).reshape(-1)   # (Ns,)
    ns = m.shape[0]

    max_tile_rows = max(8, _round_up(int(max_tile_rows), 8))
    rows_needed = pl.cdiv(ns, LANES)
    if rows_needed <= max_tile_rows:
        tile_rows = _round_up(rows_needed, 8)
    else:
        tile_rows = max_tile_rows
    rows_pad = _round_up(rows_needed, tile_rows)
    num_tiles = rows_pad // tile_rows

    m = jnp.pad(m, (0, rows_pad * LANES - ns), constant_values=-1.0)
    m = m.reshape(rows_pad, LANES)

    Bo = output.shape[0]
    out_t = jnp.zeros((PAD_BINS, Bo), jnp.float32).at[:NUM_BINS, :].set(
        output.astype(jnp.float32).T)
    psedo_t = jnp.zeros((PAD_BINS, Bo), jnp.float32).at[:NUM_BINS, :].set(
        psedo_curve.astype(jnp.float32).T)

    # Resident bf16 bin-iota (row b == b), 64 KiB; replaces the 256 KiB tri matrix.
    bins = jnp.broadcast_to(
        jnp.arange(PAD_BINS, dtype=jnp.float32)[:, None],
        (PAD_BINS, LANES)).astype(jnp.bfloat16)

    step_arr = jnp.asarray(step, jnp.int32).reshape((1,))

    kernel = functools.partial(_hist_prior_loss_kernel,
                               lambda_smooth=float(lambda_smooth), n_batch=Bo)

    grid_spec = pltpu.PrefetchScalarGridSpec(
        num_scalar_prefetch=1,
        grid=(num_tiles,),
        in_specs=[
            pl.BlockSpec((tile_rows, LANES), lambda i, s: (i, 0)),      # pixel means
            pl.BlockSpec((PAD_BINS, LANES), lambda i, s: (0, 0)),       # bin iota (resident)
            pl.BlockSpec((PAD_BINS, Bo), lambda i, s: (0, 0)),          # output curve^T
            pl.BlockSpec((PAD_BINS, Bo), lambda i, s: (0, 0)),          # psedo curve^T
        ],
        out_specs=pl.BlockSpec(memory_space=pltpu.MemorySpace.SMEM),    # scalar loss
        scratch_shapes=[
            pltpu.VMEM((tile_rows, LANES), jnp.float32),                # idx scratch
            pltpu.VMEM((PAD_BINS, 1), jnp.float32),                     # CDF accumulator
        ],
    )

    total = pl.pallas_call(
        kernel,
        out_shape=jax.ShapeDtypeStruct((1, 1), jnp.float32),
        grid_spec=grid_spec,
        compiler_params=pltpu.CompilerParams(
            dimension_semantics=("arbitrary",)),   # reduction over pixel tiles
    )(step_arr, m, bins, out_t, psedo_t)
    return total[0, 0]


def reference_loss(output, inp, psedo_curve, step, lambda_smooth=0.1):
    """Pure-JAX reference mirroring the PyTorch forward."""
    B, H, W, C = inp.shape
    Ho, Wo = int(H * 0.25), int(W * 0.25)
    r = (jnp.arange(Ho) * H) // Ho
    c = (jnp.arange(Wo) * W) // Wo
    small = inp[:, r][:, :, c]
    m = jnp.mean(small, axis=-1).reshape(-1)
    valid = (m >= 0.0) & (m <= 1.0)
    idx = jnp.clip(jnp.minimum(jnp.floor(m * NUM_BINS), NUM_BINS - 1),
                   0, NUM_BINS - 1).astype(jnp.int32)
    hist = jnp.zeros(NUM_BINS, jnp.float32).at[idx].add(
        jnp.where(valid, 1.0, 0.0))
    cdf = jnp.cumsum(hist)
    prior = (cdf / cdf[-1])[None, :]
    cl = jnp.mean((output - prior) ** 2)
    psedo_loss = (jnp.mean((psedo_curve - output) ** 2)
                  + 0.01 * jnp.mean((psedo_curve - prior) ** 2))
    smooth = jnp.mean((output[:, 1:] - output[:, :-1]) ** 2)
    total = cl + lambda_smooth * smooth + 0.5 * psedo_loss
    if step >= 3000:
        total = 0.1 * cl + lambda_smooth * smooth + 0.5 * psedo_loss
    return total


if __name__ == "__main__":
    key = jax.random.PRNGKey(0)
    k1, k2, k3, k4 = jax.random.split(key, 4)

    B, H, W, C = 2, 16, 16, 4
    inp = jax.random.uniform(k1, (B, H, W, C), jnp.float32)          # NHWC in [0,1]
    output = jax.random.uniform(k2, (B, NUM_BINS), jnp.float32)
    psedo_curve = jax.random.uniform(k3, (B, NUM_BINS), jnp.float32)

    for step in (100, 3000):                                          # both loss branches
        loss = jax.block_until_ready(
            histogram_prior_loss(output, inp, psedo_curve, step))
        ref = reference_loss(output, inp, psedo_curve, step)
        np.testing.assert_allclose(np.asarray(loss), np.asarray(ref),
                                   rtol=1e-4, atol=1e-5)

    # Multi-tile path: force a small tile so several grid steps accumulate the CDF.
    H2 = W2 = 128   # 32*32*2 = 2048 pixel means -> 16 rows -> 2 tiles at tile_rows=8
    inp_big = jax.random.uniform(k4, (B, H2, W2, C), jnp.float32)
    loss_big = jax.block_until_ready(
        histogram_prior_loss(output, inp_big, psedo_curve, 100, max_tile_rows=8))
    ref_big = reference_loss(output, inp_big, psedo_curve, 100)
    np.testing.assert_allclose(np.asarray(loss_big), np.asarray(ref_big),
                               rtol=1e-4, atol=1e-5)

    print("KERNEL_OK")
</pallas_src>

<mosaic_0001>
module attributes {stable_mosaic.version = 11 : i64} {
  func.func @_hist_prior_loss_kernel(%arg0: i32, %arg1: memref<1xi32, #tpu.memory_space<smem>>, %arg2: memref<8x128xf32, #tpu.memory_space<vmem>>, %arg3: memref<256x128xbf16, #tpu.memory_space<vmem>>, %arg4: memref<256x2xf32, #tpu.memory_space<vmem>>, %arg5: memref<256x2xf32, #tpu.memory_space<vmem>>, %arg6: memref<1x1xf32, #tpu.memory_space<smem>>, %arg7: memref<8x128xf32, #tpu.memory_space<vmem>>, %arg8: memref<256x1xf32, #tpu.memory_space<vmem>>) attributes {dimension_semantics = [#tpu.dimension_semantics<arbitrary>], iteration_bounds = array<i64: 1>, scalar_prefetch = 1 : i64, scratch_operands = 2 : i64, tpu.core_type = #tpu.core_type<tc>, window_params = [{transform_indices = @transform_0, window_bounds = array<i64: 8, 128>}, {pipeline_mode = #tpu.pipeline_mode<synchronous>, transform_indices = @transform_1, window_bounds = array<i64: 256, 128>}, {pipeline_mode = #tpu.pipeline_mode<synchronous>, transform_indices = @transform_2, window_bounds = array<i64: 256, 2>}, {pipeline_mode = #tpu.pipeline_mode<synchronous>, transform_indices = @transform_3, window_bounds = array<i64: 256, 2>}, {transform_indices = @transform_4, window_bounds = array<i64: 1, 1>}]} {
    %c0_i32 = arith.constant 0 : i32
    %0 = arith.cmpi eq, %arg0, %c0_i32 : i32
    %1 = arith.extui %0 : i1 to i32
    %c0_i32_0 = arith.constant 0 : i32
    %2 = arith.cmpi ne, %1, %c0_i32_0 : i32
    scf.if %2 {
      %cst_64 = arith.constant 0.000000e+00 : f32
      %128 = vector.broadcast %cst_64 : f32 to vector<256x1xf32>
      %c0_65 = arith.constant 0 : index
      %c0_66 = arith.constant 0 : index
      %129 = vector.load %arg8[%c0_65, %c0_66] : memref<256x1xf32, #tpu.memory_space<vmem>>, vector<256x1xf32>
      tpu.vector_store %arg8[%c0_65, %c0_66], %128 {strides = array<i32>} : memref<256x1xf32, #tpu.memory_space<vmem>>, vector<256x1xf32>,
    } else {
    }
    %c0 = arith.constant 0 : index
    %c0_1 = arith.constant 0 : index
    %3 = vector.load %arg2[%c0, %c0_1] : memref<8x128xf32, #tpu.memory_space<vmem>>, vector<8x128xf32>
    %cst = arith.constant 0.000000e+00 : f32
    %4 = vector.broadcast %cst : f32 to vector<8x128xf32>
    %5 = arith.cmpf oge, %3, %4 : vector<8x128xf32>
    %cst_2 = arith.constant 1.000000e+00 : f32
    %6 = vector.broadcast %cst_2 : f32 to vector<8x128xf32>
    %7 = arith.cmpf ole, %3, %6 : vector<8x128xf32>
    %8 = arith.andi %5, %7 : vector<8x128xi1>
    %cst_3 = arith.constant 2.550000e+02 : f32
    %9 = vector.broadcast %cst_3 : f32 to vector<8x128xf32>
    %10 = arith.mulf %3, %9 : vector<8x128xf32>
    %11 = math.floor %10 : vector<8x128xf32>
    %cst_4 = arith.constant 2.540000e+02 : f32
    %12 = vector.broadcast %cst_4 : f32 to vector<8x128xf32>
    %13 = arith.minimumf %11, %12 : vector<8x128xf32>
    %cst_5 = arith.constant 5.120000e+02 : f32
    %14 = vector.broadcast %cst_5 : f32 to vector<8x128xf32>
    %15 = arith.select %8, %13, %14 : vector<8x128xi1>, vector<8x128xf32>
    %c0_6 = arith.constant 0 : index
    %c0_7 = arith.constant 0 : index
    %16 = vector.load %arg7[%c0_6, %c0_7] : memref<8x128xf32, #tpu.memory_space<vmem>>, vector<8x128xf32>
    tpu.vector_store %arg7[%c0_6, %c0_7], %15 {strides = array<i32>} : memref<8x128xf32, #tpu.memory_space<vmem>>, vector<8x128xf32>,
    %c0_8 = arith.constant 0 : index
    %c0_9 = arith.constant 0 : index
    %17 = vector.load %arg3[%c0_8, %c0_9] : memref<256x128xbf16, #tpu.memory_space<vmem>>, vector<256x128xbf16>
    %cst_10 = arith.constant 1.000000e+00 : bf16
    %18 = vector.broadcast %cst_10 : bf16 to vector<128x1xbf16>
    %c0_i32_11 = arith.constant 0 : i32
    %c8_i32 = arith.constant 8 : i32
    %19 = arith.muli %c0_i32_11, %c8_i32 : i32
    %20 = tpu.assume_multiple %19, 8 : i32
    %c0_i32_12 = arith.constant 0 : i32
    %21 = arith.addi %20, %c0_i32_12 : i32
    %22 = arith.index_cast %21 : i32 to index
    %c0_13 = arith.constant 0 : index
    %23 = vector.load %arg7[%22, %c0_13] : memref<8x128xf32, #tpu.memory_space<vmem>>, vector<1x128xf32>
    %24 = arith.truncf %23 : vector<1x128xf32> to vector<1x128xbf16>
    %25 = vector.broadcast %24 : vector<1x128xbf16> to vector<256x128xbf16>
    %26 = arith.cmpf ole, %25, %17 : vector<256x128xbf16>
    %27 = arith.extui %26 : vector<256x128xi1> to vector<256x128xi32>
    %28 = arith.sitofp %27 : vector<256x128xi32> to vector<256x128xf32>
    %29 = arith.truncf %28 : vector<256x128xf32> to vector<256x128xbf16>
    %c0_14 = arith.constant 0 : index
    %c0_15 = arith.constant 0 : index
    %30 = vector.load %arg8[%c0_14, %c0_15] : memref<256x1xf32, #tpu.memory_space<vmem>>, vector<256x1xf32>
    %cst_16 = arith.constant dense<0.000000e+00> : vector<256x1xf32>
    %31 = tpu.matmul %29, %18, %cst_16 {dimension_numbers = #tpu.dot_dimension_numbers<[1], [0], [0], [1], [0, 0, 1, 1], [], []>} : vector<256x128xbf16>, vector<128x1xbf16>, vector<256x1xf32> -> vector<256x1xf32>
    %32 = arith.addf %30, %31 : vector<256x1xf32>
    %c0_17 = arith.constant 0 : index
    %c0_18 = arith.constant 0 : index
    %33 = vector.load %arg8[%c0_17, %c0_18] : memref<256x1xf32, #tpu.memory_space<vmem>>, vector<256x1xf32>
    tpu.vector_store %arg8[%c0_17, %c0_18], %32 {strides = array<i32>} : memref<256x1xf32, #tpu.memory_space<vmem>>, vector<256x1xf32>,
    %c1_i32 = arith.constant 1 : i32
    %34 = arith.addi %20, %c1_i32 : i32
    %35 = arith.index_cast %34 : i32 to index
    %c0_19 = arith.constant 0 : index
    %36 = vector.load %arg7[%35, %c0_19] : memref<8x128xf32, #tpu.memory_space<vmem>>, vector<1x128xf32>
    %37 = arith.truncf %36 : vector<1x128xf32> to vector<1x128xbf16>
    %38 = vector.broadcast %37 : vector<1x128xbf16> to vector<256x128xbf16>
    %39 = arith.cmpf ole, %38, %17 : vector<256x128xbf16>
    %40 = arith.extui %39 : vector<256x128xi1> to vector<256x128xi32>
    %41 = arith.sitofp %40 : vector<256x128xi32> to vector<256x128xf32>
    %42 = arith.truncf %41 : vector<256x128xf32> to vector<256x128xbf16>
    %c0_20 = arith.constant 0 : index
    %c0_21 = arith.constant 0 : index
    %43 = vector.load %arg8[%c0_20, %c0_21] : memref<256x1xf32, #tpu.memory_space<vmem>>, vector<256x1xf32>
    %cst_22 = arith.constant dense<0.000000e+00> : vector<256x1xf32>
    %44 = tpu.matmul %42, %18, %cst_22 {dimension_numbers = #tpu.dot_dimension_numbers<[1], [0], [0], [1], [0, 0, 1, 1], [], []>} : vector<256x128xbf16>, vector<128x1xbf16>, vector<256x1xf32> -> vector<256x1xf32>
    %45 = arith.addf %43, %44 : vector<256x1xf32>
    %c0_23 = arith.constant 0 : index
    %c0_24 = arith.constant 0 : index
    %46 = vector.load %arg8[%c0_23, %c0_24] : memref<256x1xf32, #tpu.memory_space<vmem>>, vector<256x1xf32>
    tpu.vector_store %arg8[%c0_23, %c0_24], %45 {strides = array<i32>} : memref<256x1xf32, #tpu.memory_space<vmem>>, vector<256x1xf32>,
    %c2_i32 = arith.constant 2 : i32
    %47 = arith.addi %20, %c2_i32 : i32
    %48 = arith.index_cast %47 : i32 to index
    %c0_25 = arith.constant 0 : index
    %49 = vector.load %arg7[%48, %c0_25] : memref<8x128xf32, #tpu.memory_space<vmem>>, vector<1x128xf32>
    %50 = arith.truncf %49 : vector<1x128xf32> to vector<1x128xbf16>
    %51 = vector.broadcast %50 : vector<1x128xbf16> to vector<256x128xbf16>
    %52 = arith.cmpf ole, %51, %17 : vector<256x128xbf16>
    %53 = arith.extui %52 : vector<256x128xi1> to vector<256x128xi32>
    %54 = arith.sitofp %53 : vector<256x128xi32> to vector<256x128xf32>
    %55 = arith.truncf %54 : vector<256x128xf32> to vector<256x128xbf16>
    %c0_26 = arith.constant 0 : index
    %c0_27 = arith.constant 0 : index
    %56 = vector.load %arg8[%c0_26, %c0_27] : memref<256x1xf32, #tpu.memory_space<vmem>>, vector<256x1xf32>
    %cst_28 = arith.constant dense<0.000000e+00> : vector<256x1xf32>
    %57 = tpu.matmul %55, %18, %cst_28 {dimension_numbers = #tpu.dot_dimension_numbers<[1], [0], [0], [1], [0, 0, 1, 1], [], []>} : vector<256x128xbf16>, vector<128x1xbf16>, vector<256x1xf32> -> vector<256x1xf32>
    %58 = arith.addf %56, %57 : vector<256x1xf32>
    %c0_29 = arith.constant 0 : index
    %c0_30 = arith.constant 0 : index
    %59 = vector.load %arg8[%c0_29, %c0_30] : memref<256x1xf32, #tpu.memory_space<vmem>>, vector<256x1xf32>
    tpu.vector_store %arg8[%c0_29, %c0_30], %58 {strides = array<i32>} : memref<256x1xf32, #tpu.memory_space<vmem>>, vector<256x1xf32>,
    %c3_i32 = arith.constant 3 : i32
    %60 = arith.addi %20, %c3_i32 : i32
    %61 = arith.index_cast %60 : i32 to index
    %c0_31 = arith.constant 0 : index
    %62 = vector.load %arg7[%61, %c0_31] : memref<8x128xf32, #tpu.memory_space<vmem>>, vector<1x128xf32>
    %63 = arith.truncf %62 : vector<1x128xf32> to vector<1x128xbf16>
    %64 = vector.broadcast %63 : vector<1x128xbf16> to vector<256x128xbf16>
    %65 = arith.cmpf ole, %64, %17 : vector<256x128xbf16>
    %66 = arith.extui %65 : vector<256x128xi1> to vector<256x128xi32>
    %67 = arith.sitofp %66 : vector<256x128xi32> to vector<256x128xf32>
    %68 = arith.truncf %67 : vector<256x128xf32> to vector<256x128xbf16>
    %c0_32 = arith.constant 0 : index
    %c0_33 = arith.constant 0 : index
    %69 = vector.load %arg8[%c0_32, %c0_33] : memref<256x1xf32, #tpu.memory_space<vmem>>, vector<256x1xf32>
    %cst_34 = arith.constant dense<0.000000e+00> : vector<256x1xf32>
    %70 = tpu.matmul %68, %18, %cst_34 {dimension_numbers = #tpu.dot_dimension_numbers<[1], [0], [0], [1], [0, 0, 1, 1], [], []>} : vector<256x128xbf16>, vector<128x1xbf16>, vector<256x1xf32> -> vector<256x1xf32>
    %71 = arith.addf %69, %70 : vector<256x1xf32>
    %c0_35 = arith.constant 0 : index
    %c0_36 = arith.constant 0 : index
    %72 = vector.load %arg8[%c0_35, %c0_36] : memref<256x1xf32, #tpu.memory_space<vmem>>, vector<256x1xf32>
    tpu.vector_store %arg8[%c0_35, %c0_36], %71 {strides = array<i32>} : memref<256x1xf32, #tpu.memory_space<vmem>>, vector<256x1xf32>,
    %c4_i32 = arith.constant 4 : i32
    %73 = arith.addi %20, %c4_i32 : i32
    %74 = arith.index_cast %73 : i32 to index
    %c0_37 = arith.constant 0 : index
    %75 = vector.load %arg7[%74, %c0_37] : memref<8x128xf32, #tpu.memory_space<vmem>>, vector<1x128xf32>
    %76 = arith.truncf %75 : vector<1x128xf32> to vector<1x128xbf16>
    %77 = vector.broadcast %76 : vector<1x128xbf16> to vector<256x128xbf16>
    %78 = arith.cmpf ole, %77, %17 : vector<256x128xbf16>
    %79 = arith.extui %78 : vector<256x128xi1> to vector<256x128xi32>
    %80 = arith.sitofp %79 : vector<256x128xi32> to vector<256x128xf32>
    %81 = arith.truncf %80 : vector<256x128xf32> to vector<256x128xbf16>
    %c0_38 = arith.constant 0 : index
    %c0_39 = arith.constant 0 : index
    %82 = vector.load %arg8[%c0_38, %c0_39] : memref<256x1xf32, #tpu.memory_space<vmem>>, vector<256x1xf32>
    %cst_40 = arith.constant dense<0.000000e+00> : vector<256x1xf32>
    %83 = tpu.matmul %81, %18, %cst_40 {dimension_numbers = #tpu.dot_dimension_numbers<[1], [0], [0], [1], [0, 0, 1, 1], [], []>} : vector<256x128xbf16>, vector<128x1xbf16>, vector<256x1xf32> -> vector<256x1xf32>
    %84 = arith.addf %82, %83 : vector<256x1xf32>
    %c0_41 = arith.constant 0 : index
    %c0_42 = arith.constant 0 : index
    %85 = vector.load %arg8[%c0_41, %c0_42] : memref<256x1xf32, #tpu.memory_space<vmem>>, vector<256x1xf32>
    tpu.vector_store %arg8[%c0_41, %c0_42], %84 {strides = array<i32>} : memref<256x1xf32, #tpu.memory_space<vmem>>, vector<256x1xf32>,
    %c5_i32 = arith.constant 5 : i32
    %86 = arith.addi %20, %c5_i32 : i32
    %87 = arith.index_cast %86 : i32 to index
    %c0_43 = arith.constant 0 : index
    %88 = vector.load %arg7[%87, %c0_43] : memref<8x128xf32, #tpu.memory_space<vmem>>, vector<1x128xf32>
    %89 = arith.truncf %88 : vector<1x128xf32> to vector<1x128xbf16>
    %90 = vector.broadcast %89 : vector<1x128xbf16> to vector<256x128xbf16>
    %91 = arith.cmpf ole, %90, %17 : vector<256x128xbf16>
    %92 = arith.extui %91 : vector<256x128xi1> to vector<256x128xi32>
    %93 = arith.sitofp %92 : vector<256x128xi32> to vector<256x128xf32>
    %94 = arith.truncf %93 : vector<256x128xf32> to vector<256x128xbf16>
    %c0_44 = arith.constant 0 : index
    %c0_45 = arith.constant 0 : index
    %95 = vector.load %arg8[%c0_44, %c0_45] : memref<256x1xf32, #tpu.memory_space<vmem>>, vector<256x1xf32>
    %cst_46 = arith.constant dense<0.000000e+00> : vector<256x1xf32>
    %96 = tpu.matmul %94, %18, %cst_46 {dimension_numbers = #tpu.dot_dimension_numbers<[1], [0], [0], [1], [0, 0, 1, 1], [], []>} : vector<256x128xbf16>, vector<128x1xbf16>, vector<256x1xf32> -> vector<256x1xf32>
    %97 = arith.addf %95, %96 : vector<256x1xf32>
    %c0_47 = arith.constant 0 : index
    %c0_48 = arith.constant 0 : index
    %98 = vector.load %arg8[%c0_47, %c0_48] : memref<256x1xf32, #tpu.memory_space<vmem>>, vector<256x1xf32>
    tpu.vector_store %arg8[%c0_47, %c0_48], %97 {strides = array<i32>} : memref<256x1xf32, #tpu.memory_space<vmem>>, vector<256x1xf32>,
    %c6_i32 = arith.constant 6 : i32
    %99 = arith.addi %20, %c6_i32 : i32
    %100 = arith.index_cast %99 : i32 to index
    %c0_49 = arith.constant 0 : index
    %101 = vector.load %arg7[%100, %c0_49] : memref<8x128xf32, #tpu.memory_space<vmem>>, vector<1x128xf32>
    %102 = arith.truncf %101 : vector<1x128xf32> to vector<1x128xbf16>
    %103 = vector.broadcast %102 : vector<1x128xbf16> to vector<256x128xbf16>
    %104 = arith.cmpf ole, %103, %17 : vector<256x128xbf16>
    %105 = arith.extui %104 : vector<256x128xi1> to vector<256x128xi32>
    %106 = arith.sitofp %105 : vector<256x128xi32> to vector<256x128xf32>
    %107 = arith.truncf %106 : vector<256x128xf32> to vector<256x128xbf16>
    %c0_50 = arith.constant 0 : index
    %c0_51 = arith.constant 0 : index
    %108 = vector.load %arg8[%c0_50, %c0_51] : memref<256x1xf32, #tpu.memory_space<vmem>>, vector<256x1xf32>
    %cst_52 = arith.constant dense<0.000000e+00> : vector<256x1xf32>
    %109 = tpu.matmul %107, %18, %cst_52 {dimension_numbers = #tpu.dot_dimension_numbers<[1], [0], [0], [1], [0, 0, 1, 1], [], []>} : vector<256x128xbf16>, vector<128x1xbf16>, vector<256x1xf32> -> vector<256x1xf32>
    %110 = arith.addf %108, %109 : vector<256x1xf32>
    %c0_53 = arith.constant 0 : index
    %c0_54 = arith.constant 0 : index
    %111 = vector.load %arg8[%c0_53, %c0_54] : memref<256x1xf32, #tpu.memory_space<vmem>>, vector<256x1xf32>
    tpu.vector_store %arg8[%c0_53, %c0_54], %110 {strides = array<i32>} : memref<256x1xf32, #tpu.memory_space<vmem>>, vector<256x1xf32>,
    %c7_i32 = arith.constant 7 : i32
    %112 = arith.addi %20, %c7_i32 : i32
    %113 = arith.index_cast %112 : i32 to index
    %c0_55 = arith.constant 0 : index
    %114 = vector.load %arg7[%113, %c0_55] : memref<8x128xf32, #tpu.memory_space<vmem>>, vector<1x128xf32>
    %115 = arith.truncf %114 : vector<1x128xf32> to vector<1x128xbf16>
    %116 = vector.broadcast %115 : vector<1x128xbf16> to vector<256x128xbf16>
    %117 = arith.cmpf ole, %116, %17 : vector<256x128xbf16>
    %118 = arith.extui %117 : vector<256x128xi1> to vector<256x128xi32>
    %119 = arith.sitofp %118 : vector<256x128xi32> to vector<256x128xf32>
    %120 = arith.truncf %119 : vector<256x128xf32> to vector<256x128xbf16>
    %c0_56 = arith.constant 0 : index
    %c0_57 = arith.constant 0 : index
    %121 = vector.load %arg8[%c0_56, %c0_57] : memref<256x1xf32, #tpu.memory_space<vmem>>, vector<256x1xf32>
    %cst_58 = arith.constant dense<0.000000e+00> : vector<256x1xf32>
    %122 = tpu.matmul %120, %18, %cst_58 {dimension_numbers = #tpu.dot_dimension_numbers<[1], [0], [0], [1], [0, 0, 1, 1], [], []>} : vector<256x128xbf16>, vector<128x1xbf16>, vector<256x1xf32> -> vector<256x1xf32>
    %123 = arith.addf %121, %122 : vector<256x1xf32>
    %c0_59 = arith.constant 0 : index
    %c0_60 = arith.constant 0 : index
    %124 = vector.load %arg8[%c0_59, %c0_60] : memref<256x1xf32, #tpu.memory_space<vmem>>, vector<256x1xf32>
    tpu.vector_store %arg8[%c0_59, %c0_60], %123 {strides = array<i32>} : memref<256x1xf32, #tpu.memory_space<vmem>>, vector<256x1xf32>,
    %c1_i32_61 = arith.constant 1 : i32
    %c0_i32_62 = arith.constant 0 : i32
    %125 = arith.cmpi eq, %arg0, %c0_i32_62 : i32
    %126 = arith.extui %125 : i1 to i32
    %c0_i32_63 = arith.constant 0 : i32
    %127 = arith.cmpi ne, %126, %c0_i32_63 : i32
    scf.if %127 {
      %c0_64 = arith.constant 0 : index
      %c0_65 = arith.constant 0 : index
      %128 = vector.load %arg8[%c0_64, %c0_65] : memref<256x1xf32, #tpu.memory_space<vmem>>, vector<256x1xf32>
      %129 = vector.shape_cast %128 : vector<256x1xf32> to vector<1x256x1xf32>
      %cst_66 = arith.constant dense<0xFF800000> : vector<1xf32>
      %130 = vector.multi_reduction <maximumf>, %129, %cst_66 [1, 2] : vector<1x256x1xf32> to vector<1xf32>
      %131 = vector.shape_cast %130 : vector<1xf32> to vector<1x1x1xf32>
      %132 = vector.extract %131[0, 0, 0] : f32 from vector<1x1x1xf32>
      %133 = vector.broadcast %132 : f32 to vector<256x1xf32>
      %134 = arith.divf %128, %133 : vector<256x1xf32>
      %c0_67 = arith.constant 0 : index
      %c0_68 = arith.constant 0 : index
      %135 = vector.load %arg4[%c0_67, %c0_68] : memref<256x2xf32, #tpu.memory_space<vmem>>, vector<256x2xf32>
      %c0_69 = arith.constant 0 : index
      %c0_70 = arith.constant 0 : index
      %136 = vector.load %arg5[%c0_69, %c0_70] : memref<256x2xf32, #tpu.memory_space<vmem>>, vector<256x2xf32>
      %137 = tpu.iota {dimensions = array<i32: 0>} : vector<256x2xi32>
      %c255_i32 = arith.constant 255 : i32
      %138 = vector.broadcast %c255_i32 : i32 to vector<256x2xi32>
      %139 = arith.cmpi slt, %137, %138 : vector<256x2xi32>
      %140 = arith.extui %139 : vector<256x2xi1> to vector<256x2xi32>
      %141 = arith.sitofp %140 : vector<256x2xi32> to vector<256x2xf32>
      %142 = vector.broadcast %134 : vector<256x1xf32> to vector<256x2xf32>
      %143 = arith.subf %135, %142 : vector<256x2xf32>
      %144 = arith.mulf %143, %141 : vector<256x2xf32>
      %145 = arith.mulf %144, %144 : vector<256x2xf32>
      %146 = vector.shape_cast %145 : vector<256x2xf32> to vector<1x256x2xf32>
      %cst_71 = arith.constant dense<0.000000e+00> : vector<1xf32>
      %147 = vector.multi_reduction <add>, %146, %cst_71 [1, 2] : vector<1x256x2xf32> to vector<1xf32>
      %148 = vector.shape_cast %147 : vector<1xf32> to vector<1x1x1xf32>
      %149 = vector.extract %148[0, 0, 0] : f32 from vector<1x1x1xf32>
      %cst_72 = arith.constant 5.100000e+02 : f32
      %150 = arith.divf %149, %cst_72 : f32
      %151 = arith.subf %136, %135 : vector<256x2xf32>
      %152 = arith.mulf %151, %141 : vector<256x2xf32>
      %153 = vector.broadcast %134 : vector<256x1xf32> to vector<256x2xf32>
      %154 = arith.subf %136, %153 : vector<256x2xf32>
      %155 = arith.mulf %154, %141 : vector<256x2xf32>
      %156 = arith.mulf %152, %152 : vector<256x2xf32>
      %157 = vector.shape_cast %156 : vector<256x2xf32> to vector<1x256x2xf32>
      %cst_73 = arith.constant dense<0.000000e+00> : vector<1xf32>
      %158 = vector.multi_reduction <add>, %157, %cst_73 [1, 2] : vector<1x256x2xf32> to vector<1xf32>
      %159 = vector.shape_cast %158 : vector<1xf32> to vector<1x1x1xf32>
      %160 = vector.extract %159[0, 0, 0] : f32 from vector<1x1x1xf32>
      %161 = arith.mulf %155, %155 : vector<256x2xf32>
      %162 = vector.shape_cast %161 : vector<256x2xf32> to vector<1x256x2xf32>
      %cst_74 = arith.constant dense<0.000000e+00> : vector<1xf32>
      %163 = vector.multi_reduction <add>, %162, %cst_74 [1, 2] : vector<1x256x2xf32> to vector<1xf32>
      %164 = vector.shape_cast %163 : vector<1xf32> to vector<1x1x1xf32>
      %165 = vector.extract %164[0, 0, 0] : f32 from vector<1x1x1xf32>
      %cst_75 = arith.constant 0.00999999977 : f32
      %166 = arith.mulf %cst_75, %165 : f32
      %167 = arith.addf %160, %166 : f32
      %cst_76 = arith.constant 5.100000e+02 : f32
      %168 = arith.divf %167, %cst_76 : f32
      %c1 = arith.constant 1 : index
      %c0_77 = arith.constant 0 : index
      %169 = vector.load %arg4[%c1, %c0_77] : memref<256x2xf32, #tpu.memory_space<vmem>>, vector<254x2xf32>
      %c0_78 = arith.constant 0 : index
      %c0_79 = arith.constant 0 : index
      %170 = vector.load %arg4[%c0_78, %c0_79] : memref<256x2xf32, #tpu.memory_space<vmem>>, vector<254x2xf32>
      %171 = arith.subf %169, %170 : vector<254x2xf32>
      %172 = arith.mulf %171, %171 : vector<254x2xf32>
      %173 = vector.shape_cast %172 : vector<254x2xf32> to vector<1x254x2xf32>
      %cst_80 = arith.constant dense<0.000000e+00> : vector<1xf32>
      %174 = vector.multi_reduction <add>, %173, %cst_80 [1, 2] : vector<1x254x2xf32> to vector<1xf32>
      %175 = vector.shape_cast %174 : vector<1xf32> to vector<1x1x1xf32>
      %176 = vector.extract %175[0, 0, 0] : f32 from vector<1x1x1xf32>
      %cst_81 = arith.constant 5.080000e+02 : f32
      %177 = arith.divf %176, %cst_81 : f32
      %c0_82 = arith.constant 0 : index
      %178 = memref.load %arg1[%c0_82] : memref<1xi32, #tpu.memory_space<smem>>
      %c3000_i32 = arith.constant 3000 : i32
      %179 = arith.cmpi sge, %178, %c3000_i32 : i32
      %cst_83 = arith.constant 1.000000e-01 : f32
      %cst_84 = arith.constant 1.000000e+00 : f32
      %180 = arith.select %179, %cst_83, %cst_84 : f32
      %181 = arith.mulf %180, %150 : f32
      %cst_85 = arith.constant 1.000000e-01 : f32
      %182 = arith.mulf %cst_85, %177 : f32
      %183 = arith.addf %181, %182 : f32
      %cst_86 = arith.constant 5.000000e-01 : f32
      %184 = arith.mulf %cst_86, %168 : f32
      %185 = arith.addf %183, %184 : f32
      %c0_87 = arith.constant 0 : index
      %c0_88 = arith.constant 0 : index
      %186 = memref.load %arg6[%c0_87, %c0_88] : memref<1x1xf32, #tpu.memory_space<smem>>
      memref.store %185, %arg6[%c0_87, %c0_88] : memref<1x1xf32, #tpu.memory_space<smem>>
    } else {
    }
    return
  }
  func.func @transform_0(%arg0: i32, %arg1: memref<1xi32, #tpu.memory_space<smem>>) -> (i32, i32) {
    %c0_i32 = arith.constant 0 : i32
    %c0_i32_0 = arith.constant 0 : i32
    return %arg0, %c0_i32 : i32, i32
  }
  func.func @transform_1(%arg0: i32, %arg1: memref<1xi32, #tpu.memory_space<smem>>) -> (i32, i32) {
    %c0_i32 = arith.constant 0 : i32
    %c0_i32_0 = arith.constant 0 : i32
    %c0_i32_1 = arith.constant 0 : i32
    return %c0_i32, %c0_i32_0 : i32, i32
  }
  func.func @transform_2(%arg0: i32, %arg1: memref<1xi32, #tpu.memory_space<smem>>) -> (i32, i32) {
    %c0_i32 = arith.constant 0 : i32
    %c0_i32_0 = arith.constant 0 : i32
    %c0_i32_1 = arith.constant 0 : i32
    return %c0_i32, %c0_i32_0 : i32, i32
  }
  func.func @transform_3(%arg0: i32, %arg1: memref<1xi32, #tpu.memory_space<smem>>) -> (i32, i32) {
    %c0_i32 = arith.constant 0 : i32
    %c0_i32_0 = arith.constant 0 : i32
    %c0_i32_1 = arith.constant 0 : i32
    return %c0_i32, %c0_i32_0 : i32, i32
  }
  func.func @transform_4(%arg0: i32, %arg1: memref<1xi32, #tpu.memory_space<smem>>) -> (i32, i32) {
    %c0_i32 = arith.constant 0 : i32
    %c0_i32_0 = arith.constant 0 : i32
    %c0_i32_1 = arith.constant 0 : i32
    return %c0_i32, %c0_i32_0 : i32, i32
  }
}

</mosaic_0001>

<llo_original>
// kernel: histogram_prior_loss.1
$region0: #{histogram_prior_loss.1}
  #allocation0 [shape = 'u32[]', space=smem, size = 0x4, offset = 0x4, fixed_abs, tag = 'smem constant byte address 0x4 - core index']
  #allocation1 [shape = 'u32[144,128]{1,0:T(1,128)}', space=vmem, size = 0x12000, scoped, tag = 'internal scratch']
  #allocation2 [shape = 'f32[8,128]{1,0:T(8,128)}', space=vmem, size = 0x1000, scoped, tag = 'scratch operand']
  #allocation3 [shape = 'f32[256,1]{1,0:T(8,128)}', space=vmem, size = 0x20000, scoped, tag = 'scratch operand']
  #allocation4 [shape = 's32[1]{0}', space=sflag, size = 0x4, scoped, tag = 'scoped memory for histogram_prior_loss.1']
  #allocation5 [shape = 's32[1]{0:T(128)S(6)}', space=smem, size = 0x200, scoped, tag = 'prefetched SMEM operand 0']
  %s0 = inlined_call_operand.<no memory space> [shape: s32[1], index: 0, kind: input, shape index: {}]
  %s1 = inlined_call_operand.vmem [shape: f32[8,128], index: 1, kind: input, shape index: {}]
  %s2 = inlined_call_operand.vmem [shape: bf16[256,128], index: 2, kind: input, shape index: {}]
  %s3 = inlined_call_operand.vmem [shape: f32[256,2], index: 3, kind: input, shape index: {}]
  %s4 = inlined_call_operand.vmem [shape: f32[256,2], index: 4, kind: input, shape index: {}]
  %s5 = inlined_call_operand.hbm [shape: f32[1,1], index: 5, kind: output, shape index: {}]
  %s6 = sld [smem:[#allocation0]]
  $region34: #{histogram_prior_loss.1} parent=0
    _
  %s8 = ssub.s32 1, %s6
  %s9 = scalar_select 0, %s8, %s6
  %10 = sst [smem:[#allocation5]] %s0
  $region1: #{histogram_prior_loss.1} parent=0
    #allocation6 [shape = 'u8[512]{0}', space=smem, size = 0x200, scoped, tag = 'output window, operand 0, single buffered']
    #allocation7 [shape = 's32[1]{0}', space=sflag, size = 0x4, scoped, tag = 'scoped memory for histogram_prior_loss.1']
    %11 = vsyncpa [#allocation7], 0
    // Predicated region
    $region2: #{histogram_prior_loss.1} parent=1 // pred_check
      _
    $region3: #{histogram_prior_loss.1} parent=1 // pred_check_branch
      %13 = sbr.rel (0) target = $region5
    $region4: #{histogram_prior_loss.1} parent=1 // pred_region
      _
    $region5: #{histogram_prior_loss.1} parent=1 // pred_fallthru
      _
    // Predicated region
    $region6: #{histogram_prior_loss.1} parent=1 // pred_check
      _
    $region7: #{histogram_prior_loss.1} parent=1 // pred_check_branch
      %15 = sbr.rel (0) target = $region9
    $region8: #{histogram_prior_loss.1} parent=1 // pred_region
      _
    $region9: #{histogram_prior_loss.1} parent=1 // pred_fallthru
      _
    // Predicated region
    $region10: #{histogram_prior_loss.1} parent=1 // pred_check
      _
    $region11: #{histogram_prior_loss.1} parent=1 // pred_check_branch
      %17 = sbr.rel (0) target = $region13
    $region12: #{histogram_prior_loss.1} parent=1 // pred_region
      _
    $region13: #{histogram_prior_loss.1} parent=1 // pred_fallthru
      _
    // Predicated region
    $region14: #{histogram_prior_loss.1} parent=1 // pred_check
      _
    $region15: #{histogram_prior_loss.1} parent=1 // pred_check_branch
      %19 = sbr.rel (0) target = $region17
    $region16: #{histogram_prior_loss.1} parent=1 // pred_region
      _
    $region17: #{histogram_prior_loss.1} parent=1 // pred_fallthru
      _
    %p24 = scmp.eq.s32.totalorder 0, 0
    // Predicated region
    $region18: #{histogram_prior_loss.1} parent=1 // pred_check
      %p25 = pneg %p24
    $region19: #{histogram_prior_loss.1} parent=1 // pred_check_branch
      %27 = sbr.rel (%p25) target = $region21
    $region20: #{histogram_prior_loss.1} parent=1 // pred_region
      %vm28 = vcmask 7168
      %29 = vst.msk [vmem:[#allocation3] sm:$0xff] %vm28, 0.0
      %30 = vst.msk [vmem:[#allocation3 + $0x8] sm:$0xff] %vm28, 0.0
      %31 = vst.msk [vmem:[#allocation3 + $0x10] sm:$0xff] %vm28, 0.0
      %32 = vst.msk [vmem:[#allocation3 + $0x18] sm:$0xff] %vm28, 0.0
      %33 = vst.msk [vmem:[#allocation3 + $0x20] sm:$0xff] %vm28, 0.0
      %34 = vst.msk [vmem:[#allocation3 + $0x28] sm:$0xff] %vm28, 0.0
      %35 = vst.msk [vmem:[#allocation3 + $0x30] sm:$0xff] %vm28, 0.0
      %36 = vst.msk [vmem:[#allocation3 + $0x38] sm:$0xff] %vm28, 0.0
      %37 = vst.msk [vmem:[#allocation3 + $0x40] sm:$0xff] %vm28, 0.0
      %38 = vst.msk [vmem:[#allocation3 + $0x48] sm:$0xff] %vm28, 0.0
      %39 = vst.msk [vmem:[#allocation3 + $0x50] sm:$0xff] %vm28, 0.0
      %40 = vst.msk [vmem:[#allocation3 + $0x58] sm:$0xff] %vm28, 0.0
      %41 = vst.msk [vmem:[#allocation3 + $0x60] sm:$0xff] %vm28, 0.0
      %42 = vst.msk [vmem:[#allocation3 + $0x68] sm:$0xff] %vm28, 0.0
      %43 = vst.msk [vmem:[#allocation3 + $0x70] sm:$0xff] %vm28, 0.0
      %44 = vst.msk [vmem:[#allocation3 + $0x78] sm:$0xff] %vm28, 0.0
      %45 = vst.msk [vmem:[#allocation3 + $0x80] sm:$0xff] %vm28, 0.0
      %46 = vst.msk [vmem:[#allocation3 + $0x88] sm:$0xff] %vm28, 0.0
      %47 = vst.msk [vmem:[#allocation3 + $0x90] sm:$0xff] %vm28, 0.0
      %48 = vst.msk [vmem:[#allocation3 + $0x98] sm:$0xff] %vm28, 0.0
      %49 = vst.msk [vmem:[#allocation3 + $0xa0] sm:$0xff] %vm28, 0.0
      %50 = vst.msk [vmem:[#allocation3 + $0xa8] sm:$0xff] %vm28, 0.0
      %51 = vst.msk [vmem:[#allocation3 + $0xb0] sm:$0xff] %vm28, 0.0
      %52 = vst.msk [vmem:[#allocation3 + $0xb8] sm:$0xff] %vm28, 0.0
      %53 = vst.msk [vmem:[#allocation3 + $0xc0] sm:$0xff] %vm28, 0.0
      %54 = vst.msk [vmem:[#allocation3 + $0xc8] sm:$0xff] %vm28, 0.0
      %55 = vst.msk [vmem:[#allocation3 + $0xd0] sm:$0xff] %vm28, 0.0
      %56 = vst.msk [vmem:[#allocation3 + $0xd8] sm:$0xff] %vm28, 0.0
      %57 = vst.msk [vmem:[#allocation3 + $0xe0] sm:$0xff] %vm28, 0.0
      %58 = vst.msk [vmem:[#allocation3 + $0xe8] sm:$0xff] %vm28, 0.0
      %59 = vst.msk [vmem:[#allocation3 + $0xf0] sm:$0xff] %vm28, 0.0
      %60 = vst.msk [vmem:[#allocation3 + $0xf8] sm:$0xff] %vm28, 0.0
    $region21: #{histogram_prior_loss.1} parent=1 // pred_fallthru
      _
    %v61 = vld [vmem:[%s1] sm:$0xff]
    %vm62 = vcmp.ge.f32.partialorder %v61, 0.0
    %vm63 = vcmp.le.f32.partialorder %v61, 1.0
    %vm64 = vmand %vm62, %vm63
    %v65 = vmul.f32 %v61, 255.0
    %v66 = vfloor.f32 %v65
    %v67 = vmin.f32 %v66, 254.0
    %v68 = vsel %vm64, %v67, 512.0
    %69 = vst [vmem:[#allocation2] sm:$0xff] %v68
    %v70 = vld [vmem:[%s2] sm:$0xf]
    %v71 = vld [vmem:[%s2 + $0x4] sm:$0xf]
    %v72 = vld [vmem:[%s2 + $0x8] sm:$0xf]
    %v73 = vld [vmem:[%s2 + $0xc] sm:$0xf]
    %v74 = vld [vmem:[%s2 + $0x10] sm:$0xf]
    %v75 = vld [vmem:[%s2 + $0x14] sm:$0xf]
    %v76 = vld [vmem:[%s2 + $0x18] sm:$0xf]
    %v77 = vld [vmem:[%s2 + $0x1c] sm:$0xf]
    %v78 = vld [vmem:[%s2 + $0x20] sm:$0xf]
    %v79 = vld [vmem:[%s2 + $0x24] sm:$0xf]
    %v80 = vld [vmem:[%s2 + $0x28] sm:$0xf]
    %v81 = vld [vmem:[%s2 + $0x2c] sm:$0xf]
    %v82 = vld [vmem:[%s2 + $0x30] sm:$0xf]
    %v83 = vld [vmem:[%s2 + $0x34] sm:$0xf]
    %v84 = vld [vmem:[%s2 + $0x38] sm:$0xf]
    %v85 = vld [vmem:[%s2 + $0x3c] sm:$0xf]
    %v86 = vld [vmem:[%s2 + $0x40] sm:$0xf]
    %v87 = vld [vmem:[%s2 + $0x44] sm:$0xf]
    %v88 = vld [vmem:[%s2 + $0x48] sm:$0xf]
    %v89 = vld [vmem:[%s2 + $0x4c] sm:$0xf]
    %v90 = vld [vmem:[%s2 + $0x50] sm:$0xf]
    %v91 = vld [vmem:[%s2 + $0x54] sm:$0xf]
    %v92 = vld [vmem:[%s2 + $0x58] sm:$0xf]
    %v93 = vld [vmem:[%s2 + $0x5c] sm:$0xf]
    %v94 = vld [vmem:[%s2 + $0x60] sm:$0xf]
    %v95 = vld [vmem:[%s2 + $0x64] sm:$0xf]
    %v96 = vld [vmem:[%s2 + $0x68] sm:$0xf]
    %v97 = vld [vmem:[%s2 + $0x6c] sm:$0xf]
    %v98 = vld [vmem:[%s2 + $0x70] sm:$0xf]
    %v99 = vld [vmem:[%s2 + $0x74] sm:$0xf]
    %v100 = vld [vmem:[%s2 + $0x78] sm:$0xf]
    %v101 = vld [vmem:[%s2 + $0x7c] sm:$0xf]
    %v102 = vld [vmem:[#allocation2] sm:$0x1]
    %v103 = vpack.c.bf16 %v102, %v102
    %v105 = vpack.i.b16 %v103, %v103
    %v107 = vlaneseq
    %v108 = vshrl.u32 %v107, 7
    %v109 = vsub.s32 0, %v108
    %v110 = vrot.slane %v105, %v109
    %v143 = vunpack.c.l.b16 %v70
    %v144 = vunpack.c.l.b16 %v71
    %v145 = vunpack.c.l.b16 %v72
    %v146 = vunpack.c.l.b16 %v73
    %v147 = vunpack.c.l.b16 %v74
    %v148 = vunpack.c.l.b16 %v75
    %v149 = vunpack.c.l.b16 %v76
    %v150 = vunpack.c.l.b16 %v77
    %v151 = vunpack.c.l.b16 %v78
    %v152 = vunpack.c.l.b16 %v79
    %v153 = vunpack.c.l.b16 %v80
    %v154 = vunpack.c.l.b16 %v81
    %v155 = vunpack.c.l.b16 %v82
    %v156 = vunpack.c.l.b16 %v83
    %v157 = vunpack.c.l.b16 %v84
    %v158 = vunpack.c.l.b16 %v85
    %v159 = vunpack.c.l.b16 %v86
    %v160 = vunpack.c.l.b16 %v87
    %v161 = vunpack.c.l.b16 %v88
    %v162 = vunpack.c.l.b16 %v89
    %v163 = vunpack.c.l.b16 %v90
    %v164 = vunpack.c.l.b16 %v91
    %v165 = vunpack.c.l.b16 %v92
    %v166 = vunpack.c.l.b16 %v93
    %v167 = vunpack.c.l.b16 %v94
    %v168 = vunpack.c.l.b16 %v95
    %v169 = vunpack.c.l.b16 %v96
    %v170 = vunpack.c.l.b16 %v97
    %v171 = vunpack.c.l.b16 %v98
    %v172 = vunpack.c.l.b16 %v99
    %v173 = vunpack.c.l.b16 %v100
    %v174 = vunpack.c.l.b16 %v101
    %v175 = vpack.c.b16 %v144, %v143
    %v176 = vpack.c.b16 %v146, %v145
    %v177 = vpack.c.b16 %v148, %v147
    %v178 = vpack.c.b16 %v150, %v149
    %v179 = vpack.c.b16 %v152, %v151
    %v180 = vpack.c.b16 %v154, %v153
    %v181 = vpack.c.b16 %v156, %v155
    %v182 = vpack.c.b16 %v158, %v157
    %v183 = vpack.c.b16 %v160, %v159
    %v184 = vpack.c.b16 %v162, %v161
    %v185 = vpack.c.b16 %v164, %v163
    %v186 = vpack.c.b16 %v166, %v165
    %v187 = vpack.c.b16 %v168, %v167
    %v188 = vpack.c.b16 %v170, %v169
    %v189 = vpack.c.b16 %v172, %v171
    %v190 = vpack.c.b16 %v174, %v173
    %vm207 = vcmp.le.bf16.partialorder %v110, %v175
    %vm208 = vcmp.le.bf16.partialorder %v110, %v176
    %vm209 = vcmp.le.bf16.partialorder %v110, %v177
    %vm210 = vcmp.le.bf16.partialorder %v110, %v178
    %vm211 = vcmp.le.bf16.partialorder %v110, %v179
    %vm212 = vcmp.le.bf16.partialorder %v110, %v180
    %vm213 = vcmp.le.bf16.partialorder %v110, %v181
    %vm214 = vcmp.le.bf16.partialorder %v110, %v182
    %vm215 = vcmp.le.bf16.partialorder %v110, %v183
    %vm216 = vcmp.le.bf16.partialorder %v110, %v184
    %vm217 = vcmp.le.bf16.partialorder %v110, %v185
    %vm218 = vcmp.le.bf16.partialorder %v110, %v186
    %vm219 = vcmp.le.bf16.partialorder %v110, %v187
    %vm220 = vcmp.le.bf16.partialorder %v110, %v188
    %vm221 = vcmp.le.bf16.partialorder %v110, %v189
    %vm222 = vcmp.le.bf16.partialorder %v110, %v190
    %v223 = vsel %vm207, 65537, 0
    %v224 = vsel %vm208, 65537, 0
    %v225 = vsel %vm209, 65537, 0
    %v226 = vsel %vm210, 65537, 0
    %v227 = vsel %vm211, 65537, 0
    %v228 = vsel %vm212, 65537, 0
    %v229 = vsel %vm213, 65537, 0
    %v230 = vsel %vm214, 65537, 0
    %v231 = vsel %vm215, 65537, 0
    %v232 = vsel %vm216, 65537, 0
    %v233 = vsel %vm217, 65537, 0
    %v234 = vsel %vm218, 65537, 0
    %v235 = vsel %vm219, 65537, 0
    %v236 = vsel %vm220, 65537, 0
    %v237 = vsel %vm221, 65537, 0
    %v238 = vsel %vm222, 65537, 0
    %v239 = vunpack.c.l.b16 %v223
    %v240 = vunpack.c.h.b16 %v223
    %v241 = vunpack.c.l.b16 %v224
    %v242 = vunpack.c.h.b16 %v224
    %v243 = vunpack.c.l.b16 %v225
    %v244 = vunpack.c.h.b16 %v225
    %v245 = vunpack.c.l.b16 %v226
    %v246 = vunpack.c.h.b16 %v226
    %v247 = vunpack.c.l.b16 %v227
    %v248 = vunpack.c.h.b16 %v227
    %v249 = vunpack.c.l.b16 %v228
    %v250 = vunpack.c.h.b16 %v228
    %v251 = vunpack.c.l.b16 %v229
    %v252 = vunpack.c.h.b16 %v229
    %v253 = vunpack.c.l.b16 %v230
    %v254 = vunpack.c.h.b16 %v230
    %v255 = vunpack.c.l.b16 %v231
    %v256 = vunpack.c.h.b16 %v231
    %v257 = vunpack.c.l.b16 %v232
    %v258 = vunpack.c.h.b16 %v232
    %v259 = vunpack.c.l.b16 %v233
    %v260 = vunpack.c.h.b16 %v233
    %v261 = vunpack.c.l.b16 %v234
    %v262 = vunpack.c.h.b16 %v234
    %v263 = vunpack.c.l.b16 %v235
    %v264 = vunpack.c.h.b16 %v235
    %v265 = vunpack.c.l.b16 %v236
    %v266 = vunpack.c.h.b16 %v236
    %v267 = vunpack.c.l.b16 %v237
    %v268 = vunpack.c.h.b16 %v237
    %v269 = vunpack.c.l.b16 %v238
    %v270 = vunpack.c.h.b16 %v238
    %v271 = vpack.c.b16 %v239, %v239
    %v272 = vpack.c.b16 %v240, %v240
    %v273 = vpack.c.b16 %v241, %v241
    %v274 = vpack.c.b16 %v242, %v242
    %v275 = vpack.c.b16 %v243, %v243
    %v276 = vpack.c.b16 %v244, %v244
    %v277 = vpack.c.b16 %v245, %v245
    %v278 = vpack.c.b16 %v246, %v246
    %v279 = vpack.c.b16 %v247, %v247
    %v280 = vpack.c.b16 %v248, %v248
    %v281 = vpack.c.b16 %v249, %v249
    %v282 = vpack.c.b16 %v250, %v250
    %v283 = vpack.c.b16 %v251, %v251
    %v284 = vpack.c.b16 %v252, %v252
    %v285 = vpack.c.b16 %v253, %v253
    %v286 = vpack.c.b16 %v254, %v254
    %v287 = vpack.c.b16 %v255, %v255
    %v288 = vpack.c.b16 %v256, %v256
    %v289 = vpack.c.b16 %v257, %v257
    %v290 = vpack.c.b16 %v258, %v258
    %v291 = vpack.c.b16 %v259, %v259
    %v292 = vpack.c.b16 %v260, %v260
    %v293 = vpack.c.b16 %v261, %v261
    %v294 = vpack.c.b16 %v262, %v262
    %v295 = vpack.c.b16 %v263, %v263
    %v296 = vpack.c.b16 %v264, %v264
    %v297 = vpack.c.b16 %v265, %v265
    %v298 = vpack.c.b16 %v266, %v266
    %v299 = vpack.c.b16 %v267, %v267
    %v300 = vpack.c.b16 %v268, %v268
    %v301 = vpack.c.b16 %v269, %v269
    %v302 = vpack.c.b16 %v270, %v270
    %vm303 = vcmp.ne.s16.totalorder %v271, 0
    %vm304 = vcmp.ne.s16.totalorder %v272, 0
    %vm305 = vcmp.ne.s16.totalorder %v273, 0
    %vm306 = vcmp.ne.s16.totalorder %v274, 0
    %vm307 = vcmp.ne.s16.totalorder %v275, 0
    %vm308 = vcmp.ne.s16.totalorder %v276, 0
    %vm309 = vcmp.ne.s16.totalorder %v277, 0
    %vm310 = vcmp.ne.s16.totalorder %v278, 0
    %vm311 = vcmp.ne.s16.totalorder %v279, 0
    %vm312 = vcmp.ne.s16.totalorder %v280, 0
    %vm313 = vcmp.ne.s16.totalorder %v281, 0
    %vm314 = vcmp.ne.s16.totalorder %v282, 0
    %vm315 = vcmp.ne.s16.totalorder %v283, 0
    %vm316 = vcmp.ne.s16.totalorder %v284, 0
    %vm317 = vcmp.ne.s16.totalorder %v285, 0
    %vm318 = vcmp.ne.s16.totalorder %v286, 0
    %vm319 = vcmp.ne.s16.totalorder %v287, 0
    %vm320 = vcmp.ne.s16.totalorder %v288, 0
    %vm321 = vcmp.ne.s16.totalorder %v289, 0
    %vm322 = vcmp.ne.s16.totalorder %v290, 0
    %vm323 = vcmp.ne.s16.totalorder %v291, 0
    %vm324 = vcmp.ne.s16.totalorder %v292, 0
    %vm325 = vcmp.ne.s16.totalorder %v293, 0
    %vm326 = vcmp.ne.s16.totalorder %v294, 0
    %vm327 = vcmp.ne.s16.totalorder %v295, 0
    %vm328 = vcmp.ne.s16.totalorder %v296, 0
    %vm329 = vcmp.ne.s16.totalorder %v297, 0
    %vm330 = vcmp.ne.s16.totalorder %v298, 0
    %vm331 = vcmp.ne.s16.totalorder %v299, 0
    %vm332 = vcmp.ne.s16.totalorder %v300, 0
    %vm333 = vcmp.ne.s16.totalorder %v301, 0
    %vm334 = vcmp.ne.s16.totalorder %v302, 0
    %v335 = vsel %vm303, 65537, 0
    %v336 = vsel %vm304, 65537, 0
    %v337 = vsel %vm305, 65537, 0
    %v338 = vsel %vm306, 65537, 0
    %v339 = vsel %vm307, 65537, 0
    %v340 = vsel %vm308, 65537, 0
    %v341 = vsel %vm309, 65537, 0
    %v342 = vsel %vm310, 65537, 0
    %v343 = vsel %vm311, 65537, 0
    %v344 = vsel %vm312, 65537, 0
    %v345 = vsel %vm313, 65537, 0
    %v346 = vsel %vm314, 65537, 0
    %v347 = vsel %vm315, 65537, 0
    %v348 = vsel %vm316, 65537, 0
    %v349 = vsel %vm317, 65537, 0
    %v350 = vsel %vm318, 65537, 0
    %v351 = vsel %vm319, 65537, 0
    %v352 = vsel %vm320, 65537, 0
    %v353 = vsel %vm321, 65537, 0
    %v354 = vsel %vm322, 65537, 0
    %v355 = vsel %vm323, 65537, 0
    %v356 = vsel %vm324, 65537, 0
    %v357 = vsel %vm325, 65537, 0
    %v358 = vsel %vm326, 65537, 0
    %v359 = vsel %vm327, 65537, 0
    %v360 = vsel %vm328, 65537, 0
    %v361 = vsel %vm329, 65537, 0
    %v362 = vsel %vm330, 65537, 0
    %v363 = vsel %vm331, 65537, 0
    %v364 = vsel %vm332, 65537, 0
    %v365 = vsel %vm333, 65537, 0
    %v366 = vsel %vm334, 65537, 0
    %v367 = vunpack.c.l.b16 %v335
    %v368 = vunpack.c.l.b16 %v336
    %v369 = vunpack.c.l.b16 %v337
    %v370 = vunpack.c.l.b16 %v338
    %v371 = vunpack.c.l.b16 %v339
    %v372 = vunpack.c.l.b16 %v340
    %v373 = vunpack.c.l.b16 %v341
    %v374 = vunpack.c.l.b16 %v342
    %v375 = vunpack.c.l.b16 %v343
    %v376 = vunpack.c.l.b16 %v344
    %v377 = vunpack.c.l.b16 %v345
    %v378 = vunpack.c.l.b16 %v346
    %v379 = vunpack.c.l.b16 %v347
    %v380 = vunpack.c.l.b16 %v348
    %v381 = vunpack.c.l.b16 %v349
    %v382 = vunpack.c.l.b16 %v350
    %v383 = vunpack.c.l.b16 %v351
    %v384 = vunpack.c.l.b16 %v352
    %v385 = vunpack.c.l.b16 %v353
    %v386 = vunpack.c.l.b16 %v354
    %v387 = vunpack.c.l.b16 %v355
    %v388 = vunpack.c.l.b16 %v356
    %v389 = vunpack.c.l.b16 %v357
    %v390 = vunpack.c.l.b16 %v358
    %v391 = vunpack.c.l.b16 %v359
    %v392 = vunpack.c.l.b16 %v360
    %v393 = vunpack.c.l.b16 %v361
    %v394 = vunpack.c.l.b16 %v362
    %v395 = vunpack.c.l.b16 %v363
    %v396 = vunpack.c.l.b16 %v364
    %v397 = vunpack.c.l.b16 %v365
    %v398 = vunpack.c.l.b16 %v366
    %vm399 = vcmp.ne.s32.totalorder %v367, 0
    %vm400 = vcmp.ne.s32.totalorder %v368, 0
    %vm401 = vcmp.ne.s32.totalorder %v369, 0
    %vm402 = vcmp.ne.s32.totalorder %v370, 0
    %vm403 = vcmp.ne.s32.totalorder %v371, 0
    %vm404 = vcmp.ne.s32.totalorder %v372, 0
    %vm405 = vcmp.ne.s32.totalorder %v373, 0
    %vm406 = vcmp.ne.s32.totalorder %v374, 0
    %vm407 = vcmp.ne.s32.totalorder %v375, 0
    %vm408 = vcmp.ne.s32.totalorder %v376, 0
    %vm409 = vcmp.ne.s32.totalorder %v377, 0
    %vm410 = vcmp.ne.s32.totalorder %v378, 0
    %vm411 = vcmp.ne.s32.totalorder %v379, 0
    %vm412 = vcmp.ne.s32.totalorder %v380, 0
    %vm413 = vcmp.ne.s32.totalorder %v381, 0
    %vm414 = vcmp.ne.s32.totalorder %v382, 0
    %vm415 = vcmp.ne.s32.totalorder %v383, 0
    %vm416 = vcmp.ne.s32.totalorder %v384, 0
    %vm417 = vcmp.ne.s32.totalorder %v385, 0
    %vm418 = vcmp.ne.s32.totalorder %v386, 0
    %vm419 = vcmp.ne.s32.totalorder %v387, 0
    %vm420 = vcmp.ne.s32.totalorder %v388, 0
    %vm421 = vcmp.ne.s32.totalorder %v389, 0
    %vm422 = vcmp.ne.s32.totalorder %v390, 0
    %vm423 = vcmp.ne.s32.totalorder %v391, 0
    %vm424 = vcmp.ne.s32.totalorder %v392, 0
    %vm425 = vcmp.ne.s32.totalorder %v393, 0
    %vm426 = vcmp.ne.s32.totalorder %v394, 0
    %vm427 = vcmp.ne.s32.totalorder %v395, 0
    %vm428 = vcmp.ne.s32.totalorder %v396, 0
    %vm429 = vcmp.ne.s32.totalorder %v397, 0
    %vm430 = vcmp.ne.s32.totalorder %v398, 0
    %v431 = vsel %vm399, 1, 0
    %v432 = vsel %vm400, 1, 0
    %v433 = vsel %vm401, 1, 0
    %v434 = vsel %vm402, 1, 0
    %v435 = vsel %vm403, 1, 0
    %v436 = vsel %vm404, 1, 0
    %v437 = vsel %vm405, 1, 0
    %v438 = vsel %vm406, 1, 0
    %v439 = vsel %vm407, 1, 0
    %v440 = vsel %vm408, 1, 0
    %v441 = vsel %vm409, 1, 0
    %v442 = vsel %vm410, 1, 0
    %v443 = vsel %vm411, 1, 0
    %v444 = vsel %vm412, 1, 0
    %v445 = vsel %vm413, 1, 0
    %v446 = vsel %vm414, 1, 0
    %v447 = vsel %vm415, 1, 0
    %v448 = vsel %vm416, 1, 0
    %v449 = vsel %vm417, 1, 0
    %v450 = vsel %vm418, 1, 0
    %v451 = vsel %vm419, 1, 0
    %v452 = vsel %vm420, 1, 0
    %v453 = vsel %vm421, 1, 0
    %v454 = vsel %vm422, 1, 0
    %v455 = vsel %vm423, 1, 0
    %v456 = vsel %vm424, 1, 0
    %v457 = vsel %vm425, 1, 0
    %v458 = vsel %vm426, 1, 0
    %v459 = vsel %vm427, 1, 0
    %v460 = vsel %vm428, 1, 0
    %v461 = vsel %vm429, 1, 0
    %v462 = vsel %vm430, 1, 0
    %v463 = vcvt.s32.f32 %v431
    %v464 = vcvt.s32.f32 %v432
    %v465 = vcvt.s32.f32 %v433
    %v466 = vcvt.s32.f32 %v434
    %v467 = vcvt.s32.f32 %v435
    %v468 = vcvt.s32.f32 %v436
    %v469 = vcvt.s32.f32 %v437
    %v470 = vcvt.s32.f32 %v438
    %v471 = vcvt.s32.f32 %v439
    %v472 = vcvt.s32.f32 %v440
    %v473 = vcvt.s32.f32 %v441
    %v474 = vcvt.s32.f32 %v442
    %v475 = vcvt.s32.f32 %v443
    %v476 = vcvt.s32.f32 %v444
    %v477 = vcvt.s32.f32 %v445
    %v478 = vcvt.s32.f32 %v446
    %v479 = vcvt.s32.f32 %v447
    %v480 = vcvt.s32.f32 %v448
    %v481 = vcvt.s32.f32 %v449
    %v482 = vcvt.s32.f32 %v450
    %v483 = vcvt.s32.f32 %v451
    %v484 = vcvt.s32.f32 %v452
    %v485 = vcvt.s32.f32 %v453
    %v486 = vcvt.s32.f32 %v454
    %v487 = vcvt.s32.f32 %v455
    %v488 = vcvt.s32.f32 %v456
    %v489 = vcvt.s32.f32 %v457
    %v490 = vcvt.s32.f32 %v458
    %v491 = vcvt.s32.f32 %v459
    %v492 = vcvt.s32.f32 %v460
    %v493 = vcvt.s32.f32 %v461
    %v494 = vcvt.s32.f32 %v462
    %v495 = vpack.c.bf16 %v464, %v463
    %v496 = vpack.c.bf16 %v466, %v465
    %v497 = vpack.c.bf16 %v468, %v467
    %v498 = vpack.c.bf16 %v470, %v469
    %v499 = vpack.c.bf16 %v472, %v471
    %v500 = vpack.c.bf16 %v474, %v473
    %v501 = vpack.c.bf16 %v476, %v475
    %v502 = vpack.c.bf16 %v478, %v477
    %v503 = vpack.c.bf16 %v480, %v479
    %v504 = vpack.c.bf16 %v482, %v481
    %v505 = vpack.c.bf16 %v484, %v483
    %v506 = vpack.c.bf16 %v486, %v485
    %v507 = vpack.c.bf16 %v488, %v487
    %v508 = vpack.c.bf16 %v490, %v489
    %v509 = vpack.c.bf16 %v492, %v491
    %v510 = vpack.c.bf16 %v494, %v493
    %v511 = vld [vmem:[#allocation3] sm:$0xff]
    %v512 = vld [vmem:[#allocation3 + $0x8] sm:$0xff]
    %v513 = vld [vmem:[#allocation3 + $0x10] sm:$0xff]
    %v514 = vld [vmem:[#allocation3 + $0x18] sm:$0xff]
    %v515 = vld [vmem:[#allocation3 + $0x20] sm:$0xff]
    %v516 = vld [vmem:[#allocation3 + $0x28] sm:$0xff]
    %v517 = vld [vmem:[#allocation3 + $0x30] sm:$0xff]
    %v518 = vld [vmem:[#allocation3 + $0x38] sm:$0xff]
    %v519 = vld [vmem:[#allocation3 + $0x40] sm:$0xff]
    %v520 = vld [vmem:[#allocation3 + $0x48] sm:$0xff]
    %v521 = vld [vmem:[#allocation3 + $0x50] sm:$0xff]
    %v522 = vld [vmem:[#allocation3 + $0x58] sm:$0xff]
    %v523 = vld [vmem:[#allocation3 + $0x60] sm:$0xff]
    %v524 = vld [vmem:[#allocation3 + $0x68] sm:$0xff]
    %v525 = vld [vmem:[#allocation3 + $0x70] sm:$0xff]
    %v526 = vld [vmem:[#allocation3 + $0x78] sm:$0xff]
    %v527 = vld [vmem:[#allocation3 + $0x80] sm:$0xff]
    %v528 = vld [vmem:[#allocation3 + $0x88] sm:$0xff]
    %v529 = vld [vmem:[#allocation3 + $0x90] sm:$0xff]
    %v530 = vld [vmem:[#allocation3 + $0x98] sm:$0xff]
    %v531 = vld [vmem:[#allocation3 + $0xa0] sm:$0xff]
    %v532 = vld [vmem:[#allocation3 + $0xa8] sm:$0xff]
    %v533 = vld [vmem:[#allocation3 + $0xb0] sm:$0xff]
    %v534 = vld [vmem:[#allocation3 + $0xb8] sm:$0xff]
    %v535 = vld [vmem:[#allocation3 + $0xc0] sm:$0xff]
    %v536 = vld [vmem:[#allocation3 + $0xc8] sm:$0xff]
    %v537 = vld [vmem:[#allocation3 + $0xd0] sm:$0xff]
    %v538 = vld [vmem:[#allocation3 + $0xd8] sm:$0xff]
    %v539 = vld [vmem:[#allocation3 + $0xe0] sm:$0xff]
    %v540 = vld [vmem:[#allocation3 + $0xe8] sm:$0xff]
    %v541 = vld [vmem:[#allocation3 + $0xf0] sm:$0xff]
    %v542 = vld [vmem:[#allocation3 + $0xf8] sm:$0xff]
    %543 = vmatprep.subr.bf16.mxu0 0
    %544 = vmatpush1.bf16.msra.mxu0 1065369472
    %545 = vmatprep.subr.bf16.mxu0 0
    %546 = vmatpush1.bf16.msra.mxu0 1065369472
    %547 = vmatprep.subr.bf16.mxu0 0
    %548 = vmatpush1.bf16.msra.mxu0 1065369472
    %549 = vmatprep.subr.bf16.mxu0 0
    %550 = vmatpush1.bf16.msra.mxu0 1065369472
    %551 = vmatprep.subr.bf16.mxu0 0
    %552 = vmatpush1.bf16.msra.mxu0 1065369472
    %553 = vmatprep.subr.bf16.mxu0 0
    %554 = vmatpush1.bf16.msra.mxu0 1065369472
    %555 = vmatprep.subr.bf16.mxu0 0
    %556 = vmatpush1.bf16.msra.mxu0 1065369472
    %557 = vmatprep.subr.bf16.mxu0 0
    %558 = vmatpush1.bf16.msra.mxu0 1065369472
    %559 = vmatprep.subr.bf16.mxu0 0
    %560 = vmatpush2.bf16.msra.mxu0 0
    %561 = vmatprep.subr.bf16.mxu0 0
    %562 = vmatpush2.bf16.msra.mxu0 0
    %563 = vmatprep.subr.bf16.mxu0 0
    %564 = vmatpush2.bf16.msra.mxu0 0
    %565 = vmatprep.subr.bf16.mxu0 0
    %566 = vmatpush2.bf16.msra.mxu0 0
    %567 = vmatprep.subr.bf16.mxu0 0
    %568 = vmatpush2.bf16.msra.mxu0 0
    %569 = vmatprep.subr.bf16.mxu0 0
    %570 = vmatpush2.bf16.msra.mxu0 0
    %571 = vmatprep.subr.bf16.mxu0 0
    %572 = vmatpush2.bf16.msra.mxu0 0
    %573 = vmatprep.subr.bf16.mxu0 0
    %574 = vmatpush2.bf16.msra.mxu0 0
    %575 = vmatprep.mubr.bf16.mxu0 0
    %576 = vmatmul.mubr.bf16.gmra.mxu0 %v495
    %v577 = vpop.f32.mrf.mxu0
    %v578 = vadd.f32 0.0, %v577
    %v579 = vpop.f32.mrf.mxu0
    %v580 = vpop.f32.mrf.mxu0
    %v581 = vadd.f32 0.0, %v580
    %v582 = vpop.f32.mrf.mxu0
    %583 = vmatprep.mubr.bf16.mxu0 0
    %584 = vmatmul.mubr.bf16.gmra.mxu0 %v496
    %v585 = vpop.f32.mrf.mxu0
    %v586 = vadd.f32 0.0, %v585
    %v587 = vpop.f32.mrf.mxu0
    %v588 = vpop.f32.mrf.mxu0
    %v589 = vadd.f32 0.0, %v588
    %v590 = vpop.f32.mrf.mxu0
    %591 = vmatprep.mubr.bf16.mxu0 0
    %592 = vmatmul.mubr.bf16.gmra.mxu0 %v497
    %v593 = vpop.f32.mrf.mxu0
    %v594 = vadd.f32 0.0, %v593
    %v595 = vpop.f32.mrf.mxu0
    %v596 = vpop.f32.mrf.mxu0
    %v597 = vadd.f32 0.0, %v596
    %v598 = vpop.f32.mrf.mxu0
    %599 = vmatprep.mubr.bf16.mxu0 0
    %600 = vmatmul.mubr.bf16.gmra.mxu0 %v498
    %v601 = vpop.f32.mrf.mxu0
    %v602 = vadd.f32 0.0, %v601
    %v603 = vpop.f32.mrf.mxu0
    %v604 = vpop.f32.mrf.mxu0
    %v605 = vadd.f32 0.0, %v604
    %v606 = vpop.f32.mrf.mxu0
    %607 = vmatprep.mubr.bf16.mxu0 0
    %608 = vmatmul.mubr.bf16.gmra.mxu0 %v499
    %v609 = vpop.f32.mrf.mxu0
    %v610 = vadd.f32 0.0, %v609
    %v611 = vpop.f32.mrf.mxu0
    %v612 = vpop.f32.mrf.mxu0
    %v613 = vadd.f32 0.0, %v612
    %v614 = vpop.f32.mrf.mxu0
    %615 = vmatprep.mubr.bf16.mxu0 0
    %616 = vmatmul.mubr.bf16.gmra.mxu0 %v500
    %v617 = vpop.f32.mrf.mxu0
    %v618 = vadd.f32 0.0, %v617
    %v619 = vpop.f32.mrf.mxu0
    %v620 = vpop.f32.mrf.mxu0
    %v621 = vadd.f32 0.0, %v620
    %v622 = vpop.f32.mrf.mxu0
    %623 = vmatprep.mubr.bf16.mxu0 0
    %624 = vmatmul.mubr.bf16.gmra.mxu0 %v501
    %v625 = vpop.f32.mrf.mxu0
    %v626 = vadd.f32 0.0, %v625
    %v627 = vpop.f32.mrf.mxu0
    %v628 = vpop.f32.mrf.mxu0
    %v629 = vadd.f32 0.0, %v628
    %v630 = vpop.f32.mrf.mxu0
    %631 = vmatprep.mubr.bf16.mxu0 0
    %632 = vmatmul.mubr.bf16.gmra.mxu0 %v502
    %v633 = vpop.f32.mrf.mxu0
    %v634 = vadd.f32 0.0, %v633
    %v635 = vpop.f32.mrf.mxu0
    %v636 = vpop.f32.mrf.mxu0
    %v637 = vadd.f32 0.0, %v636
    %v638 = vpop.f32.mrf.mxu0
    %639 = vmatprep.mubr.bf16.mxu0 0
    %640 = vmatmul.mubr.bf16.gmra.mxu0 %v503
    %v641 = vpop.f32.mrf.mxu0
    %v642 = vadd.f32 0.0, %v641
    %v643 = vpop.f32.mrf.mxu0
    %v644 = vpop.f32.mrf.mxu0
    %v645 = vadd.f32 0.0, %v644
    %v646 = vpop.f32.mrf.mxu0
    %647 = vmatprep.mubr.bf16.mxu0 0
    %648 = vmatmul.mubr.bf16.gmra.mxu0 %v504
    %v649 = vpop.f32.mrf.mxu0
    %v650 = vadd.f32 0.0, %v649
    %v651 = vpop.f32.mrf.mxu0
    %v652 = vpop.f32.mrf.mxu0
    %v653 = vadd.f32 0.0, %v652
    %v654 = vpop.f32.mrf.mxu0
    %655 = vmatprep.mubr.bf16.mxu0 0
    %656 = vmatmul.mubr.bf16.gmra.mxu0 %v505
    %v657 = vpop.f32.mrf.mxu0
    %v658 = vadd.f32 0.0, %v657
    %v659 = vpop.f32.mrf.mxu0
    %v660 = vpop.f32.mrf.mxu0
    %v661 = vadd.f32 0.0, %v660
    %v662 = vpop.f32.mrf.mxu0
    %663 = vmatprep.mubr.bf16.mxu0 0
    %664 = vmatmul.mubr.bf16.gmra.mxu0 %v506
    %v665 = vpop.f32.mrf.mxu0
    %v666 = vadd.f32 0.0, %v665
    %v667 = vpop.f32.mrf.mxu0
    %v668 = vpop.f32.mrf.mxu0
    %v669 = vadd.f32 0.0, %v668
    %v670 = vpop.f32.mrf.mxu0
    %671 = vmatprep.mubr.bf16.mxu0 0
    %672 = vmatmul.mubr.bf16.gmra.mxu0 %v507
    %v673 = vpop.f32.mrf.mxu0
    %v674 = vadd.f32 0.0, %v673
    %v675 = vpop.f32.mrf.mxu0
    %v676 = vpop.f32.mrf.mxu0
    %v677 = vadd.f32 0.0, %v676
    %v678 = vpop.f32.mrf.mxu0
    %679 = vmatprep.mubr.bf16.mxu0 0
    %680 = vmatmul.mubr.bf16.gmra.mxu0 %v508
    %v681 = vpop.f32.mrf.mxu0
    %v682 = vadd.f32 0.0, %v681
    %v683 = vpop.f32.mrf.mxu0
    %v684 = vpop.f32.mrf.mxu0
    %v685 = vadd.f32 0.0, %v684
    %v686 = vpop.f32.mrf.mxu0
    %687 = vmatprep.mubr.bf16.mxu0 0
    %688 = vmatmul.mubr.bf16.gmra.mxu0 %v509
    %v689 = vpop.f32.mrf.mxu0
    %v690 = vadd.f32 0.0, %v689
    %v691 = vpop.f32.mrf.mxu0
    %v692 = vpop.f32.mrf.mxu0
    %v693 = vadd.f32 0.0, %v692
    %v694 = vpop.f32.mrf.mxu0
    %695 = vmatprep.mubr.bf16.mxu0 0
    %696 = vmatmul.mubr.bf16.gmra.mxu0 %v510
    %v697 = vpop.f32.mrf.mxu0
    %v698 = vadd.f32 0.0, %v697
    %v699 = vpop.f32.mrf.mxu0
    %v700 = vpop.f32.mrf.mxu0
    %v701 = vadd.f32 0.0, %v700
    %v702 = vpop.f32.mrf.mxu0
    %703 = vdwg.mxu0
    %v704 = vadd.f32 %v511, %v578
    %v705 = vadd.f32 %v512, %v581
    %v706 = vadd.f32 %v513, %v586
    %v707 = vadd.f32 %v514, %v589
    %v708 = vadd.f32 %v515, %v594
    %v709 = vadd.f32 %v516, %v597
    %v710 = vadd.f32 %v517, %v602
    %v711 = vadd.f32 %v518, %v605
    %v712 = vadd.f32 %v519, %v610
    %v713 = vadd.f32 %v520, %v613
    %v714 = vadd.f32 %v521, %v618
    %v715 = vadd.f32 %v522, %v621
    %v716 = vadd.f32 %v523, %v626
    %v717 = vadd.f32 %v524, %v629
    %v718 = vadd.f32 %v525, %v634
    %v719 = vadd.f32 %v526, %v637
    %v720 = vadd.f32 %v527, %v642
    %v721 = vadd.f32 %v528, %v645
    %v722 = vadd.f32 %v529, %v650
    %v723 = vadd.f32 %v530, %v653
    %v724 = vadd.f32 %v531, %v658
    %v725 = vadd.f32 %v532, %v661
    %v726 = vadd.f32 %v533, %v666
    %v727 = vadd.f32 %v534, %v669
    %v728 = vadd.f32 %v535, %v674
    %v729 = vadd.f32 %v536, %v677
    %v730 = vadd.f32 %v537, %v682
    %v731 = vadd.f32 %v538, %v685
    %v732 = vadd.f32 %v539, %v690
    %v733 = vadd.f32 %v540, %v693
    %v734 = vadd.f32 %v541, %v698
    %v735 = vadd.f32 %v542, %v701
    %vm736 = vcmask 7168
    %737 = vst.msk [vmem:[#allocation3] sm:$0xff] %vm736, %v704
    %738 = vst.msk [vmem:[#allocation3 + $0x8] sm:$0xff] %vm736, %v705
    %739 = vst.msk [vmem:[#allocation3 + $0x10] sm:$0xff] %vm736, %v706
    %740 = vst.msk [vmem:[#allocation3 + $0x18] sm:$0xff] %vm736, %v707
    %741 = vst.msk [vmem:[#allocation3 + $0x20] sm:$0xff] %vm736, %v708
    %742 = vst.msk [vmem:[#allocation3 + $0x28] sm:$0xff] %vm736, %v709
    %743 = vst.msk [vmem:[#allocation3 + $0x30] sm:$0xff] %vm736, %v710
    %744 = vst.msk [vmem:[#allocation3 + $0x38] sm:$0xff] %vm736, %v711
    %745 = vst.msk [vmem:[#allocation3 + $0x40] sm:$0xff] %vm736, %v712
    %746 = vst.msk [vmem:[#allocation3 + $0x48] sm:$0xff] %vm736, %v713
    %747 = vst.msk [vmem:[#allocation3 + $0x50] sm:$0xff] %vm736, %v714
    %748 = vst.msk [vmem:[#allocation3 + $0x58] sm:$0xff] %vm736, %v715
    %749 = vst.msk [vmem:[#allocation3 + $0x60] sm:$0xff] %vm736, %v716
    %750 = vst.msk [vmem:[#allocation3 + $0x68] sm:$0xff] %vm736, %v717
    %751 = vst.msk [vmem:[#allocation3 + $0x70] sm:$0xff] %vm736, %v718
    %752 = vst.msk [vmem:[#allocation3 + $0x78] sm:$0xff] %vm736, %v719
    %753 = vst.msk [vmem:[#allocation3 + $0x80] sm:$0xff] %vm736, %v720
    %754 = vst.msk [vmem:[#allocation3 + $0x88] sm:$0xff] %vm736, %v721
    %755 = vst.msk [vmem:[#allocation3 + $0x90] sm:$0xff] %vm736, %v722
    %756 = vst.msk [vmem:[#allocation3 + $0x98] sm:$0xff] %vm736, %v723
    %757 = vst.msk [vmem:[#allocation3 + $0xa0] sm:$0xff] %vm736, %v724
    %758 = vst.msk [vmem:[#allocation3 + $0xa8] sm:$0xff] %vm736, %v725
    %759 = vst.msk [vmem:[#allocation3 + $0xb0] sm:$0xff] %vm736, %v726
    %760 = vst.msk [vmem:[#allocation3 + $0xb8] sm:$0xff] %vm736, %v727
    %761 = vst.msk [vmem:[#allocation3 + $0xc0] sm:$0xff] %vm736, %v728
    %762 = vst.msk [vmem:[#allocation3 + $0xc8] sm:$0xff] %vm736, %v729
    %763 = vst.msk [vmem:[#allocation3 + $0xd0] sm:$0xff] %vm736, %v730
    %764 = vst.msk [vmem:[#allocation3 + $0xd8] sm:$0xff] %vm736, %v731
    %765 = vst.msk [vmem:[#allocation3 + $0xe0] sm:$0xff] %vm736, %v732
    %766 = vst.msk [vmem:[#allocation3 + $0xe8] sm:$0xff] %vm736, %v733
    %767 = vst.msk [vmem:[#allocation3 + $0xf0] sm:$0xff] %vm736, %v734
    %768 = vst.msk [vmem:[#allocation3 + $0xf8] sm:$0xff] %vm736, %v735
    %s769 = sadd.s32 0, 1
    %s770 = scalar_lea.vmem [#allocation2], %s769
    %v771 = vld [vmem:[%s770] sm:$0x1]
    %v772 = vpack.c.bf16 %v771, %v771
    %v774 = vpack.i.b16 %v772, %v772
    %v776 = vlaneseq
    %v777 = vshrl.u32 %v776, 7
    %v778 = vsub.s32 0, %v777
    %v779 = vrot.slane %v774, %v778
    %vm780 = vcmp.le.bf16.partialorder %v779, %v175
    %vm781 = vcmp.le.bf16.partialorder %v779, %v176
    %vm782 = vcmp.le.bf16.partialorder %v779, %v177
    %vm783 = vcmp.le.bf16.partialorder %v779, %v178
    %vm784 = vcmp.le.bf16.partialorder %v779, %v179
    %vm785 = vcmp.le.bf16.partialorder %v779, %v180
    %vm786 = vcmp.le.bf16.partialorder %v779, %v181
    %vm787 = vcmp.le.bf16.partialorder %v779, %v182
    %vm788 = vcmp.le.bf16.partialorder %v779, %v183
    %vm789 = vcmp.le.bf16.partialorder %v779, %v184
    %vm790 = vcmp.le.bf16.partialorder %v779, %v185
    %vm791 = vcmp.le.bf16.partialorder %v779, %v186
    %vm792 = vcmp.le.bf16.partialorder %v779, %v187
    %vm793 = vcmp.le.bf16.partialorder %v779, %v188
    %vm794 = vcmp.le.bf16.partialorder %v779, %v189
    %vm795 = vcmp.le.bf16.partialorder %v779, %v190
    %v796 = vsel %vm780, 65537, 0
    %v797 = vsel %vm781, 65537, 0
    %v798 = vsel %vm782, 65537, 0
    %v799 = vsel %vm783, 65537, 0
    %v800 = vsel %vm784, 65537, 0
    %v801 = vsel %vm785, 65537, 0
    %v802 = vsel %vm786, 65537, 0
    %v803 = vsel %vm787, 65537, 0
    %v804 = vsel %vm788, 65537, 0
    %v805 = vsel %vm789, 65537, 0
    %v806 = vsel %vm790, 65537, 0
    %v807 = vsel %vm791, 65537, 0
    %v808 = vsel %vm792, 65537, 0
    %v809 = vsel %vm793, 65537, 0
    %v810 = vsel %vm794, 65537, 0
    %v811 = vsel %vm795, 65537, 0
    %v812 = vunpack.c.l.b16 %v796
    %v813 = vunpack.c.h.b16 %v796
    %v814 = vunpack.c.l.b16 %v797
    %v815 = vunpack.c.h.b16 %v797
    %v816 = vunpack.c.l.b16 %v798
    %v817 = vunpack.c.h.b16 %v798
    %v818 = vunpack.c.l.b16 %v799
    %v819 = vunpack.c.h.b16 %v799
    %v820 = vunpack.c.l.b16 %v800
    %v821 = vunpack.c.h.b16 %v800
    %v822 = vunpack.c.l.b16 %v801
    %v823 = vunpack.c.h.b16 %v801
    %v824 = vunpack.c.l.b16 %v802
    %v825 = vunpack.c.h.b16 %v802
    %v826 = vunpack.c.l.b16 %v803
    %v827 = vunpack.c.h.b16 %v803
    %v828 = vunpack.c.l.b16 %v804
    %v829 = vunpack.c.h.b16 %v804
    %v830 = vunpack.c.l.b16 %v805
    %v831 = vunpack.c.h.b16 %v805
    %v832 = vunpack.c.l.b16 %v806
    %v833 = vunpack.c.h.b16 %v806
    %v834 = vunpack.c.l.b16 %v807
    %v835 = vunpack.c.h.b16 %v807
    %v836 = vunpack.c.l.b16 %v808
    %v837 = vunpack.c.h.b16 %v808
    %v838 = vunpack.c.l.b16 %v809
    %v839 = vunpack.c.h.b16 %v809
    %v840 = vunpack.c.l.b16 %v810
    %v841 = vunpack.c.h.b16 %v810
    %v842 = vunpack.c.l.b16 %v811
    %v843 = vunpack.c.h.b16 %v811
    %v844 = vpack.c.b16 %v812, %v812
    %v845 = vpack.c.b16 %v813, %v813
    %v846 = vpack.c.b16 %v814, %v814
    %v847 = vpack.c.b16 %v815, %v815
    %v848 = vpack.c.b16 %v816, %v816
    %v849 = vpack.c.b16 %v817, %v817
    %v850 = vpack.c.b16 %v818, %v818
    %v851 = vpack.c.b16 %v819, %v819
    %v852 = vpack.c.b16 %v820, %v820
    %v853 = vpack.c.b16 %v821, %v821
    %v854 = vpack.c.b16 %v822, %v822
    %v855 = vpack.c.b16 %v823, %v823
    %v856 = vpack.c.b16 %v824, %v824
    %v857 = vpack.c.b16 %v825, %v825
    %v858 = vpack.c.b16 %v826, %v826
    %v859 = vpack.c.b16 %v827, %v827
    %v860 = vpack.c.b16 %v828, %v828
    %v861 = vpack.c.b16 %v829, %v829
    %v862 = vpack.c.b16 %v830, %v830
    %v863 = vpack.c.b16 %v831, %v831
    %v864 = vpack.c.b16 %v832, %v832
    %v865 = vpack.c.b16 %v833, %v833
    %v866 = vpack.c.b16 %v834, %v834
    %v867 = vpack.c.b16 %v835, %v835
    %v868 = vpack.c.b16 %v836, %v836
    %v869 = vpack.c.b16 %v837, %v837
    %v870 = vpack.c.b16 %v838, %v838
    %v871 = vpack.c.b16 %v839, %v839
    %v872 = vpack.c.b16 %v840, %v840
    %v873 = vpack.c.b16 %v841, %v841
    %v874 = vpack.c.b16 %v842, %v842
    %v875 = vpack.c.b16 %v843, %v843
    %vm876 = vcmp.ne.s16.totalorder %v844, 0
    %vm877 = vcmp.ne.s16.totalorder %v845, 0
    %vm878 = vcmp.ne.s16.totalorder %v846, 0
    %vm879 = vcmp.ne.s16.totalorder %v847, 0
    %vm880 = vcmp.ne.s16.totalorder %v848, 0
    %vm881 = vcmp.ne.s16.totalorder %v849, 0
    %vm882 = vcmp.ne.s16.totalorder %v850, 0
    %vm883 = vcmp.ne.s16.totalorder %v851, 0
    %vm884 = vcmp.ne.s16.totalorder %v852, 0
    %vm885 = vcmp.ne.s16.totalorder %v853, 0
    %vm886 = vcmp.ne.s16.totalorder %v854, 0
    %vm887 = vcmp.ne.s16.totalorder %v855, 0
    %vm888 = vcmp.ne.s16.totalorder %v856, 0
    %vm889 = vcmp.ne.s16.totalorder %v857, 0
    %vm890 = vcmp.ne.s16.totalorder %v858, 0
    %vm891 = vcmp.ne.s16.totalorder %v859, 0
    %vm892 = vcmp.ne.s16.totalorder %v860, 0
    %vm893 = vcmp.ne.s16.totalorder %v861, 0
    %vm894 = vcmp.ne.s16.totalorder %v862, 0
    %vm895 = vcmp.ne.s16.totalorder %v863, 0
    %vm896 = vcmp.ne.s16.totalorder %v864, 0
    %vm897 = vcmp.ne.s16.totalorder %v865, 0
    %vm898 = vcmp.ne.s16.totalorder %v866, 0
    %vm899 = vcmp.ne.s16.totalorder %v867, 0
    %vm900 = vcmp.ne.s16.totalorder %v868, 0
    %vm901 = vcmp.ne.s16.totalorder %v869, 0
    %vm902 = vcmp.ne.s16.totalorder %v870, 0
    %vm903 = vcmp.ne.s16.totalorder %v871, 0
    %vm904 = vcmp.ne.s16.totalorder %v872, 0
    %vm905 = vcmp.ne.s16.totalorder %v873, 0
    %vm906 = vcmp.ne.s16.totalorder %v874, 0
    %vm907 = vcmp.ne.s16.totalorder %v875, 0
    %v908 = vsel %vm876, 65537, 0
    %v909 = vsel %vm877, 65537, 0
    %v910 = vsel %vm878, 65537, 0
    %v911 = vsel %vm879, 65537, 0
    %v912 = vsel %vm880, 65537, 0
    %v913 = vsel %vm881, 65537, 0
    %v914 = vsel %vm882, 65537, 0
    %v915 = vsel %vm883, 65537, 0
    %v916 = vsel %vm884, 65537, 0
    %v917 = vsel %vm885, 65537, 0
    %v918 = vsel %vm886, 65537, 0
    %v919 = vsel %vm887, 65537, 0
    %v920 = vsel %vm888, 65537, 0
    %v921 = vsel %vm889, 65537, 0
    %v922 = vsel %vm890, 65537, 0
    %v923 = vsel %vm891, 65537, 0
    %v924 = vsel %vm892, 65537, 0
    %v925 = vsel %vm893, 65537, 0
    %v926 = vsel %vm894, 65537, 0
    %v927 = vsel %vm895, 65537, 0
    %v928 = vsel %vm896, 65537, 0
    %v929 = vsel %vm897, 65537, 0
    %v930 = vsel %vm898, 65537, 0
    %v931 = vsel %vm899, 65537, 0
    %v932 = vsel %vm900, 65537, 0
    %v933 = vsel %vm901, 65537, 0
    %v934 = vsel %vm902, 65537, 0
    %v935 = vsel %vm903, 65537, 0
    %v936 = vsel %vm904, 65537, 0
    %v937 = vsel %vm905, 65537, 0
    %v938 = vsel %vm906, 65537, 0
    %v939 = vsel %vm907, 65537, 0
    %v940 = vunpack.c.l.b16 %v908
    %v941 = vunpack.c.l.b16 %v909
    %v942 = vunpack.c.l.b16 %v910
    %v943 = vunpack.c.l.b16 %v911
    %v944 = vunpack.c.l.b16 %v912
    %v945 = vunpack.c.l.b16 %v913
    %v946 = vunpack.c.l.b16 %v914
    %v947 = vunpack.c.l.b16 %v915
    %v948 = vunpack.c.l.b16 %v916
    %v949 = vunpack.c.l.b16 %v917
    %v950 = vunpack.c.l.b16 %v918
    %v951 = vunpack.c.l.b16 %v919
    %v952 = vunpack.c.l.b16 %v920
    %v953 = vunpack.c.l.b16 %v921
    %v954 = vunpack.c.l.b16 %v922
    %v955 = vunpack.c.l.b16 %v923
    %v956 = vunpack.c.l.b16 %v924
    %v957 = vunpack.c.l.b16 %v925
    %v958 = vunpack.c.l.b16 %v926
    %v959 = vunpack.c.l.b16 %v927
    %v960 = vunpack.c.l.b16 %v928
    %v961 = vunpack.c.l.b16 %v929
    %v962 = vunpack.c.l.b16 %v930
    %v963 = vunpack.c.l.b16 %v931
    %v964 = vunpack.c.l.b16 %v932
    %v965 = vunpack.c.l.b16 %v933
    %v966 = vunpack.c.l.b16 %v934
    %v967 = vunpack.c.l.b16 %v935
    %v968 = vunpack.c.l.b16 %v936
    %v969 = vunpack.c.l.b16 %v937
    %v970 = vunpack.c.l.b16 %v938
    %v971 = vunpack.c.l.b16 %v939
    %vm972 = vcmp.ne.s32.totalorder %v940, 0
    %vm973 = vcmp.ne.s32.totalorder %v941, 0
    %vm974 = vcmp.ne.s32.totalorder %v942, 0
    %vm975 = vcmp.ne.s32.totalorder %v943, 0
    %vm976 = vcmp.ne.s32.totalorder %v944, 0
    %vm977 = vcmp.ne.s32.totalorder %v945, 0
    %vm978 = vcmp.ne.s32.totalorder %v946, 0
    %vm979 = vcmp.ne.s32.totalorder %v947, 0
    %vm980 = vcmp.ne.s32.totalorder %v948, 0
    %vm981 = vcmp.ne.s32.totalorder %v949, 0
    %vm982 = vcmp.ne.s32.totalorder %v950, 0
    %vm983 = vcmp.ne.s32.totalorder %v951, 0
    %vm984 = vcmp.ne.s32.totalorder %v952, 0
    %vm985 = vcmp.ne.s32.totalorder %v953, 0
    %vm986 = vcmp.ne.s32.totalorder %v954, 0
    %vm987 = vcmp.ne.s32.totalorder %v955, 0
    %vm988 = vcmp.ne.s32.totalorder %v956, 0
    %vm989 = vcmp.ne.s32.totalorder %v957, 0
    %vm990 = vcmp.ne.s32.totalorder %v958, 0
    %vm991 = vcmp.ne.s32.totalorder %v959, 0
    %vm992 = vcmp.ne.s32.totalorder %v960, 0
    %vm993 = vcmp.ne.s32.totalorder %v961, 0
    %vm994 = vcmp.ne.s32.totalorder %v962, 0
    %vm995 = vcmp.ne.s32.totalorder %v963, 0
    %vm996 = vcmp.ne.s32.totalorder %v964, 0
    %vm997 = vcmp.ne.s32.totalorder %v965, 0
    %vm998 = vcmp.ne.s32.totalorder %v966, 0
    %vm999 = vcmp.ne.s32.totalorder %v967, 0
    %vm1000 = vcmp.ne.s32.totalorder %v968, 0
    %vm1001 = vcmp.ne.s32.totalorder %v969, 0
    %vm1002 = vcmp.ne.s32.totalorder %v970, 0
    %vm1003 = vcmp.ne.s32.totalorder %v971, 0
    %v1004 = vsel %vm972, 1, 0
    %v1005 = vsel %vm973, 1, 0
    %v1006 = vsel %vm974, 1, 0
    %v1007 = vsel %vm975, 1, 0
    %v1008 = vsel %vm976, 1, 0
    %v1009 = vsel %vm977, 1, 0
    %v1010 = vsel %vm978, 1, 0
    %v1011 = vsel %vm979, 1, 0
    %v1012 = vsel %vm980, 1, 0
    %v1013 = vsel %vm981, 1, 0
    %v1014 = vsel %vm982, 1, 0
    %v1015 = vsel %vm983, 1, 0
    %v1016 = vsel %vm984, 1, 0
    %v1017 = vsel %vm985, 1, 0
    %v1018 = vsel %vm986, 1, 0
    %v1019 = vsel %vm987, 1, 0
    %v1020 = vsel %vm988, 1, 0
    %v1021 = vsel %vm989, 1, 0
    %v1022 = vsel %vm990, 1, 0
    %v1023 = vsel %vm991, 1, 0
    %v1024 = vsel %vm992, 1, 0
    %v1025 = vsel %vm993, 1, 0
    %v1026 = vsel %vm994, 1, 0
    %v1027 = vsel %vm995, 1, 0
    %v1028 = vsel %vm996, 1, 0
    %v1029 = vsel %vm997, 1, 0
    %v1030 = vsel %vm998, 1, 0
    %v1031 = vsel %vm999, 1, 0
    %v1032 = vsel %vm1000, 1, 0
    %v1033 = vsel %vm1001, 1, 0
    %v1034 = vsel %vm1002, 1, 0
    %v1035 = vsel %vm1003, 1, 0
    %v1036 = vcvt.s32.f32 %v1004
    %v1037 = vcvt.s32.f32 %v1005
    %v1038 = vcvt.s32.f32 %v1006
    %v1039 = vcvt.s32.f32 %v1007
    %v1040 = vcvt.s32.f32 %v1008
    %v1041 = vcvt.s32.f32 %v1009
    %v1042 = vcvt.s32.f32 %v1010
    %v1043 = vcvt.s32.f32 %v1011
    %v1044 = vcvt.s32.f32 %v1012
    %v1045 = vcvt.s32.f32 %v1013
    %v1046 = vcvt.s32.f32 %v1014
    %v1047 = vcvt.s32.f32 %v1015
    %v1048 = vcvt.s32.f32 %v1016
    %v1049 = vcvt.s32.f32 %v1017
    %v1050 = vcvt.s32.f32 %v1018
    %v1051 = vcvt.s32.f32 %v1019
    %v1052 = vcvt.s32.f32 %v1020
    %v1053 = vcvt.s32.f32 %v1021
    %v1054 = vcvt.s32.f32 %v1022
    %v1055 = vcvt.s32.f32 %v1023
    %v1056 = vcvt.s32.f32 %v1024
    %v1057 = vcvt.s32.f32 %v1025
    %v1058 = vcvt.s32.f32 %v1026
    %v1059 = vcvt.s32.f32 %v1027
    %v1060 = vcvt.s32.f32 %v1028
    %v1061 = vcvt.s32.f32 %v1029
    %v1062 = vcvt.s32.f32 %v1030
    %v1063 = vcvt.s32.f32 %v1031
    %v1064 = vcvt.s32.f32 %v1032
    %v1065 = vcvt.s32.f32 %v1033
    %v1066 = vcvt.s32.f32 %v1034
    %v1067 = vcvt.s32.f32 %v1035
    %v1068 = vpack.c.bf16 %v1037, %v1036
    %v1069 = vpack.c.bf16 %v1039, %v1038
    %v1070 = vpack.c.bf16 %v1041, %v1040
    %v1071 = vpack.c.bf16 %v1043, %v1042
    %v1072 = vpack.c.bf16 %v1045, %v1044
    %v1073 = vpack.c.bf16 %v1047, %v1046
    %v1074 = vpack.c.bf16 %v1049, %v1048
    %v1075 = vpack.c.bf16 %v1051, %v1050
    %v1076 = vpack.c.bf16 %v1053, %v1052
    %v1077 = vpack.c.bf16 %v1055, %v1054
    %v1078 = vpack.c.bf16 %v1057, %v1056
    %v1079 = vpack.c.bf16 %v1059, %v1058
    %v1080 = vpack.c.bf16 %v1061, %v1060
    %v1081 = vpack.c.bf16 %v1063, %v1062
    %v1082 = vpack.c.bf16 %v1065, %v1064
    %v1083 = vpack.c.bf16 %v1067, %v1066
    %v1084 = vld [vmem:[#allocation3] sm:$0xff]
    %v1085 = vld [vmem:[#allocation3 + $0x8] sm:$0xff]
    %v1086 = vld [vmem:[#allocation3 + $0x10] sm:$0xff]
    %v1087 = vld [vmem:[#allocation3 + $0x18] sm:$0xff]
    %v1088 = vld [vmem:[#allocation3 + $0x20] sm:$0xff]
    %v1089 = vld [vmem:[#allocation3 + $0x28] sm:$0xff]
    %v1090 = vld [vmem:[#allocation3 + $0x30] sm:$0xff]
    %v1091 = vld [vmem:[#allocation3 + $0x38] sm:$0xff]
    %v1092 = vld [vmem:[#allocation3 + $0x40] sm:$0xff]
    %v1093 = vld [vmem:[#allocation3 + $0x48] sm:$0xff]
    %v1094 = vld [vmem:[#allocation3 + $0x50] sm:$0xff]
    %v1095 = vld [vmem:[#allocation3 + $0x58] sm:$0xff]
    %v1096 = vld [vmem:[#allocation3 + $0x60] sm:$0xff]
    %v1097 = vld [vmem:[#allocation3 + $0x68] sm:$0xff]
    %v1098 = vld [vmem:[#allocation3 + $0x70] sm:$0xff]
    %v1099 = vld [vmem:[#allocation3 + $0x78] sm:$0xff]
    %v1100 = vld [vmem:[#allocation3 + $0x80] sm:$0xff]
    %v1101 = vld [vmem:[#allocation3 + $0x88] sm:$0xff]
    %v1102 = vld [vmem:[#allocation3 + $0x90] sm:$0xff]
    %v1103 = vld [vmem:[#allocation3 + $0x98] sm:$0xff]
    %v1104 = vld [vmem:[#allocation3 + $0xa0] sm:$0xff]
    %v1105 = vld [vmem:[#allocation3 + $0xa8] sm:$0xff]
    %v1106 = vld [vmem:[#allocation3 + $0xb0] sm:$0xff]
    %v1107 = vld [vmem:[#allocation3 + $0xb8] sm:$0xff]
    %v1108 = vld [vmem:[#allocation3 + $0xc0] sm:$0xff]
    %v1109 = vld [vmem:[#allocation3 + $0xc8] sm:$0xff]
    %v1110 = vld [vmem:[#allocation3 + $0xd0] sm:$0xff]
    %v1111 = vld [vmem:[#allocation3 + $0xd8] sm:$0xff]
    %v1112 = vld [vmem:[#allocation3 + $0xe0] sm:$0xff]
    %v1113 = vld [vmem:[#allocation3 + $0xe8] sm:$0xff]
    %v1114 = vld [vmem:[#allocation3 + $0xf0] sm:$0xff]
    %v1115 = vld [vmem:[#allocation3 + $0xf8] sm:$0xff]
    %1116 = vmatprep.subr.bf16.mxu0 0
    %1117 = vmatpush1.bf16.msra.mxu0 1065369472
    %1118 = vmatprep.subr.bf16.mxu0 0
    %1119 = vmatpush1.bf16.msra.mxu0 1065369472
    %1120 = vmatprep.subr.bf16.mxu0 0
    %1121 = vmatpush1.bf16.msra.mxu0 1065369472
    %1122 = vmatprep.subr.bf16.mxu0 0
    %1123 = vmatpush1.bf16.msra.mxu0 1065369472
    %1124 = vmatprep.subr.bf16.mxu0 0
    %1125 = vmatpush1.bf16.msra.mxu0 1065369472
    %1126 = vmatprep.subr.bf16.mxu0 0
    %1127 = vmatpush1.bf16.msra.mxu0 1065369472
    %1128 = vmatprep.subr.bf16.mxu0 0
    %1129 = vmatpush1.bf16.msra.mxu0 1065369472
    %1130 = vmatprep.subr.bf16.mxu0 0
    %1131 = vmatpush1.bf16.msra.mxu0 1065369472
    %1132 = vmatprep.subr.bf16.mxu0 0
    %1133 = vmatpush2.bf16.msra.mxu0 0
    %1134 = vmatprep.subr.bf16.mxu0 0
    %1135 = vmatpush2.bf16.msra.mxu0 0
    %1136 = vmatprep.subr.bf16.mxu0 0
    %1137 = vmatpush2.bf16.msra.mxu0 0
    %1138 = vmatprep.subr.bf16.mxu0 0
    %1139 = vmatpush2.bf16.msra.mxu0 0
    %1140 = vmatprep.subr.bf16.mxu0 0
    %1141 = vmatpush2.bf16.msra.mxu0 0
    %1142 = vmatprep.subr.bf16.mxu0 0
    %1143 = vmatpush2.bf16.msra.mxu0 0
    %1144 = vmatprep.subr.bf16.mxu0 0
    %1145 = vmatpush2.bf16.msra.mxu0 0
    %1146 = vmatprep.subr.bf16.mxu0 0
    %1147 = vmatpush2.bf16.msra.mxu0 0
    %1148 = vmatprep.mubr.bf16.mxu0 0
    %1149 = vmatmul.mubr.bf16.gmra.mxu0 %v1068
    %v1150 = vpop.f32.mrf.mxu0
    %v1151 = vadd.f32 0.0, %v1150
    %v1152 = vpop.f32.mrf.mxu0
    %v1153 = vpop.f32.mrf.mxu0
    %v1154 = vadd.f32 0.0, %v1153
    %v1155 = vpop.f32.mrf.mxu0
    %1156 = vmatprep.mubr.bf16.mxu0 0
    %1157 = vmatmul.mubr.bf16.gmra.mxu0 %v1069
    %v1158 = vpop.f32.mrf.mxu0
    %v1159 = vadd.f32 0.0, %v1158
    %v1160 = vpop.f32.mrf.mxu0
    %v1161 = vpop.f32.mrf.mxu0
    %v1162 = vadd.f32 0.0, %v1161
    %v1163 = vpop.f32.mrf.mxu0
    %1164 = vmatprep.mubr.bf16.mxu0 0
    %1165 = vmatmul.mubr.bf16.gmra.mxu0 %v1070
    %v1166 = vpop.f32.mrf.mxu0
    %v1167 = vadd.f32 0.0, %v1166
    %v1168 = vpop.f32.mrf.mxu0
    %v1169 = vpop.f32.mrf.mxu0
    %v1170 = vadd.f32 0.0, %v1169
    %v1171 = vpop.f32.mrf.mxu0
    %1172 = vmatprep.mubr.bf16.mxu0 0
    %1173 = vmatmul.mubr.bf16.gmra.mxu0 %v1071
    %v1174 = vpop.f32.mrf.mxu0
    %v1175 = vadd.f32 0.0, %v1174
    %v1176 = vpop.f32.mrf.mxu0
    %v1177 = vpop.f32.mrf.mxu0
    %v1178 = vadd.f32 0.0, %v1177
    %v1179 = vpop.f32.mrf.mxu0
    %1180 = vmatprep.mubr.bf16.mxu0 0
    %1181 = vmatmul.mubr.bf16.gmra.mxu0 %v1072
    %v1182 = vpop.f32.mrf.mxu0
    %v1183 = vadd.f32 0.0, %v1182
    %v1184 = vpop.f32.mrf.mxu0
    %v1185 = vpop.f32.mrf.mxu0
    %v1186 = vadd.f32 0.0, %v1185
    %v1187 = vpop.f32.mrf.mxu0
    %1188 = vmatprep.mubr.bf16.mxu0 0
    %1189 = vmatmul.mubr.bf16.gmra.mxu0 %v1073
    %v1190 = vpop.f32.mrf.mxu0
    %v1191 = vadd.f32 0.0, %v1190
    %v1192 = vpop.f32.mrf.mxu0
    %v1193 = vpop.f32.mrf.mxu0
    %v1194 = vadd.f32 0.0, %v1193
    %v1195 = vpop.f32.mrf.mxu0
    %1196 = vmatprep.mubr.bf16.mxu0 0
    %1197 = vmatmul.mubr.bf16.gmra.mxu0 %v1074
    %v1198 = vpop.f32.mrf.mxu0
    %v1199 = vadd.f32 0.0, %v1198
    %v1200 = vpop.f32.mrf.mxu0
    %v1201 = vpop.f32.mrf.mxu0
    %v1202 = vadd.f32 0.0, %v1201
    %v1203 = vpop.f32.mrf.mxu0
    %1204 = vmatprep.mubr.bf16.mxu0 0
    %1205 = vmatmul.mubr.bf16.gmra.mxu0 %v1075
    %v1206 = vpop.f32.mrf.mxu0
    %v1207 = vadd.f32 0.0, %v1206
    %v1208 = vpop.f32.mrf.mxu0
    %v1209 = vpop.f32.mrf.mxu0
    %v1210 = vadd.f32 0.0, %v1209
    %v1211 = vpop.f32.mrf.mxu0
    %1212 = vmatprep.mubr.bf16.mxu0 0
    %1213 = vmatmul.mubr.bf16.gmra.mxu0 %v1076
    %v1214 = vpop.f32.mrf.mxu0
    %v1215 = vadd.f32 0.0, %v1214
    %v1216 = vpop.f32.mrf.mxu0
    %v1217 = vpop.f32.mrf.mxu0
    %v1218 = vadd.f32 0.0, %v1217
    %v1219 = vpop.f32.mrf.mxu0
    %1220 = vmatprep.mubr.bf16.mxu0 0
    %1221 = vmatmul.mubr.bf16.gmra.mxu0 %v1077
    %v1222 = vpop.f32.mrf.mxu0
    %v1223 = vadd.f32 0.0, %v1222
    %v1224 = vpop.f32.mrf.mxu0
    %v1225 = vpop.f32.mrf.mxu0
    %v1226 = vadd.f32 0.0, %v1225
    %v1227 = vpop.f32.mrf.mxu0
    %1228 = vmatprep.mubr.bf16.mxu0 0
    %1229 = vmatmul.mubr.bf16.gmra.mxu0 %v1078
    %v1230 = vpop.f32.mrf.mxu0
    %v1231 = vadd.f32 0.0, %v1230
    %v1232 = vpop.f32.mrf.mxu0
    %v1233 = vpop.f32.mrf.mxu0
    %v1234 = vadd.f32 0.0, %v1233
    %v1235 = vpop.f32.mrf.mxu0
    %1236 = vmatprep.mubr.bf16.mxu0 0
    %1237 = vmatmul.mubr.bf16.gmra.mxu0 %v1079
    %v1238 = vpop.f32.mrf.mxu0
    %v1239 = vadd.f32 0.0, %v1238
    %v1240 = vpop.f32.mrf.mxu0
    %v1241 = vpop.f32.mrf.mxu0
    %v1242 = vadd.f32 0.0, %v1241
    %v1243 = vpop.f32.mrf.mxu0
    %1244 = vmatprep.mubr.bf16.mxu0 0
    %1245 = vmatmul.mubr.bf16.gmra.mxu0 %v1080
    %v1246 = vpop.f32.mrf.mxu0
    %v1247 = vadd.f32 0.0, %v1246
    %v1248 = vpop.f32.mrf.mxu0
    %v1249 = vpop.f32.mrf.mxu0
    %v1250 = vadd.f32 0.0, %v1249
    %v1251 = vpop.f32.mrf.mxu0
    %1252 = vmatprep.mubr.bf16.mxu0 0
    %1253 = vmatmul.mubr.bf16.gmra.mxu0 %v1081
    %v1254 = vpop.f32.mrf.mxu0
    %v1255 = vadd.f32 0.0, %v1254
    %v1256 = vpop.f32.mrf.mxu0
    %v1257 = vpop.f32.mrf.mxu0
    %v1258 = vadd.f32 0.0, %v1257
    %v1259 = vpop.f32.mrf.mxu0
    %1260 = vmatprep.mubr.bf16.mxu0 0
    %1261 = vmatmul.mubr.bf16.gmra.mxu0 %v1082
    %v1262 = vpop.f32.mrf.mxu0
    %v1263 = vadd.f32 0.0, %v1262
    %v1264 = vpop.f32.mrf.mxu0
    %v1265 = vpop.f32.mrf.mxu0
    %v1266 = vadd.f32 0.0, %v1265
    %v1267 = vpop.f32.mrf.mxu0
    %1268 = vmatprep.mubr.bf16.mxu0 0
    %1269 = vmatmul.mubr.bf16.gmra.mxu0 %v1083
    %v1270 = vpop.f32.mrf.mxu0
    %v1271 = vadd.f32 0.0, %v1270
    %v1272 = vpop.f32.mrf.mxu0
    %v1273 = vpop.f32.mrf.mxu0
    %v1274 = vadd.f32 0.0, %v1273
    %v1275 = vpop.f32.mrf.mxu0
    %1276 = vdwg.mxu0
    %v1277 = vadd.f32 %v1084, %v1151
    %v1278 = vadd.f32 %v1085, %v1154
    %v1279 = vadd.f32 %v1086, %v1159
    %v1280 = vadd.f32 %v1087, %v1162
    %v1281 = vadd.f32 %v1088, %v1167
    %v1282 = vadd.f32 %v1089, %v1170
    %v1283 = vadd.f32 %v1090, %v1175
    %v1284 = vadd.f32 %v1091, %v1178
    %v1285 = vadd.f32 %v1092, %v1183
    %v1286 = vadd.f32 %v1093, %v1186
    %v1287 = vadd.f32 %v1094, %v1191
    %v1288 = vadd.f32 %v1095, %v1194
    %v1289 = vadd.f32 %v1096, %v1199
    %v1290 = vadd.f32 %v1097, %v1202
    %v1291 = vadd.f32 %v1098, %v1207
    %v1292 = vadd.f32 %v1099, %v1210
    %v1293 = vadd.f32 %v1100, %v1215
    %v1294 = vadd.f32 %v1101, %v1218
    %v1295 = vadd.f32 %v1102, %v1223
    %v1296 = vadd.f32 %v1103, %v1226
    %v1297 = vadd.f32 %v1104, %v1231
    %v1298 = vadd.f32 %v1105, %v1234
    %v1299 = vadd.f32 %v1106, %v1239
    %v1300 = vadd.f32 %v1107, %v1242
    %v1301 = vadd.f32 %v1108, %v1247
    %v1302 = vadd.f32 %v1109, %v1250
    %v1303 = vadd.f32 %v1110, %v1255
    %v1304 = vadd.f32 %v1111, %v1258
    %v1305 = vadd.f32 %v1112, %v1263
    %v1306 = vadd.f32 %v1113, %v1266
    %v1307 = vadd.f32 %v1114, %v1271
    %v1308 = vadd.f32 %v1115, %v1274
    %1309 = vst.msk [vmem:[#allocation3] sm:$0xff] %vm736, %v1277
    %1310 = vst.msk [vmem:[#allocation3 + $0x8] sm:$0xff] %vm736, %v1278
    %1311 = vst.msk [vmem:[#allocation3 + $0x10] sm:$0xff] %vm736, %v1279
    %1312 = vst.msk [vmem:[#allocation3 + $0x18] sm:$0xff] %vm736, %v1280
    %1313 = vst.msk [vmem:[#allocation3 + $0x20] sm:$0xff] %vm736, %v1281
    %1314 = vst.msk [vmem:[#allocation3 + $0x28] sm:$0xff] %vm736, %v1282
    %1315 = vst.msk [vmem:[#allocation3 + $0x30] sm:$0xff] %vm736, %v1283
    %1316 = vst.msk [vmem:[#allocation3 + $0x38] sm:$0xff] %vm736, %v1284
    %1317 = vst.msk [vmem:[#allocation3 + $0x40] sm:$0xff] %vm736, %v1285
    %1318 = vst.msk [vmem:[#allocation3 + $0x48] sm:$0xff] %vm736, %v1286
    %1319 = vst.msk [vmem:[#allocation3 + $0x50] sm:$0xff] %vm736, %v1287
    %1320 = vst.msk [vmem:[#allocation3 + $0x58] sm:$0xff] %vm736, %v1288
    %1321 = vst.msk [vmem:[#allocation3 + $0x60] sm:$0xff] %vm736, %v1289
    %1322 = vst.msk [vmem:[#allocation3 + $0x68] sm:$0xff] %vm736, %v1290
    %1323 = vst.msk [vmem:[#allocation3 + $0x70] sm:$0xff] %vm736, %v1291
    %1324 = vst.msk [vmem:[#allocation3 + $0x78] sm:$0xff] %vm736, %v1292
    %1325 = vst.msk [vmem:[#allocation3 + $0x80] sm:$0xff] %vm736, %v1293
    %1326 = vst.msk [vmem:[#allocation3 + $0x88] sm:$0xff] %vm736, %v1294
    %1327 = vst.msk [vmem:[#allocation3 + $0x90] sm:$0xff] %vm736, %v1295
    %1328 = vst.msk [vmem:[#allocation3 + $0x98] sm:$0xff] %vm736, %v1296
    %1329 = vst.msk [vmem:[#allocation3 + $0xa0] sm:$0xff] %vm736, %v1297
    %1330 = vst.msk [vmem:[#allocation3 + $0xa8] sm:$0xff] %vm736, %v1298
    %1331 = vst.msk [vmem:[#allocation3 + $0xb0] sm:$0xff] %vm736, %v1299
    %1332 = vst.msk [vmem:[#allocation3 + $0xb8] sm:$0xff] %vm736, %v1300
    %1333 = vst.msk [vmem:[#allocation3 + $0xc0] sm:$0xff] %vm736, %v1301
    %1334 = vst.msk [vmem:[#allocation3 + $0xc8] sm:$0xff] %vm736, %v1302
    %1335 = vst.msk [vmem:[#allocation3 + $0xd0] sm:$0xff] %vm736, %v1303
    %1336 = vst.msk [vmem:[#allocation3 + $0xd8] sm:$0xff] %vm736, %v1304
    %1337 = vst.msk [vmem:[#allocation3 + $0xe0] sm:$0xff] %vm736, %v1305
    %1338 = vst.msk [vmem:[#allocation3 + $0xe8] sm:$0xff] %vm736, %v1306
    %1339 = vst.msk [vmem:[#allocation3 + $0xf0] sm:$0xff] %vm736, %v1307
    %1340 = vst.msk [vmem:[#allocation3 + $0xf8] sm:$0xff] %vm736, %v1308
    %s1341 = sadd.s32 0, 2
    %s1342 = scalar_lea.vmem [#allocation2], %s1341
    %v1343 = vld [vmem:[%s1342] sm:$0x1]
    %v1344 = vpack.c.bf16 %v1343, %v1343
    %v1346 = vpack.i.b16 %v1344, %v1344
    %v1348 = vlaneseq
    %v1349 = vshrl.u32 %v1348, 7
    %v1350 = vsub.s32 0, %v1349
    %v1351 = vrot.slane %v1346, %v1350
    %vm1352 = vcmp.le.bf16.partialorder %v1351, %v175
    %vm1353 = vcmp.le.bf16.partialorder %v1351, %v176
    %vm1354 = vcmp.le.bf16.partialorder %v1351, %v177
    %vm1355 = vcmp.le.bf16.partialorder %v1351, %v178
    %vm1356 = vcmp.le.bf16.partialorder %v1351, %v179
    %vm1357 = vcmp.le.bf16.partialorder %v1351, %v180
    %vm1358 = vcmp.le.bf16.partialorder %v1351, %v181
    %vm1359 = vcmp.le.bf16.partialorder %v1351, %v182
    %vm1360 = vcmp.le.bf16.partialorder %v1351, %v183
    %vm1361 = vcmp.le.bf16.partialorder %v1351, %v184
    %vm1362 = vcmp.le.bf16.partialorder %v1351, %v185
    %vm1363 = vcmp.le.bf16.partialorder %v1351, %v186
    %vm1364 = vcmp.le.bf16.partialorder %v1351, %v187
    %vm1365 = vcmp.le.bf16.partialorder %v1351, %v188
    %vm1366 = vcmp.le.bf16.partialorder %v1351, %v189
    %vm1367 = vcmp.le.bf16.partialorder %v1351, %v190
    %v1368 = vsel %vm1352, 65537, 0
    %v1369 = vsel %vm1353, 65537, 0
    %v1370 = vsel %vm1354, 65537, 0
    %v1371 = vsel %vm1355, 65537, 0
    %v1372 = vsel %vm1356, 65537, 0
    %v1373 = vsel %vm1357, 65537, 0
    %v1374 = vsel %vm1358, 65537, 0
    %v1375 = vsel %vm1359, 65537, 0
    %v1376 = vsel %vm1360, 65537, 0
    %v1377 = vsel %vm1361, 65537, 0
    %v1378 = vsel %vm1362, 65537, 0
    %v1379 = vsel %vm1363, 65537, 0
    %v1380 = vsel %vm1364, 65537, 0
    %v1381 = vsel %vm1365, 65537, 0
    %v1382 = vsel %vm1366, 65537, 0
    %v1383 = vsel %vm1367, 65537, 0
    %v1384 = vunpack.c.l.b16 %v1368
    %v1385 = vunpack.c.h.b16 %v1368
    %v1386 = vunpack.c.l.b16 %v1369
    %v1387 = vunpack.c.h.b16 %v1369
    %v1388 = vunpack.c.l.b16 %v1370
    %v1389 = vunpack.c.h.b16 %v1370
    %v1390 = vunpack.c.l.b16 %v1371
    %v1391 = vunpack.c.h.b16 %v1371
    %v1392 = vunpack.c.l.b16 %v1372
    %v1393 = vunpack.c.h.b16 %v1372
    %v1394 = vunpack.c.l.b16 %v1373
    %v1395 = vunpack.c.h.b16 %v1373
    %v1396 = vunpack.c.l.b16 %v1374
    %v1397 = vunpack.c.h.b16 %v1374
    %v1398 = vunpack.c.l.b16 %v1375
    %v1399 = vunpack.c.h.b16 %v1375
    %v1400 = vunpack.c.l.b16 %v1376
    %v1401 = vunpack.c.h.b16 %v1376
    %v1402 = vunpack.c.l.b16 %v1377
    %v1403 = vunpack.c.h.b16 %v1377
    %v1404 = vunpack.c.l.b16 %v1378
    %v1405 = vunpack.c.h.b16 %v1378
    %v1406 = vunpack.c.l.b16 %v1379
    %v1407 = vunpack.c.h.b16 %v1379
    %v1408 = vunpack.c.l.b16 %v1380
    %v1409 = vunpack.c.h.b16 %v1380
    %v1410 = vunpack.c.l.b16 %v1381
    %v1411 = vunpack.c.h.b16 %v1381
    %v1412 = vunpack.c.l.b16 %v1382
    %v1413 = vunpack.c.h.b16 %v1382
    %v1414 = vunpack.c.l.b16 %v1383
    %v1415 = vunpack.c.h.b16 %v1383
    %v1416 = vpack.c.b16 %v1384, %v1384
    %v1417 = vpack.c.b16 %v1385, %v1385
    %v1418 = vpack.c.b16 %v1386, %v1386
    %v1419 = vpack.c.b16 %v1387, %v1387
    %v1420 = vpack.c.b16 %v1388, %v1388
    %v1421 = vpack.c.b16 %v1389, %v1389
    %v1422 = vpack.c.b16 %v1390, %v1390
    %v1423 = vpack.c.b16 %v1391, %v1391
    %v1424 = vpack.c.b16 %v1392, %v1392
    %v1425 = vpack.c.b16 %v1393, %v1393
    %v1426 = vpack.c.b16 %v1394, %v1394
    %v1427 = vpack.c.b16 %v1395, %v1395
    %v1428 = vpack.c.b16 %v1396, %v1396
    %v1429 = vpack.c.b16 %v1397, %v1397
    %v1430 = vpack.c.b16 %v1398, %v1398
    %v1431 = vpack.c.b16 %v1399, %v1399
    %v1432 = vpack.c.b16 %v1400, %v1400
    %v1433 = vpack.c.b16 %v1401, %v1401
    %v1434 = vpack.c.b16 %v1402, %v1402
    %v1435 = vpack.c.b16 %v1403, %v1403
    %v1436 = vpack.c.b16 %v1404, %v1404
    %v1437 = vpack.c.b16 %v1405, %v1405
    %v1438 = vpack.c.b16 %v1406, %v1406
    %v1439 = vpack.c.b16 %v1407, %v1407
    %v1440 = vpack.c.b16 %v1408, %v1408
    %v1441 = vpack.c.b16 %v1409, %v1409
    %v1442 = vpack.c.b16 %v1410, %v1410
    %v1443 = vpack.c.b16 %v1411, %v1411
    %v1444 = vpack.c.b16 %v1412, %v1412
    %v1445 = vpack.c.b16 %v1413, %v1413
    %v1446 = vpack.c.b16 %v1414, %v1414
    %v1447 = vpack.c.b16 %v1415, %v1415
    %vm1448 = vcmp.ne.s16.totalorder %v1416, 0
    %vm1449 = vcmp.ne.s16.totalorder %v1417, 0
    %vm1450 = vcmp.ne.s16.totalorder %v1418, 0
    %vm1451 = vcmp.ne.s16.totalorder %v1419, 0
    %vm1452 = vcmp.ne.s16.totalorder %v1420, 0
    %vm1453 = vcmp.ne.s16.totalorder %v1421, 0
    %vm1454 = vcmp.ne.s16.totalorder %v1422, 0
    %vm1455 = vcmp.ne.s16.totalorder %v1423, 0
    %vm1456 = vcmp.ne.s16.totalorder %v1424, 0
    %vm1457 = vcmp.ne.s16.totalorder %v1425, 0
    %vm1458 = vcmp.ne.s16.totalorder %v1426, 0
    %vm1459 = vcmp.ne.s16.totalorder %v1427, 0
    %vm1460 = vcmp.ne.s16.totalorder %v1428, 0
    %vm1461 = vcmp.ne.s16.totalorder %v1429, 0
    %vm1462 = vcmp.ne.s16.totalorder %v1430, 0
    %vm1463 = vcmp.ne.s16.totalorder %v1431, 0
    %vm1464 = vcmp.ne.s16.totalorder %v1432, 0
    %vm1465 = vcmp.ne.s16.totalorder %v1433, 0
    %vm1466 = vcmp.ne.s16.totalorder %v1434, 0
    %vm1467 = vcmp.ne.s16.totalorder %v1435, 0
    %vm1468 = vcmp.ne.s16.totalorder %v1436, 0
    %vm1469 = vcmp.ne.s16.totalorder %v1437, 0
    %vm1470 = vcmp.ne.s16.totalorder %v1438, 0
    %vm1471 = vcmp.ne.s16.totalorder %v1439, 0
    %vm1472 = vcmp.ne.s16.totalorder %v1440, 0
    %vm1473 = vcmp.ne.s16.totalorder %v1441, 0
    %vm1474 = vcmp.ne.s16.totalorder %v1442, 0
    %vm1475 = vcmp.ne.s16.totalorder %v1443, 0
    %vm1476 = vcmp.ne.s16.totalorder %v1444, 0
    %vm1477 = vcmp.ne.s16.totalorder %v1445, 0
    %vm1478 = vcmp.ne.s16.totalorder %v1446, 0
    %vm1479 = vcmp.ne.s16.totalorder %v1447, 0
    %v1480 = vsel %vm1448, 65537, 0
    %v1481 = vsel %vm1449, 65537, 0
    %v1482 = vsel %vm1450, 65537, 0
    %v1483 = vsel %vm1451, 65537, 0
    %v1484 = vsel %vm1452, 65537, 0
    %v1485 = vsel %vm1453, 65537, 0
    %v1486 = vsel %vm1454, 65537, 0
    %v1487 = vsel %vm1455, 65537, 0
    %v1488 = vsel %vm1456, 65537, 0
    %v1489 = vsel %vm1457, 65537, 0
    %v1490 = vsel %vm1458, 65537, 0
    %v1491 = vsel %vm1459, 65537, 0
    %v1492 = vsel %vm1460, 65537, 0
    %v1493 = vsel %vm1461, 65537, 0
    %v1494 = vsel %vm1462, 65537, 0
    %v1495 = vsel %vm1463, 65537, 0
    %v1496 = vsel %vm1464, 65537, 0
    %v1497 = vsel %vm1465, 65537, 0
    %v1498 = vsel %vm1466, 65537, 0
    %v1499 = vsel %vm1467, 65537, 0
    %v1500 = vsel %vm1468, 65537, 0
    %v1501 = vsel %vm1469, 65537, 0
    %v1502 = vsel %vm1470, 65537, 0
    %v1503 = vsel %vm1471, 65537, 0
    %v1504 = vsel %vm1472, 65537, 0
    %v1505 = vsel %vm1473, 65537, 0
    %v1506 = vsel %vm1474, 65537, 0
    %v1507 = vsel %vm1475, 65537, 0
    %v1508 = vsel %vm1476, 65537, 0
    %v1509 = vsel %vm1477, 65537, 0
    %v1510 = vsel %vm1478, 65537, 0
    %v1511 = vsel %vm1479, 65537, 0
    %v1512 = vunpack.c.l.b16 %v1480
    %v1513 = vunpack.c.l.b16 %v1481
    %v1514 = vunpack.c.l.b16 %v1482
    %v1515 = vunpack.c.l.b16 %v1483
    %v1516 = vunpack.c.l.b16 %v1484
    %v1517 = vunpack.c.l.b16 %v1485
    %v1518 = vunpack.c.l.b16 %v1486
    %v1519 = vunpack.c.l.b16 %v1487
    %v1520 = vunpack.c.l.b16 %v1488
    %v1521 = vunpack.c.l.b16 %v1489
    %v1522 = vunpack.c.l.b16 %v1490
    %v1523 = vunpack.c.l.b16 %v1491
    %v1524 = vunpack.c.l.b16 %v1492
    %v1525 = vunpack.c.l.b16 %v1493
    %v1526 = vunpack.c.l.b16 %v1494
    %v1527 = vunpack.c.l.b16 %v1495
    %v1528 = vunpack.c.l.b16 %v1496
    %v1529 = vunpack.c.l.b16 %v1497
    %v1530 = vunpack.c.l.b16 %v1498
    %v1531 = vunpack.c.l.b16 %v1499
    %v1532 = vunpack.c.l.b16 %v1500
    %v1533 = vunpack.c.l.b16 %v1501
    %v1534 = vunpack.c.l.b16 %v1502
    %v1535 = vunpack.c.l.b16 %v1503
    %v1536 = vunpack.c.l.b16 %v1504
    %v1537 = vunpack.c.l.b16 %v1505
    %v1538 = vunpack.c.l.b16 %v1506
    %v1539 = vunpack.c.l.b16 %v1507
    %v1540 = vunpack.c.l.b16 %v1508
    %v1541 = vunpack.c.l.b16 %v1509
    %v1542 = vunpack.c.l.b16 %v1510
    %v1543 = vunpack.c.l.b16 %v1511
    %vm1544 = vcmp.ne.s32.totalorder %v1512, 0
    %vm1545 = vcmp.ne.s32.totalorder %v1513, 0
    %vm1546 = vcmp.ne.s32.totalorder %v1514, 0
    %vm1547 = vcmp.ne.s32.totalorder %v1515, 0
    %vm1548 = vcmp.ne.s32.totalorder %v1516, 0
    %vm1549 = vcmp.ne.s32.totalorder %v1517, 0
    %vm1550 = vcmp.ne.s32.totalorder %v1518, 0
    %vm1551 = vcmp.ne.s32.totalorder %v1519, 0
    %vm1552 = vcmp.ne.s32.totalorder %v1520, 0
    %vm1553 = vcmp.ne.s32.totalorder %v1521, 0
    %vm1554 = vcmp.ne.s32.totalorder %v1522, 0
    %vm1555 = vcmp.ne.s32.totalorder %v1523, 0
    %vm1556 = vcmp.ne.s32.totalorder %v1524, 0
    %vm1557 = vcmp.ne.s32.totalorder %v1525, 0
    %vm1558 = vcmp.ne.s32.totalorder %v1526, 0
    %vm1559 = vcmp.ne.s32.totalorder %v1527, 0
    %vm1560 = vcmp.ne.s32.totalorder %v1528, 0
    %vm1561 = vcmp.ne.s32.totalorder %v1529, 0
    %vm1562 = vcmp.ne.s32.totalorder %v1530, 0
    %vm1563 = vcmp.ne.s32.totalorder %v1531, 0
    %vm1564 = vcmp.ne.s32.totalorder %v1532, 0
    %vm1565 = vcmp.ne.s32.totalorder %v1533, 0
    %vm1566 = vcmp.ne.s32.totalorder %v1534, 0
    %vm1567 = vcmp.ne.s32.totalorder %v1535, 0
    %vm1568 = vcmp.ne.s32.totalorder %v1536, 0
    %vm1569 = vcmp.ne.s32.totalorder %v1537, 0
    %vm1570 = vcmp.ne.s32.totalorder %v1538, 0
    %vm1571 = vcmp.ne.s32.totalorder %v1539, 0
    %vm1572 = vcmp.ne.s32.totalorder %v1540, 0
    %vm1573 = vcmp.ne.s32.totalorder %v1541, 0
    %vm1574 = vcmp.ne.s32.totalorder %v1542, 0
    %vm1575 = vcmp.ne.s32.totalorder %v1543, 0
    %v1576 = vsel %vm1544, 1, 0
    %v1577 = vsel %vm1545, 1, 0
    %v1578 = vsel %vm1546, 1, 0
    %v1579 = vsel %vm1547, 1, 0
    %v1580 = vsel %vm1548, 1, 0
    %v1581 = vsel %vm1549, 1, 0
    %v1582 = vsel %vm1550, 1, 0
    %v1583 = vsel %vm1551, 1, 0
    %v1584 = vsel %vm1552, 1, 0
    %v1585 = vsel %vm1553, 1, 0
    %v1586 = vsel %vm1554, 1, 0
    %v1587 = vsel %vm1555, 1, 0
    %v1588 = vsel %vm1556, 1, 0
    %v1589 = vsel %vm1557, 1, 0
    %v1590 = vsel %vm1558, 1, 0
    %v1591 = vsel %vm1559, 1, 0
    %v1592 = vsel %vm1560, 1, 0
    %v1593 = vsel %vm1561, 1, 0
    %v1594 = vsel %vm1562, 1, 0
    %v1595 = vsel %vm1563, 1, 0
    %v1596 = vsel %vm1564, 1, 0
    %v1597 = vsel %vm1565, 1, 0
    %v1598 = vsel %vm1566, 1, 0
    %v1599 = vsel %vm1567, 1, 0
    %v1600 = vsel %vm1568, 1, 0
    %v1601 = vsel %vm1569, 1, 0
    %v1602 = vsel %vm1570, 1, 0
    %v1603 = vsel %vm1571, 1, 0
    %v1604 = vsel %vm1572, 1, 0
    %v1605 = vsel %vm1573, 1, 0
    %v1606 = vsel %vm1574, 1, 0
    %v1607 = vsel %vm1575, 1, 0
    %v1608 = vcvt.s32.f32 %v1576
    %v1609 = vcvt.s32.f32 %v1577
    %v1610 = vcvt.s32.f32 %v1578
    %v1611 = vcvt.s32.f32 %v1579
    %v1612 = vcvt.s32.f32 %v1580
    %v1613 = vcvt.s32.f32 %v1581
    %v1614 = vcvt.s32.f32 %v1582
    %v1615 = vcvt.s32.f32 %v1583
    %v1616 = vcvt.s32.f32 %v1584
    %v1617 = vcvt.s32.f32 %v1585
    %v1618 = vcvt.s32.f32 %v1586
    %v1619 = vcvt.s32.f32 %v1587
    %v1620 = vcvt.s32.f32 %v1588
    %v1621 = vcvt.s32.f32 %v1589
    %v1622 = vcvt.s32.f32 %v1590
    %v1623 = vcvt.s32.f32 %v1591
    %v1624 = vcvt.s32.f32 %v1592
    %v1625 = vcvt.s32.f32 %v1593
    %v1626 = vcvt.s32.f32 %v1594
    %v1627 = vcvt.s32.f32 %v1595
    %v1628 = vcvt.s32.f32 %v1596
    %v1629 = vcvt.s32.f32 %v1597
    %v1630 = vcvt.s32.f32 %v1598
    %v1631 = vcvt.s32.f32 %v1599
    %v1632 = vcvt.s32.f32 %v1600
    %v1633 = vcvt.s32.f32 %v1601
    %v1634 = vcvt.s32.f32 %v1602
    %v1635 = vcvt.s32.f32 %v1603
    %v1636 = vcvt.s32.f32 %v1604
    %v1637 = vcvt.s32.f32 %v1605
    %v1638 = vcvt.s32.f32 %v1606
    %v1639 = vcvt.s32.f32 %v1607
    %v1640 = vpack.c.bf16 %v1609, %v1608
    %v1641 = vpack.c.bf16 %v1611, %v1610
    %v1642 = vpack.c.bf16 %v1613, %v1612
    %v1643 = vpack.c.bf16 %v1615, %v1614
    %v1644 = vpack.c.bf16 %v1617, %v1616
    %v1645 = vpack.c.bf16 %v1619, %v1618
    %v1646 = vpack.c.bf16 %v1621, %v1620
    %v1647 = vpack.c.bf16 %v1623, %v1622
    %v1648 = vpack.c.bf16 %v1625, %v1624
    %v1649 = vpack.c.bf16 %v1627, %v1626
    %v1650 = vpack.c.bf16 %v1629, %v1628
    %v1651 = vpack.c.bf16 %v1631, %v1630
    %v1652 = vpack.c.bf16 %v1633, %v1632
    %v1653 = vpack.c.bf16 %v1635, %v1634
    %v1654 = vpack.c.bf16 %v1637, %v1636
    %v1655 = vpack.c.bf16 %v1639, %v1638
    %v1656 = vld [vmem:[#allocation3] sm:$0xff]
    %v1657 = vld [vmem:[#allocation3 + $0x8] sm:$0xff]
    %v1658 = vld [vmem:[#allocation3 + $0x10] sm:$0xff]
    %v1659 = vld [vmem:[#allocation3 + $0x18] sm:$0xff]
    %v1660 = vld [vmem:[#allocation3 + $0x20] sm:$0xff]
    %v1661 = vld [vmem:[#allocation3 + $0x28] sm:$0xff]
    %v1662 = vld [vmem:[#allocation3 + $0x30] sm:$0xff]
    %v1663 = vld [vmem:[#allocation3 + $0x38] sm:$0xff]
    %v1664 = vld [vmem:[#allocation3 + $0x40] sm:$0xff]
    %v1665 = vld [vmem:[#allocation3 + $0x48] sm:$0xff]
    %v1666 = vld [vmem:[#allocation3 + $0x50] sm:$0xff]
    %v1667 = vld [vmem:[#allocation3 + $0x58] sm:$0xff]
    %v1668 = vld [vmem:[#allocation3 + $0x60] sm:$0xff]
    %v1669 = vld [vmem:[#allocation3 + $0x68] sm:$0xff]
    %v1670 = vld [vmem:[#allocation3 + $0x70] sm:$0xff]
    %v1671 = vld [vmem:[#allocation3 + $0x78] sm:$0xff]
    %v1672 = vld [vmem:[#allocation3 + $0x80] sm:$0xff]
    %v1673 = vld [vmem:[#allocation3 + $0x88] sm:$0xff]
    %v1674 = vld [vmem:[#allocation3 + $0x90] sm:$0xff]
    %v1675 = vld [vmem:[#allocation3 + $0x98] sm:$0xff]
    %v1676 = vld [vmem:[#allocation3 + $0xa0] sm:$0xff]
    %v1677 = vld [vmem:[#allocation3 + $0xa8] sm:$0xff]
    %v1678 = vld [vmem:[#allocation3 + $0xb0] sm:$0xff]
    %v1679 = vld [vmem:[#allocation3 + $0xb8] sm:$0xff]
    %v1680 = vld [vmem:[#allocation3 + $0xc0] sm:$0xff]
    %v1681 = vld [vmem:[#allocation3 + $0xc8] sm:$0xff]
    %v1682 = vld [vmem:[#allocation3 + $0xd0] sm:$0xff]
    %v1683 = vld [vmem:[#allocation3 + $0xd8] sm:$0xff]
    %v1684 = vld [vmem:[#allocation3 + $0xe0] sm:$0xff]
    %v1685 = vld [vmem:[#allocation3 + $0xe8] sm:$0xff]
    %v1686 = vld [vmem:[#allocation3 + $0xf0] sm:$0xff]
    %v1687 = vld [vmem:[#allocation3 + $0xf8] sm:$0xff]
    %1688 = vmatprep.subr.bf16.mxu0 0
    %1689 = vmatpush1.bf16.msra.mxu0 1065369472
    %1690 = vmatprep.subr.bf16.mxu0 0
    %1691 = vmatpush1.bf16.msra.mxu0 1065369472
    %1692 = vmatprep.subr.bf16.mxu0 0
    %1693 = vmatpush1.bf16.msra.mxu0 1065369472
    %1694 = vmatprep.subr.bf16.mxu0 0
    %1695 = vmatpush1.bf16.msra.mxu0 1065369472
    %1696 = vmatprep.subr.bf16.mxu0 0
    %1697 = vmatpush1.bf16.msra.mxu0 1065369472
    %1698 = vmatprep.subr.bf16.mxu0 0
    %1699 = vmatpush1.bf16.msra.mxu0 1065369472
    %1700 = vmatprep.subr.bf16.mxu0 0
    %1701 = vmatpush1.bf16.msra.mxu0 1065369472
    %1702 = vmatprep.subr.bf16.mxu0 0
    %1703 = vmatpush1.bf16.msra.mxu0 1065369472
    %1704 = vmatprep.subr.bf16.mxu0 0
    %1705 = vmatpush2.bf16.msra.mxu0 0
    %1706 = vmatprep.subr.bf16.mxu0 0
    %1707 = vmatpush2.bf16.msra.mxu0 0
    %1708 = vmatprep.subr.bf16.mxu0 0
    %1709 = vmatpush2.bf16.msra.mxu0 0
    %1710 = vmatprep.subr.bf16.mxu0 0
    %1711 = vmatpush2.bf16.msra.mxu0 0
    %1712 = vmatprep.subr.bf16.mxu0 0
    %1713 = vmatpush2.bf16.msra.mxu0 0
    %1714 = vmatprep.subr.bf16.mxu0 0
    %1715 = vmatpush2.bf16.msra.mxu0 0
    %1716 = vmatprep.subr.bf16.mxu0 0
    %1717 = vmatpush2.bf16.msra.mxu0 0
    %1718 = vmatprep.subr.bf16.mxu0 0
    %1719 = vmatpush2.bf16.msra.mxu0 0
    %1720 = vmatprep.mubr.bf16.mxu0 0
    %1721 = vmatmul.mubr.bf16.gmra.mxu0 %v1640
    %v1722 = vpop.f32.mrf.mxu0
    %v1723 = vadd.f32 0.0, %v1722
    %v1724 = vpop.f32.mrf.mxu0
    %v1725 = vpop.f32.mrf.mxu0
    %v1726 = vadd.f32 0.0, %v1725
    %v1727 = vpop.f32.mrf.mxu0
    %1728 = vmatprep.mubr.bf16.mxu0 0
    %1729 = vmatmul.mubr.bf16.gmra.mxu0 %v1641
    %v1730 = vpop.f32.mrf.mxu0
    %v1731 = vadd.f32 0.0, %v1730
    %v1732 = vpop.f32.mrf.mxu0
    %v1733 = vpop.f32.mrf.mxu0
    %v1734 = vadd.f32 0.0, %v1733
    %v1735 = vpop.f32.mrf.mxu0
    %1736 = vmatprep.mubr.bf16.mxu0 0
    %1737 = vmatmul.mubr.bf16.gmra.mxu0 %v1642
    %v1738 = vpop.f32.mrf.mxu0
    %v1739 = vadd.f32 0.0, %v1738
    %v1740 = vpop.f32.mrf.mxu0
    %v1741 = vpop.f32.mrf.mxu0
    %v1742 = vadd.f32 0.0, %v1741
    %v1743 = vpop.f32.mrf.mxu0
    %1744 = vmatprep.mubr.bf16.mxu0 0
    %1745 = vmatmul.mubr.bf16.gmra.mxu0 %v1643
    %v1746 = vpop.f32.mrf.mxu0
    %v1747 = vadd.f32 0.0, %v1746
    %v1748 = vpop.f32.mrf.mxu0
    %v1749 = vpop.f32.mrf.mxu0
    %v1750 = vadd.f32 0.0, %v1749
    %v1751 = vpop.f32.mrf.mxu0
    %1752 = vmatprep.mubr.bf16.mxu0 0
    %1753 = vmatmul.mubr.bf16.gmra.mxu0 %v1644
    %v1754 = vpop.f32.mrf.mxu0
    %v1755 = vadd.f32 0.0, %v1754
    %v1756 = vpop.f32.mrf.mxu0
    %v1757 = vpop.f32.mrf.mxu0
    %v1758 = vadd.f32 0.0, %v1757
    %v1759 = vpop.f32.mrf.mxu0
    %1760 = vmatprep.mubr.bf16.mxu0 0
    %1761 = vmatmul.mubr.bf16.gmra.mxu0 %v1645
    %v1762 = vpop.f32.mrf.mxu0
    %v1763 = vadd.f32 0.0, %v1762
    %v1764 = vpop.f32.mrf.mxu0
    %v1765 = vpop.f32.mrf.mxu0
    %v1766 = vadd.f32 0.0, %v1765
    %v1767 = vpop.f32.mrf.mxu0
    %1768 = vmatprep.mubr.bf16.mxu0 0
    %1769 = vmatmul.mubr.bf16.gmra.mxu0 %v1646
    %v1770 = vpop.f32.mrf.mxu0
    %v1771 = vadd.f32 0.0, %v1770
    %v1772 = vpop.f32.mrf.mxu0
    %v1773 = vpop.f32.mrf.mxu0
    %v1774 = vadd.f32 0.0, %v1773
    %v1775 = vpop.f32.mrf.mxu0
    %1776 = vmatprep.mubr.bf16.mxu0 0
    %1777 = vmatmul.mubr.bf16.gmra.mxu0 %v1647
    %v1778 = vpop.f32.mrf.mxu0
    %v1779 = vadd.f32 0.0, %v1778
    %v1780 = vpop.f32.mrf.mxu0
    %v1781 = vpop.f32.mrf.mxu0
    %v1782 = vadd.f32 0.0, %v1781
    %v1783 = vpop.f32.mrf.mxu0
    %1784 = vmatprep.mubr.bf16.mxu0 0
    %1785 = vmatmul.mubr.bf16.gmra.mxu0 %v1648
    %v1786 = vpop.f32.mrf.mxu0
    %v1787 = vadd.f32 0.0, %v1786
    %v1788 = vpop.f32.mrf.mxu0
    %v1789 = vpop.f32.mrf.mxu0
    %v1790 = vadd.f32 0.0, %v1789
    %v1791 = vpop.f32.mrf.mxu0
    %1792 = vmatprep.mubr.bf16.mxu0 0
    %1793 = vmatmul.mubr.bf16.gmra.mxu0 %v1649
    %v1794 = vpop.f32.mrf.mxu0
    %v1795 = vadd.f32 0.0, %v1794
    %v1796 = vpop.f32.mrf.mxu0
    %v1797 = vpop.f32.mrf.mxu0
    %v1798 = vadd.f32 0.0, %v1797
    %v1799 = vpop.f32.mrf.mxu0
    %1800 = vmatprep.mubr.bf16.mxu0 0
    %1801 = vmatmul.mubr.bf16.gmra.mxu0 %v1650
    %v1802 = vpop.f32.mrf.mxu0
    %v1803 = vadd.f32 0.0, %v1802
    %v1804 = vpop.f32.mrf.mxu0
    %v1805 = vpop.f32.mrf.mxu0
    %v1806 = vadd.f32 0.0, %v1805
    %v1807 = vpop.f32.mrf.mxu0
    %1808 = vmatprep.mubr.bf16.mxu0 0
    %1809 = vmatmul.mubr.bf16.gmra.mxu0 %v1651
    %v1810 = vpop.f32.mrf.mxu0
    %v1811 = vadd.f32 0.0, %v1810
    %v1812 = vpop.f32.mrf.mxu0
    %v1813 = vpop.f32.mrf.mxu0
    %v1814 = vadd.f32 0.0, %v1813
    %v1815 = vpop.f32.mrf.mxu0
    %1816 = vmatprep.mubr.bf16.mxu0 0
    %1817 = vmatmul.mubr.bf16.gmra.mxu0 %v1652
    %v1818 = vpop.f32.mrf.mxu0
    %v1819 = vadd.f32 0.0, %v1818
    %v1820 = vpop.f32.mrf.mxu0
    %v1821 = vpop.f32.mrf.mxu0
    %v1822 = vadd.f32 0.0, %v1821
    %v1823 = vpop.f32.mrf.mxu0
    %1824 = vmatprep.mubr.bf16.mxu0 0
    %1825 = vmatmul.mubr.bf16.gmra.mxu0 %v1653
    %v1826 = vpop.f32.mrf.mxu0
    %v1827 = vadd.f32 0.0, %v1826
    %v1828 = vpop.f32.mrf.mxu0
    %v1829 = vpop.f32.mrf.mxu0
    %v1830 = vadd.f32 0.0, %v1829
    %v1831 = vpop.f32.mrf.mxu0
    %1832 = vmatprep.mubr.bf16.mxu0 0
    %1833 = vmatmul.mubr.bf16.gmra.mxu0 %v1654
    %v1834 = vpop.f32.mrf.mxu0
    %v1835 = vadd.f32 0.0, %v1834
    %v1836 = vpop.f32.mrf.mxu0
    %v1837 = vpop.f32.mrf.mxu0
    %v1838 = vadd.f32 0.0, %v1837
    %v1839 = vpop.f32.mrf.mxu0
    %1840 = vmatprep.mubr.bf16.mxu0 0
    %1841 = vmatmul.mubr.bf16.gmra.mxu0 %v1655
    %v1842 = vpop.f32.mrf.mxu0
    %v1843 = vadd.f32 0.0, %v1842
    %v1844 = vpop.f32.mrf.mxu0
    %v1845 = vpop.f32.mrf.mxu0
    %v1846 = vadd.f32 0.0, %v1845
    %v1847 = vpop.f32.mrf.mxu0
    %1848 = vdwg.mxu0
    %v1849 = vadd.f32 %v1656, %v1723
    %v1850 = vadd.f32 %v1657, %v1726
    %v1851 = vadd.f32 %v1658, %v1731
    %v1852 = vadd.f32 %v1659, %v1734
    %v1853 = vadd.f32 %v1660, %v1739
    %v1854 = vadd.f32 %v1661, %v1742
    %v1855 = vadd.f32 %v1662, %v1747
    %v1856 = vadd.f32 %v1663, %v1750
    %v1857 = vadd.f32 %v1664, %v1755
    %v1858 = vadd.f32 %v1665, %v1758
    %v1859 = vadd.f32 %v1666, %v1763
    %v1860 = vadd.f32 %v1667, %v1766
    %v1861 = vadd.f32 %v1668, %v1771
    %v1862 = vadd.f32 %v1669, %v1774
    %v1863 = vadd.f32 %v1670, %v1779
    %v1864 = vadd.f32 %v1671, %v1782
    %v1865 = vadd.f32 %v1672, %v1787
    %v1866 = vadd.f32 %v1673, %v1790
    %v1867 = vadd.f32 %v1674, %v1795
    %v1868 = vadd.f32 %v1675, %v1798
    %v1869 = vadd.f32 %v1676, %v1803
    %v1870 = vadd.f32 %v1677, %v1806
    %v1871 = vadd.f32 %v1678, %v1811
    %v1872 = vadd.f32 %v1679, %v1814
    %v1873 = vadd.f32 %v1680, %v1819
    %v1874 = vadd.f32 %v1681, %v1822
    %v1875 = vadd.f32 %v1682, %v1827
    %v1876 = vadd.f32 %v1683, %v1830
    %v1877 = vadd.f32 %v1684, %v1835
    %v1878 = vadd.f32 %v1685, %v1838
    %v1879 = vadd.f32 %v1686, %v1843
    %v1880 = vadd.f32 %v1687, %v1846
    %1881 = vst.msk [vmem:[#allocation3] sm:$0xff] %vm736, %v1849
    %1882 = vst.msk [vmem:[#allocation3 + $0x8] sm:$0xff] %vm736, %v1850
    %1883 = vst.msk [vmem:[#allocation3 + $0x10] sm:$0xff] %vm736, %v1851
    %1884 = vst.msk [vmem:[#allocation3 + $0x18] sm:$0xff] %vm736, %v1852
    %1885 = vst.msk [vmem:[#allocation3 + $0x20] sm:$0xff] %vm736, %v1853
    %1886 = vst.msk [vmem:[#allocation3 + $0x28] sm:$0xff] %vm736, %v1854
    %1887 = vst.msk [vmem:[#allocation3 + $0x30] sm:$0xff] %vm736, %v1855
    %1888 = vst.msk [vmem:[#allocation3 + $0x38] sm:$0xff] %vm736, %v1856
    %1889 = vst.msk [vmem:[#allocation3 + $0x40] sm:$0xff] %vm736, %v1857
    %1890 = vst.msk [vmem:[#allocation3 + $0x48] sm:$0xff] %vm736, %v1858
    %1891 = vst.msk [vmem:[#allocation3 + $0x50] sm:$0xff] %vm736, %v1859
    %1892 = vst.msk [vmem:[#allocation3 + $0x58] sm:$0xff] %vm736, %v1860
    %1893 = vst.msk [vmem:[#allocation3 + $0x60] sm:$0xff] %vm736, %v1861
    %1894 = vst.msk [vmem:[#allocation3 + $0x68] sm:$0xff] %vm736, %v1862
    %1895 = vst.msk [vmem:[#allocation3 + $0x70] sm:$0xff] %vm736, %v1863
    %1896 = vst.msk [vmem:[#allocation3 + $0x78] sm:$0xff] %vm736, %v1864
    %1897 = vst.msk [vmem:[#allocation3 + $0x80] sm:$0xff] %vm736, %v1865
    %1898 = vst.msk [vmem:[#allocation3 + $0x88] sm:$0xff] %vm736, %v1866
    %1899 = vst.msk [vmem:[#allocation3 + $0x90] sm:$0xff] %vm736, %v1867
    %1900 = vst.msk [vmem:[#allocation3 + $0x98] sm:$0xff] %vm736, %v1868
    %1901 = vst.msk [vmem:[#allocation3 + $0xa0] sm:$0xff] %vm736, %v1869
    %1902 = vst.msk [vmem:[#allocation3 + $0xa8] sm:$0xff] %vm736, %v1870
    %1903 = vst.msk [vmem:[#allocation3 + $0xb0] sm:$0xff] %vm736, %v1871
    %1904 = vst.msk [vmem:[#allocation3 + $0xb8] sm:$0xff] %vm736, %v1872
    %1905 = vst.msk [vmem:[#allocation3 + $0xc0] sm:$0xff] %vm736, %v1873
    %1906 = vst.msk [vmem:[#allocation3 + $0xc8] sm:$0xff] %vm736, %v1874
    %1907 = vst.msk [vmem:[#allocation3 + $0xd0] sm:$0xff] %vm736, %v1875
    %1908 = vst.msk [vmem:[#allocation3 + $0xd8] sm:$0xff] %vm736, %v1876
    %1909 = vst.msk [vmem:[#allocation3 + $0xe0] sm:$0xff] %vm736, %v1877
    %1910 = vst.msk [vmem:[#allocation3 + $0xe8] sm:$0xff] %vm736, %v1878
    %1911 = vst.msk [vmem:[#allocation3 + $0xf0] sm:$0xff] %vm736, %v1879
    %1912 = vst.msk [vmem:[#allocation3 + $0xf8] sm:$0xff] %vm736, %v1880
    %s1913 = sadd.s32 0, 3
    %s1914 = scalar_lea.vmem [#allocation2], %s1913
    %v1915 = vld [vmem:[%s1914] sm:$0x1]
    %v1916 = vpack.c.bf16 %v1915, %v1915
    %v1918 = vpack.i.b16 %v1916, %v1916
    %v1920 = vlaneseq
    %v1921 = vshrl.u32 %v1920, 7
    %v1922 = vsub.s32 0, %v1921
    %v1923 = vrot.slane %v1918, %v1922
    %vm1924 = vcmp.le.bf16.partialorder %v1923, %v175
    %vm1925 = vcmp.le.bf16.partialorder %v1923, %v176
    %vm1926 = vcmp.le.bf16.partialorder %v1923, %v177
    %vm1927 = vcmp.le.bf16.partialorder %v1923, %v178
    %vm1928 = vcmp.le.bf16.partialorder %v1923, %v179
    %vm1929 = vcmp.le.bf16.partialorder %v1923, %v180
    %vm1930 = vcmp.le.bf16.partialorder %v1923, %v181
    %vm1931 = vcmp.le.bf16.partialorder %v1923, %v182
    %vm1932 = vcmp.le.bf16.partialorder %v1923, %v183
    %vm1933 = vcmp.le.bf16.partialorder %v1923, %v184
    %vm1934 = vcmp.le.bf16.partialorder %v1923, %v185
    %vm1935 = vcmp.le.bf16.partialorder %v1923, %v186
    %vm1936 = vcmp.le.bf16.partialorder %v1923, %v187
    %vm1937 = vcmp.le.bf16.partialorder %v1923, %v188
    %vm1938 = vcmp.le.bf16.partialorder %v1923, %v189
    %vm1939 = vcmp.le.bf16.partialorder %v1923, %v190
    %v1940 = vsel %vm1924, 65537, 0
    %v1941 = vsel %vm1925, 65537, 0
    %v1942 = vsel %vm1926, 65537, 0
    %v1943 = vsel %vm1927, 65537, 0
    %v1944 = vsel %vm1928, 65537, 0
    %v1945 = vsel %vm1929, 65537, 0
    %v1946 = vsel %vm1930, 65537, 0
    %v1947 = vsel %vm1931, 65537, 0
    %v1948 = vsel %vm1932, 65537, 0
    %v1949 = vsel %vm1933, 65537, 0
    %v1950 = vsel %vm1934, 65537, 0
    %v1951 = vsel %vm1935, 65537, 0
    %v1952 = vsel %vm1936, 65537, 0
    %v1953 = vsel %vm1937, 65537, 0
    %v1954 = vsel %vm1938, 65537, 0
    %v1955 = vsel %vm1939, 65537, 0
    %v1956 = vunpack.c.l.b16 %v1940
    %v1957 = vunpack.c.h.b16 %v1940
    %v1958 = vunpack.c.l.b16 %v1941
    %v1959 = vunpack.c.h.b16 %v1941
    %v1960 = vunpack.c.l.b16 %v1942
    %v1961 = vunpack.c.h.b16 %v1942
    %v1962 = vunpack.c.l.b16 %v1943
    %v1963 = vunpack.c.h.b16 %v1943
    %v1964 = vunpack.c.l.b16 %v1944
    %v1965 = vunpack.c.h.b16 %v1944
    %v1966 = vunpack.c.l.b16 %v1945
    %v1967 = vunpack.c.h.b16 %v1945
    %v1968 = vunpack.c.l.b16 %v1946
    %v1969 = vunpack.c.h.b16 %v1946
    %v1970 = vunpack.c.l.b16 %v1947
    %v1971 = vunpack.c.h.b16 %v1947
    %v1972 = vunpack.c.l.b16 %v1948
    %v1973 = vunpack.c.h.b16 %v1948
    %v1974 = vunpack.c.l.b16 %v1949
    %v1975 = vunpack.c.h.b16 %v1949
    %v1976 = vunpack.c.l.b16 %v1950
    %v1977 = vunpack.c.h.b16 %v1950
    %v1978 = vunpack.c.l.b16 %v1951
    %v1979 = vunpack.c.h.b16 %v1951
    %v1980 = vunpack.c.l.b16 %v1952
    %v1981 = vunpack.c.h.b16 %v1952
    %v1982 = vunpack.c.l.b16 %v1953
    %v1983 = vunpack.c.h.b16 %v1953
    %v1984 = vunpack.c.l.b16 %v1954
    %v1985 = vunpack.c.h.b16 %v1954
    %v1986 = vunpack.c.l.b16 %v1955
    %v1987 = vunpack.c.h.b16 %v1955
    %v1988 = vpack.c.b16 %v1956, %v1956
    %v1989 = vpack.c.b16 %v1957, %v1957
    %v1990 = vpack.c.b16 %v1958, %v1958
    %v1991 = vpack.c.b16 %v1959, %v1959
    %v1992 = vpack.c.b16 %v1960, %v1960
    %v1993 = vpack.c.b16 %v1961, %v1961
    %v1994 = vpack.c.b16 %v1962, %v1962
    %v1995 = vpack.c.b16 %v1963, %v1963
    %v1996 = vpack.c.b16 %v1964, %v1964
    %v1997 = vpack.c.b16 %v1965, %v1965
    %v1998 = vpack.c.b16 %v1966, %v1966
    %v1999 = vpack.c.b16 %v1967, %v1967
    %v2000 = vpack.c.b16 %v1968, %v1968
    %v2001 = vpack.c.b16 %v1969, %v1969
    %v2002 = vpack.c.b16 %v1970, %v1970
    %v2003 = vpack.c.b16 %v1971, %v1971
    %v2004 = vpack.c.b16 %v1972, %v1972
    %v2005 = vpack.c.b16 %v1973, %v1973
    %v2006 = vpack.c.b16 %v1974, %v1974
    %v2007 = vpack.c.b16 %v1975, %v1975
    %v2008 = vpack.c.b16 %v1976, %v1976
    %v2009 = vpack.c.b16 %v1977, %v1977
    %v2010 = vpack.c.b16 %v1978, %v1978
    %v2011 = vpack.c.b16 %v1979, %v1979
    %v2012 = vpack.c.b16 %v1980, %v1980
    %v2013 = vpack.c.b16 %v1981, %v1981
    %v2014 = vpack.c.b16 %v1982, %v1982
    %v2015 = vpack.c.b16 %v1983, %v1983
    %v2016 = vpack.c.b16 %v1984, %v1984
    %v2017 = vpack.c.b16 %v1985, %v1985
    %v2018 = vpack.c.b16 %v1986, %v1986
    %v2019 = vpack.c.b16 %v1987, %v1987
    %vm2020 = vcmp.ne.s16.totalorder %v1988, 0
    %vm2021 = vcmp.ne.s16.totalorder %v1989, 0
    %vm2022 = vcmp.ne.s16.totalorder %v1990, 0
    %vm2023 = vcmp.ne.s16.totalorder %v1991, 0
    %vm2024 = vcmp.ne.s16.totalorder %v1992, 0
    %vm2025 = vcmp.ne.s16.totalorder %v1993, 0
    %vm2026 = vcmp.ne.s16.totalorder %v1994, 0
    %vm2027 = vcmp.ne.s16.totalorder %v1995, 0
    %vm2028 = vcmp.ne.s16.totalorder %v1996, 0
    %vm2029 = vcmp.ne.s16.totalorder %v1997, 0
    %vm2030 = vcmp.ne.s16.totalorder %v1998, 0
    %vm2031 = vcmp.ne.s16.totalorder %v1999, 0
    %vm2032 = vcmp.ne.s16.totalorder %v2000, 0
    %vm2033 = vcmp.ne.s16.totalorder %v2001, 0
    %vm2034 = vcmp.ne.s16.totalorder %v2002, 0
    %vm2035 = vcmp.ne.s16.totalorder %v2003, 0
    %vm2036 = vcmp.ne.s16.totalorder %v2004, 0
    %vm2037 = vcmp.ne.s16.totalorder %v2005, 0
    %vm2038 = vcmp.ne.s16.totalorder %v2006, 0
    %vm2039 = vcmp.ne.s16.totalorder %v2007, 0
    %vm2040 = vcmp.ne.s16.totalorder %v2008, 0
    %vm2041 = vcmp.ne.s16.totalorder %v2009, 0
    %vm2042 = vcmp.ne.s16.totalorder %v2010, 0
    %vm2043 = vcmp.ne.s16.totalorder %v2011, 0
    %vm2044 = vcmp.ne.s16.totalorder %v2012, 0
    %vm2045 = vcmp.ne.s16.totalorder %v2013, 0
    %vm2046 = vcmp.ne.s16.totalorder %v2014, 0
    %vm2047 = vcmp.ne.s16.totalorder %v2015, 0
    %vm2048 = vcmp.ne.s16.totalorder %v2016, 0
    %vm2049 = vcmp.ne.s16.totalorder %v2017, 0
    %vm2050 = vcmp.ne.s16.totalorder %v2018, 0
    %vm2051 = vcmp.ne.s16.totalorder %v2019, 0
    %v2052 = vsel %vm2020, 65537, 0
    %v2053 = vsel %vm2021, 65537, 0
    %v2054 = vsel %vm2022, 65537, 0
    %v2055 = vsel %vm2023, 65537, 0
    %v2056 = vsel %vm2024, 65537, 0
    %v2057 = vsel %vm2025, 65537, 0
    %v2058 = vsel %vm2026, 65537, 0
    %v2059 = vsel %vm2027, 65537, 0
    %v2060 = vsel %vm2028, 65537, 0
    %v2061 = vsel %vm2029, 65537, 0
    %v2062 = vsel %vm2030, 65537, 0
    %v2063 = vsel %vm2031, 65537, 0
    %v2064 = vsel %vm2032, 65537, 0
    %v2065 = vsel %vm2033, 65537, 0
    %v2066 = vsel %vm2034, 65537, 0
    %v2067 = vsel %vm2035, 65537, 0
    %v2068 = vsel %vm2036, 65537, 0
    %v2069 = vsel %vm2037, 65537, 0
    %v2070 = vsel %vm2038, 65537, 0
    %v2071 = vsel %vm2039, 65537, 0
    %v2072 = vsel %vm2040, 65537, 0
    %v2073 = vsel %vm2041, 65537, 0
    %v2074 = vsel %vm2042, 65537, 0
    %v2075 = vsel %vm2043, 65537, 0
    %v2076 = vsel %vm2044, 65537, 0
    %v2077 = vsel %vm2045, 65537, 0
    %v2078 = vsel %vm2046, 65537, 0
    %v2079 = vsel %vm2047, 65537, 0
    %v2080 = vsel %vm2048, 65537, 0
    %v2081 = vsel %vm2049, 65537, 0
    %v2082 = vsel %vm2050, 65537, 0
    %v2083 = vsel %vm2051, 65537, 0
    %v2084 = vunpack.c.l.b16 %v2052
    %v2085 = vunpack.c.l.b16 %v2053
    %v2086 = vunpack.c.l.b16 %v2054
    %v2087 = vunpack.c.l.b16 %v2055
    %v2088 = vunpack.c.l.b16 %v2056
    %v2089 = vunpack.c.l.b16 %v2057
    %v2090 = vunpack.c.l.b16 %v2058
    %v2091 = vunpack.c.l.b16 %v2059
    %v2092 = vunpack.c.l.b16 %v2060
    %v2093 = vunpack.c.l.b16 %v2061
    %v2094 = vunpack.c.l.b16 %v2062
    %v2095 = vunpack.c.l.b16 %v2063
    %v2096 = vunpack.c.l.b16 %v2064
    %v2097 = vunpack.c.l.b16 %v2065
    %v2098 = vunpack.c.l.b16 %v2066
    %v2099 = vunpack.c.l.b16 %v2067
    %v2100 = vunpack.c.l.b16 %v2068
    %v2101 = vunpack.c.l.b16 %v2069
    %v2102 = vunpack.c.l.b16 %v2070
    %v2103 = vunpack.c.l.b16 %v2071
    %v2104 = vunpack.c.l.b16 %v2072
    %v2105 = vunpack.c.l.b16 %v2073
    %v2106 = vunpack.c.l.b16 %v2074
    %v2107 = vunpack.c.l.b16 %v2075
    %v2108 = vunpack.c.l.b16 %v2076
    %v2109 = vunpack.c.l.b16 %v2077
    %v2110 = vunpack.c.l.b16 %v2078
    %v2111 = vunpack.c.l.b16 %v2079
    %v2112 = vunpack.c.l.b16 %v2080
    %v2113 = vunpack.c.l.b16 %v2081
    %v2114 = vunpack.c.l.b16 %v2082
    %v2115 = vunpack.c.l.b16 %v2083
    %vm2116 = vcmp.ne.s32.totalorder %v2084, 0
    %vm2117 = vcmp.ne.s32.totalorder %v2085, 0
    %vm2118 = vcmp.ne.s32.totalorder %v2086, 0
    %vm2119 = vcmp.ne.s32.totalorder %v2087, 0
    %vm2120 = vcmp.ne.s32.totalorder %v2088, 0
    %vm2121 = vcmp.ne.s32.totalorder %v2089, 0
    %vm2122 = vcmp.ne.s32.totalorder %v2090, 0
    %vm2123 = vcmp.ne.s32.totalorder %v2091, 0
    %vm2124 = vcmp.ne.s32.totalorder %v2092, 0
    %vm2125 = vcmp.ne.s32.totalorder %v2093, 0
    %vm2126 = vcmp.ne.s32.totalorder %v2094, 0
    %vm2127 = vcmp.ne.s32.totalorder %v2095, 0
    %vm2128 = vcmp.ne.s32.totalorder %v2096, 0
    %vm2129 = vcmp.ne.s32.totalorder %v2097, 0
    %vm2130 = vcmp.ne.s32.totalorder %v2098, 0
    %vm2131 = vcmp.ne.s32.totalorder %v2099, 0
    %vm2132 = vcmp.ne.s32.totalorder %v2100, 0
    %vm2133 = vcmp.ne.s32.totalorder %v2101, 0
    %vm2134 = vcmp.ne.s32.totalorder %v2102, 0
    %vm2135 = vcmp.ne.s32.totalorder %v2103, 0
    %vm2136 = vcmp.ne.s32.totalorder %v2104, 0
    %vm2137 = vcmp.ne.s32.totalorder %v2105, 0
    %vm2138 = vcmp.ne.s32.totalorder %v2106, 0
    %vm2139 = vcmp.ne.s32.totalorder %v2107, 0
    %vm2140 = vcmp.ne.s32.totalorder %v2108, 0
    %vm2141 = vcmp.ne.s32.totalorder %v2109, 0
    %vm2142 = vcmp.ne.s32.totalorder %v2110, 0
    %vm2143 = vcmp.ne.s32.totalorder %v2111, 0
    %vm2144 = vcmp.ne.s32.totalorder %v2112, 0
    %vm2145 = vcmp.ne.s32.totalorder %v2113, 0
    %vm2146 = vcmp.ne.s32.totalorder %v2114, 0
    %vm2147 = vcmp.ne.s32.totalorder %v2115, 0
    %v2148 = vsel %vm2116, 1, 0
    %v2149 = vsel %vm2117, 1, 0
    %v2150 = vsel %vm2118, 1, 0
    %v2151 = vsel %vm2119, 1, 0
    %v2152 = vsel %vm2120, 1, 0
    %v2153 = vsel %vm2121, 1, 0
    %v2154 = vsel %vm2122, 1, 0
    %v2155 = vsel %vm2123, 1, 0
    %v2156 = vsel %vm2124, 1, 0
    %v2157 = vsel %vm2125, 1, 0
    %v2158 = vsel %vm2126, 1, 0
    %v2159 = vsel %vm2127, 1, 0
    %v2160 = vsel %vm2128, 1, 0
    %v2161 = vsel %vm2129, 1, 0
    %v2162 = vsel %vm2130, 1, 0
    %v2163 = vsel %vm2131, 1, 0
    %v2164 = vsel %vm2132, 1, 0
    %v2165 = vsel %vm2133, 1, 0
    %v2166 = vsel %vm2134, 1, 0
    %v2167 = vsel %vm2135, 1, 0
    %v2168 = vsel %vm2136, 1, 0
    %v2169 = vsel %vm2137, 1, 0
    %v2170 = vsel %vm2138, 1, 0
    %v2171 = vsel %vm2139, 1, 0
    %v2172 = vsel %vm2140, 1, 0
    %v2173 = vsel %vm2141, 1, 0
    %v2174 = vsel %vm2142, 1, 0
    %v2175 = vsel %vm2143, 1, 0
    %v2176 = vsel %vm2144, 1, 0
    %v2177 = vsel %vm2145, 1, 0
    %v2178 = vsel %vm2146, 1, 0
    %v2179 = vsel %vm2147, 1, 0
    %v2180 = vcvt.s32.f32 %v2148
    %v2181 = vcvt.s32.f32 %v2149
    %v2182 = vcvt.s32.f32 %v2150
    %v2183 = vcvt.s32.f32 %v2151
    %v2184 = vcvt.s32.f32 %v2152
    %v2185 = vcvt.s32.f32 %v2153
    %v2186 = vcvt.s32.f32 %v2154
    %v2187 = vcvt.s32.f32 %v2155
    %v2188 = vcvt.s32.f32 %v2156
    %v2189 = vcvt.s32.f32 %v2157
    %v2190 = vcvt.s32.f32 %v2158
    %v2191 = vcvt.s32.f32 %v2159
    %v2192 = vcvt.s32.f32 %v2160
    %v2193 = vcvt.s32.f32 %v2161
    %v2194 = vcvt.s32.f32 %v2162
    %v2195 = vcvt.s32.f32 %v2163
    %v2196 = vcvt.s32.f32 %v2164
    %v2197 = vcvt.s32.f32 %v2165
    %v2198 = vcvt.s32.f32 %v2166
    %v2199 = vcvt.s32.f32 %v2167
    %v2200 = vcvt.s32.f32 %v2168
    %v2201 = vcvt.s32.f32 %v2169
    %v2202 = vcvt.s32.f32 %v2170
    %v2203 = vcvt.s32.f32 %v2171
    %v2204 = vcvt.s32.f32 %v2172
    %v2205 = vcvt.s32.f32 %v2173
    %v2206 = vcvt.s32.f32 %v2174
    %v2207 = vcvt.s32.f32 %v2175
    %v2208 = vcvt.s32.f32 %v2176
    %v2209 = vcvt.s32.f32 %v2177
    %v2210 = vcvt.s32.f32 %v2178
    %v2211 = vcvt.s32.f32 %v2179
    %v2212 = vpack.c.bf16 %v2181, %v2180
    %v2213 = vpack.c.bf16 %v2183, %v2182
    %v2214 = vpack.c.bf16 %v2185, %v2184
    %v2215 = vpack.c.bf16 %v2187, %v2186
    %v2216 = vpack.c.bf16 %v2189, %v2188
    %v2217 = vpack.c.bf16 %v2191, %v2190
    %v2218 = vpack.c.bf16 %v2193, %v2192
    %v2219 = vpack.c.bf16 %v2195, %v2194
    %v2220 = vpack.c.bf16 %v2197, %v2196
    %v2221 = vpack.c.bf16 %v2199, %v2198
    %v2222 = vpack.c.bf16 %v2201, %v2200
    %v2223 = vpack.c.bf16 %v2203, %v2202
    %v2224 = vpack.c.bf16 %v2205, %v2204
    %v2225 = vpack.c.bf16 %v2207, %v2206
    %v2226 = vpack.c.bf16 %v2209, %v2208
    %v2227 = vpack.c.bf16 %v2211, %v2210
    %v2228 = vld [vmem:[#allocation3] sm:$0xff]
    %v2229 = vld [vmem:[#allocation3 + $0x8] sm:$0xff]
    %v2230 = vld [vmem:[#allocation3 + $0x10] sm:$0xff]
    %v2231 = vld [vmem:[#allocation3 + $0x18] sm:$0xff]
    %v2232 = vld [vmem:[#allocation3 + $0x20] sm:$0xff]
    %v2233 = vld [vmem:[#allocation3 + $0x28] sm:$0xff]
    %v2234 = vld [vmem:[#allocation3 + $0x30] sm:$0xff]
    %v2235 = vld [vmem:[#allocation3 + $0x38] sm:$0xff]
    %v2236 = vld [vmem:[#allocation3 + $0x40] sm:$0xff]
    %v2237 = vld [vmem:[#allocation3 + $0x48] sm:$0xff]
    %v2238 = vld [vmem:[#allocation3 + $0x50] sm:$0xff]
    %v2239 = vld [vmem:[#allocation3 + $0x58] sm:$0xff]
    %v2240 = vld [vmem:[#allocation3 + $0x60] sm:$0xff]
    %v2241 = vld [vmem:[#allocation3 + $0x68] sm:$0xff]
    %v2242 = vld [vmem:[#allocation3 + $0x70] sm:$0xff]
    %v2243 = vld [vmem:[#allocation3 + $0x78] sm:$0xff]
    %v2244 = vld [vmem:[#allocation3 + $0x80] sm:$0xff]
    %v2245 = vld [vmem:[#allocation3 + $0x88] sm:$0xff]
    %v2246 = vld [vmem:[#allocation3 + $0x90] sm:$0xff]
    %v2247 = vld [vmem:[#allocation3 + $0x98] sm:$0xff]
    %v2248 = vld [vmem:[#allocation3 + $0xa0] sm:$0xff]
    %v2249 = vld [vmem:[#allocation3 + $0xa8] sm:$0xff]
    %v2250 = vld [vmem:[#allocation3 + $0xb0] sm:$0xff]
    %v2251 = vld [vmem:[#allocation3 + $0xb8] sm:$0xff]
    %v2252 = vld [vmem:[#allocation3 + $0xc0] sm:$0xff]
    %v2253 = vld [vmem:[#allocation3 + $0xc8] sm:$0xff]
    %v2254 = vld [vmem:[#allocation3 + $0xd0] sm:$0xff]
    %v2255 = vld [vmem:[#allocation3 + $0xd8] sm:$0xff]
    %v2256 = vld [vmem:[#allocation3 + $0xe0] sm:$0xff]
    %v2257 = vld [vmem:[#allocation3 + $0xe8] sm:$0xff]
    %v2258 = vld [vmem:[#allocation3 + $0xf0] sm:$0xff]
    %v2259 = vld [vmem:[#allocation3 + $0xf8] sm:$0xff]
    %2260 = vmatprep.subr.bf16.mxu0 0
    %2261 = vmatpush1.bf16.msra.mxu0 1065369472
    %2262 = vmatprep.subr.bf16.mxu0 0
    %2263 = vmatpush1.bf16.msra.mxu0 1065369472
    %2264 = vmatprep.subr.bf16.mxu0 0
    %2265 = vmatpush1.bf16.msra.mxu0 1065369472
    %2266 = vmatprep.subr.bf16.mxu0 0
    %2267 = vmatpush1.bf16.msra.mxu0 1065369472
    %2268 = vmatprep.subr.bf16.mxu0 0
    %2269 = vmatpush1.bf16.msra.mxu0 1065369472
    %2270 = vmatprep.subr.bf16.mxu0 0
    %2271 = vmatpush1.bf16.msra.mxu0 1065369472
    %2272 = vmatprep.subr.bf16.mxu0 0
    %2273 = vmatpush1.bf16.msra.mxu0 1065369472
    %2274 = vmatprep.subr.bf16.mxu0 0
    %2275 = vmatpush1.bf16.msra.mxu0 1065369472
    %2276 = vmatprep.subr.bf16.mxu0 0
    %2277 = vmatpush2.bf16.msra.mxu0 0
    %2278 = vmatprep.subr.bf16.mxu0 0
    %2279 = vmatpush2.bf16.msra.mxu0 0
    %2280 = vmatprep.subr.bf16.mxu0 0
    %2281 = vmatpush2.bf16.msra.mxu0 0
    %2282 = vmatprep.subr.bf16.mxu0 0
    %2283 = vmatpush2.bf16.msra.mxu0 0
    %2284 = vmatprep.subr.bf16.mxu0 0
    %2285 = vmatpush2.bf16.msra.mxu0 0
    %2286 = vmatprep.subr.bf16.mxu0 0
    %2287 = vmatpush2.bf16.msra.mxu0 0
    %2288 = vmatprep.subr.bf16.mxu0 0
    %2289 = vmatpush2.bf16.msra.mxu0 0
    %2290 = vmatprep.subr.bf16.mxu0 0
    %2291 = vmatpush2.bf16.msra.mxu0 0
    %2292 = vmatprep.mubr.bf16.mxu0 0
    %2293 = vmatmul.mubr.bf16.gmra.mxu0 %v2212
    %v2294 = vpop.f32.mrf.mxu0
    %v2295 = vadd.f32 0.0, %v2294
    %v2296 = vpop.f32.mrf.mxu0
    %v2297 = vpop.f32.mrf.mxu0
    %v2298 = vadd.f32 0.0, %v2297
    %v2299 = vpop.f32.mrf.mxu0
    %2300 = vmatprep.mubr.bf16.mxu0 0
    %2301 = vmatmul.mubr.bf16.gmra.mxu0 %v2213
    %v2302 = vpop.f32.mrf.mxu0
    %v2303 = vadd.f32 0.0, %v2302
    %v2304 = vpop.f32.mrf.mxu0
    %v2305 = vpop.f32.mrf.mxu0
    %v2306 = vadd.f32 0.0, %v2305
    %v2307 = vpop.f32.mrf.mxu0
    %2308 = vmatprep.mubr.bf16.mxu0 0
    %2309 = vmatmul.mubr.bf16.gmra.mxu0 %v2214
    %v2310 = vpop.f32.mrf.mxu0
    %v2311 = vadd.f32 0.0, %v2310
    %v2312 = vpop.f32.mrf.mxu0
    %v2313 = vpop.f32.mrf.mxu0
    %v2314 = vadd.f32 0.0, %v2313
    %v2315 = vpop.f32.mrf.mxu0
    %2316 = vmatprep.mubr.bf16.mxu0 0
    %2317 = vmatmul.mubr.bf16.gmra.mxu0 %v2215
    %v2318 = vpop.f32.mrf.mxu0
    %v2319 = vadd.f32 0.0, %v2318
    %v2320 = vpop.f32.mrf.mxu0
    %v2321 = vpop.f32.mrf.mxu0
    %v2322 = vadd.f32 0.0, %v2321
    %v2323 = vpop.f32.mrf.mxu0
    %2324 = vmatprep.mubr.bf16.mxu0 0
    %2325 = vmatmul.mubr.bf16.gmra.mxu0 %v2216
    %v2326 = vpop.f32.mrf.mxu0
    %v2327 = vadd.f32 0.0, %v2326
    %v2328 = vpop.f32.mrf.mxu0
    %v2329 = vpop.f32.mrf.mxu0
    %v2330 = vadd.f32 0.0, %v2329
    %v2331 = vpop.f32.mrf.mxu0
    %2332 = vmatprep.mubr.bf16.mxu0 0
    %2333 = vmatmul.mubr.bf16.gmra.mxu0 %v2217
    %v2334 = vpop.f32.mrf.mxu0
    %v2335 = vadd.f32 0.0, %v2334
    %v2336 = vpop.f32.mrf.mxu0
    %v2337 = vpop.f32.mrf.mxu0
    %v2338 = vadd.f32 0.0, %v2337
    %v2339 = vpop.f32.mrf.mxu0
    %2340 = vmatprep.mubr.bf16.mxu0 0
    %2341 = vmatmul.mubr.bf16.gmra.mxu0 %v2218
    %v2342 = vpop.f32.mrf.mxu0
    %v2343 = vadd.f32 0.0, %v2342
    %v2344 = vpop.f32.mrf.mxu0
    %v2345 = vpop.f32.mrf.mxu0
    %v2346 = vadd.f32 0.0, %v2345
    %v2347 = vpop.f32.mrf.mxu0
    %2348 = vmatprep.mubr.bf16.mxu0 0
    %2349 = vmatmul.mubr.bf16.gmra.mxu0 %v2219
    %v2350 = vpop.f32.mrf.mxu0
    %v2351 = vadd.f32 0.0, %v2350
    %v2352 = vpop.f32.mrf.mxu0
    %v2353 = vpop.f32.mrf.mxu0
    %v2354 = vadd.f32 0.0, %v2353
    %v2355 = vpop.f32.mrf.mxu0
    %2356 = vmatprep.mubr.bf16.mxu0 0
    %2357 = vmatmul.mubr.bf16.gmra.mxu0 %v2220
    %v2358 = vpop.f32.mrf.mxu0
    %v2359 = vadd.f32 0.0, %v2358
    %v2360 = vpop.f32.mrf.mxu0
    %v2361 = vpop.f32.mrf.mxu0
    %v2362 = vadd.f32 0.0, %v2361
    %v2363 = vpop.f32.mrf.mxu0
    %2364 = vmatprep.mubr.bf16.mxu0 0
    %2365 = vmatmul.mubr.bf16.gmra.mxu0 %v2221
    %v2366 = vpop.f32.mrf.mxu0
    %v2367 = vadd.f32 0.0, %v2366
    %v2368 = vpop.f32.mrf.mxu0
    %v2369 = vpop.f32.mrf.mxu0
    %v2370 = vadd.f32 0.0, %v2369
    %v2371 = vpop.f32.mrf.mxu0
    %2372 = vmatprep.mubr.bf16.mxu0 0
    %2373 = vmatmul.mubr.bf16.gmra.mxu0 %v2222
    %v2374 = vpop.f32.mrf.mxu0
    %v2375 = vadd.f32 0.0, %v2374
    %v2376 = vpop.f32.mrf.mxu0
    %v2377 = vpop.f32.mrf.mxu0
    %v2378 = vadd.f32 0.0, %v2377
    %v2379 = vpop.f32.mrf.mxu0
    %2380 = vmatprep.mubr.bf16.mxu0 0
    %2381 = vmatmul.mubr.bf16.gmra.mxu0 %v2223
    %v2382 = vpop.f32.mrf.mxu0
    %v2383 = vadd.f32 0.0, %v2382
    %v2384 = vpop.f32.mrf.mxu0
    %v2385 = vpop.f32.mrf.mxu0
    %v2386 = vadd.f32 0.0, %v2385
    %v2387 = vpop.f32.mrf.mxu0
    %2388 = vmatprep.mubr.bf16.mxu0 0
    %2389 = vmatmul.mubr.bf16.gmra.mxu0 %v2224
    %v2390 = vpop.f32.mrf.mxu0
    %v2391 = vadd.f32 0.0, %v2390
    %v2392 = vpop.f32.mrf.mxu0
    %v2393 = vpop.f32.mrf.mxu0
    %v2394 = vadd.f32 0.0, %v2393
    %v2395 = vpop.f32.mrf.mxu0
    %2396 = vmatprep.mubr.bf16.mxu0 0
    %2397 = vmatmul.mubr.bf16.gmra.mxu0 %v2225
    %v2398 = vpop.f32.mrf.mxu0
    %v2399 = vadd.f32 0.0, %v2398
    %v2400 = vpop.f32.mrf.mxu0
    %v2401 = vpop.f32.mrf.mxu0
    %v2402 = vadd.f32 0.0, %v2401
    %v2403 = vpop.f32.mrf.mxu0
    %2404 = vmatprep.mubr.bf16.mxu0 0
    %2405 = vmatmul.mubr.bf16.gmra.mxu0 %v2226
    %v2406 = vpop.f32.mrf.mxu0
    %v2407 = vadd.f32 0.0, %v2406
    %v2408 = vpop.f32.mrf.mxu0
    %v2409 = vpop.f32.mrf.mxu0
    %v2410 = vadd.f32 0.0, %v2409
    %v2411 = vpop.f32.mrf.mxu0
    %2412 = vmatprep.mubr.bf16.mxu0 0
    %2413 = vmatmul.mubr.bf16.gmra.mxu0 %v2227
    %v2414 = vpop.f32.mrf.mxu0
    %v2415 = vadd.f32 0.0, %v2414
    %v2416 = vpop.f32.mrf.mxu0
    %v2417 = vpop.f32.mrf.mxu0
    %v2418 = vadd.f32 0.0, %v2417
    %v2419 = vpop.f32.mrf.mxu0
    %2420 = vdwg.mxu0
    %v2421 = vadd.f32 %v2228, %v2295
    %v2422 = vadd.f32 %v2229, %v2298
    %v2423 = vadd.f32 %v2230, %v2303
    %v2424 = vadd.f32 %v2231, %v2306
    %v2425 = vadd.f32 %v2232, %v2311
    %v2426 = vadd.f32 %v2233, %v2314
    %v2427 = vadd.f32 %v2234, %v2319
    %v2428 = vadd.f32 %v2235, %v2322
    %v2429 = vadd.f32 %v2236, %v2327
    %v2430 = vadd.f32 %v2237, %v2330
    %v2431 = vadd.f32 %v2238, %v2335
    %v2432 = vadd.f32 %v2239, %v2338
    %v2433 = vadd.f32 %v2240, %v2343
    %v2434 = vadd.f32 %v2241, %v2346
    %v2435 = vadd.f32 %v2242, %v2351
    %v2436 = vadd.f32 %v2243, %v2354
    %v2437 = vadd.f32 %v2244, %v2359
    %v2438 = vadd.f32 %v2245, %v2362
    %v2439 = vadd.f32 %v2246, %v2367
    %v2440 = vadd.f32 %v2247, %v2370
    %v2441 = vadd.f32 %v2248, %v2375
    %v2442 = vadd.f32 %v2249, %v2378
    %v2443 = vadd.f32 %v2250, %v2383
    %v2444 = vadd.f32 %v2251, %v2386
    %v2445 = vadd.f32 %v2252, %v2391
    %v2446 = vadd.f32 %v2253, %v2394
    %v2447 = vadd.f32 %v2254, %v2399
    %v2448 = vadd.f32 %v2255, %v2402
    %v2449 = vadd.f32 %v2256, %v2407
    %v2450 = vadd.f32 %v2257, %v2410
    %v2451 = vadd.f32 %v2258, %v2415
    %v2452 = vadd.f32 %v2259, %v2418
    %2453 = vst.msk [vmem:[#allocation3] sm:$0xff] %vm736, %v2421
    %2454 = vst.msk [vmem:[#allocation3 + $0x8] sm:$0xff] %vm736, %v2422
    %2455 = vst.msk [vmem:[#allocation3 + $0x10] sm:$0xff] %vm736, %v2423
    %2456 = vst.msk [vmem:[#allocation3 + $0x18] sm:$0xff] %vm736, %v2424
    %2457 = vst.msk [vmem:[#allocation3 + $0x20] sm:$0xff] %vm736, %v2425
    %2458 = vst.msk [vmem:[#allocation3 + $0x28] sm:$0xff] %vm736, %v2426
    %2459 = vst.msk [vmem:[#allocation3 + $0x30] sm:$0xff] %vm736, %v2427
    %2460 = vst.msk [vmem:[#allocation3 + $0x38] sm:$0xff] %vm736, %v2428
    %2461 = vst.msk [vmem:[#allocation3 + $0x40] sm:$0xff] %vm736, %v2429
    %2462 = vst.msk [vmem:[#allocation3 + $0x48] sm:$0xff] %vm736, %v2430
    %2463 = vst.msk [vmem:[#allocation3 + $0x50] sm:$0xff] %vm736, %v2431
    %2464 = vst.msk [vmem:[#allocation3 + $0x58] sm:$0xff] %vm736, %v2432
    %2465 = vst.msk [vmem:[#allocation3 + $0x60] sm:$0xff] %vm736, %v2433
    %2466 = vst.msk [vmem:[#allocation3 + $0x68] sm:$0xff] %vm736, %v2434
    %2467 = vst.msk [vmem:[#allocation3 + $0x70] sm:$0xff] %vm736, %v2435
    %2468 = vst.msk [vmem:[#allocation3 + $0x78] sm:$0xff] %vm736, %v2436
    %2469 = vst.msk [vmem:[#allocation3 + $0x80] sm:$0xff] %vm736, %v2437
    %2470 = vst.msk [vmem:[#allocation3 + $0x88] sm:$0xff] %vm736, %v2438
    %2471 = vst.msk [vmem:[#allocation3 + $0x90] sm:$0xff] %vm736, %v2439
    %2472 = vst.msk [vmem:[#allocation3 + $0x98] sm:$0xff] %vm736, %v2440
    %2473 = vst.msk [vmem:[#allocation3 + $0xa0] sm:$0xff] %vm736, %v2441
    %2474 = vst.msk [vmem:[#allocation3 + $0xa8] sm:$0xff] %vm736, %v2442
    %2475 = vst.msk [vmem:[#allocation3 + $0xb0] sm:$0xff] %vm736, %v2443
    %2476 = vst.msk [vmem:[#allocation3 + $0xb8] sm:$0xff] %vm736, %v2444
    %2477 = vst.msk [vmem:[#allocation3 + $0xc0] sm:$0xff] %vm736, %v2445
    %2478 = vst.msk [vmem:[#allocation3 + $0xc8] sm:$0xff] %vm736, %v2446
    %2479 = vst.msk [vmem:[#allocation3 + $0xd0] sm:$0xff] %vm736, %v2447
    %2480 = vst.msk [vmem:[#allocation3 + $0xd8] sm:$0xff] %vm736, %v2448
    %2481 = vst.msk [vmem:[#allocation3 + $0xe0] sm:$0xff] %vm736, %v2449
    %2482 = vst.msk [vmem:[#allocation3 + $0xe8] sm:$0xff] %vm736, %v2450
    %2483 = vst.msk [vmem:[#allocation3 + $0xf0] sm:$0xff] %vm736, %v2451
    %2484 = vst.msk [vmem:[#allocation3 + $0xf8] sm:$0xff] %vm736, %v2452
    %s2485 = sadd.s32 0, 4
    %s2486 = scalar_lea.vmem [#allocation2], %s2485
    %v2487 = vld [vmem:[%s2486] sm:$0x1]
    %v2488 = vpack.c.bf16 %v2487, %v2487
    %v2490 = vpack.i.b16 %v2488, %v2488
    %v2492 = vlaneseq
    %v2493 = vshrl.u32 %v2492, 7
    %v2494 = vsub.s32 0, %v2493
    %v2495 = vrot.slane %v2490, %v2494
    %vm2496 = vcmp.le.bf16.partialorder %v2495, %v175
    %vm2497 = vcmp.le.bf16.partialorder %v2495, %v176
    %vm2498 = vcmp.le.bf16.partialorder %v2495, %v177
    %vm2499 = vcmp.le.bf16.partialorder %v2495, %v178
    %vm2500 = vcmp.le.bf16.partialorder %v2495, %v179
    %vm2501 = vcmp.le.bf16.partialorder %v2495, %v180
    %vm2502 = vcmp.le.bf16.partialorder %v2495, %v181
    %vm2503 = vcmp.le.bf16.partialorder %v2495, %v182
    %vm2504 = vcmp.le.bf16.partialorder %v2495, %v183
    %vm2505 = vcmp.le.bf16.partialorder %v2495, %v184
    %vm2506 = vcmp.le.bf16.partialorder %v2495, %v185
    %vm2507 = vcmp.le.bf16.partialorder %v2495, %v186
    %vm2508 = vcmp.le.bf16.partialorder %v2495, %v187
    %vm2509 = vcmp.le.bf16.partialorder %v2495, %v188
    %vm2510 = vcmp.le.bf16.partialorder %v2495, %v189
    %vm2511 = vcmp.le.bf16.partialorder %v2495, %v190
    %v2512 = vsel %vm2496, 65537, 0
    %v2513 = vsel %vm2497, 65537, 0
    %v2514 = vsel %vm2498, 65537, 0
    %v2515 = vsel %vm2499, 65537, 0
    %v2516 = vsel %vm2500, 65537, 0
    %v2517 = vsel %vm2501, 65537, 0
    %v2518 = vsel %vm2502, 65537, 0
    %v2519 = vsel %vm2503, 65537, 0
    %v2520 = vsel %vm2504, 65537, 0
    %v2521 = vsel %vm2505, 65537, 0
    %v2522 = vsel %vm2506, 65537, 0
    %v2523 = vsel %vm2507, 65537, 0
    %v2524 = vsel %vm2508, 65537, 0
    %v2525 = vsel %vm2509, 65537, 0
    %v2526 = vsel %vm2510, 65537, 0
    %v2527 = vsel %vm2511, 65537, 0
    %v2528 = vunpack.c.l.b16 %v2512
    %v2529 = vunpack.c.h.b16 %v2512
    %v2530 = vunpack.c.l.b16 %v2513
    %v2531 = vunpack.c.h.b16 %v2513
    %v2532 = vunpack.c.l.b16 %v2514
    %v2533 = vunpack.c.h.b16 %v2514
    %v2534 = vunpack.c.l.b16 %v2515
    %v2535 = vunpack.c.h.b16 %v2515
    %v2536 = vunpack.c.l.b16 %v2516
    %v2537 = vunpack.c.h.b16 %v2516
    %v2538 = vunpack.c.l.b16 %v2517
    %v2539 = vunpack.c.h.b16 %v2517
    %v2540 = vunpack.c.l.b16 %v2518
    %v2541 = vunpack.c.h.b16 %v2518
    %v2542 = vunpack.c.l.b16 %v2519
    %v2543 = vunpack.c.h.b16 %v2519
    %v2544 = vunpack.c.l.b16 %v2520
    %v2545 = vunpack.c.h.b16 %v2520
    %v2546 = vunpack.c.l.b16 %v2521
    %v2547 = vunpack.c.h.b16 %v2521
    %v2548 = vunpack.c.l.b16 %v2522
    %v2549 = vunpack.c.h.b16 %v2522
    %v2550 = vunpack.c.l.b16 %v2523
    %v2551 = vunpack.c.h.b16 %v2523
    %v2552 = vunpack.c.l.b16 %v2524
    %v2553 = vunpack.c.h.b16 %v2524
    %v2554 = vunpack.c.l.b16 %v2525
    %v2555 = vunpack.c.h.b16 %v2525
    %v2556 = vunpack.c.l.b16 %v2526
    %v2557 = vunpack.c.h.b16 %v2526
    %v2558 = vunpack.c.l.b16 %v2527
    %v2559 = vunpack.c.h.b16 %v2527
    %v2560 = vpack.c.b16 %v2528, %v2528
    %v2561 = vpack.c.b16 %v2529, %v2529
    %v2562 = vpack.c.b16 %v2530, %v2530
    %v2563 = vpack.c.b16 %v2531, %v2531
    %v2564 = vpack.c.b16 %v2532, %v2532
    %v2565 = vpack.c.b16 %v2533, %v2533
    %v2566 = vpack.c.b16 %v2534, %v2534
    %v2567 = vpack.c.b16 %v2535, %v2535
    %v2568 = vpack.c.b16 %v2536, %v2536
    %v2569 = vpack.c.b16 %v2537, %v2537
    %v2570 = vpack.c.b16 %v2538, %v2538
    %v2571 = vpack.c.b16 %v2539, %v2539
    %v2572 = vpack.c.b16 %v2540, %v2540
    %v2573 = vpack.c.b16 %v2541, %v2541
    %v2574 = vpack.c.b16 %v2542, %v2542
    %v2575 = vpack.c.b16 %v2543, %v2543
    %v2576 = vpack.c.b16 %v2544, %v2544
    %v2577 = vpack.c.b16 %v2545, %v2545
    %v2578 = vpack.c.b16 %v2546, %v2546
    %v2579 = vpack.c.b16 %v2547, %v2547
    %v2580 = vpack.c.b16 %v2548, %v2548
    %v2581 = vpack.c.b16 %v2549, %v2549
    %v2582 = vpack.c.b16 %v2550, %v2550
    %v2583 = vpack.c.b16 %v2551, %v2551
    %v2584 = vpack.c.b16 %v2552, %v2552
    %v2585 = vpack.c.b16 %v2553, %v2553
    %v2586 = vpack.c.b16 %v2554, %v2554
    %v2587 = vpack.c.b16 %v2555, %v2555
    %v2588 = vpack.c.b16 %v2556, %v2556
    %v2589 = vpack.c.b16 %v2557, %v2557
    %v2590 = vpack.c.b16 %v2558, %v2558
    %v2591 = vpack.c.b16 %v2559, %v2559
    %vm2592 = vcmp.ne.s16.totalorder %v2560, 0
    %vm2593 = vcmp.ne.s16.totalorder %v2561, 0
    %vm2594 = vcmp.ne.s16.totalorder %v2562, 0
    %vm2595 = vcmp.ne.s16.totalorder %v2563, 0
    %vm2596 = vcmp.ne.s16.totalorder %v2564, 0
    %vm2597 = vcmp.ne.s16.totalorder %v2565, 0
    %vm2598 = vcmp.ne.s16.totalorder %v2566, 0
    %vm2599 = vcmp.ne.s16.totalorder %v2567, 0
    %vm2600 = vcmp.ne.s16.totalorder %v2568, 0
    %vm2601 = vcmp.ne.s16.totalorder %v2569, 0
    %vm2602 = vcmp.ne.s16.totalorder %v2570, 0
    %vm2603 = vcmp.ne.s16.totalorder %v2571, 0
    %vm2604 = vcmp.ne.s16.totalorder %v2572, 0
    %vm2605 = vcmp.ne.s16.totalorder %v2573, 0
    %vm2606 = vcmp.ne.s16.totalorder %v2574, 0
    %vm2607 = vcmp.ne.s16.totalorder %v2575, 0
    %vm2608 = vcmp.ne.s16.totalorder %v2576, 0
    %vm2609 = vcmp.ne.s16.totalorder %v2577, 0
    %vm2610 = vcmp.ne.s16.totalorder %v2578, 0
    %vm2611 = vcmp.ne.s16.totalorder %v2579, 0
    %vm2612 = vcmp.ne.s16.totalorder %v2580, 0
    %vm2613 = vcmp.ne.s16.totalorder %v2581, 0
    %vm2614 = vcmp.ne.s16.totalorder %v2582, 0
    %vm2615 = vcmp.ne.s16.totalorder %v2583, 0
    %vm2616 = vcmp.ne.s16.totalorder %v2584, 0
    %vm2617 = vcmp.ne.s16.totalorder %v2585, 0
    %vm2618 = vcmp.ne.s16.totalorder %v2586, 0
    %vm2619 = vcmp.ne.s16.totalorder %v2587, 0
    %vm2620 = vcmp.ne.s16.totalorder %v2588, 0
    %vm2621 = vcmp.ne.s16.totalorder %v2589, 0
    %vm2622 = vcmp.ne.s16.totalorder %v2590, 0
    %vm2623 = vcmp.ne.s16.totalorder %v2591, 0
    %v2624 = vsel %vm2592, 65537, 0
    %v2625 = vsel %vm2593, 65537, 0
    %v2626 = vsel %vm2594, 65537, 0
    %v2627 = vsel %vm2595, 65537, 0
    %v2628 = vsel %vm2596, 65537, 0
    %v2629 = vsel %vm2597, 65537, 0
    %v2630 = vsel %vm2598, 65537, 0
    %v2631 = vsel %vm2599, 65537, 0
    %v2632 = vsel %vm2600, 65537, 0
    %v2633 = vsel %vm2601, 65537, 0
    %v2634 = vsel %vm2602, 65537, 0
    %v2635 = vsel %vm2603, 65537, 0
    %v2636 = vsel %vm2604, 65537, 0
    %v2637 = vsel %vm2605, 65537, 0
    %v2638 = vsel %vm2606, 65537, 0
    %v2639 = vsel %vm2607, 65537, 0
    %v2640 = vsel %vm2608, 65537, 0
    %v2641 = vsel %vm2609, 65537, 0
    %v2642 = vsel %vm2610, 65537, 0
    %v2643 = vsel %vm2611, 65537, 0
    %v2644 = vsel %vm2612, 65537, 0
    %v2645 = vsel %vm2613, 65537, 0
    %v2646 = vsel %vm2614, 65537, 0
    %v2647 = vsel %vm2615, 65537, 0
    %v2648 = vsel %vm2616, 65537, 0
    %v2649 = vsel %vm2617, 65537, 0
    %v2650 = vsel %vm2618, 65537, 0
    %v2651 = vsel %vm2619, 65537, 0
    %v2652 = vsel %vm2620, 65537, 0
    %v2653 = vsel %vm2621, 65537, 0
    %v2654 = vsel %vm2622, 65537, 0
    %v2655 = vsel %vm2623, 65537, 0
    %v2656 = vunpack.c.l.b16 %v2624
    %v2657 = vunpack.c.l.b16 %v2625
    %v2658 = vunpack.c.l.b16 %v2626
    %v2659 = vunpack.c.l.b16 %v2627
    %v2660 = vunpack.c.l.b16 %v2628
    %v2661 = vunpack.c.l.b16 %v2629
    %v2662 = vunpack.c.l.b16 %v2630
    %v2663 = vunpack.c.l.b16 %v2631
    %v2664 = vunpack.c.l.b16 %v2632
    %v2665 = vunpack.c.l.b16 %v2633
    %v2666 = vunpack.c.l.b16 %v2634
    %v2667 = vunpack.c.l.b16 %v2635
    %v2668 = vunpack.c.l.b16 %v2636
    %v2669 = vunpack.c.l.b16 %v2637
    %v2670 = vunpack.c.l.b16 %v2638
    %v2671 = vunpack.c.l.b16 %v2639
    %v2672 = vunpack.c.l.b16 %v2640
    %v2673 = vunpack.c.l.b16 %v2641
    %v2674 = vunpack.c.l.b16 %v2642
    %v2675 = vunpack.c.l.b16 %v2643
    %v2676 = vunpack.c.l.b16 %v2644
    %v2677 = vunpack.c.l.b16 %v2645
    %v2678 = vunpack.c.l.b16 %v2646
    %v2679 = vunpack.c.l.b16 %v2647
    %v2680 = vunpack.c.l.b16 %v2648
    %v2681 = vunpack.c.l.b16 %v2649
    %v2682 = vunpack.c.l.b16 %v2650
    %v2683 = vunpack.c.l.b16 %v2651
    %v2684 = vunpack.c.l.b16 %v2652
    %v2685 = vunpack.c.l.b16 %v2653
    %v2686 = vunpack.c.l.b16 %v2654
    %v2687 = vunpack.c.l.b16 %v2655
    %vm2688 = vcmp.ne.s32.totalorder %v2656, 0
    %vm2689 = vcmp.ne.s32.totalorder %v2657, 0
    %vm2690 = vcmp.ne.s32.totalorder %v2658, 0
    %vm2691 = vcmp.ne.s32.totalorder %v2659, 0
    %vm2692 = vcmp.ne.s32.totalorder %v2660, 0
    %vm2693 = vcmp.ne.s32.totalorder %v2661, 0
    %vm2694 = vcmp.ne.s32.totalorder %v2662, 0
    %vm2695 = vcmp.ne.s32.totalorder %v2663, 0
    %vm2696 = vcmp.ne.s32.totalorder %v2664, 0
    %vm2697 = vcmp.ne.s32.totalorder %v2665, 0
    %vm2698 = vcmp.ne.s32.totalorder %v2666, 0
    %vm2699 = vcmp.ne.s32.totalorder %v2667, 0
    %vm2700 = vcmp.ne.s32.totalorder %v2668, 0
    %vm2701 = vcmp.ne.s32.totalorder %v2669, 0
    %vm2702 = vcmp.ne.s32.totalorder %v2670, 0
    %vm2703 = vcmp.ne.s32.totalorder %v2671, 0
    %vm2704 = vcmp.ne.s32.totalorder %v2672, 0
    %vm2705 = vcmp.ne.s32.totalorder %v2673, 0
    %vm2706 = vcmp.ne.s32.totalorder %v2674, 0
    %vm2707 = vcmp.ne.s32.totalorder %v2675, 0
    %vm2708 = vcmp.ne.s32.totalorder %v2676, 0
    %vm2709 = vcmp.ne.s32.totalorder %v2677, 0
    %vm2710 = vcmp.ne.s32.totalorder %v2678, 0
    %vm2711 = vcmp.ne.s32.totalorder %v2679, 0
    %vm2712 = vcmp.ne.s32.totalorder %v2680, 0
    %vm2713 = vcmp.ne.s32.totalorder %v2681, 0
    %vm2714 = vcmp.ne.s32.totalorder %v2682, 0
    %vm2715 = vcmp.ne.s32.totalorder %v2683, 0
    %vm2716 = vcmp.ne.s32.totalorder %v2684, 0
    %vm2717 = vcmp.ne.s32.totalorder %v2685, 0
    %vm2718 = vcmp.ne.s32.totalorder %v2686, 0
    %vm2719 = vcmp.ne.s32.totalorder %v2687, 0
    %v2720 = vsel %vm2688, 1, 0
    %v2721 = vsel %vm2689, 1, 0
    %v2722 = vsel %vm2690, 1, 0
    %v2723 = vsel %vm2691, 1, 0
    %v2724 = vsel %vm2692, 1, 0
    %v2725 = vsel %vm2693, 1, 0
    %v2726 = vsel %vm2694, 1, 0
    %v2727 = vsel %vm2695, 1, 0
    %v2728 = vsel %vm2696, 1, 0
    %v2729 = vsel %vm2697, 1, 0
    %v2730 = vsel %vm2698, 1, 0
    %v2731 = vsel %vm2699, 1, 0
    %v2732 = vsel %vm2700, 1, 0
    %v2733 = vsel %vm2701, 1, 0
    %v2734 = vsel %vm2702, 1, 0
    %v2735 = vsel %vm2703, 1, 0
    %v2736 = vsel %vm2704, 1, 0
    %v2737 = vsel %vm2705, 1, 0
    %v2738 = vsel %vm2706, 1, 0
    %v2739 = vsel %vm2707, 1, 0
    %v2740 = vsel %vm2708, 1, 0
    %v2741 = vsel %vm2709, 1, 0
    %v2742 = vsel %vm2710, 1, 0
    %v2743 = vsel %vm2711, 1, 0
    %v2744 = vsel %vm2712, 1, 0
    %v2745 = vsel %vm2713, 1, 0
    %v2746 = vsel %vm2714, 1, 0
    %v2747 = vsel %vm2715, 1, 0
    %v2748 = vsel %vm2716, 1, 0
    %v2749 = vsel %vm2717, 1, 0
    %v2750 = vsel %vm2718, 1, 0
    %v2751 = vsel %vm2719, 1, 0
    %v2752 = vcvt.s32.f32 %v2720
    %v2753 = vcvt.s32.f32 %v2721
    %v2754 = vcvt.s32.f32 %v2722
    %v2755 = vcvt.s32.f32 %v2723
    %v2756 = vcvt.s32.f32 %v2724
    %v2757 = vcvt.s32.f32 %v2725
    %v2758 = vcvt.s32.f32 %v2726
    %v2759 = vcvt.s32.f32 %v2727
    %v2760 = vcvt.s32.f32 %v2728
    %v2761 = vcvt.s32.f32 %v2729
    %v2762 = vcvt.s32.f32 %v2730
    %v2763 = vcvt.s32.f32 %v2731
    %v2764 = vcvt.s32.f32 %v2732
    %v2765 = vcvt.s32.f32 %v2733
    %v2766 = vcvt.s32.f32 %v2734
    %v2767 = vcvt.s32.f32 %v2735
    %v2768 = vcvt.s32.f32 %v2736
    %v2769 = vcvt.s32.f32 %v2737
    %v2770 = vcvt.s32.f32 %v2738
    %v2771 = vcvt.s32.f32 %v2739
    %v2772 = vcvt.s32.f32 %v2740
    %v2773 = vcvt.s32.f32 %v2741
    %v2774 = vcvt.s32.f32 %v2742
    %v2775 = vcvt.s32.f32 %v2743
    %v2776 = vcvt.s32.f32 %v2744
    %v2777 = vcvt.s32.f32 %v2745
    %v2778 = vcvt.s32.f32 %v2746
    %v2779 = vcvt.s32.f32 %v2747
    %v2780 = vcvt.s32.f32 %v2748
    %v2781 = vcvt.s32.f32 %v2749
    %v2782 = vcvt.s32.f32 %v2750
    %v2783 = vcvt.s32.f32 %v2751
    %v2784 = vpack.c.bf16 %v2753, %v2752
    %v2785 = vpack.c.bf16 %v2755, %v2754
    %v2786 = vpack.c.bf16 %v2757, %v2756
    %v2787 = vpack.c.bf16 %v2759, %v2758
    %v2788 = vpack.c.bf16 %v2761, %v2760
    %v2789 = vpack.c.bf16 %v2763, %v2762
    %v2790 = vpack.c.bf16 %v2765, %v2764
    %v2791 = vpack.c.bf16 %v2767, %v2766
    %v2792 = vpack.c.bf16 %v2769, %v2768
    %v2793 = vpack.c.bf16 %v2771, %v2770
    %v2794 = vpack.c.bf16 %v2773, %v2772
    %v2795 = vpack.c.bf16 %v2775, %v2774
    %v2796 = vpack.c.bf16 %v2777, %v2776
    %v2797 = vpack.c.bf16 %v2779, %v2778
    %v2798 = vpack.c.bf16 %v2781, %v2780
    %v2799 = vpack.c.bf16 %v2783, %v2782
    %v2800 = vld [vmem:[#allocation3] sm:$0xff]
    %v2801 = vld [vmem:[#allocation3 + $0x8] sm:$0xff]
    %v2802 = vld [vmem:[#allocation3 + $0x10] sm:$0xff]
    %v2803 = vld [vmem:[#allocation3 + $0x18] sm:$0xff]
    %v2804 = vld [vmem:[#allocation3 + $0x20] sm:$0xff]
    %v2805 = vld [vmem:[#allocation3 + $0x28] sm:$0xff]
    %v2806 = vld [vmem:[#allocation3 + $0x30] sm:$0xff]
    %v2807 = vld [vmem:[#allocation3 + $0x38] sm:$0xff]
    %v2808 = vld [vmem:[#allocation3 + $0x40] sm:$0xff]
    %v2809 = vld [vmem:[#allocation3 + $0x48] sm:$0xff]
    %v2810 = vld [vmem:[#allocation3 + $0x50] sm:$0xff]
    %v2811 = vld [vmem:[#allocation3 + $0x58] sm:$0xff]
    %v2812 = vld [vmem:[#allocation3 + $0x60] sm:$0xff]
    %v2813 = vld [vmem:[#allocation3 + $0x68] sm:$0xff]
    %v2814 = vld [vmem:[#allocation3 + $0x70] sm:$0xff]
    %v2815 = vld [vmem:[#allocation3 + $0x78] sm:$0xff]
    %v2816 = vld [vmem:[#allocation3 + $0x80] sm:$0xff]
    %v2817 = vld [vmem:[#allocation3 + $0x88] sm:$0xff]
    %v2818 = vld [vmem:[#allocation3 + $0x90] sm:$0xff]
    %v2819 = vld [vmem:[#allocation3 + $0x98] sm:$0xff]
    %v2820 = vld [vmem:[#allocation3 + $0xa0] sm:$0xff]
    %v2821 = vld [vmem:[#allocation3 + $0xa8] sm:$0xff]
    %v2822 = vld [vmem:[#allocation3 + $0xb0] sm:$0xff]
    %v2823 = vld [vmem:[#allocation3 + $0xb8] sm:$0xff]
    %v2824 = vld [vmem:[#allocation3 + $0xc0] sm:$0xff]
    %v2825 = vld [vmem:[#allocation3 + $0xc8] sm:$0xff]
    %v2826 = vld [vmem:[#allocation3 + $0xd0] sm:$0xff]
    %v2827 = vld [vmem:[#allocation3 + $0xd8] sm:$0xff]
    %v2828 = vld [vmem:[#allocation3 + $0xe0] sm:$0xff]
    %v2829 = vld [vmem:[#allocation3 + $0xe8] sm:$0xff]
    %v2830 = vld [vmem:[#allocation3 + $0xf0] sm:$0xff]
    %v2831 = vld [vmem:[#allocation3 + $0xf8] sm:$0xff]
    %2832 = vmatprep.subr.bf16.mxu0 0
    %2833 = vmatpush1.bf16.msra.mxu0 1065369472
    %2834 = vmatprep.subr.bf16.mxu0 0
    %2835 = vmatpush1.bf16.msra.mxu0 1065369472
    %2836 = vmatprep.subr.bf16.mxu0 0
    %2837 = vmatpush1.bf16.msra.mxu0 1065369472
    %2838 = vmatprep.subr.bf16.mxu0 0
    %2839 = vmatpush1.bf16.msra.mxu0 1065369472
    %2840 = vmatprep.subr.bf16.mxu0 0
    %2841 = vmatpush1.bf16.msra.mxu0 1065369472
    %2842 = vmatprep.subr.bf16.mxu0 0
    %2843 = vmatpush1.bf16.msra.mxu0 1065369472
    %2844 = vmatprep.subr.bf16.mxu0 0
    %2845 = vmatpush1.bf16.msra.mxu0 1065369472
    %2846 = vmatprep.subr.bf16.mxu0 0
    %2847 = vmatpush1.bf16.msra.mxu0 1065369472
    %2848 = vmatprep.subr.bf16.mxu0 0
    %2849 = vmatpush2.bf16.msra.mxu0 0
    %2850 = vmatprep.subr.bf16.mxu0 0
    %2851 = vmatpush2.bf16.msra.mxu0 0
    %2852 = vmatprep.subr.bf16.mxu0 0
    %2853 = vmatpush2.bf16.msra.mxu0 0
    %2854 = vmatprep.subr.bf16.mxu0 0
    %2855 = vmatpush2.bf16.msra.mxu0 0
    %2856 = vmatprep.subr.bf16.mxu0 0
    %2857 = vmatpush2.bf16.msra.mxu0 0
    %2858 = vmatprep.subr.bf16.mxu0 0
    %2859 = vmatpush2.bf16.msra.mxu0 0
    %2860 = vmatprep.subr.bf16.mxu0 0
    %2861 = vmatpush2.bf16.msra.mxu0 0
    %2862 = vmatprep.subr.bf16.mxu0 0
    %2863 = vmatpush2.bf16.msra.mxu0 0
    %2864 = vmatprep.mubr.bf16.mxu0 0
    %2865 = vmatmul.mubr.bf16.gmra.mxu0 %v2784
    %v2866 = vpop.f32.mrf.mxu0
    %v2867 = vadd.f32 0.0, %v2866
    %v2868 = vpop.f32.mrf.mxu0
    %v2869 = vpop.f32.mrf.mxu0
    %v2870 = vadd.f32 0.0, %v2869
    %v2871 = vpop.f32.mrf.mxu0
    %2872 = vmatprep.mubr.bf16.mxu0 0
    %2873 = vmatmul.mubr.bf16.gmra.mxu0 %v2785
    %v2874 = vpop.f32.mrf.mxu0
    %v2875 = vadd.f32 0.0, %v2874
    %v2876 = vpop.f32.mrf.mxu0
    %v2877 = vpop.f32.mrf.mxu0
    %v2878 = vadd.f32 0.0, %v2877
    %v2879 = vpop.f32.mrf.mxu0
    %2880 = vmatprep.mubr.bf16.mxu0 0
    %2881 = vmatmul.mubr.bf16.gmra.mxu0 %v2786
    %v2882 = vpop.f32.mrf.mxu0
    %v2883 = vadd.f32 0.0, %v2882
    %v2884 = vpop.f32.mrf.mxu0
    %v2885 = vpop.f32.mrf.mxu0
    %v2886 = vadd.f32 0.0, %v2885
    %v2887 = vpop.f32.mrf.mxu0
    %2888 = vmatprep.mubr.bf16.mxu0 0
    %2889 = vmatmul.mubr.bf16.gmra.mxu0 %v2787
    %v2890 = vpop.f32.mrf.mxu0
    %v2891 = vadd.f32 0.0, %v2890
    %v2892 = vpop.f32.mrf.mxu0
    %v2893 = vpop.f32.mrf.mxu0
    %v2894 = vadd.f32 0.0, %v2893
    %v2895 = vpop.f32.mrf.mxu0
    %2896 = vmatprep.mubr.bf16.mxu0 0
    %2897 = vmatmul.mubr.bf16.gmra.mxu0 %v2788
    %v2898 = vpop.f32.mrf.mxu0
    %v2899 = vadd.f32 0.0, %v2898
    %v2900 = vpop.f32.mrf.mxu0
    %v2901 = vpop.f32.mrf.mxu0
    %v2902 = vadd.f32 0.0, %v2901
    %v2903 = vpop.f32.mrf.mxu0
    %2904 = vmatprep.mubr.bf16.mxu0 0
    %2905 = vmatmul.mubr.bf16.gmra.mxu0 %v2789
    %v2906 = vpop.f32.mrf.mxu0
    %v2907 = vadd.f32 0.0, %v2906
    %v2908 = vpop.f32.mrf.mxu0
    %v2909 = vpop.f32.mrf.mxu0
    %v2910 = vadd.f32 0.0, %v2909
    %v2911 = vpop.f32.mrf.mxu0
    %2912 = vmatprep.mubr.bf16.mxu0 0
    %2913 = vmatmul.mubr.bf16.gmra.mxu0 %v2790
    %v2914 = vpop.f32.mrf.mxu0
    %v2915 = vadd.f32 0.0, %v2914
    %v2916 = vpop.f32.mrf.mxu0
    %v2917 = vpop.f32.mrf.mxu0
    %v2918 = vadd.f32 0.0, %v2917
    %v2919 = vpop.f32.mrf.mxu0
    %2920 = vmatprep.mubr.bf16.mxu0 0
    %2921 = vmatmul.mubr.bf16.gmra.mxu0 %v2791
    %v2922 = vpop.f32.mrf.mxu0
    %v2923 = vadd.f32 0.0, %v2922
    %v2924 = vpop.f32.mrf.mxu0
    %v2925 = vpop.f32.mrf.mxu0
    %v2926 = vadd.f32 0.0, %v2925
    %v2927 = vpop.f32.mrf.mxu0
    %2928 = vmatprep.mubr.bf16.mxu0 0
    %2929 = vmatmul.mubr.bf16.gmra.mxu0 %v2792
    %v2930 = vpop.f32.mrf.mxu0
    %v2931 = vadd.f32 0.0, %v2930
    %v2932 = vpop.f32.mrf.mxu0
    %v2933 = vpop.f32.mrf.mxu0
    %v2934 = vadd.f32 0.0, %v2933
    %v2935 = vpop.f32.mrf.mxu0
    %2936 = vmatprep.mubr.bf16.mxu0 0
    %2937 = vmatmul.mubr.bf16.gmra.mxu0 %v2793
    %v2938 = vpop.f32.mrf.mxu0
    %v2939 = vadd.f32 0.0, %v2938
    %v2940 = vpop.f32.mrf.mxu0
    %v2941 = vpop.f32.mrf.mxu0
    %v2942 = vadd.f32 0.0, %v2941
    %v2943 = vpop.f32.mrf.mxu0
    %2944 = vmatprep.mubr.bf16.mxu0 0
    %2945 = vmatmul.mubr.bf16.gmra.mxu0 %v2794
    %v2946 = vpop.f32.mrf.mxu0
    %v2947 = vadd.f32 0.0, %v2946
    %v2948 = vpop.f32.mrf.mxu0
    %v2949 = vpop.f32.mrf.mxu0
    %v2950 = vadd.f32 0.0, %v2949
    %v2951 = vpop.f32.mrf.mxu0
    %2952 = vmatprep.mubr.bf16.mxu0 0
    %2953 = vmatmul.mubr.bf16.gmra.mxu0 %v2795
    %v2954 = vpop.f32.mrf.mxu0
    %v2955 = vadd.f32 0.0, %v2954
    %v2956 = vpop.f32.mrf.mxu0
    %v2957 = vpop.f32.mrf.mxu0
    %v2958 = vadd.f32 0.0, %v2957
    %v2959 = vpop.f32.mrf.mxu0
    %2960 = vmatprep.mubr.bf16.mxu0 0
    %2961 = vmatmul.mubr.bf16.gmra.mxu0 %v2796
    %v2962 = vpop.f32.mrf.mxu0
    %v2963 = vadd.f32 0.0, %v2962
    %v2964 = vpop.f32.mrf.mxu0
    %v2965 = vpop.f32.mrf.mxu0
    %v2966 = vadd.f32 0.0, %v2965
    %v2967 = vpop.f32.mrf.mxu0
    %2968 = vmatprep.mubr.bf16.mxu0 0
    %2969 = vmatmul.mubr.bf16.gmra.mxu0 %v2797
    %v2970 = vpop.f32.mrf.mxu0
    %v2971 = vadd.f32 0.0, %v2970
    %v2972 = vpop.f32.mrf.mxu0
    %v2973 = vpop.f32.mrf.mxu0
    %v2974 = vadd.f32 0.0, %v2973
    %v2975 = vpop.f32.mrf.mxu0
    %2976 = vmatprep.mubr.bf16.mxu0 0
    %2977 = vmatmul.mubr.bf16.gmra.mxu0 %v2798
    %v2978 = vpop.f32.mrf.mxu0
    %v2979 = vadd.f32 0.0, %v2978
    %v2980 = vpop.f32.mrf.mxu0
    %v2981 = vpop.f32.mrf.mxu0
    %v2982 = vadd.f32 0.0, %v2981
    %v2983 = vpop.f32.mrf.mxu0
    %2984 = vmatprep.mubr.bf16.mxu0 0
    %2985 = vmatmul.mubr.bf16.gmra.mxu0 %v2799
    %v2986 = vpop.f32.mrf.mxu0
    %v2987 = vadd.f32 0.0, %v2986
    %v2988 = vpop.f32.mrf.mxu0
    %v2989 = vpop.f32.mrf.mxu0
    %v2990 = vadd.f32 0.0, %v2989
    %v2991 = vpop.f32.mrf.mxu0
    %2992 = vdwg.mxu0
    %v2993 = vadd.f32 %v2800, %v2867
    %v2994 = vadd.f32 %v2801, %v2870
    %v2995 = vadd.f32 %v2802, %v2875
    %v2996 = vadd.f32 %v2803, %v2878
    %v2997 = vadd.f32 %v2804, %v2883
    %v2998 = vadd.f32 %v2805, %v2886
    %v2999 = vadd.f32 %v2806, %v2891
    %v3000 = vadd.f32 %v2807, %v2894
    %v3001 = vadd.f32 %v2808, %v2899
    %v3002 = vadd.f32 %v2809, %v2902
    %v3003 = vadd.f32 %v2810, %v2907
    %v3004 = vadd.f32 %v2811, %v2910
    %v3005 = vadd.f32 %v2812, %v2915
    %v3006 = vadd.f32 %v2813, %v2918
    %v3007 = vadd.f32 %v2814, %v2923
    %v3008 = vadd.f32 %v2815, %v2926
    %v3009 = vadd.f32 %v2816, %v2931
    %v3010 = vadd.f32 %v2817, %v2934
    %v3011 = vadd.f32 %v2818, %v2939
    %v3012 = vadd.f32 %v2819, %v2942
    %v3013 = vadd.f32 %v2820, %v2947
    %v3014 = vadd.f32 %v2821, %v2950
    %v3015 = vadd.f32 %v2822, %v2955
    %v3016 = vadd.f32 %v2823, %v2958
    %v3017 = vadd.f32 %v2824, %v2963
    %v3018 = vadd.f32 %v2825, %v2966
    %v3019 = vadd.f32 %v2826, %v2971
    %v3020 = vadd.f32 %v2827, %v2974
    %v3021 = vadd.f32 %v2828, %v2979
    %v3022 = vadd.f32 %v2829, %v2982
    %v3023 = vadd.f32 %v2830, %v2987
    %v3024 = vadd.f32 %v2831, %v2990
    %3025 = vst.msk [vmem:[#allocation3] sm:$0xff] %vm736, %v2993
    %3026 = vst.msk [vmem:[#allocation3 + $0x8] sm:$0xff] %vm736, %v2994
    %3027 = vst.msk [vmem:[#allocation3 + $0x10] sm:$0xff] %vm736, %v2995
    %3028 = vst.msk [vmem:[#allocation3 + $0x18] sm:$0xff] %vm736, %v2996
    %3029 = vst.msk [vmem:[#allocation3 + $0x20] sm:$0xff] %vm736, %v2997
    %3030 = vst.msk [vmem:[#allocation3 + $0x28] sm:$0xff] %vm736, %v2998
    %3031 = vst.msk [vmem:[#allocation3 + $0x30] sm:$0xff] %vm736, %v2999
    %3032 = vst.msk [vmem:[#allocation3 + $0x38] sm:$0xff] %vm736, %v3000
    %3033 = vst.msk [vmem:[#allocation3 + $0x40] sm:$0xff] %vm736, %v3001
    %3034 = vst.msk [vmem:[#allocation3 + $0x48] sm:$0xff] %vm736, %v3002
    %3035 = vst.msk [vmem:[#allocation3 + $0x50] sm:$0xff] %vm736, %v3003
    %3036 = vst.msk [vmem:[#allocation3 + $0x58] sm:$0xff] %vm736, %v3004
    %3037 = vst.msk [vmem:[#allocation3 + $0x60] sm:$0xff] %vm736, %v3005
    %3038 = vst.msk [vmem:[#allocation3 + $0x68] sm:$0xff] %vm736, %v3006
    %3039 = vst.msk [vmem:[#allocation3 + $0x70] sm:$0xff] %vm736, %v3007
    %3040 = vst.msk [vmem:[#allocation3 + $0x78] sm:$0xff] %vm736, %v3008
    %3041 = vst.msk [vmem:[#allocation3 + $0x80] sm:$0xff] %vm736, %v3009
    %3042 = vst.msk [vmem:[#allocation3 + $0x88] sm:$0xff] %vm736, %v3010
    %3043 = vst.msk [vmem:[#allocation3 + $0x90] sm:$0xff] %vm736, %v3011
    %3044 = vst.msk [vmem:[#allocation3 + $0x98] sm:$0xff] %vm736, %v3012
    %3045 = vst.msk [vmem:[#allocation3 + $0xa0] sm:$0xff] %vm736, %v3013
    %3046 = vst.msk [vmem:[#allocation3 + $0xa8] sm:$0xff] %vm736, %v3014
    %3047 = vst.msk [vmem:[#allocation3 + $0xb0] sm:$0xff] %vm736, %v3015
    %3048 = vst.msk [vmem:[#allocation3 + $0xb8] sm:$0xff] %vm736, %v3016
    %3049 = vst.msk [vmem:[#allocation3 + $0xc0] sm:$0xff] %vm736, %v3017
    %3050 = vst.msk [vmem:[#allocation3 + $0xc8] sm:$0xff] %vm736, %v3018
    %3051 = vst.msk [vmem:[#allocation3 + $0xd0] sm:$0xff] %vm736, %v3019
    %3052 = vst.msk [vmem:[#allocation3 + $0xd8] sm:$0xff] %vm736, %v3020
    %3053 = vst.msk [vmem:[#allocation3 + $0xe0] sm:$0xff] %vm736, %v3021
    %3054 = vst.msk [vmem:[#allocation3 + $0xe8] sm:$0xff] %vm736, %v3022
    %3055 = vst.msk [vmem:[#allocation3 + $0xf0] sm:$0xff] %vm736, %v3023
    %3056 = vst.msk [vmem:[#allocation3 + $0xf8] sm:$0xff] %vm736, %v3024
    %s3057 = sadd.s32 0, 5
    %s3058 = scalar_lea.vmem [#allocation2], %s3057
    %v3059 = vld [vmem:[%s3058] sm:$0x1]
    %v3060 = vpack.c.bf16 %v3059, %v3059
    %v3062 = vpack.i.b16 %v3060, %v3060
    %v3064 = vlaneseq
    %v3065 = vshrl.u32 %v3064, 7
    %v3066 = vsub.s32 0, %v3065
    %v3067 = vrot.slane %v3062, %v3066
    %vm3068 = vcmp.le.bf16.partialorder %v3067, %v175
    %vm3069 = vcmp.le.bf16.partialorder %v3067, %v176
    %vm3070 = vcmp.le.bf16.partialorder %v3067, %v177
    %vm3071 = vcmp.le.bf16.partialorder %v3067, %v178
    %vm3072 = vcmp.le.bf16.partialorder %v3067, %v179
    %vm3073 = vcmp.le.bf16.partialorder %v3067, %v180
    %vm3074 = vcmp.le.bf16.partialorder %v3067, %v181
    %vm3075 = vcmp.le.bf16.partialorder %v3067, %v182
    %vm3076 = vcmp.le.bf16.partialorder %v3067, %v183
    %vm3077 = vcmp.le.bf16.partialorder %v3067, %v184
    %vm3078 = vcmp.le.bf16.partialorder %v3067, %v185
    %vm3079 = vcmp.le.bf16.partialorder %v3067, %v186
    %vm3080 = vcmp.le.bf16.partialorder %v3067, %v187
    %vm3081 = vcmp.le.bf16.partialorder %v3067, %v188
    %vm3082 = vcmp.le.bf16.partialorder %v3067, %v189
    %vm3083 = vcmp.le.bf16.partialorder %v3067, %v190
    %v3084 = vsel %vm3068, 65537, 0
    %v3085 = vsel %vm3069, 65537, 0
    %v3086 = vsel %vm3070, 65537, 0
    %v3087 = vsel %vm3071, 65537, 0
    %v3088 = vsel %vm3072, 65537, 0
    %v3089 = vsel %vm3073, 65537, 0
    %v3090 = vsel %vm3074, 65537, 0
    %v3091 = vsel %vm3075, 65537, 0
    %v3092 = vsel %vm3076, 65537, 0
    %v3093 = vsel %vm3077, 65537, 0
    %v3094 = vsel %vm3078, 65537, 0
    %v3095 = vsel %vm3079, 65537, 0
    %v3096 = vsel %vm3080, 65537, 0
    %v3097 = vsel %vm3081, 65537, 0
    %v3098 = vsel %vm3082, 65537, 0
    %v3099 = vsel %vm3083, 65537, 0
    %v3100 = vunpack.c.l.b16 %v3084
    %v3101 = vunpack.c.h.b16 %v3084
    %v3102 = vunpack.c.l.b16 %v3085
    %v3103 = vunpack.c.h.b16 %v3085
    %v3104 = vunpack.c.l.b16 %v3086
    %v3105 = vunpack.c.h.b16 %v3086
    %v3106 = vunpack.c.l.b16 %v3087
    %v3107 = vunpack.c.h.b16 %v3087
    %v3108 = vunpack.c.l.b16 %v3088
    %v3109 = vunpack.c.h.b16 %v3088
    %v3110 = vunpack.c.l.b16 %v3089
    %v3111 = vunpack.c.h.b16 %v3089
    %v3112 = vunpack.c.l.b16 %v3090
    %v3113 = vunpack.c.h.b16 %v3090
    %v3114 = vunpack.c.l.b16 %v3091
    %v3115 = vunpack.c.h.b16 %v3091
    %v3116 = vunpack.c.l.b16 %v3092
    %v3117 = vunpack.c.h.b16 %v3092
    %v3118 = vunpack.c.l.b16 %v3093
    %v3119 = vunpack.c.h.b16 %v3093
    %v3120 = vunpack.c.l.b16 %v3094
    %v3121 = vunpack.c.h.b16 %v3094
    %v3122 = vunpack.c.l.b16 %v3095
    %v3123 = vunpack.c.h.b16 %v3095
    %v3124 = vunpack.c.l.b16 %v3096
    %v3125 = vunpack.c.h.b16 %v3096
    %v3126 = vunpack.c.l.b16 %v3097
    %v3127 = vunpack.c.h.b16 %v3097
    %v3128 = vunpack.c.l.b16 %v3098
    %v3129 = vunpack.c.h.b16 %v3098
    %v3130 = vunpack.c.l.b16 %v3099
    %v3131 = vunpack.c.h.b16 %v3099
    %v3132 = vpack.c.b16 %v3100, %v3100
    %v3133 = vpack.c.b16 %v3101, %v3101
    %v3134 = vpack.c.b16 %v3102, %v3102
    %v3135 = vpack.c.b16 %v3103, %v3103
    %v3136 = vpack.c.b16 %v3104, %v3104
    %v3137 = vpack.c.b16 %v3105, %v3105
    %v3138 = vpack.c.b16 %v3106, %v3106
    %v3139 = vpack.c.b16 %v3107, %v3107
    %v3140 = vpack.c.b16 %v3108, %v3108
    %v3141 = vpack.c.b16 %v3109, %v3109
    %v3142 = vpack.c.b16 %v3110, %v3110
    %v3143 = vpack.c.b16 %v3111, %v3111
    %v3144 = vpack.c.b16 %v3112, %v3112
    %v3145 = vpack.c.b16 %v3113, %v3113
    %v3146 = vpack.c.b16 %v3114, %v3114
    %v3147 = vpack.c.b16 %v3115, %v3115
    %v3148 = vpack.c.b16 %v3116, %v3116
    %v3149 = vpack.c.b16 %v3117, %v3117
    %v3150 = vpack.c.b16 %v3118, %v3118
    %v3151 = vpack.c.b16 %v3119, %v3119
    %v3152 = vpack.c.b16 %v3120, %v3120
    %v3153 = vpack.c.b16 %v3121, %v3121
    %v3154 = vpack.c.b16 %v3122, %v3122
    %v3155 = vpack.c.b16 %v3123, %v3123
    %v3156 = vpack.c.b16 %v3124, %v3124
    %v3157 = vpack.c.b16 %v3125, %v3125
    %v3158 = vpack.c.b16 %v3126, %v3126
    %v3159 = vpack.c.b16 %v3127, %v3127
    %v3160 = vpack.c.b16 %v3128, %v3128
    %v3161 = vpack.c.b16 %v3129, %v3129
    %v3162 = vpack.c.b16 %v3130, %v3130
    %v3163 = vpack.c.b16 %v3131, %v3131
    %vm3164 = vcmp.ne.s16.totalorder %v3132, 0
    %vm3165 = vcmp.ne.s16.totalorder %v3133, 0
    %vm3166 = vcmp.ne.s16.totalorder %v3134, 0
    %vm3167 = vcmp.ne.s16.totalorder %v3135, 0
    %vm3168 = vcmp.ne.s16.totalorder %v3136, 0
    %vm3169 = vcmp.ne.s16.totalorder %v3137, 0
    %vm3170 = vcmp.ne.s16.totalorder %v3138, 0
    %vm3171 = vcmp.ne.s16.totalorder %v3139, 0
    %vm3172 = vcmp.ne.s16.totalorder %v3140, 0
    %vm3173 = vcmp.ne.s16.totalorder %v3141, 0
    %vm3174 = vcmp.ne.s16.totalorder %v3142, 0
    %vm3175 = vcmp.ne.s16.totalorder %v3143, 0
    %vm3176 = vcmp.ne.s16.totalorder %v3144, 0
    %vm3177 = vcmp.ne.s16.totalorder %v3145, 0
    %vm3178 = vcmp.ne.s16.totalorder %v3146, 0
    %vm3179 = vcmp.ne.s16.totalorder %v3147, 0
    %vm3180 = vcmp.ne.s16.totalorder %v3148, 0
    %vm3181 = vcmp.ne.s16.totalorder %v3149, 0
    %vm3182 = vcmp.ne.s16.totalorder %v3150, 0
    %vm3183 = vcmp.ne.s16.totalorder %v3151, 0
    %vm3184 = vcmp.ne.s16.totalorder %v3152, 0
    %vm3185 = vcmp.ne.s16.totalorder %v3153, 0
    %vm3186 = vcmp.ne.s16.totalorder %v3154, 0
    %vm3187 = vcmp.ne.s16.totalorder %v3155, 0
    %vm3188 = vcmp.ne.s16.totalorder %v3156, 0
    %vm3189 = vcmp.ne.s16.totalorder %v3157, 0
    %vm3190 = vcmp.ne.s16.totalorder %v3158, 0
    %vm3191 = vcmp.ne.s16.totalorder %v3159, 0
    %vm3192 = vcmp.ne.s16.totalorder %v3160, 0
    %vm3193 = vcmp.ne.s16.totalorder %v3161, 0
    %vm3194 = vcmp.ne.s16.totalorder %v3162, 0
    %vm3195 = vcmp.ne.s16.totalorder %v3163, 0
    %v3196 = vsel %vm3164, 65537, 0
    %v3197 = vsel %vm3165, 65537, 0
    %v3198 = vsel %vm3166, 65537, 0
    %v3199 = vsel %vm3167, 65537, 0
    %v3200 = vsel %vm3168, 65537, 0
    %v3201 = vsel %vm3169, 65537, 0
    %v3202 = vsel %vm3170, 65537, 0
    %v3203 = vsel %vm3171, 65537, 0
    %v3204 = vsel %vm3172, 65537, 0
    %v3205 = vsel %vm3173, 65537, 0
    %v3206 = vsel %vm3174, 65537, 0
    %v3207 = vsel %vm3175, 65537, 0
    %v3208 = vsel %vm3176, 65537, 0
    %v3209 = vsel %vm3177, 65537, 0
    %v3210 = vsel %vm3178, 65537, 0
    %v3211 = vsel %vm3179, 65537, 0
    %v3212 = vsel %vm3180, 65537, 0
    %v3213 = vsel %vm3181, 65537, 0
    %v3214 = vsel %vm3182, 65537, 0
    %v3215 = vsel %vm3183, 65537, 0
    %v3216 = vsel %vm3184, 65537, 0
    %v3217 = vsel %vm3185, 65537, 0
    %v3218 = vsel %vm3186, 65537, 0
    %v3219 = vsel %vm3187, 65537, 0
    %v3220 = vsel %vm3188, 65537, 0
    %v3221 = vsel %vm3189, 65537, 0
    %v3222 = vsel %vm3190, 65537, 0
    %v3223 = vsel %vm3191, 65537, 0
    %v3224 = vsel %vm3192, 65537, 0
    %v3225 = vsel %vm3193, 65537, 0
    %v3226 = vsel %vm3194, 65537, 0
    %v3227 = vsel %vm3195, 65537, 0
    %v3228 = vunpack.c.l.b16 %v3196
    %v3229 = vunpack.c.l.b16 %v3197
    %v3230 = vunpack.c.l.b16 %v3198
    %v3231 = vunpack.c.l.b16 %v3199
    %v3232 = vunpack.c.l.b16 %v3200
    %v3233 = vunpack.c.l.b16 %v3201
    %v3234 = vunpack.c.l.b16 %v3202
    %v3235 = vunpack.c.l.b16 %v3203
    %v3236 = vunpack.c.l.b16 %v3204
    %v3237 = vunpack.c.l.b16 %v3205
    %v3238 = vunpack.c.l.b16 %v3206
    %v3239 = vunpack.c.l.b16 %v3207
    %v3240 = vunpack.c.l.b16 %v3208
    %v3241 = vunpack.c.l.b16 %v3209
    %v3242 = vunpack.c.l.b16 %v3210
    %v3243 = vunpack.c.l.b16 %v3211
    %v3244 = vunpack.c.l.b16 %v3212
    %v3245 = vunpack.c.l.b16 %v3213
    %v3246 = vunpack.c.l.b16 %v3214
    %v3247 = vunpack.c.l.b16 %v3215
    %v3248 = vunpack.c.l.b16 %v3216
    %v3249 = vunpack.c.l.b16 %v3217
    %v3250 = vunpack.c.l.b16 %v3218
    %v3251 = vunpack.c.l.b16 %v3219
    %v3252 = vunpack.c.l.b16 %v3220
    %v3253 = vunpack.c.l.b16 %v3221
    %v3254 = vunpack.c.l.b16 %v3222
    %v3255 = vunpack.c.l.b16 %v3223
    %v3256 = vunpack.c.l.b16 %v3224
    %v3257 = vunpack.c.l.b16 %v3225
    %v3258 = vunpack.c.l.b16 %v3226
    %v3259 = vunpack.c.l.b16 %v3227
    %vm3260 = vcmp.ne.s32.totalorder %v3228, 0
    %vm3261 = vcmp.ne.s32.totalorder %v3229, 0
    %vm3262 = vcmp.ne.s32.totalorder %v3230, 0
    %vm3263 = vcmp.ne.s32.totalorder %v3231, 0
    %vm3264 = vcmp.ne.s32.totalorder %v3232, 0
    %vm3265 = vcmp.ne.s32.totalorder %v3233, 0
    %vm3266 = vcmp.ne.s32.totalorder %v3234, 0
    %vm3267 = vcmp.ne.s32.totalorder %v3235, 0
    %vm3268 = vcmp.ne.s32.totalorder %v3236, 0
    %vm3269 = vcmp.ne.s32.totalorder %v3237, 0
    %vm3270 = vcmp.ne.s32.totalorder %v3238, 0
    %vm3271 = vcmp.ne.s32.totalorder %v3239, 0
    %vm3272 = vcmp.ne.s32.totalorder %v3240, 0
    %vm3273 = vcmp.ne.s32.totalorder %v3241, 0
    %vm3274 = vcmp.ne.s32.totalorder %v3242, 0
    %vm3275 = vcmp.ne.s32.totalorder %v3243, 0
    %vm3276 = vcmp.ne.s32.totalorder %v3244, 0
    %vm3277 = vcmp.ne.s32.totalorder %v3245, 0
    %vm3278 = vcmp.ne.s32.totalorder %v3246, 0
    %vm3279 = vcmp.ne.s32.totalorder %v3247, 0
    %vm3280 = vcmp.ne.s32.totalorder %v3248, 0
    %vm3281 = vcmp.ne.s32.totalorder %v3249, 0
    %vm3282 = vcmp.ne.s32.totalorder %v3250, 0
    %vm3283 = vcmp.ne.s32.totalorder %v3251, 0
    %vm3284 = vcmp.ne.s32.totalorder %v3252, 0
    %vm3285 = vcmp.ne.s32.totalorder %v3253, 0
    %vm3286 = vcmp.ne.s32.totalorder %v3254, 0
    %vm3287 = vcmp.ne.s32.totalorder %v3255, 0
    %vm3288 = vcmp.ne.s32.totalorder %v3256, 0
    %vm3289 = vcmp.ne.s32.totalorder %v3257, 0
    %vm3290 = vcmp.ne.s32.totalorder %v3258, 0
    %vm3291 = vcmp.ne.s32.totalorder %v3259, 0
    %v3292 = vsel %vm3260, 1, 0
    %v3293 = vsel %vm3261, 1, 0
    %v3294 = vsel %vm3262, 1, 0
    %v3295 = vsel %vm3263, 1, 0
    %v3296 = vsel %vm3264, 1, 0
    %v3297 = vsel %vm3265, 1, 0
    %v3298 = vsel %vm3266, 1, 0
    %v3299 = vsel %vm3267, 1, 0
    %v3300 = vsel %vm3268, 1, 0
    %v3301 = vsel %vm3269, 1, 0
    %v3302 = vsel %vm3270, 1, 0
    %v3303 = vsel %vm3271, 1, 0
    %v3304 = vsel %vm3272, 1, 0
    %v3305 = vsel %vm3273, 1, 0
    %v3306 = vsel %vm3274, 1, 0
    %v3307 = vsel %vm3275, 1, 0
    %v3308 = vsel %vm3276, 1, 0
    %v3309 = vsel %vm3277, 1, 0
    %v3310 = vsel %vm3278, 1, 0
    %v3311 = vsel %vm3279, 1, 0
    %v3312 = vsel %vm3280, 1, 0
    %v3313 = vsel %vm3281, 1, 0
    %v3314 = vsel %vm3282, 1, 0
    %v3315 = vsel %vm3283, 1, 0
    %v3316 = vsel %vm3284, 1, 0
    %v3317 = vsel %vm3285, 1, 0
    %v3318 = vsel %vm3286, 1, 0
    %v3319 = vsel %vm3287, 1, 0
    %v3320 = vsel %vm3288, 1, 0
    %v3321 = vsel %vm3289, 1, 0
    %v3322 = vsel %vm3290, 1, 0
    %v3323 = vsel %vm3291, 1, 0
    %v3324 = vcvt.s32.f32 %v3292
    %v3325 = vcvt.s32.f32 %v3293
    %v3326 = vcvt.s32.f32 %v3294
    %v3327 = vcvt.s32.f32 %v3295
    %v3328 = vcvt.s32.f32 %v3296
    %v3329 = vcvt.s32.f32 %v3297
    %v3330 = vcvt.s32.f32 %v3298
    %v3331 = vcvt.s32.f32 %v3299
    %v3332 = vcvt.s32.f32 %v3300
    %v3333 = vcvt.s32.f32 %v3301
    %v3334 = vcvt.s32.f32 %v3302
    %v3335 = vcvt.s32.f32 %v3303
    %v3336 = vcvt.s32.f32 %v3304
    %v3337 = vcvt.s32.f32 %v3305
    %v3338 = vcvt.s32.f32 %v3306
    %v3339 = vcvt.s32.f32 %v3307
    %v3340 = vcvt.s32.f32 %v3308
    %v3341 = vcvt.s32.f32 %v3309
    %v3342 = vcvt.s32.f32 %v3310
    %v3343 = vcvt.s32.f32 %v3311
    %v3344 = vcvt.s32.f32 %v3312
    %v3345 = vcvt.s32.f32 %v3313
    %v3346 = vcvt.s32.f32 %v3314
    %v3347 = vcvt.s32.f32 %v3315
    %v3348 = vcvt.s32.f32 %v3316
    %v3349 = vcvt.s32.f32 %v3317
    %v3350 = vcvt.s32.f32 %v3318
    %v3351 = vcvt.s32.f32 %v3319
    %v3352 = vcvt.s32.f32 %v3320
    %v3353 = vcvt.s32.f32 %v3321
    %v3354 = vcvt.s32.f32 %v3322
    %v3355 = vcvt.s32.f32 %v3323
    %v3356 = vpack.c.bf16 %v3325, %v3324
    %v3357 = vpack.c.bf16 %v3327, %v3326
    %v3358 = vpack.c.bf16 %v3329, %v3328
    %v3359 = vpack.c.bf16 %v3331, %v3330
    %v3360 = vpack.c.bf16 %v3333, %v3332
    %v3361 = vpack.c.bf16 %v3335, %v3334
    %v3362 = vpack.c.bf16 %v3337, %v3336
    %v3363 = vpack.c.bf16 %v3339, %v3338
    %v3364 = vpack.c.bf16 %v3341, %v3340
    %v3365 = vpack.c.bf16 %v3343, %v3342
    %v3366 = vpack.c.bf16 %v3345, %v3344
    %v3367 = vpack.c.bf16 %v3347, %v3346
    %v3368 = vpack.c.bf16 %v3349, %v3348
    %v3369 = vpack.c.bf16 %v3351, %v3350
    %v3370 = vpack.c.bf16 %v3353, %v3352
    %v3371 = vpack.c.bf16 %v3355, %v3354
    %v3372 = vld [vmem:[#allocation3] sm:$0xff]
    %v3373 = vld [vmem:[#allocation3 + $0x8] sm:$0xff]
    %v3374 = vld [vmem:[#allocation3 + $0x10] sm:$0xff]
    %v3375 = vld [vmem:[#allocation3 + $0x18] sm:$0xff]
    %v3376 = vld [vmem:[#allocation3 + $0x20] sm:$0xff]
    %v3377 = vld [vmem:[#allocation3 + $0x28] sm:$0xff]
    %v3378 = vld [vmem:[#allocation3 + $0x30] sm:$0xff]
    %v3379 = vld [vmem:[#allocation3 + $0x38] sm:$0xff]
    %v3380 = vld [vmem:[#allocation3 + $0x40] sm:$0xff]
    %v3381 = vld [vmem:[#allocation3 + $0x48] sm:$0xff]
    %v3382 = vld [vmem:[#allocation3 + $0x50] sm:$0xff]
    %v3383 = vld [vmem:[#allocation3 + $0x58] sm:$0xff]
    %v3384 = vld [vmem:[#allocation3 + $0x60] sm:$0xff]
    %v3385 = vld [vmem:[#allocation3 + $0x68] sm:$0xff]
    %v3386 = vld [vmem:[#allocation3 + $0x70] sm:$0xff]
    %v3387 = vld [vmem:[#allocation3 + $0x78] sm:$0xff]
    %v3388 = vld [vmem:[#allocation3 + $0x80] sm:$0xff]
    %v3389 = vld [vmem:[#allocation3 + $0x88] sm:$0xff]
    %v3390 = vld [vmem:[#allocation3 + $0x90] sm:$0xff]
    %v3391 = vld [vmem:[#allocation3 + $0x98] sm:$0xff]
    %v3392 = vld [vmem:[#allocation3 + $0xa0] sm:$0xff]
    %v3393 = vld [vmem:[#allocation3 + $0xa8] sm:$0xff]
    %v3394 = vld [vmem:[#allocation3 + $0xb0] sm:$0xff]
    %v3395 = vld [vmem:[#allocation3 + $0xb8] sm:$0xff]
    %v3396 = vld [vmem:[#allocation3 + $0xc0] sm:$0xff]
    %v3397 = vld [vmem:[#allocation3 + $0xc8] sm:$0xff]
    %v3398 = vld [vmem:[#allocation3 + $0xd0] sm:$0xff]
    %v3399 = vld [vmem:[#allocation3 + $0xd8] sm:$0xff]
    %v3400 = vld [vmem:[#allocation3 + $0xe0] sm:$0xff]
    %v3401 = vld [vmem:[#allocation3 + $0xe8] sm:$0xff]
    %v3402 = vld [vmem:[#allocation3 + $0xf0] sm:$0xff]
    %v3403 = vld [vmem:[#allocation3 + $0xf8] sm:$0xff]
    %3404 = vmatprep.subr.bf16.mxu0 0
    %3405 = vmatpush1.bf16.msra.mxu0 1065369472
    %3406 = vmatprep.subr.bf16.mxu0 0
    %3407 = vmatpush1.bf16.msra.mxu0 1065369472
    %3408 = vmatprep.subr.bf16.mxu0 0
    %3409 = vmatpush1.bf16.msra.mxu0 1065369472
    %3410 = vmatprep.subr.bf16.mxu0 0
    %3411 = vmatpush1.bf16.msra.mxu0 1065369472
    %3412 = vmatprep.subr.bf16.mxu0 0
    %3413 = vmatpush1.bf16.msra.mxu0 1065369472
    %3414 = vmatprep.subr.bf16.mxu0 0
    %3415 = vmatpush1.bf16.msra.mxu0 1065369472
    %3416 = vmatprep.subr.bf16.mxu0 0
    %3417 = vmatpush1.bf16.msra.mxu0 1065369472
    %3418 = vmatprep.subr.bf16.mxu0 0
    %3419 = vmatpush1.bf16.msra.mxu0 1065369472
    %3420 = vmatprep.subr.bf16.mxu0 0
    %3421 = vmatpush2.bf16.msra.mxu0 0
    %3422 = vmatprep.subr.bf16.mxu0 0
    %3423 = vmatpush2.bf16.msra.mxu0 0
    %3424 = vmatprep.subr.bf16.mxu0 0
    %3425 = vmatpush2.bf16.msra.mxu0 0
    %3426 = vmatprep.subr.bf16.mxu0 0
    %3427 = vmatpush2.bf16.msra.mxu0 0
    %3428 = vmatprep.subr.bf16.mxu0 0
    %3429 = vmatpush2.bf16.msra.mxu0 0
    %3430 = vmatprep.subr.bf16.mxu0 0
    %3431 = vmatpush2.bf16.msra.mxu0 0
    %3432 = vmatprep.subr.bf16.mxu0 0
    %3433 = vmatpush2.bf16.msra.mxu0 0
    %3434 = vmatprep.subr.bf16.mxu0 0
    %3435 = vmatpush2.bf16.msra.mxu0 0
    %3436 = vmatprep.mubr.bf16.mxu0 0
    %3437 = vmatmul.mubr.bf16.gmra.mxu0 %v3356
    %v3438 = vpop.f32.mrf.mxu0
    %v3439 = vadd.f32 0.0, %v3438
    %v3440 = vpop.f32.mrf.mxu0
    %v3441 = vpop.f32.mrf.mxu0
    %v3442 = vadd.f32 0.0, %v3441
    %v3443 = vpop.f32.mrf.mxu0
    %3444 = vmatprep.mubr.bf16.mxu0 0
    %3445 = vmatmul.mubr.bf16.gmra.mxu0 %v3357
    %v3446 = vpop.f32.mrf.mxu0
    %v3447 = vadd.f32 0.0, %v3446
    %v3448 = vpop.f32.mrf.mxu0
    %v3449 = vpop.f32.mrf.mxu0
    %v3450 = vadd.f32 0.0, %v3449
    %v3451 = vpop.f32.mrf.mxu0
    %3452 = vmatprep.mubr.bf16.mxu0 0
    %3453 = vmatmul.mubr.bf16.gmra.mxu0 %v3358
    %v3454 = vpop.f32.mrf.mxu0
    %v3455 = vadd.f32 0.0, %v3454
    %v3456 = vpop.f32.mrf.mxu0
    %v3457 = vpop.f32.mrf.mxu0
    %v3458 = vadd.f32 0.0, %v3457
    %v3459 = vpop.f32.mrf.mxu0
    %3460 = vmatprep.mubr.bf16.mxu0 0
    %3461 = vmatmul.mubr.bf16.gmra.mxu0 %v3359
    %v3462 = vpop.f32.mrf.mxu0
    %v3463 = vadd.f32 0.0, %v3462
    %v3464 = vpop.f32.mrf.mxu0
    %v3465 = vpop.f32.mrf.mxu0
    %v3466 = vadd.f32 0.0, %v3465
    %v3467 = vpop.f32.mrf.mxu0
    %3468 = vmatprep.mubr.bf16.mxu0 0
    %3469 = vmatmul.mubr.bf16.gmra.mxu0 %v3360
    %v3470 = vpop.f32.mrf.mxu0
    %v3471 = vadd.f32 0.0, %v3470
    %v3472 = vpop.f32.mrf.mxu0
    %v3473 = vpop.f32.mrf.mxu0
    %v3474 = vadd.f32 0.0, %v3473
    %v3475 = vpop.f32.mrf.mxu0
    %3476 = vmatprep.mubr.bf16.mxu0 0
    %3477 = vmatmul.mubr.bf16.gmra.mxu0 %v3361
    %v3478 = vpop.f32.mrf.mxu0
    %v3479 = vadd.f32 0.0, %v3478
    %v3480 = vpop.f32.mrf.mxu0
    %v3481 = vpop.f32.mrf.mxu0
    %v3482 = vadd.f32 0.0, %v3481
    %v3483 = vpop.f32.mrf.mxu0
    %3484 = vmatprep.mubr.bf16.mxu0 0
    %3485 = vmatmul.mubr.bf16.gmra.mxu0 %v3362
    %v3486 = vpop.f32.mrf.mxu0
    %v3487 = vadd.f32 0.0, %v3486
    %v3488 = vpop.f32.mrf.mxu0
    %v3489 = vpop.f32.mrf.mxu0
    %v3490 = vadd.f32 0.0, %v3489
    %v3491 = vpop.f32.mrf.mxu0
    %3492 = vmatprep.mubr.bf16.mxu0 0
    %3493 = vmatmul.mubr.bf16.gmra.mxu0 %v3363
    %v3494 = vpop.f32.mrf.mxu0
    %v3495 = vadd.f32 0.0, %v3494
    %v3496 = vpop.f32.mrf.mxu0
    %v3497 = vpop.f32.mrf.mxu0
    %v3498 = vadd.f32 0.0, %v3497
    %v3499 = vpop.f32.mrf.mxu0
    %3500 = vmatprep.mubr.bf16.mxu0 0
    %3501 = vmatmul.mubr.bf16.gmra.mxu0 %v3364
    %v3502 = vpop.f32.mrf.mxu0
    %v3503 = vadd.f32 0.0, %v3502
    %v3504 = vpop.f32.mrf.mxu0
    %v3505 = vpop.f32.mrf.mxu0
    %v3506 = vadd.f32 0.0, %v3505
    %v3507 = vpop.f32.mrf.mxu0
    %3508 = vmatprep.mubr.bf16.mxu0 0
    %3509 = vmatmul.mubr.bf16.gmra.mxu0 %v3365
    %v3510 = vpop.f32.mrf.mxu0
    %v3511 = vadd.f32 0.0, %v3510
    %v3512 = vpop.f32.mrf.mxu0
    %v3513 = vpop.f32.mrf.mxu0
    %v3514 = vadd.f32 0.0, %v3513
    %v3515 = vpop.f32.mrf.mxu0
    %3516 = vmatprep.mubr.bf16.mxu0 0
    %3517 = vmatmul.mubr.bf16.gmra.mxu0 %v3366
    %v3518 = vpop.f32.mrf.mxu0
    %v3519 = vadd.f32 0.0, %v3518
    %v3520 = vpop.f32.mrf.mxu0
    %v3521 = vpop.f32.mrf.mxu0
    %v3522 = vadd.f32 0.0, %v3521
    %v3523 = vpop.f32.mrf.mxu0
    %3524 = vmatprep.mubr.bf16.mxu0 0
    %3525 = vmatmul.mubr.bf16.gmra.mxu0 %v3367
    %v3526 = vpop.f32.mrf.mxu0
    %v3527 = vadd.f32 0.0, %v3526
    %v3528 = vpop.f32.mrf.mxu0
    %v3529 = vpop.f32.mrf.mxu0
    %v3530 = vadd.f32 0.0, %v3529
    %v3531 = vpop.f32.mrf.mxu0
    %3532 = vmatprep.mubr.bf16.mxu0 0
    %3533 = vmatmul.mubr.bf16.gmra.mxu0 %v3368
    %v3534 = vpop.f32.mrf.mxu0
    %v3535 = vadd.f32 0.0, %v3534
    %v3536 = vpop.f32.mrf.mxu0
    %v3537 = vpop.f32.mrf.mxu0
    %v3538 = vadd.f32 0.0, %v3537
    %v3539 = vpop.f32.mrf.mxu0
    %3540 = vmatprep.mubr.bf16.mxu0 0
    %3541 = vmatmul.mubr.bf16.gmra.mxu0 %v3369
    %v3542 = vpop.f32.mrf.mxu0
    %v3543 = vadd.f32 0.0, %v3542
    %v3544 = vpop.f32.mrf.mxu0
    %v3545 = vpop.f32.mrf.mxu0
    %v3546 = vadd.f32 0.0, %v3545
    %v3547 = vpop.f32.mrf.mxu0
    %3548 = vmatprep.mubr.bf16.mxu0 0
    %3549 = vmatmul.mubr.bf16.gmra.mxu0 %v3370
    %v3550 = vpop.f32.mrf.mxu0
    %v3551 = vadd.f32 0.0, %v3550
    %v3552 = vpop.f32.mrf.mxu0
    %v3553 = vpop.f32.mrf.mxu0
    %v3554 = vadd.f32 0.0, %v3553
    %v3555 = vpop.f32.mrf.mxu0
    %3556 = vmatprep.mubr.bf16.mxu0 0
    %3557 = vmatmul.mubr.bf16.gmra.mxu0 %v3371
    %v3558 = vpop.f32.mrf.mxu0
    %v3559 = vadd.f32 0.0, %v3558
    %v3560 = vpop.f32.mrf.mxu0
    %v3561 = vpop.f32.mrf.mxu0
    %v3562 = vadd.f32 0.0, %v3561
    %v3563 = vpop.f32.mrf.mxu0
    %3564 = vdwg.mxu0
    %v3565 = vadd.f32 %v3372, %v3439
    %v3566 = vadd.f32 %v3373, %v3442
    %v3567 = vadd.f32 %v3374, %v3447
    %v3568 = vadd.f32 %v3375, %v3450
    %v3569 = vadd.f32 %v3376, %v3455
    %v3570 = vadd.f32 %v3377, %v3458
    %v3571 = vadd.f32 %v3378, %v3463
    %v3572 = vadd.f32 %v3379, %v3466
    %v3573 = vadd.f32 %v3380, %v3471
    %v3574 = vadd.f32 %v3381, %v3474
    %v3575 = vadd.f32 %v3382, %v3479
    %v3576 = vadd.f32 %v3383, %v3482
    %v3577 = vadd.f32 %v3384, %v3487
    %v3578 = vadd.f32 %v3385, %v3490
    %v3579 = vadd.f32 %v3386, %v3495
    %v3580 = vadd.f32 %v3387, %v3498
    %v3581 = vadd.f32 %v3388, %v3503
    %v3582 = vadd.f32 %v3389, %v3506
    %v3583 = vadd.f32 %v3390, %v3511
    %v3584 = vadd.f32 %v3391, %v3514
    %v3585 = vadd.f32 %v3392, %v3519
    %v3586 = vadd.f32 %v3393, %v3522
    %v3587 = vadd.f32 %v3394, %v3527
    %v3588 = vadd.f32 %v3395, %v3530
    %v3589 = vadd.f32 %v3396, %v3535
    %v3590 = vadd.f32 %v3397, %v3538
    %v3591 = vadd.f32 %v3398, %v3543
    %v3592 = vadd.f32 %v3399, %v3546
    %v3593 = vadd.f32 %v3400, %v3551
    %v3594 = vadd.f32 %v3401, %v3554
    %v3595 = vadd.f32 %v3402, %v3559
    %v3596 = vadd.f32 %v3403, %v3562
    %3597 = vst.msk [vmem:[#allocation3] sm:$0xff] %vm736, %v3565
    %3598 = vst.msk [vmem:[#allocation3 + $0x8] sm:$0xff] %vm736, %v3566
    %3599 = vst.msk [vmem:[#allocation3 + $0x10] sm:$0xff] %vm736, %v3567
    %3600 = vst.msk [vmem:[#allocation3 + $0x18] sm:$0xff] %vm736, %v3568
    %3601 = vst.msk [vmem:[#allocation3 + $0x20] sm:$0xff] %vm736, %v3569
    %3602 = vst.msk [vmem:[#allocation3 + $0x28] sm:$0xff] %vm736, %v3570
    %3603 = vst.msk [vmem:[#allocation3 + $0x30] sm:$0xff] %vm736, %v3571
    %3604 = vst.msk [vmem:[#allocation3 + $0x38] sm:$0xff] %vm736, %v3572
    %3605 = vst.msk [vmem:[#allocation3 + $0x40] sm:$0xff] %vm736, %v3573
    %3606 = vst.msk [vmem:[#allocation3 + $0x48] sm:$0xff] %vm736, %v3574
    %3607 = vst.msk [vmem:[#allocation3 + $0x50] sm:$0xff] %vm736, %v3575
    %3608 = vst.msk [vmem:[#allocation3 + $0x58] sm:$0xff] %vm736, %v3576
    %3609 = vst.msk [vmem:[#allocation3 + $0x60] sm:$0xff] %vm736, %v3577
    %3610 = vst.msk [vmem:[#allocation3 + $0x68] sm:$0xff] %vm736, %v3578
    %3611 = vst.msk [vmem:[#allocation3 + $0x70] sm:$0xff] %vm736, %v3579
    %3612 = vst.msk [vmem:[#allocation3 + $0x78] sm:$0xff] %vm736, %v3580
    %3613 = vst.msk [vmem:[#allocation3 + $0x80] sm:$0xff] %vm736, %v3581
    %3614 = vst.msk [vmem:[#allocation3 + $0x88] sm:$0xff] %vm736, %v3582
    %3615 = vst.msk [vmem:[#allocation3 + $0x90] sm:$0xff] %vm736, %v3583
    %3616 = vst.msk [vmem:[#allocation3 + $0x98] sm:$0xff] %vm736, %v3584
    %3617 = vst.msk [vmem:[#allocation3 + $0xa0] sm:$0xff] %vm736, %v3585
    %3618 = vst.msk [vmem:[#allocation3 + $0xa8] sm:$0xff] %vm736, %v3586
    %3619 = vst.msk [vmem:[#allocation3 + $0xb0] sm:$0xff] %vm736, %v3587
    %3620 = vst.msk [vmem:[#allocation3 + $0xb8] sm:$0xff] %vm736, %v3588
    %3621 = vst.msk [vmem:[#allocation3 + $0xc0] sm:$0xff] %vm736, %v3589
    %3622 = vst.msk [vmem:[#allocation3 + $0xc8] sm:$0xff] %vm736, %v3590
    %3623 = vst.msk [vmem:[#allocation3 + $0xd0] sm:$0xff] %vm736, %v3591
    %3624 = vst.msk [vmem:[#allocation3 + $0xd8] sm:$0xff] %vm736, %v3592
    %3625 = vst.msk [vmem:[#allocation3 + $0xe0] sm:$0xff] %vm736, %v3593
    %3626 = vst.msk [vmem:[#allocation3 + $0xe8] sm:$0xff] %vm736, %v3594
    %3627 = vst.msk [vmem:[#allocation3 + $0xf0] sm:$0xff] %vm736, %v3595
    %3628 = vst.msk [vmem:[#allocation3 + $0xf8] sm:$0xff] %vm736, %v3596
    %s3629 = sadd.s32 0, 6
    %s3630 = scalar_lea.vmem [#allocation2], %s3629
    %v3631 = vld [vmem:[%s3630] sm:$0x1]
    %v3632 = vpack.c.bf16 %v3631, %v3631
    %v3634 = vpack.i.b16 %v3632, %v3632
    %v3636 = vlaneseq
    %v3637 = vshrl.u32 %v3636, 7
    %v3638 = vsub.s32 0, %v3637
    %v3639 = vrot.slane %v3634, %v3638
    %vm3640 = vcmp.le.bf16.partialorder %v3639, %v175
    %vm3641 = vcmp.le.bf16.partialorder %v3639, %v176
    %vm3642 = vcmp.le.bf16.partialorder %v3639, %v177
    %vm3643 = vcmp.le.bf16.partialorder %v3639, %v178
    %vm3644 = vcmp.le.bf16.partialorder %v3639, %v179
    %vm3645 = vcmp.le.bf16.partialorder %v3639, %v180
    %vm3646 = vcmp.le.bf16.partialorder %v3639, %v181
    %vm3647 = vcmp.le.bf16.partialorder %v3639, %v182
    %vm3648 = vcmp.le.bf16.partialorder %v3639, %v183
    %vm3649 = vcmp.le.bf16.partialorder %v3639, %v184
    %vm3650 = vcmp.le.bf16.partialorder %v3639, %v185
    %vm3651 = vcmp.le.bf16.partialorder %v3639, %v186
    %vm3652 = vcmp.le.bf16.partialorder %v3639, %v187
    %vm3653 = vcmp.le.bf16.partialorder %v3639, %v188
    %vm3654 = vcmp.le.bf16.partialorder %v3639, %v189
    %vm3655 = vcmp.le.bf16.partialorder %v3639, %v190
    %v3656 = vsel %vm3640, 65537, 0
    %v3657 = vsel %vm3641, 65537, 0
    %v3658 = vsel %vm3642, 65537, 0
    %v3659 = vsel %vm3643, 65537, 0
    %v3660 = vsel %vm3644, 65537, 0
    %v3661 = vsel %vm3645, 65537, 0
    %v3662 = vsel %vm3646, 65537, 0
    %v3663 = vsel %vm3647, 65537, 0
    %v3664 = vsel %vm3648, 65537, 0
    %v3665 = vsel %vm3649, 65537, 0
    %v3666 = vsel %vm3650, 65537, 0
    %v3667 = vsel %vm3651, 65537, 0
    %v3668 = vsel %vm3652, 65537, 0
    %v3669 = vsel %vm3653, 65537, 0
    %v3670 = vsel %vm3654, 65537, 0
    %v3671 = vsel %vm3655, 65537, 0
    %v3672 = vunpack.c.l.b16 %v3656
    %v3673 = vunpack.c.h.b16 %v3656
    %v3674 = vunpack.c.l.b16 %v3657
    %v3675 = vunpack.c.h.b16 %v3657
    %v3676 = vunpack.c.l.b16 %v3658
    %v3677 = vunpack.c.h.b16 %v3658
    %v3678 = vunpack.c.l.b16 %v3659
    %v3679 = vunpack.c.h.b16 %v3659
    %v3680 = vunpack.c.l.b16 %v3660
    %v3681 = vunpack.c.h.b16 %v3660
    %v3682 = vunpack.c.l.b16 %v3661
    %v3683 = vunpack.c.h.b16 %v3661
    %v3684 = vunpack.c.l.b16 %v3662
    %v3685 = vunpack.c.h.b16 %v3662
    %v3686 = vunpack.c.l.b16 %v3663
    %v3687 = vunpack.c.h.b16 %v3663
    %v3688 = vunpack.c.l.b16 %v3664
    %v3689 = vunpack.c.h.b16 %v3664
    %v3690 = vunpack.c.l.b16 %v3665
    %v3691 = vunpack.c.h.b16 %v3665
    %v3692 = vunpack.c.l.b16 %v3666
    %v3693 = vunpack.c.h.b16 %v3666
    %v3694 = vunpack.c.l.b16 %v3667
    %v3695 = vunpack.c.h.b16 %v3667
    %v3696 = vunpack.c.l.b16 %v3668
    %v3697 = vunpack.c.h.b16 %v3668
    %v3698 = vunpack.c.l.b16 %v3669
    %v3699 = vunpack.c.h.b16 %v3669
    %v3700 = vunpack.c.l.b16 %v3670
    %v3701 = vunpack.c.h.b16 %v3670
    %v3702 = vunpack.c.l.b16 %v3671
    %v3703 = vunpack.c.h.b16 %v3671
    %v3704 = vpack.c.b16 %v3672, %v3672
    %v3705 = vpack.c.b16 %v3673, %v3673
    %v3706 = vpack.c.b16 %v3674, %v3674
    %v3707 = vpack.c.b16 %v3675, %v3675
    %v3708 = vpack.c.b16 %v3676, %v3676
    %v3709 = vpack.c.b16 %v3677, %v3677
    %v3710 = vpack.c.b16 %v3678, %v3678
    %v3711 = vpack.c.b16 %v3679, %v3679
    %v3712 = vpack.c.b16 %v3680, %v3680
    %v3713 = vpack.c.b16 %v3681, %v3681
    %v3714 = vpack.c.b16 %v3682, %v3682
    %v3715 = vpack.c.b16 %v3683, %v3683
    %v3716 = vpack.c.b16 %v3684, %v3684
    %v3717 = vpack.c.b16 %v3685, %v3685
    %v3718 = vpack.c.b16 %v3686, %v3686
    %v3719 = vpack.c.b16 %v3687, %v3687
    %v3720 = vpack.c.b16 %v3688, %v3688
    %v3721 = vpack.c.b16 %v3689, %v3689
    %v3722 = vpack.c.b16 %v3690, %v3690
    %v3723 = vpack.c.b16 %v3691, %v3691
    %v3724 = vpack.c.b16 %v3692, %v3692
    %v3725 = vpack.c.b16 %v3693, %v3693
    %v3726 = vpack.c.b16 %v3694, %v3694
    %v3727 = vpack.c.b16 %v3695, %v3695
    %v3728 = vpack.c.b16 %v3696, %v3696
    %v3729 = vpack.c.b16 %v3697, %v3697
    %v3730 = vpack.c.b16 %v3698, %v3698
    %v3731 = vpack.c.b16 %v3699, %v3699
    %v3732 = vpack.c.b16 %v3700, %v3700
    %v3733 = vpack.c.b16 %v3701, %v3701
    %v3734 = vpack.c.b16 %v3702, %v3702
    %v3735 = vpack.c.b16 %v3703, %v3703
    %vm3736 = vcmp.ne.s16.totalorder %v3704, 0
    %vm3737 = vcmp.ne.s16.totalorder %v3705, 0
    %vm3738 = vcmp.ne.s16.totalorder %v3706, 0
    %vm3739 = vcmp.ne.s16.totalorder %v3707, 0
    %vm3740 = vcmp.ne.s16.totalorder %v3708, 0
    %vm3741 = vcmp.ne.s16.totalorder %v3709, 0
    %vm3742 = vcmp.ne.s16.totalorder %v3710, 0
    %vm3743 = vcmp.ne.s16.totalorder %v3711, 0
    %vm3744 = vcmp.ne.s16.totalorder %v3712, 0
    %vm3745 = vcmp.ne.s16.totalorder %v3713, 0
    %vm3746 = vcmp.ne.s16.totalorder %v3714, 0
    %vm3747 = vcmp.ne.s16.totalorder %v3715, 0
    %vm3748 = vcmp.ne.s16.totalorder %v3716, 0
    %vm3749 = vcmp.ne.s16.totalorder %v3717, 0
    %vm3750 = vcmp.ne.s16.totalorder %v3718, 0
    %vm3751 = vcmp.ne.s16.totalorder %v3719, 0
    %vm3752 = vcmp.ne.s16.totalorder %v3720, 0
    %vm3753 = vcmp.ne.s16.totalorder %v3721, 0
    %vm3754 = vcmp.ne.s16.totalorder %v3722, 0
    %vm3755 = vcmp.ne.s16.totalorder %v3723, 0
    %vm3756 = vcmp.ne.s16.totalorder %v3724, 0
    %vm3757 = vcmp.ne.s16.totalorder %v3725, 0
    %vm3758 = vcmp.ne.s16.totalorder %v3726, 0
    %vm3759 = vcmp.ne.s16.totalorder %v3727, 0
    %vm3760 = vcmp.ne.s16.totalorder %v3728, 0
    %vm3761 = vcmp.ne.s16.totalorder %v3729, 0
    %vm3762 = vcmp.ne.s16.totalorder %v3730, 0
    %vm3763 = vcmp.ne.s16.totalorder %v3731, 0
    %vm3764 = vcmp.ne.s16.totalorder %v3732, 0
    %vm3765 = vcmp.ne.s16.totalorder %v3733, 0
    %vm3766 = vcmp.ne.s16.totalorder %v3734, 0
    %vm3767 = vcmp.ne.s16.totalorder %v3735, 0
    %v3768 = vsel %vm3736, 65537, 0
    %v3769 = vsel %vm3737, 65537, 0
    %v3770 = vsel %vm3738, 65537, 0
    %v3771 = vsel %vm3739, 65537, 0
    %v3772 = vsel %vm3740, 65537, 0
    %v3773 = vsel %vm3741, 65537, 0
    %v3774 = vsel %vm3742, 65537, 0
    %v3775 = vsel %vm3743, 65537, 0
    %v3776 = vsel %vm3744, 65537, 0
    %v3777 = vsel %vm3745, 65537, 0
    %v3778 = vsel %vm3746, 65537, 0
    %v3779 = vsel %vm3747, 65537, 0
    %v3780 = vsel %vm3748, 65537, 0
    %v3781 = vsel %vm3749, 65537, 0
    %v3782 = vsel %vm3750, 65537, 0
    %v3783 = vsel %vm3751, 65537, 0
    %v3784 = vsel %vm3752, 65537, 0
    %v3785 = vsel %vm3753, 65537, 0
    %v3786 = vsel %vm3754, 65537, 0
    %v3787 = vsel %vm3755, 65537, 0
    %v3788 = vsel %vm3756, 65537, 0
    %v3789 = vsel %vm3757, 65537, 0
    %v3790 = vsel %vm3758, 65537, 0
    %v3791 = vsel %vm3759, 65537, 0
    %v3792 = vsel %vm3760, 65537, 0
    %v3793 = vsel %vm3761, 65537, 0
    %v3794 = vsel %vm3762, 65537, 0
    %v3795 = vsel %vm3763, 65537, 0
    %v3796 = vsel %vm3764, 65537, 0
    %v3797 = vsel %vm3765, 65537, 0
    %v3798 = vsel %vm3766, 65537, 0
    %v3799 = vsel %vm3767, 65537, 0
    %v3800 = vunpack.c.l.b16 %v3768
    %v3801 = vunpack.c.l.b16 %v3769
    %v3802 = vunpack.c.l.b16 %v3770
    %v3803 = vunpack.c.l.b16 %v3771
    %v3804 = vunpack.c.l.b16 %v3772
    %v3805 = vunpack.c.l.b16 %v3773
    %v3806 = vunpack.c.l.b16 %v3774
    %v3807 = vunpack.c.l.b16 %v3775
    %v3808 = vunpack.c.l.b16 %v3776
    %v3809 = vunpack.c.l.b16 %v3777
    %v3810 = vunpack.c.l.b16 %v3778
    %v3811 = vunpack.c.l.b16 %v3779
    %v3812 = vunpack.c.l.b16 %v3780
    %v3813 = vunpack.c.l.b16 %v3781
    %v3814 = vunpack.c.l.b16 %v3782
    %v3815 = vunpack.c.l.b16 %v3783
    %v3816 = vunpack.c.l.b16 %v3784
    %v3817 = vunpack.c.l.b16 %v3785
    %v3818 = vunpack.c.l.b16 %v3786
    %v3819 = vunpack.c.l.b16 %v3787
    %v3820 = vunpack.c.l.b16 %v3788
    %v3821 = vunpack.c.l.b16 %v3789
    %v3822 = vunpack.c.l.b16 %v3790
    %v3823 = vunpack.c.l.b16 %v3791
    %v3824 = vunpack.c.l.b16 %v3792
    %v3825 = vunpack.c.l.b16 %v3793
    %v3826 = vunpack.c.l.b16 %v3794
    %v3827 = vunpack.c.l.b16 %v3795
    %v3828 = vunpack.c.l.b16 %v3796
    %v3829 = vunpack.c.l.b16 %v3797
    %v3830 = vunpack.c.l.b16 %v3798
    %v3831 = vunpack.c.l.b16 %v3799
    %vm3832 = vcmp.ne.s32.totalorder %v3800, 0
    %vm3833 = vcmp.ne.s32.totalorder %v3801, 0
    %vm3834 = vcmp.ne.s32.totalorder %v3802, 0
    %vm3835 = vcmp.ne.s32.totalorder %v3803, 0
    %vm3836 = vcmp.ne.s32.totalorder %v3804, 0
    %vm3837 = vcmp.ne.s32.totalorder %v3805, 0
    %vm3838 = vcmp.ne.s32.totalorder %v3806, 0
    %vm3839 = vcmp.ne.s32.totalorder %v3807, 0
    %vm3840 = vcmp.ne.s32.totalorder %v3808, 0
    %vm3841 = vcmp.ne.s32.totalorder %v3809, 0
    %vm3842 = vcmp.ne.s32.totalorder %v3810, 0
    %vm3843 = vcmp.ne.s32.totalorder %v3811, 0
    %vm3844 = vcmp.ne.s32.totalorder %v3812, 0
    %vm3845 = vcmp.ne.s32.totalorder %v3813, 0
    %vm3846 = vcmp.ne.s32.totalorder %v3814, 0
    %vm3847 = vcmp.ne.s32.totalorder %v3815, 0
    %vm3848 = vcmp.ne.s32.totalorder %v3816, 0
    %vm3849 = vcmp.ne.s32.totalorder %v3817, 0
    %vm3850 = vcmp.ne.s32.totalorder %v3818, 0
    %vm3851 = vcmp.ne.s32.totalorder %v3819, 0
    %vm3852 = vcmp.ne.s32.totalorder %v3820, 0
    %vm3853 = vcmp.ne.s32.totalorder %v3821, 0
    %vm3854 = vcmp.ne.s32.totalorder %v3822, 0
    %vm3855 = vcmp.ne.s32.totalorder %v3823, 0
    %vm3856 = vcmp.ne.s32.totalorder %v3824, 0
    %vm3857 = vcmp.ne.s32.totalorder %v3825, 0
    %vm3858 = vcmp.ne.s32.totalorder %v3826, 0
    %vm3859 = vcmp.ne.s32.totalorder %v3827, 0
    %vm3860 = vcmp.ne.s32.totalorder %v3828, 0
    %vm3861 = vcmp.ne.s32.totalorder %v3829, 0
    %vm3862 = vcmp.ne.s32.totalorder %v3830, 0
    %vm3863 = vcmp.ne.s32.totalorder %v3831, 0
    %v3864 = vsel %vm3832, 1, 0
    %v3865 = vsel %vm3833, 1, 0
    %v3866 = vsel %vm3834, 1, 0
    %v3867 = vsel %vm3835, 1, 0
    %v3868 = vsel %vm3836, 1, 0
    %v3869 = vsel %vm3837, 1, 0
    %v3870 = vsel %vm3838, 1, 0
    %v3871 = vsel %vm3839, 1, 0
    %v3872 = vsel %vm3840, 1, 0
    %v3873 = vsel %vm3841, 1, 0
    %v3874 = vsel %vm3842, 1, 0
    %v3875 = vsel %vm3843, 1, 0
    %v3876 = vsel %vm3844, 1, 0
    %v3877 = vsel %vm3845, 1, 0
    %v3878 = vsel %vm3846, 1, 0
    %v3879 = vsel %vm3847, 1, 0
    %v3880 = vsel %vm3848, 1, 0
    %v3881 = vsel %vm3849, 1, 0
    %v3882 = vsel %vm3850, 1, 0
    %v3883 = vsel %vm3851, 1, 0
    %v3884 = vsel %vm3852, 1, 0
    %v3885 = vsel %vm3853, 1, 0
    %v3886 = vsel %vm3854, 1, 0
    %v3887 = vsel %vm3855, 1, 0
    %v3888 = vsel %vm3856, 1, 0
    %v3889 = vsel %vm3857, 1, 0
    %v3890 = vsel %vm3858, 1, 0
    %v3891 = vsel %vm3859, 1, 0
    %v3892 = vsel %vm3860, 1, 0
    %v3893 = vsel %vm3861, 1, 0
    %v3894 = vsel %vm3862, 1, 0
    %v3895 = vsel %vm3863, 1, 0
    %v3896 = vcvt.s32.f32 %v3864
    %v3897 = vcvt.s32.f32 %v3865
    %v3898 = vcvt.s32.f32 %v3866
    %v3899 = vcvt.s32.f32 %v3867
    %v3900 = vcvt.s32.f32 %v3868
    %v3901 = vcvt.s32.f32 %v3869
    %v3902 = vcvt.s32.f32 %v3870
    %v3903 = vcvt.s32.f32 %v3871
    %v3904 = vcvt.s32.f32 %v3872
    %v3905 = vcvt.s32.f32 %v3873
    %v3906 = vcvt.s32.f32 %v3874
    %v3907 = vcvt.s32.f32 %v3875
    %v3908 = vcvt.s32.f32 %v3876
    %v3909 = vcvt.s32.f32 %v3877
    %v3910 = vcvt.s32.f32 %v3878
    %v3911 = vcvt.s32.f32 %v3879
    %v3912 = vcvt.s32.f32 %v3880
    %v3913 = vcvt.s32.f32 %v3881
    %v3914 = vcvt.s32.f32 %v3882
    %v3915 = vcvt.s32.f32 %v3883
    %v3916 = vcvt.s32.f32 %v3884
    %v3917 = vcvt.s32.f32 %v3885
    %v3918 = vcvt.s32.f32 %v3886
    %v3919 = vcvt.s32.f32 %v3887
    %v3920 = vcvt.s32.f32 %v3888
    %v3921 = vcvt.s32.f32 %v3889
    %v3922 = vcvt.s32.f32 %v3890
    %v3923 = vcvt.s32.f32 %v3891
    %v3924 = vcvt.s32.f32 %v3892
    %v3925 = vcvt.s32.f32 %v3893
    %v3926 = vcvt.s32.f32 %v3894
    %v3927 = vcvt.s32.f32 %v3895
    %v3928 = vpack.c.bf16 %v3897, %v3896
    %v3929 = vpack.c.bf16 %v3899, %v3898
    %v3930 = vpack.c.bf16 %v3901, %v3900
    %v3931 = vpack.c.bf16 %v3903, %v3902
    %v3932 = vpack.c.bf16 %v3905, %v3904
    %v3933 = vpack.c.bf16 %v3907, %v3906
    %v3934 = vpack.c.bf16 %v3909, %v3908
    %v3935 = vpack.c.bf16 %v3911, %v3910
    %v3936 = vpack.c.bf16 %v3913, %v3912
    %v3937 = vpack.c.bf16 %v3915, %v3914
    %v3938 = vpack.c.bf16 %v3917, %v3916
    %v3939 = vpack.c.bf16 %v3919, %v3918
    %v3940 = vpack.c.bf16 %v3921, %v3920
    %v3941 = vpack.c.bf16 %v3923, %v3922
    %v3942 = vpack.c.bf16 %v3925, %v3924
    %v3943 = vpack.c.bf16 %v3927, %v3926
    %v3944 = vld [vmem:[#allocation3] sm:$0xff]
    %v3945 = vld [vmem:[#allocation3 + $0x8] sm:$0xff]
    %v3946 = vld [vmem:[#allocation3 + $0x10] sm:$0xff]
    %v3947 = vld [vmem:[#allocation3 + $0x18] sm:$0xff]
    %v3948 = vld [vmem:[#allocation3 + $0x20] sm:$0xff]
    %v3949 = vld [vmem:[#allocation3 + $0x28] sm:$0xff]
    %v3950 = vld [vmem:[#allocation3 + $0x30] sm:$0xff]
    %v3951 = vld [vmem:[#allocation3 + $0x38] sm:$0xff]
    %v3952 = vld [vmem:[#allocation3 + $0x40] sm:$0xff]
    %v3953 = vld [vmem:[#allocation3 + $0x48] sm:$0xff]
    %v3954 = vld [vmem:[#allocation3 + $0x50] sm:$0xff]
    %v3955 = vld [vmem:[#allocation3 + $0x58] sm:$0xff]
    %v3956 = vld [vmem:[#allocation3 + $0x60] sm:$0xff]
    %v3957 = vld [vmem:[#allocation3 + $0x68] sm:$0xff]
    %v3958 = vld [vmem:[#allocation3 + $0x70] sm:$0xff]
    %v3959 = vld [vmem:[#allocation3 + $0x78] sm:$0xff]
    %v3960 = vld [vmem:[#allocation3 + $0x80] sm:$0xff]
    %v3961 = vld [vmem:[#allocation3 + $0x88] sm:$0xff]
    %v3962 = vld [vmem:[#allocation3 + $0x90] sm:$0xff]
    %v3963 = vld [vmem:[#allocation3 + $0x98] sm:$0xff]
    %v3964 = vld [vmem:[#allocation3 + $0xa0] sm:$0xff]
    %v3965 = vld [vmem:[#allocation3 + $0xa8] sm:$0xff]
    %v3966 = vld [vmem:[#allocation3 + $0xb0] sm:$0xff]
    %v3967 = vld [vmem:[#allocation3 + $0xb8] sm:$0xff]
    %v3968 = vld [vmem:[#allocation3 + $0xc0] sm:$0xff]
    %v3969 = vld [vmem:[#allocation3 + $0xc8] sm:$0xff]
    %v3970 = vld [vmem:[#allocation3 + $0xd0] sm:$0xff]
    %v3971 = vld [vmem:[#allocation3 + $0xd8] sm:$0xff]
    %v3972 = vld [vmem:[#allocation3 + $0xe0] sm:$0xff]
    %v3973 = vld [vmem:[#allocation3 + $0xe8] sm:$0xff]
    %v3974 = vld [vmem:[#allocation3 + $0xf0] sm:$0xff]
    %v3975 = vld [vmem:[#allocation3 + $0xf8] sm:$0xff]
    %3976 = vmatprep.subr.bf16.mxu0 0
    %3977 = vmatpush1.bf16.msra.mxu0 1065369472
    %3978 = vmatprep.subr.bf16.mxu0 0
    %3979 = vmatpush1.bf16.msra.mxu0 1065369472
    %3980 = vmatprep.subr.bf16.mxu0 0
    %3981 = vmatpush1.bf16.msra.mxu0 1065369472
    %3982 = vmatprep.subr.bf16.mxu0 0
    %3983 = vmatpush1.bf16.msra.mxu0 1065369472
    %3984 = vmatprep.subr.bf16.mxu0 0
    %3985 = vmatpush1.bf16.msra.mxu0 1065369472
    %3986 = vmatprep.subr.bf16.mxu0 0
    %3987 = vmatpush1.bf16.msra.mxu0 1065369472
    %3988 = vmatprep.subr.bf16.mxu0 0
    %3989 = vmatpush1.bf16.msra.mxu0 1065369472
    %3990 = vmatprep.subr.bf16.mxu0 0
    %3991 = vmatpush1.bf16.msra.mxu0 1065369472
    %3992 = vmatprep.subr.bf16.mxu0 0
    %3993 = vmatpush2.bf16.msra.mxu0 0
    %3994 = vmatprep.subr.bf16.mxu0 0
    %3995 = vmatpush2.bf16.msra.mxu0 0
    %3996 = vmatprep.subr.bf16.mxu0 0
    %3997 = vmatpush2.bf16.msra.mxu0 0
    %3998 = vmatprep.subr.bf16.mxu0 0
    %3999 = vmatpush2.bf16.msra.mxu0 0
    %4000 = vmatprep.subr.bf16.mxu0 0
    %4001 = vmatpush2.bf16.msra.mxu0 0
    %4002 = vmatprep.subr.bf16.mxu0 0
    %4003 = vmatpush2.bf16.msra.mxu0 0
    %4004 = vmatprep.subr.bf16.mxu0 0
    %4005 = vmatpush2.bf16.msra.mxu0 0
    %4006 = vmatprep.subr.bf16.mxu0 0
    %4007 = vmatpush2.bf16.msra.mxu0 0
    %4008 = vmatprep.mubr.bf16.mxu0 0
    %4009 = vmatmul.mubr.bf16.gmra.mxu0 %v3928
    %v4010 = vpop.f32.mrf.mxu0
    %v4011 = vadd.f32 0.0, %v4010
    %v4012 = vpop.f32.mrf.mxu0
    %v4013 = vpop.f32.mrf.mxu0
    %v4014 = vadd.f32 0.0, %v4013
    %v4015 = vpop.f32.mrf.mxu0
    %4016 = vmatprep.mubr.bf16.mxu0 0
    %4017 = vmatmul.mubr.bf16.gmra.mxu0 %v3929
    %v4018 = vpop.f32.mrf.mxu0
    %v4019 = vadd.f32 0.0, %v4018
    %v4020 = vpop.f32.mrf.mxu0
    %v4021 = vpop.f32.mrf.mxu0
    %v4022 = vadd.f32 0.0, %v4021
    %v4023 = vpop.f32.mrf.mxu0
    %4024 = vmatprep.mubr.bf16.mxu0 0
    %4025 = vmatmul.mubr.bf16.gmra.mxu0 %v3930
    %v4026 = vpop.f32.mrf.mxu0
    %v4027 = vadd.f32 0.0, %v4026
    %v4028 = vpop.f32.mrf.mxu0
    %v4029 = vpop.f32.mrf.mxu0
    %v4030 = vadd.f32 0.0, %v4029
    %v4031 = vpop.f32.mrf.mxu0
    %4032 = vmatprep.mubr.bf16.mxu0 0
    %4033 = vmatmul.mubr.bf16.gmra.mxu0 %v3931
    %v4034 = vpop.f32.mrf.mxu0
    %v4035 = vadd.f32 0.0, %v4034
    %v4036 = vpop.f32.mrf.mxu0
    %v4037 = vpop.f32.mrf.mxu0
    %v4038 = vadd.f32 0.0, %v4037
    %v4039 = vpop.f32.mrf.mxu0
    %4040 = vmatprep.mubr.bf16.mxu0 0
    %4041 = vmatmul.mubr.bf16.gmra.mxu0 %v3932
    %v4042 = vpop.f32.mrf.mxu0
    %v4043 = vadd.f32 0.0, %v4042
    %v4044 = vpop.f32.mrf.mxu0
    %v4045 = vpop.f32.mrf.mxu0
    %v4046 = vadd.f32 0.0, %v4045
    %v4047 = vpop.f32.mrf.mxu0
    %4048 = vmatprep.mubr.bf16.mxu0 0
    %4049 = vmatmul.mubr.bf16.gmra.mxu0 %v3933
    %v4050 = vpop.f32.mrf.mxu0
    %v4051 = vadd.f32 0.0, %v4050
    %v4052 = vpop.f32.mrf.mxu0
    %v4053 = vpop.f32.mrf.mxu0
    %v4054 = vadd.f32 0.0, %v4053
    %v4055 = vpop.f32.mrf.mxu0
    %4056 = vmatprep.mubr.bf16.mxu0 0
    %4057 = vmatmul.mubr.bf16.gmra.mxu0 %v3934
    %v4058 = vpop.f32.mrf.mxu0
    %v4059 = vadd.f32 0.0, %v4058
    %v4060 = vpop.f32.mrf.mxu0
    %v4061 = vpop.f32.mrf.mxu0
    %v4062 = vadd.f32 0.0, %v4061
    %v4063 = vpop.f32.mrf.mxu0
    %4064 = vmatprep.mubr.bf16.mxu0 0
    %4065 = vmatmul.mubr.bf16.gmra.mxu0 %v3935
    %v4066 = vpop.f32.mrf.mxu0
    %v4067 = vadd.f32 0.0, %v4066
    %v4068 = vpop.f32.mrf.mxu0
    %v4069 = vpop.f32.mrf.mxu0
    %v4070 = vadd.f32 0.0, %v4069
    %v4071 = vpop.f32.mrf.mxu0
    %4072 = vmatprep.mubr.bf16.mxu0 0
    %4073 = vmatmul.mubr.bf16.gmra.mxu0 %v3936
    %v4074 = vpop.f32.mrf.mxu0
    %v4075 = vadd.f32 0.0, %v4074
    %v4076 = vpop.f32.mrf.mxu0
    %v4077 = vpop.f32.mrf.mxu0
    %v4078 = vadd.f32 0.0, %v4077
    %v4079 = vpop.f32.mrf.mxu0
    %4080 = vmatprep.mubr.bf16.mxu0 0
    %4081 = vmatmul.mubr.bf16.gmra.mxu0 %v3937
    %v4082 = vpop.f32.mrf.mxu0
    %v4083 = vadd.f32 0.0, %v4082
    %v4084 = vpop.f32.mrf.mxu0
    %v4085 = vpop.f32.mrf.mxu0
    %v4086 = vadd.f32 0.0, %v4085
    %v4087 = vpop.f32.mrf.mxu0
    %4088 = vmatprep.mubr.bf16.mxu0 0
    %4089 = vmatmul.mubr.bf16.gmra.mxu0 %v3938
    %v4090 = vpop.f32.mrf.mxu0
    %v4091 = vadd.f32 0.0, %v4090
    %v4092 = vpop.f32.mrf.mxu0
    %v4093 = vpop.f32.mrf.mxu0
    %v4094 = vadd.f32 0.0, %v4093
    %v4095 = vpop.f32.mrf.mxu0
    %4096 = vmatprep.mubr.bf16.mxu0 0
    %4097 = vmatmul.mubr.bf16.gmra.mxu0 %v3939
    %v4098 = vpop.f32.mrf.mxu0
    %v4099 = vadd.f32 0.0, %v4098
    %v4100 = vpop.f32.mrf.mxu0
    %v4101 = vpop.f32.mrf.mxu0
    %v4102 = vadd.f32 0.0, %v4101
    %v4103 = vpop.f32.mrf.mxu0
    %4104 = vmatprep.mubr.bf16.mxu0 0
    %4105 = vmatmul.mubr.bf16.gmra.mxu0 %v3940
    %v4106 = vpop.f32.mrf.mxu0
    %v4107 = vadd.f32 0.0, %v4106
    %v4108 = vpop.f32.mrf.mxu0
    %v4109 = vpop.f32.mrf.mxu0
    %v4110 = vadd.f32 0.0, %v4109
    %v4111 = vpop.f32.mrf.mxu0
    %4112 = vmatprep.mubr.bf16.mxu0 0
    %4113 = vmatmul.mubr.bf16.gmra.mxu0 %v3941
    %v4114 = vpop.f32.mrf.mxu0
    %v4115 = vadd.f32 0.0, %v4114
    %v4116 = vpop.f32.mrf.mxu0
    %v4117 = vpop.f32.mrf.mxu0
    %v4118 = vadd.f32 0.0, %v4117
    %v4119 = vpop.f32.mrf.mxu0
    %4120 = vmatprep.mubr.bf16.mxu0 0
    %4121 = vmatmul.mubr.bf16.gmra.mxu0 %v3942
    %v4122 = vpop.f32.mrf.mxu0
    %v4123 = vadd.f32 0.0, %v4122
    %v4124 = vpop.f32.mrf.mxu0
    %v4125 = vpop.f32.mrf.mxu0
    %v4126 = vadd.f32 0.0, %v4125
    %v4127 = vpop.f32.mrf.mxu0
    %4128 = vmatprep.mubr.bf16.mxu0 0
    %4129 = vmatmul.mubr.bf16.gmra.mxu0 %v3943
    %v4130 = vpop.f32.mrf.mxu0
    %v4131 = vadd.f32 0.0, %v4130
    %v4132 = vpop.f32.mrf.mxu0
    %v4133 = vpop.f32.mrf.mxu0
    %v4134 = vadd.f32 0.0, %v4133
    %v4135 = vpop.f32.mrf.mxu0
    %4136 = vdwg.mxu0
    %v4137 = vadd.f32 %v3944, %v4011
    %v4138 = vadd.f32 %v3945, %v4014
    %v4139 = vadd.f32 %v3946, %v4019
    %v4140 = vadd.f32 %v3947, %v4022
    %v4141 = vadd.f32 %v3948, %v4027
    %v4142 = vadd.f32 %v3949, %v4030
    %v4143 = vadd.f32 %v3950, %v4035
    %v4144 = vadd.f32 %v3951, %v4038
    %v4145 = vadd.f32 %v3952, %v4043
    %v4146 = vadd.f32 %v3953, %v4046
    %v4147 = vadd.f32 %v3954, %v4051
    %v4148 = vadd.f32 %v3955, %v4054
    %v4149 = vadd.f32 %v3956, %v4059
    %v4150 = vadd.f32 %v3957, %v4062
    %v4151 = vadd.f32 %v3958, %v4067
    %v4152 = vadd.f32 %v3959, %v4070
    %v4153 = vadd.f32 %v3960, %v4075
    %v4154 = vadd.f32 %v3961, %v4078
    %v4155 = vadd.f32 %v3962, %v4083
    %v4156 = vadd.f32 %v3963, %v4086
    %v4157 = vadd.f32 %v3964, %v4091
    %v4158 = vadd.f32 %v3965, %v4094
    %v4159 = vadd.f32 %v3966, %v4099
    %v4160 = vadd.f32 %v3967, %v4102
    %v4161 = vadd.f32 %v3968, %v4107
    %v4162 = vadd.f32 %v3969, %v4110
    %v4163 = vadd.f32 %v3970, %v4115
    %v4164 = vadd.f32 %v3971, %v4118
    %v4165 = vadd.f32 %v3972, %v4123
    %v4166 = vadd.f32 %v3973, %v4126
    %v4167 = vadd.f32 %v3974, %v4131
    %v4168 = vadd.f32 %v3975, %v4134
    %4169 = vst.msk [vmem:[#allocation3] sm:$0xff] %vm736, %v4137
    %4170 = vst.msk [vmem:[#allocation3 + $0x8] sm:$0xff] %vm736, %v4138
    %4171 = vst.msk [vmem:[#allocation3 + $0x10] sm:$0xff] %vm736, %v4139
    %4172 = vst.msk [vmem:[#allocation3 + $0x18] sm:$0xff] %vm736, %v4140
    %4173 = vst.msk [vmem:[#allocation3 + $0x20] sm:$0xff] %vm736, %v4141
    %4174 = vst.msk [vmem:[#allocation3 + $0x28] sm:$0xff] %vm736, %v4142
    %4175 = vst.msk [vmem:[#allocation3 + $0x30] sm:$0xff] %vm736, %v4143
    %4176 = vst.msk [vmem:[#allocation3 + $0x38] sm:$0xff] %vm736, %v4144
    %4177 = vst.msk [vmem:[#allocation3 + $0x40] sm:$0xff] %vm736, %v4145
    %4178 = vst.msk [vmem:[#allocation3 + $0x48] sm:$0xff] %vm736, %v4146
    %4179 = vst.msk [vmem:[#allocation3 + $0x50] sm:$0xff] %vm736, %v4147
    %4180 = vst.msk [vmem:[#allocation3 + $0x58] sm:$0xff] %vm736, %v4148
    %4181 = vst.msk [vmem:[#allocation3 + $0x60] sm:$0xff] %vm736, %v4149
    %4182 = vst.msk [vmem:[#allocation3 + $0x68] sm:$0xff] %vm736, %v4150
    %4183 = vst.msk [vmem:[#allocation3 + $0x70] sm:$0xff] %vm736, %v4151
    %4184 = vst.msk [vmem:[#allocation3 + $0x78] sm:$0xff] %vm736, %v4152
    %4185 = vst.msk [vmem:[#allocation3 + $0x80] sm:$0xff] %vm736, %v4153
    %4186 = vst.msk [vmem:[#allocation3 + $0x88] sm:$0xff] %vm736, %v4154
    %4187 = vst.msk [vmem:[#allocation3 + $0x90] sm:$0xff] %vm736, %v4155
    %4188 = vst.msk [vmem:[#allocation3 + $0x98] sm:$0xff] %vm736, %v4156
    %4189 = vst.msk [vmem:[#allocation3 + $0xa0] sm:$0xff] %vm736, %v4157
    %4190 = vst.msk [vmem:[#allocation3 + $0xa8] sm:$0xff] %vm736, %v4158
    %4191 = vst.msk [vmem:[#allocation3 + $0xb0] sm:$0xff] %vm736, %v4159
    %4192 = vst.msk [vmem:[#allocation3 + $0xb8] sm:$0xff] %vm736, %v4160
    %4193 = vst.msk [vmem:[#allocation3 + $0xc0] sm:$0xff] %vm736, %v4161
    %4194 = vst.msk [vmem:[#allocation3 + $0xc8] sm:$0xff] %vm736, %v4162
    %4195 = vst.msk [vmem:[#allocation3 + $0xd0] sm:$0xff] %vm736, %v4163
    %4196 = vst.msk [vmem:[#allocation3 + $0xd8] sm:$0xff] %vm736, %v4164
    %4197 = vst.msk [vmem:[#allocation3 + $0xe0] sm:$0xff] %vm736, %v4165
    %4198 = vst.msk [vmem:[#allocation3 + $0xe8] sm:$0xff] %vm736, %v4166
    %4199 = vst.msk [vmem:[#allocation3 + $0xf0] sm:$0xff] %vm736, %v4167
    %4200 = vst.msk [vmem:[#allocation3 + $0xf8] sm:$0xff] %vm736, %v4168
    %s4201 = sadd.s32 0, 7
    %s4202 = scalar_lea.vmem [#allocation2], %s4201
    %v4203 = vld [vmem:[%s4202] sm:$0x1]
    %v4204 = vpack.c.bf16 %v4203, %v4203
    %v4206 = vpack.i.b16 %v4204, %v4204
    %v4208 = vlaneseq
    %v4209 = vshrl.u32 %v4208, 7
    %v4210 = vsub.s32 0, %v4209
    %v4211 = vrot.slane %v4206, %v4210
    %vm4212 = vcmp.le.bf16.partialorder %v4211, %v175
    %vm4213 = vcmp.le.bf16.partialorder %v4211, %v176
    %vm4214 = vcmp.le.bf16.partialorder %v4211, %v177
    %vm4215 = vcmp.le.bf16.partialorder %v4211, %v178
    %vm4216 = vcmp.le.bf16.partialorder %v4211, %v179
    %vm4217 = vcmp.le.bf16.partialorder %v4211, %v180
    %vm4218 = vcmp.le.bf16.partialorder %v4211, %v181
    %vm4219 = vcmp.le.bf16.partialorder %v4211, %v182
    %vm4220 = vcmp.le.bf16.partialorder %v4211, %v183
    %vm4221 = vcmp.le.bf16.partialorder %v4211, %v184
    %vm4222 = vcmp.le.bf16.partialorder %v4211, %v185
    %vm4223 = vcmp.le.bf16.partialorder %v4211, %v186
    %vm4224 = vcmp.le.bf16.partialorder %v4211, %v187
    %vm4225 = vcmp.le.bf16.partialorder %v4211, %v188
    %vm4226 = vcmp.le.bf16.partialorder %v4211, %v189
    %vm4227 = vcmp.le.bf16.partialorder %v4211, %v190
    %v4228 = vsel %vm4212, 65537, 0
    %v4229 = vsel %vm4213, 65537, 0
    %v4230 = vsel %vm4214, 65537, 0
    %v4231 = vsel %vm4215, 65537, 0
    %v4232 = vsel %vm4216, 65537, 0
    %v4233 = vsel %vm4217, 65537, 0
    %v4234 = vsel %vm4218, 65537, 0
    %v4235 = vsel %vm4219, 65537, 0
    %v4236 = vsel %vm4220, 65537, 0
    %v4237 = vsel %vm4221, 65537, 0
    %v4238 = vsel %vm4222, 65537, 0
    %v4239 = vsel %vm4223, 65537, 0
    %v4240 = vsel %vm4224, 65537, 0
    %v4241 = vsel %vm4225, 65537, 0
    %v4242 = vsel %vm4226, 65537, 0
    %v4243 = vsel %vm4227, 65537, 0
    %v4244 = vunpack.c.l.b16 %v4228
    %v4245 = vunpack.c.h.b16 %v4228
    %v4246 = vunpack.c.l.b16 %v4229
    %v4247 = vunpack.c.h.b16 %v4229
    %v4248 = vunpack.c.l.b16 %v4230
    %v4249 = vunpack.c.h.b16 %v4230
    %v4250 = vunpack.c.l.b16 %v4231
    %v4251 = vunpack.c.h.b16 %v4231
    %v4252 = vunpack.c.l.b16 %v4232
    %v4253 = vunpack.c.h.b16 %v4232
    %v4254 = vunpack.c.l.b16 %v4233
    %v4255 = vunpack.c.h.b16 %v4233
    %v4256 = vunpack.c.l.b16 %v4234
    %v4257 = vunpack.c.h.b16 %v4234
    %v4258 = vunpack.c.l.b16 %v4235
    %v4259 = vunpack.c.h.b16 %v4235
    %v4260 = vunpack.c.l.b16 %v4236
    %v4261 = vunpack.c.h.b16 %v4236
    %v4262 = vunpack.c.l.b16 %v4237
    %v4263 = vunpack.c.h.b16 %v4237
    %v4264 = vunpack.c.l.b16 %v4238
    %v4265 = vunpack.c.h.b16 %v4238
    %v4266 = vunpack.c.l.b16 %v4239
    %v4267 = vunpack.c.h.b16 %v4239
    %v4268 = vunpack.c.l.b16 %v4240
    %v4269 = vunpack.c.h.b16 %v4240
    %v4270 = vunpack.c.l.b16 %v4241
    %v4271 = vunpack.c.h.b16 %v4241
    %v4272 = vunpack.c.l.b16 %v4242
    %v4273 = vunpack.c.h.b16 %v4242
    %v4274 = vunpack.c.l.b16 %v4243
    %v4275 = vunpack.c.h.b16 %v4243
    %v4276 = vpack.c.b16 %v4244, %v4244
    %v4277 = vpack.c.b16 %v4245, %v4245
    %v4278 = vpack.c.b16 %v4246, %v4246
    %v4279 = vpack.c.b16 %v4247, %v4247
    %v4280 = vpack.c.b16 %v4248, %v4248
    %v4281 = vpack.c.b16 %v4249, %v4249
    %v4282 = vpack.c.b16 %v4250, %v4250
    %v4283 = vpack.c.b16 %v4251, %v4251
    %v4284 = vpack.c.b16 %v4252, %v4252
    %v4285 = vpack.c.b16 %v4253, %v4253
    %v4286 = vpack.c.b16 %v4254, %v4254
    %v4287 = vpack.c.b16 %v4255, %v4255
    %v4288 = vpack.c.b16 %v4256, %v4256
    %v4289 = vpack.c.b16 %v4257, %v4257
    %v4290 = vpack.c.b16 %v4258, %v4258
    %v4291 = vpack.c.b16 %v4259, %v4259
    %v4292 = vpack.c.b16 %v4260, %v4260
    %v4293 = vpack.c.b16 %v4261, %v4261
    %v4294 = vpack.c.b16 %v4262, %v4262
    %v4295 = vpack.c.b16 %v4263, %v4263
    %v4296 = vpack.c.b16 %v4264, %v4264
    %v4297 = vpack.c.b16 %v4265, %v4265
    %v4298 = vpack.c.b16 %v4266, %v4266
    %v4299 = vpack.c.b16 %v4267, %v4267
    %v4300 = vpack.c.b16 %v4268, %v4268
    %v4301 = vpack.c.b16 %v4269, %v4269
    %v4302 = vpack.c.b16 %v4270, %v4270
    %v4303 = vpack.c.b16 %v4271, %v4271
    %v4304 = vpack.c.b16 %v4272, %v4272
    %v4305 = vpack.c.b16 %v4273, %v4273
    %v4306 = vpack.c.b16 %v4274, %v4274
    %v4307 = vpack.c.b16 %v4275, %v4275
    %vm4308 = vcmp.ne.s16.totalorder %v4276, 0
    %vm4309 = vcmp.ne.s16.totalorder %v4277, 0
    %vm4310 = vcmp.ne.s16.totalorder %v4278, 0
    %vm4311 = vcmp.ne.s16.totalorder %v4279, 0
    %vm4312 = vcmp.ne.s16.totalorder %v4280, 0
    %vm4313 = vcmp.ne.s16.totalorder %v4281, 0
    %vm4314 = vcmp.ne.s16.totalorder %v4282, 0
    %vm4315 = vcmp.ne.s16.totalorder %v4283, 0
    %vm4316 = vcmp.ne.s16.totalorder %v4284, 0
    %vm4317 = vcmp.ne.s16.totalorder %v4285, 0
    %vm4318 = vcmp.ne.s16.totalorder %v4286, 0
    %vm4319 = vcmp.ne.s16.totalorder %v4287, 0
    %vm4320 = vcmp.ne.s16.totalorder %v4288, 0
    %vm4321 = vcmp.ne.s16.totalorder %v4289, 0
    %vm4322 = vcmp.ne.s16.totalorder %v4290, 0
    %vm4323 = vcmp.ne.s16.totalorder %v4291, 0
    %vm4324 = vcmp.ne.s16.totalorder %v4292, 0
    %vm4325 = vcmp.ne.s16.totalorder %v4293, 0
    %vm4326 = vcmp.ne.s16.totalorder %v4294, 0
    %vm4327 = vcmp.ne.s16.totalorder %v4295, 0
    %vm4328 = vcmp.ne.s16.totalorder %v4296, 0
    %vm4329 = vcmp.ne.s16.totalorder %v4297, 0
    %vm4330 = vcmp.ne.s16.totalorder %v4298, 0
    %vm4331 = vcmp.ne.s16.totalorder %v4299, 0
    %vm4332 = vcmp.ne.s16.totalorder %v4300, 0
    %vm4333 = vcmp.ne.s16.totalorder %v4301, 0
    %vm4334 = vcmp.ne.s16.totalorder %v4302, 0
    %vm4335 = vcmp.ne.s16.totalorder %v4303, 0
    %vm4336 = vcmp.ne.s16.totalorder %v4304, 0
    %vm4337 = vcmp.ne.s16.totalorder %v4305, 0
    %vm4338 = vcmp.ne.s16.totalorder %v4306, 0
    %vm4339 = vcmp.ne.s16.totalorder %v4307, 0
    %v4340 = vsel %vm4308, 65537, 0
    %v4341 = vsel %vm4309, 65537, 0
    %v4342 = vsel %vm4310, 65537, 0
    %v4343 = vsel %vm4311, 65537, 0
    %v4344 = vsel %vm4312, 65537, 0
    %v4345 = vsel %vm4313, 65537, 0
    %v4346 = vsel %vm4314, 65537, 0
    %v4347 = vsel %vm4315, 65537, 0
    %v4348 = vsel %vm4316, 65537, 0
    %v4349 = vsel %vm4317, 65537, 0
    %v4350 = vsel %vm4318, 65537, 0
    %v4351 = vsel %vm4319, 65537, 0
    %v4352 = vsel %vm4320, 65537, 0
    %v4353 = vsel %vm4321, 65537, 0
    %v4354 = vsel %vm4322, 65537, 0
    %v4355 = vsel %vm4323, 65537, 0
    %v4356 = vsel %vm4324, 65537, 0
    %v4357 = vsel %vm4325, 65537, 0
    %v4358 = vsel %vm4326, 65537, 0
    %v4359 = vsel %vm4327, 65537, 0
    %v4360 = vsel %vm4328, 65537, 0
    %v4361 = vsel %vm4329, 65537, 0
    %v4362 = vsel %vm4330, 65537, 0
    %v4363 = vsel %vm4331, 65537, 0
    %v4364 = vsel %vm4332, 65537, 0
    %v4365 = vsel %vm4333, 65537, 0
    %v4366 = vsel %vm4334, 65537, 0
    %v4367 = vsel %vm4335, 65537, 0
    %v4368 = vsel %vm4336, 65537, 0
    %v4369 = vsel %vm4337, 65537, 0
    %v4370 = vsel %vm4338, 65537, 0
    %v4371 = vsel %vm4339, 65537, 0
    %v4372 = vunpack.c.l.b16 %v4340
    %v4373 = vunpack.c.l.b16 %v4341
    %v4374 = vunpack.c.l.b16 %v4342
    %v4375 = vunpack.c.l.b16 %v4343
    %v4376 = vunpack.c.l.b16 %v4344
    %v4377 = vunpack.c.l.b16 %v4345
    %v4378 = vunpack.c.l.b16 %v4346
    %v4379 = vunpack.c.l.b16 %v4347
    %v4380 = vunpack.c.l.b16 %v4348
    %v4381 = vunpack.c.l.b16 %v4349
    %v4382 = vunpack.c.l.b16 %v4350
    %v4383 = vunpack.c.l.b16 %v4351
    %v4384 = vunpack.c.l.b16 %v4352
    %v4385 = vunpack.c.l.b16 %v4353
    %v4386 = vunpack.c.l.b16 %v4354
    %v4387 = vunpack.c.l.b16 %v4355
    %v4388 = vunpack.c.l.b16 %v4356
    %v4389 = vunpack.c.l.b16 %v4357
    %v4390 = vunpack.c.l.b16 %v4358
    %v4391 = vunpack.c.l.b16 %v4359
    %v4392 = vunpack.c.l.b16 %v4360
    %v4393 = vunpack.c.l.b16 %v4361
    %v4394 = vunpack.c.l.b16 %v4362
    %v4395 = vunpack.c.l.b16 %v4363
    %v4396 = vunpack.c.l.b16 %v4364
    %v4397 = vunpack.c.l.b16 %v4365
    %v4398 = vunpack.c.l.b16 %v4366
    %v4399 = vunpack.c.l.b16 %v4367
    %v4400 = vunpack.c.l.b16 %v4368
    %v4401 = vunpack.c.l.b16 %v4369
    %v4402 = vunpack.c.l.b16 %v4370
    %v4403 = vunpack.c.l.b16 %v4371
    %vm4404 = vcmp.ne.s32.totalorder %v4372, 0
    %vm4405 = vcmp.ne.s32.totalorder %v4373, 0
    %vm4406 = vcmp.ne.s32.totalorder %v4374, 0
    %vm4407 = vcmp.ne.s32.totalorder %v4375, 0
    %vm4408 = vcmp.ne.s32.totalorder %v4376, 0
    %vm4409 = vcmp.ne.s32.totalorder %v4377, 0
    %vm4410 = vcmp.ne.s32.totalorder %v4378, 0
    %vm4411 = vcmp.ne.s32.totalorder %v4379, 0
    %vm4412 = vcmp.ne.s32.totalorder %v4380, 0
    %vm4413 = vcmp.ne.s32.totalorder %v4381, 0
    %vm4414 = vcmp.ne.s32.totalorder %v4382, 0
    %vm4415 = vcmp.ne.s32.totalorder %v4383, 0
    %vm4416 = vcmp.ne.s32.totalorder %v4384, 0
    %vm4417 = vcmp.ne.s32.totalorder %v4385, 0
    %vm4418 = vcmp.ne.s32.totalorder %v4386, 0
    %vm4419 = vcmp.ne.s32.totalorder %v4387, 0
    %vm4420 = vcmp.ne.s32.totalorder %v4388, 0
    %vm4421 = vcmp.ne.s32.totalorder %v4389, 0
    %vm4422 = vcmp.ne.s32.totalorder %v4390, 0
    %vm4423 = vcmp.ne.s32.totalorder %v4391, 0
    %vm4424 = vcmp.ne.s32.totalorder %v4392, 0
    %vm4425 = vcmp.ne.s32.totalorder %v4393, 0
    %vm4426 = vcmp.ne.s32.totalorder %v4394, 0
    %vm4427 = vcmp.ne.s32.totalorder %v4395, 0
    %vm4428 = vcmp.ne.s32.totalorder %v4396, 0
    %vm4429 = vcmp.ne.s32.totalorder %v4397, 0
    %vm4430 = vcmp.ne.s32.totalorder %v4398, 0
    %vm4431 = vcmp.ne.s32.totalorder %v4399, 0
    %vm4432 = vcmp.ne.s32.totalorder %v4400, 0
    %vm4433 = vcmp.ne.s32.totalorder %v4401, 0
    %vm4434 = vcmp.ne.s32.totalorder %v4402, 0
    %vm4435 = vcmp.ne.s32.totalorder %v4403, 0
    %v4436 = vsel %vm4404, 1, 0
    %v4437 = vsel %vm4405, 1, 0
    %v4438 = vsel %vm4406, 1, 0
    %v4439 = vsel %vm4407, 1, 0
    %v4440 = vsel %vm4408, 1, 0
    %v4441 = vsel %vm4409, 1, 0
    %v4442 = vsel %vm4410, 1, 0
    %v4443 = vsel %vm4411, 1, 0
    %v4444 = vsel %vm4412, 1, 0
    %v4445 = vsel %vm4413, 1, 0
    %v4446 = vsel %vm4414, 1, 0
    %v4447 = vsel %vm4415, 1, 0
    %v4448 = vsel %vm4416, 1, 0
    %v4449 = vsel %vm4417, 1, 0
    %v4450 = vsel %vm4418, 1, 0
    %v4451 = vsel %vm4419, 1, 0
    %v4452 = vsel %vm4420, 1, 0
    %v4453 = vsel %vm4421, 1, 0
    %v4454 = vsel %vm4422, 1, 0
    %v4455 = vsel %vm4423, 1, 0
    %v4456 = vsel %vm4424, 1, 0
    %v4457 = vsel %vm4425, 1, 0
    %v4458 = vsel %vm4426, 1, 0
    %v4459 = vsel %vm4427, 1, 0
    %v4460 = vsel %vm4428, 1, 0
    %v4461 = vsel %vm4429, 1, 0
    %v4462 = vsel %vm4430, 1, 0
    %v4463 = vsel %vm4431, 1, 0
    %v4464 = vsel %vm4432, 1, 0
    %v4465 = vsel %vm4433, 1, 0
    %v4466 = vsel %vm4434, 1, 0
    %v4467 = vsel %vm4435, 1, 0
    %v4468 = vcvt.s32.f32 %v4436
    %v4469 = vcvt.s32.f32 %v4437
    %v4470 = vcvt.s32.f32 %v4438
    %v4471 = vcvt.s32.f32 %v4439
    %v4472 = vcvt.s32.f32 %v4440
    %v4473 = vcvt.s32.f32 %v4441
    %v4474 = vcvt.s32.f32 %v4442
    %v4475 = vcvt.s32.f32 %v4443
    %v4476 = vcvt.s32.f32 %v4444
    %v4477 = vcvt.s32.f32 %v4445
    %v4478 = vcvt.s32.f32 %v4446
    %v4479 = vcvt.s32.f32 %v4447
    %v4480 = vcvt.s32.f32 %v4448
    %v4481 = vcvt.s32.f32 %v4449
    %v4482 = vcvt.s32.f32 %v4450
    %v4483 = vcvt.s32.f32 %v4451
    %v4484 = vcvt.s32.f32 %v4452
    %v4485 = vcvt.s32.f32 %v4453
    %v4486 = vcvt.s32.f32 %v4454
    %v4487 = vcvt.s32.f32 %v4455
    %v4488 = vcvt.s32.f32 %v4456
    %v4489 = vcvt.s32.f32 %v4457
    %v4490 = vcvt.s32.f32 %v4458
    %v4491 = vcvt.s32.f32 %v4459
    %v4492 = vcvt.s32.f32 %v4460
    %v4493 = vcvt.s32.f32 %v4461
    %v4494 = vcvt.s32.f32 %v4462
    %v4495 = vcvt.s32.f32 %v4463
    %v4496 = vcvt.s32.f32 %v4464
    %v4497 = vcvt.s32.f32 %v4465
    %v4498 = vcvt.s32.f32 %v4466
    %v4499 = vcvt.s32.f32 %v4467
    %v4500 = vpack.c.bf16 %v4469, %v4468
    %v4501 = vpack.c.bf16 %v4471, %v4470
    %v4502 = vpack.c.bf16 %v4473, %v4472
    %v4503 = vpack.c.bf16 %v4475, %v4474
    %v4504 = vpack.c.bf16 %v4477, %v4476
    %v4505 = vpack.c.bf16 %v4479, %v4478
    %v4506 = vpack.c.bf16 %v4481, %v4480
    %v4507 = vpack.c.bf16 %v4483, %v4482
    %v4508 = vpack.c.bf16 %v4485, %v4484
    %v4509 = vpack.c.bf16 %v4487, %v4486
    %v4510 = vpack.c.bf16 %v4489, %v4488
    %v4511 = vpack.c.bf16 %v4491, %v4490
    %v4512 = vpack.c.bf16 %v4493, %v4492
    %v4513 = vpack.c.bf16 %v4495, %v4494
    %v4514 = vpack.c.bf16 %v4497, %v4496
    %v4515 = vpack.c.bf16 %v4499, %v4498
    %v4516 = vld [vmem:[#allocation3] sm:$0xff]
    %v4517 = vld [vmem:[#allocation3 + $0x8] sm:$0xff]
    %v4518 = vld [vmem:[#allocation3 + $0x10] sm:$0xff]
    %v4519 = vld [vmem:[#allocation3 + $0x18] sm:$0xff]
    %v4520 = vld [vmem:[#allocation3 + $0x20] sm:$0xff]
    %v4521 = vld [vmem:[#allocation3 + $0x28] sm:$0xff]
    %v4522 = vld [vmem:[#allocation3 + $0x30] sm:$0xff]
    %v4523 = vld [vmem:[#allocation3 + $0x38] sm:$0xff]
    %v4524 = vld [vmem:[#allocation3 + $0x40] sm:$0xff]
    %v4525 = vld [vmem:[#allocation3 + $0x48] sm:$0xff]
    %v4526 = vld [vmem:[#allocation3 + $0x50] sm:$0xff]
    %v4527 = vld [vmem:[#allocation3 + $0x58] sm:$0xff]
    %v4528 = vld [vmem:[#allocation3 + $0x60] sm:$0xff]
    %v4529 = vld [vmem:[#allocation3 + $0x68] sm:$0xff]
    %v4530 = vld [vmem:[#allocation3 + $0x70] sm:$0xff]
    %v4531 = vld [vmem:[#allocation3 + $0x78] sm:$0xff]
    %v4532 = vld [vmem:[#allocation3 + $0x80] sm:$0xff]
    %v4533 = vld [vmem:[#allocation3 + $0x88] sm:$0xff]
    %v4534 = vld [vmem:[#allocation3 + $0x90] sm:$0xff]
    %v4535 = vld [vmem:[#allocation3 + $0x98] sm:$0xff]
    %v4536 = vld [vmem:[#allocation3 + $0xa0] sm:$0xff]
    %v4537 = vld [vmem:[#allocation3 + $0xa8] sm:$0xff]
    %v4538 = vld [vmem:[#allocation3 + $0xb0] sm:$0xff]
    %v4539 = vld [vmem:[#allocation3 + $0xb8] sm:$0xff]
    %v4540 = vld [vmem:[#allocation3 + $0xc0] sm:$0xff]
    %v4541 = vld [vmem:[#allocation3 + $0xc8] sm:$0xff]
    %v4542 = vld [vmem:[#allocation3 + $0xd0] sm:$0xff]
    %v4543 = vld [vmem:[#allocation3 + $0xd8] sm:$0xff]
    %v4544 = vld [vmem:[#allocation3 + $0xe0] sm:$0xff]
    %v4545 = vld [vmem:[#allocation3 + $0xe8] sm:$0xff]
    %v4546 = vld [vmem:[#allocation3 + $0xf0] sm:$0xff]
    %v4547 = vld [vmem:[#allocation3 + $0xf8] sm:$0xff]
    %4548 = vmatprep.subr.bf16.mxu0 0
    %4549 = vmatpush1.bf16.msra.mxu0 1065369472
    %4550 = vmatprep.subr.bf16.mxu0 0
    %4551 = vmatpush1.bf16.msra.mxu0 1065369472
    %4552 = vmatprep.subr.bf16.mxu0 0
    %4553 = vmatpush1.bf16.msra.mxu0 1065369472
    %4554 = vmatprep.subr.bf16.mxu0 0
    %4555 = vmatpush1.bf16.msra.mxu0 1065369472
    %4556 = vmatprep.subr.bf16.mxu0 0
    %4557 = vmatpush1.bf16.msra.mxu0 1065369472
    %4558 = vmatprep.subr.bf16.mxu0 0
    %4559 = vmatpush1.bf16.msra.mxu0 1065369472
    %4560 = vmatprep.subr.bf16.mxu0 0
    %4561 = vmatpush1.bf16.msra.mxu0 1065369472
    %4562 = vmatprep.subr.bf16.mxu0 0
    %4563 = vmatpush1.bf16.msra.mxu0 1065369472
    %4564 = vmatprep.subr.bf16.mxu0 0
    %4565 = vmatpush2.bf16.msra.mxu0 0
    %4566 = vmatprep.subr.bf16.mxu0 0
    %4567 = vmatpush2.bf16.msra.mxu0 0
    %4568 = vmatprep.subr.bf16.mxu0 0
    %4569 = vmatpush2.bf16.msra.mxu0 0
    %4570 = vmatprep.subr.bf16.mxu0 0
    %4571 = vmatpush2.bf16.msra.mxu0 0
    %4572 = vmatprep.subr.bf16.mxu0 0
    %4573 = vmatpush2.bf16.msra.mxu0 0
    %4574 = vmatprep.subr.bf16.mxu0 0
    %4575 = vmatpush2.bf16.msra.mxu0 0
    %4576 = vmatprep.subr.bf16.mxu0 0
    %4577 = vmatpush2.bf16.msra.mxu0 0
    %4578 = vmatprep.subr.bf16.mxu0 0
    %4579 = vmatpush2.bf16.msra.mxu0 0
    %4580 = vmatprep.mubr.bf16.mxu0 0
    %4581 = vmatmul.mubr.bf16.gmra.mxu0 %v4500
    %v4582 = vpop.f32.mrf.mxu0
    %v4583 = vadd.f32 0.0, %v4582
    %v4584 = vpop.f32.mrf.mxu0
    %v4585 = vpop.f32.mrf.mxu0
    %v4586 = vadd.f32 0.0, %v4585
    %v4587 = vpop.f32.mrf.mxu0
    %4588 = vmatprep.mubr.bf16.mxu0 0
    %4589 = vmatmul.mubr.bf16.gmra.mxu0 %v4501
    %v4590 = vpop.f32.mrf.mxu0
    %v4591 = vadd.f32 0.0, %v4590
    %v4592 = vpop.f32.mrf.mxu0
    %v4593 = vpop.f32.mrf.mxu0
    %v4594 = vadd.f32 0.0, %v4593
    %v4595 = vpop.f32.mrf.mxu0
    %4596 = vmatprep.mubr.bf16.mxu0 0
    %4597 = vmatmul.mubr.bf16.gmra.mxu0 %v4502
    %v4598 = vpop.f32.mrf.mxu0
    %v4599 = vadd.f32 0.0, %v4598
    %v4600 = vpop.f32.mrf.mxu0
    %v4601 = vpop.f32.mrf.mxu0
    %v4602 = vadd.f32 0.0, %v4601
    %v4603 = vpop.f32.mrf.mxu0
    %4604 = vmatprep.mubr.bf16.mxu0 0
    %4605 = vmatmul.mubr.bf16.gmra.mxu0 %v4503
    %v4606 = vpop.f32.mrf.mxu0
    %v4607 = vadd.f32 0.0, %v4606
    %v4608 = vpop.f32.mrf.mxu0
    %v4609 = vpop.f32.mrf.mxu0
    %v4610 = vadd.f32 0.0, %v4609
    %v4611 = vpop.f32.mrf.mxu0
    %4612 = vmatprep.mubr.bf16.mxu0 0
    %4613 = vmatmul.mubr.bf16.gmra.mxu0 %v4504
    %v4614 = vpop.f32.mrf.mxu0
    %v4615 = vadd.f32 0.0, %v4614
    %v4616 = vpop.f32.mrf.mxu0
    %v4617 = vpop.f32.mrf.mxu0
    %v4618 = vadd.f32 0.0, %v4617
    %v4619 = vpop.f32.mrf.mxu0
    %4620 = vmatprep.mubr.bf16.mxu0 0
    %4621 = vmatmul.mubr.bf16.gmra.mxu0 %v4505
    %v4622 = vpop.f32.mrf.mxu0
    %v4623 = vadd.f32 0.0, %v4622
    %v4624 = vpop.f32.mrf.mxu0
    %v4625 = vpop.f32.mrf.mxu0
    %v4626 = vadd.f32 0.0, %v4625
    %v4627 = vpop.f32.mrf.mxu0
    %4628 = vmatprep.mubr.bf16.mxu0 0
    %4629 = vmatmul.mubr.bf16.gmra.mxu0 %v4506
    %v4630 = vpop.f32.mrf.mxu0
    %v4631 = vadd.f32 0.0, %v4630
    %v4632 = vpop.f32.mrf.mxu0
    %v4633 = vpop.f32.mrf.mxu0
    %v4634 = vadd.f32 0.0, %v4633
    %v4635 = vpop.f32.mrf.mxu0
    %4636 = vmatprep.mubr.bf16.mxu0 0
    %4637 = vmatmul.mubr.bf16.gmra.mxu0 %v4507
    %v4638 = vpop.f32.mrf.mxu0
    %v4639 = vadd.f32 0.0, %v4638
    %v4640 = vpop.f32.mrf.mxu0
    %v4641 = vpop.f32.mrf.mxu0
    %v4642 = vadd.f32 0.0, %v4641
    %v4643 = vpop.f32.mrf.mxu0
    %4644 = vmatprep.mubr.bf16.mxu0 0
    %4645 = vmatmul.mubr.bf16.gmra.mxu0 %v4508
    %v4646 = vpop.f32.mrf.mxu0
    %v4647 = vadd.f32 0.0, %v4646
    %v4648 = vpop.f32.mrf.mxu0
    %v4649 = vpop.f32.mrf.mxu0
    %v4650 = vadd.f32 0.0, %v4649
    %v4651 = vpop.f32.mrf.mxu0
    %4652 = vmatprep.mubr.bf16.mxu0 0
    %4653 = vmatmul.mubr.bf16.gmra.mxu0 %v4509
    %v4654 = vpop.f32.mrf.mxu0
    %v4655 = vadd.f32 0.0, %v4654
    %v4656 = vpop.f32.mrf.mxu0
    %v4657 = vpop.f32.mrf.mxu0
    %v4658 = vadd.f32 0.0, %v4657
    %v4659 = vpop.f32.mrf.mxu0
    %4660 = vmatprep.mubr.bf16.mxu0 0
    %4661 = vmatmul.mubr.bf16.gmra.mxu0 %v4510
    %v4662 = vpop.f32.mrf.mxu0
    %v4663 = vadd.f32 0.0, %v4662
    %v4664 = vpop.f32.mrf.mxu0
    %v4665 = vpop.f32.mrf.mxu0
    %v4666 = vadd.f32 0.0, %v4665
    %v4667 = vpop.f32.mrf.mxu0
    %4668 = vmatprep.mubr.bf16.mxu0 0
    %4669 = vmatmul.mubr.bf16.gmra.mxu0 %v4511
    %v4670 = vpop.f32.mrf.mxu0
    %v4671 = vadd.f32 0.0, %v4670
    %v4672 = vpop.f32.mrf.mxu0
    %v4673 = vpop.f32.mrf.mxu0
    %v4674 = vadd.f32 0.0, %v4673
    %v4675 = vpop.f32.mrf.mxu0
    %4676 = vmatprep.mubr.bf16.mxu0 0
    %4677 = vmatmul.mubr.bf16.gmra.mxu0 %v4512
    %v4678 = vpop.f32.mrf.mxu0
    %v4679 = vadd.f32 0.0, %v4678
    %v4680 = vpop.f32.mrf.mxu0
    %v4681 = vpop.f32.mrf.mxu0
    %v4682 = vadd.f32 0.0, %v4681
    %v4683 = vpop.f32.mrf.mxu0
    %4684 = vmatprep.mubr.bf16.mxu0 0
    %4685 = vmatmul.mubr.bf16.gmra.mxu0 %v4513
    %v4686 = vpop.f32.mrf.mxu0
    %v4687 = vadd.f32 0.0, %v4686
    %v4688 = vpop.f32.mrf.mxu0
    %v4689 = vpop.f32.mrf.mxu0
    %v4690 = vadd.f32 0.0, %v4689
    %v4691 = vpop.f32.mrf.mxu0
    %4692 = vmatprep.mubr.bf16.mxu0 0
    %4693 = vmatmul.mubr.bf16.gmra.mxu0 %v4514
    %v4694 = vpop.f32.mrf.mxu0
    %v4695 = vadd.f32 0.0, %v4694
    %v4696 = vpop.f32.mrf.mxu0
    %v4697 = vpop.f32.mrf.mxu0
    %v4698 = vadd.f32 0.0, %v4697
    %v4699 = vpop.f32.mrf.mxu0
    %4700 = vmatprep.mubr.bf16.mxu0 0
    %4701 = vmatmul.mubr.bf16.gmra.mxu0 %v4515
    %v4702 = vpop.f32.mrf.mxu0
    %v4703 = vadd.f32 0.0, %v4702
    %v4704 = vpop.f32.mrf.mxu0
    %v4705 = vpop.f32.mrf.mxu0
    %v4706 = vadd.f32 0.0, %v4705
    %v4707 = vpop.f32.mrf.mxu0
    %4708 = vdwg.mxu0
    %v4709 = vadd.f32 %v4516, %v4583
    %v4710 = vadd.f32 %v4517, %v4586
    %v4711 = vadd.f32 %v4518, %v4591
    %v4712 = vadd.f32 %v4519, %v4594
    %v4713 = vadd.f32 %v4520, %v4599
    %v4714 = vadd.f32 %v4521, %v4602
    %v4715 = vadd.f32 %v4522, %v4607
    %v4716 = vadd.f32 %v4523, %v4610
    %v4717 = vadd.f32 %v4524, %v4615
    %v4718 = vadd.f32 %v4525, %v4618
    %v4719 = vadd.f32 %v4526, %v4623
    %v4720 = vadd.f32 %v4527, %v4626
    %v4721 = vadd.f32 %v4528, %v4631
    %v4722 = vadd.f32 %v4529, %v4634
    %v4723 = vadd.f32 %v4530, %v4639
    %v4724 = vadd.f32 %v4531, %v4642
    %v4725 = vadd.f32 %v4532, %v4647
    %v4726 = vadd.f32 %v4533, %v4650
    %v4727 = vadd.f32 %v4534, %v4655
    %v4728 = vadd.f32 %v4535, %v4658
    %v4729 = vadd.f32 %v4536, %v4663
    %v4730 = vadd.f32 %v4537, %v4666
    %v4731 = vadd.f32 %v4538, %v4671
    %v4732 = vadd.f32 %v4539, %v4674
    %v4733 = vadd.f32 %v4540, %v4679
    %v4734 = vadd.f32 %v4541, %v4682
    %v4735 = vadd.f32 %v4542, %v4687
    %v4736 = vadd.f32 %v4543, %v4690
    %v4737 = vadd.f32 %v4544, %v4695
    %v4738 = vadd.f32 %v4545, %v4698
    %v4739 = vadd.f32 %v4546, %v4703
    %v4740 = vadd.f32 %v4547, %v4706
    %4741 = vst.msk [vmem:[#allocation3] sm:$0xff] %vm736, %v4709
    %4742 = vst.msk [vmem:[#allocation3 + $0x8] sm:$0xff] %vm736, %v4710
    %4743 = vst.msk [vmem:[#allocation3 + $0x10] sm:$0xff] %vm736, %v4711
    %4744 = vst.msk [vmem:[#allocation3 + $0x18] sm:$0xff] %vm736, %v4712
    %4745 = vst.msk [vmem:[#allocation3 + $0x20] sm:$0xff] %vm736, %v4713
    %4746 = vst.msk [vmem:[#allocation3 + $0x28] sm:$0xff] %vm736, %v4714
    %4747 = vst.msk [vmem:[#allocation3 + $0x30] sm:$0xff] %vm736, %v4715
    %4748 = vst.msk [vmem:[#allocation3 + $0x38] sm:$0xff] %vm736, %v4716
    %4749 = vst.msk [vmem:[#allocation3 + $0x40] sm:$0xff] %vm736, %v4717
    %4750 = vst.msk [vmem:[#allocation3 + $0x48] sm:$0xff] %vm736, %v4718
    %4751 = vst.msk [vmem:[#allocation3 + $0x50] sm:$0xff] %vm736, %v4719
    %4752 = vst.msk [vmem:[#allocation3 + $0x58] sm:$0xff] %vm736, %v4720
    %4753 = vst.msk [vmem:[#allocation3 + $0x60] sm:$0xff] %vm736, %v4721
    %4754 = vst.msk [vmem:[#allocation3 + $0x68] sm:$0xff] %vm736, %v4722
    %4755 = vst.msk [vmem:[#allocation3 + $0x70] sm:$0xff] %vm736, %v4723
    %4756 = vst.msk [vmem:[#allocation3 + $0x78] sm:$0xff] %vm736, %v4724
    %4757 = vst.msk [vmem:[#allocation3 + $0x80] sm:$0xff] %vm736, %v4725
    %4758 = vst.msk [vmem:[#allocation3 + $0x88] sm:$0xff] %vm736, %v4726
    %4759 = vst.msk [vmem:[#allocation3 + $0x90] sm:$0xff] %vm736, %v4727
    %4760 = vst.msk [vmem:[#allocation3 + $0x98] sm:$0xff] %vm736, %v4728
    %4761 = vst.msk [vmem:[#allocation3 + $0xa0] sm:$0xff] %vm736, %v4729
    %4762 = vst.msk [vmem:[#allocation3 + $0xa8] sm:$0xff] %vm736, %v4730
    %4763 = vst.msk [vmem:[#allocation3 + $0xb0] sm:$0xff] %vm736, %v4731
    %4764 = vst.msk [vmem:[#allocation3 + $0xb8] sm:$0xff] %vm736, %v4732
    %4765 = vst.msk [vmem:[#allocation3 + $0xc0] sm:$0xff] %vm736, %v4733
    %4766 = vst.msk [vmem:[#allocation3 + $0xc8] sm:$0xff] %vm736, %v4734
    %4767 = vst.msk [vmem:[#allocation3 + $0xd0] sm:$0xff] %vm736, %v4735
    %4768 = vst.msk [vmem:[#allocation3 + $0xd8] sm:$0xff] %vm736, %v4736
    %4769 = vst.msk [vmem:[#allocation3 + $0xe0] sm:$0xff] %vm736, %v4737
    %4770 = vst.msk [vmem:[#allocation3 + $0xe8] sm:$0xff] %vm736, %v4738
    %4771 = vst.msk [vmem:[#allocation3 + $0xf0] sm:$0xff] %vm736, %v4739
    %4772 = vst.msk [vmem:[#allocation3 + $0xf8] sm:$0xff] %vm736, %v4740
    // Predicated region
    $region22: #{histogram_prior_loss.1} parent=1 // pred_check
      %p4773 = pneg %p24
    $region23: #{histogram_prior_loss.1} parent=1 // pred_check_branch
      %4775 = sbr.rel (%p4773) target = $region25
    $region24: #{histogram_prior_loss.1} parent=1 // pred_region
      %v4776 = vld [vmem:[#allocation3] sm:$0xff]
      %v4777 = vld [vmem:[#allocation3 + $0x8] sm:$0xff]
      %v4778 = vld [vmem:[#allocation3 + $0x10] sm:$0xff]
      %v4779 = vld [vmem:[#allocation3 + $0x18] sm:$0xff]
      %v4780 = vld [vmem:[#allocation3 + $0x20] sm:$0xff]
      %v4781 = vld [vmem:[#allocation3 + $0x28] sm:$0xff]
      %v4782 = vld [vmem:[#allocation3 + $0x30] sm:$0xff]
      %v4783 = vld [vmem:[#allocation3 + $0x38] sm:$0xff]
      %v4784 = vld [vmem:[#allocation3 + $0x40] sm:$0xff]
      %v4785 = vld [vmem:[#allocation3 + $0x48] sm:$0xff]
      %v4786 = vld [vmem:[#allocation3 + $0x50] sm:$0xff]
      %v4787 = vld [vmem:[#allocation3 + $0x58] sm:$0xff]
      %v4788 = vld [vmem:[#allocation3 + $0x60] sm:$0xff]
      %v4789 = vld [vmem:[#allocation3 + $0x68] sm:$0xff]
      %v4790 = vld [vmem:[#allocation3 + $0x70] sm:$0xff]
      %v4791 = vld [vmem:[#allocation3 + $0x78] sm:$0xff]
      %v4792 = vld [vmem:[#allocation3 + $0x80] sm:$0xff]
      %v4793 = vld [vmem:[#allocation3 + $0x88] sm:$0xff]
      %v4794 = vld [vmem:[#allocation3 + $0x90] sm:$0xff]
      %v4795 = vld [vmem:[#allocation3 + $0x98] sm:$0xff]
      %v4796 = vld [vmem:[#allocation3 + $0xa0] sm:$0xff]
      %v4797 = vld [vmem:[#allocation3 + $0xa8] sm:$0xff]
      %v4798 = vld [vmem:[#allocation3 + $0xb0] sm:$0xff]
      %v4799 = vld [vmem:[#allocation3 + $0xb8] sm:$0xff]
      %v4800 = vld [vmem:[#allocation3 + $0xc0] sm:$0xff]
      %v4801 = vld [vmem:[#allocation3 + $0xc8] sm:$0xff]
      %v4802 = vld [vmem:[#allocation3 + $0xd0] sm:$0xff]
      %v4803 = vld [vmem:[#allocation3 + $0xd8] sm:$0xff]
      %v4804 = vld [vmem:[#allocation3 + $0xe0] sm:$0xff]
      %v4805 = vld [vmem:[#allocation3 + $0xe8] sm:$0xff]
      %v4806 = vld [vmem:[#allocation3 + $0xf0] sm:$0xff]
      %v4807 = vld [vmem:[#allocation3 + $0xf8] sm:$0xff]
      %v4808 = vsel %vm736, %v4776, -inf
      %v4809 = vsel %vm736, %v4777, -inf
      %v4810 = vsel %vm736, %v4778, -inf
      %v4811 = vsel %vm736, %v4779, -inf
      %v4812 = vsel %vm736, %v4780, -inf
      %v4813 = vmax.f32 %v4808, %v4812
      %v4814 = vsel %vm736, %v4781, -inf
      %v4815 = vmax.f32 %v4809, %v4814
      %v4816 = vsel %vm736, %v4782, -inf
      %v4817 = vmax.f32 %v4810, %v4816
      %v4818 = vsel %vm736, %v4783, -inf
      %v4819 = vmax.f32 %v4811, %v4818
      %v4820 = vsel %vm736, %v4784, -inf
      %v4821 = vmax.f32 %v4813, %v4820
      %v4822 = vsel %vm736, %v4785, -inf
      %v4823 = vmax.f32 %v4815, %v4822
      %v4824 = vsel %vm736, %v4786, -inf
      %v4825 = vmax.f32 %v4817, %v4824
      %v4826 = vsel %vm736, %v4787, -inf
      %v4827 = vmax.f32 %v4819, %v4826
      %v4828 = vsel %vm736, %v4788, -inf
      %v4829 = vmax.f32 %v4821, %v4828
      %v4830 = vsel %vm736, %v4789, -inf
      %v4831 = vmax.f32 %v4823, %v4830
      %v4832 = vsel %vm736, %v4790, -inf
      %v4833 = vmax.f32 %v4825, %v4832
      %v4834 = vsel %vm736, %v4791, -inf
      %v4835 = vmax.f32 %v4827, %v4834
      %v4836 = vsel %vm736, %v4792, -inf
      %v4837 = vmax.f32 %v4829, %v4836
      %v4838 = vsel %vm736, %v4793, -inf
      %v4839 = vmax.f32 %v4831, %v4838
      %v4840 = vsel %vm736, %v4794, -inf
      %v4841 = vmax.f32 %v4833, %v4840
      %v4842 = vsel %vm736, %v4795, -inf
      %v4843 = vmax.f32 %v4835, %v4842
      %v4844 = vsel %vm736, %v4796, -inf
      %v4845 = vmax.f32 %v4837, %v4844
      %v4846 = vsel %vm736, %v4797, -inf
      %v4847 = vmax.f32 %v4839, %v4846
      %v4848 = vsel %vm736, %v4798, -inf
      %v4849 = vmax.f32 %v4841, %v4848
      %v4850 = vsel %vm736, %v4799, -inf
      %v4851 = vmax.f32 %v4843, %v4850
      %v4852 = vsel %vm736, %v4800, -inf
      %v4853 = vmax.f32 %v4845, %v4852
      %v4854 = vsel %vm736, %v4801, -inf
      %v4855 = vmax.f32 %v4847, %v4854
      %v4856 = vsel %vm736, %v4802, -inf
      %v4857 = vmax.f32 %v4849, %v4856
      %v4858 = vsel %vm736, %v4803, -inf
      %v4859 = vmax.f32 %v4851, %v4858
      %v4860 = vsel %vm736, %v4804, -inf
      %v4861 = vmax.f32 %v4853, %v4860
      %v4862 = vsel %vm736, %v4805, -inf
      %v4863 = vmax.f32 %v4855, %v4862
      %v4864 = vsel %vm736, %v4806, -inf
      %v4865 = vmax.f32 %v4857, %v4864
      %v4866 = vsel %vm736, %v4807, -inf
      %v4867 = vmax.f32 %v4859, %v4866
      %v4868 = vmax.f32 %v4861, %v4863
      %v4869 = vmax.f32 %v4865, %v4867
      %v4870 = vmax.f32 %v4868, %v4869
      %4871 = vmax.xlane.f32.xlu0 %v4870
      %v4872 = vpop.xlane.xlu0 %4871
      %v4873 = vrot.slane %v4872, 4
      %v4874 = vmax.f32 %v4872, %v4873
      %v4875 = vrot.slane %v4874, 2
      %v4876 = vmax.f32 %v4874, %v4875
      %v4877 = vrot.slane %v4876, 1
      %v4878 = vmax.f32 %v4876, %v4877
      %s4879 = vtos %v4878
      %v4880 = vstv %s4879
      %v4881 = vrcp.pop %v4880
      %v4882 = vmul.f32 %v4776, %v4881
      %v4883 = vmul.f32 %v4777, %v4881
      %v4884 = vmul.f32 %v4778, %v4881
      %v4885 = vmul.f32 %v4779, %v4881
      %v4886 = vmul.f32 %v4780, %v4881
      %v4887 = vmul.f32 %v4781, %v4881
      %v4888 = vmul.f32 %v4782, %v4881
      %v4889 = vmul.f32 %v4783, %v4881
      %v4890 = vmul.f32 %v4784, %v4881
      %v4891 = vmul.f32 %v4785, %v4881
      %v4892 = vmul.f32 %v4786, %v4881
      %v4893 = vmul.f32 %v4787, %v4881
      %v4894 = vmul.f32 %v4788, %v4881
      %v4895 = vmul.f32 %v4789, %v4881
      %v4896 = vmul.f32 %v4790, %v4881
      %v4897 = vmul.f32 %v4791, %v4881
      %v4898 = vmul.f32 %v4792, %v4881
      %v4899 = vmul.f32 %v4793, %v4881
      %v4900 = vmul.f32 %v4794, %v4881
      %v4901 = vmul.f32 %v4795, %v4881
      %v4902 = vmul.f32 %v4796, %v4881
      %v4903 = vmul.f32 %v4797, %v4881
      %v4904 = vmul.f32 %v4798, %v4881
      %v4905 = vmul.f32 %v4799, %v4881
      %v4906 = vmul.f32 %v4800, %v4881
      %v4907 = vmul.f32 %v4801, %v4881
      %v4908 = vmul.f32 %v4802, %v4881
      %v4909 = vmul.f32 %v4803, %v4881
      %v4910 = vmul.f32 %v4804, %v4881
      %v4911 = vmul.f32 %v4805, %v4881
      %v4912 = vmul.f32 %v4806, %v4881
      %v4913 = vmul.f32 %v4807, %v4881
      %v4914 = vld [vmem:[%s3] sm:$0xff]
      %v4915 = vld [vmem:[%s3 + $0x8] sm:$0xff]
      %v4916 = vld [vmem:[%s3 + $0x10] sm:$0xff]
      %v4917 = vld [vmem:[%s3 + $0x18] sm:$0xff]
      %v4918 = vld [vmem:[%s3 + $0x20] sm:$0xff]
      %v4919 = vld [vmem:[%s3 + $0x28] sm:$0xff]
      %v4920 = vld [vmem:[%s3 + $0x30] sm:$0xff]
      %v4921 = vld [vmem:[%s3 + $0x38] sm:$0xff]
      %v4922 = vld [vmem:[%s3 + $0x40] sm:$0xff]
      %v4923 = vld [vmem:[%s3 + $0x48] sm:$0xff]
      %v4924 = vld [vmem:[%s3 + $0x50] sm:$0xff]
      %v4925 = vld [vmem:[%s3 + $0x58] sm:$0xff]
      %v4926 = vld [vmem:[%s3 + $0x60] sm:$0xff]
      %v4927 = vld [vmem:[%s3 + $0x68] sm:$0xff]
      %v4928 = vld [vmem:[%s3 + $0x70] sm:$0xff]
      %v4929 = vld [vmem:[%s3 + $0x78] sm:$0xff]
      %v4930 = vld [vmem:[%s3 + $0x80] sm:$0xff]
      %v4931 = vld [vmem:[%s3 + $0x88] sm:$0xff]
      %v4932 = vld [vmem:[%s3 + $0x90] sm:$0xff]
      %v4933 = vld [vmem:[%s3 + $0x98] sm:$0xff]
      %v4934 = vld [vmem:[%s3 + $0xa0] sm:$0xff]
      %v4935 = vld [vmem:[%s3 + $0xa8] sm:$0xff]
      %v4936 = vld [vmem:[%s3 + $0xb0] sm:$0xff]
      %v4937 = vld [vmem:[%s3 + $0xb8] sm:$0xff]
      %v4938 = vld [vmem:[%s3 + $0xc0] sm:$0xff]
      %v4939 = vld [vmem:[%s3 + $0xc8] sm:$0xff]
      %v4940 = vld [vmem:[%s3 + $0xd0] sm:$0xff]
      %v4941 = vld [vmem:[%s3 + $0xd8] sm:$0xff]
      %v4942 = vld [vmem:[%s3 + $0xe0] sm:$0xff]
      %v4943 = vld [vmem:[%s3 + $0xe8] sm:$0xff]
      %v4944 = vld [vmem:[%s3 + $0xf0] sm:$0xff]
      %v4945 = vld [vmem:[%s3 + $0xf8] sm:$0xff]
      %v4946 = vld [vmem:[%s4] sm:$0xff]
      %v4947 = vld [vmem:[%s4 + $0x8] sm:$0xff]
      %v4948 = vld [vmem:[%s4 + $0x10] sm:$0xff]
      %v4949 = vld [vmem:[%s4 + $0x18] sm:$0xff]
      %v4950 = vld [vmem:[%s4 + $0x20] sm:$0xff]
      %v4951 = vld [vmem:[%s4 + $0x28] sm:$0xff]
      %v4952 = vld [vmem:[%s4 + $0x30] sm:$0xff]
      %v4953 = vld [vmem:[%s4 + $0x38] sm:$0xff]
      %v4954 = vld [vmem:[%s4 + $0x40] sm:$0xff]
      %v4955 = vld [vmem:[%s4 + $0x48] sm:$0xff]
      %v4956 = vld [vmem:[%s4 + $0x50] sm:$0xff]
      %v4957 = vld [vmem:[%s4 + $0x58] sm:$0xff]
      %v4958 = vld [vmem:[%s4 + $0x60] sm:$0xff]
      %v4959 = vld [vmem:[%s4 + $0x68] sm:$0xff]
      %v4960 = vld [vmem:[%s4 + $0x70] sm:$0xff]
      %v4961 = vld [vmem:[%s4 + $0x78] sm:$0xff]
      %v4962 = vld [vmem:[%s4 + $0x80] sm:$0xff]
      %v4963 = vld [vmem:[%s4 + $0x88] sm:$0xff]
      %v4964 = vld [vmem:[%s4 + $0x90] sm:$0xff]
      %v4965 = vld [vmem:[%s4 + $0x98] sm:$0xff]
      %v4966 = vld [vmem:[%s4 + $0xa0] sm:$0xff]
      %v4967 = vld [vmem:[%s4 + $0xa8] sm:$0xff]
      %v4968 = vld [vmem:[%s4 + $0xb0] sm:$0xff]
      %v4969 = vld [vmem:[%s4 + $0xb8] sm:$0xff]
      %v4970 = vld [vmem:[%s4 + $0xc0] sm:$0xff]
      %v4971 = vld [vmem:[%s4 + $0xc8] sm:$0xff]
      %v4972 = vld [vmem:[%s4 + $0xd0] sm:$0xff]
      %v4973 = vld [vmem:[%s4 + $0xd8] sm:$0xff]
      %v4974 = vld [vmem:[%s4 + $0xe0] sm:$0xff]
      %v4975 = vld [vmem:[%s4 + $0xe8] sm:$0xff]
      %v4976 = vld [vmem:[%s4 + $0xf0] sm:$0xff]
      %v4977 = vld [vmem:[%s4 + $0xf8] sm:$0xff]
      %v4978 = vlaneseq
      %v4979 = vshrl.u32 %v4978, 7
      %v4980 = vadd.s32 %v4979, 8
      %v4981 = vadd.s32 %v4979, 16
      %v4982 = vadd.s32 %v4979, 24
      %v4983 = vadd.s32 %v4979, 32
      %v4984 = vadd.s32 %v4979, 40
      %v4985 = vadd.s32 %v4979, 48
      %v4986 = vadd.s32 %v4979, 56
      %v4987 = vadd.s32 %v4979, 64
      %v4988 = vadd.s32 %v4979, 72
      %v4989 = vadd.s32 %v4979, 80
      %v4990 = vadd.s32 %v4979, 88
      %v4991 = vadd.s32 %v4979, 96
      %v4992 = vadd.s32 %v4979, 104
      %v4993 = vadd.s32 %v4979, 112
      %v4994 = vadd.s32 %v4979, 120
      %v4995 = vadd.s32 %v4979, 128
      %v4996 = vadd.s32 %v4979, 136
      %v4997 = vadd.s32 %v4979, 144
      %v4998 = vadd.s32 %v4979, 152
      %v4999 = vadd.s32 %v4979, 160
      %v5000 = vadd.s32 %v4979, 168
      %v5001 = vadd.s32 %v4979, 176
      %v5002 = vadd.s32 %v4979, 184
      %v5003 = vadd.s32 %v4979, 192
      %v5004 = vadd.s32 %v4979, 200
      %v5005 = vadd.s32 %v4979, 208
      %v5006 = vadd.s32 %v4979, 216
      %v5007 = vadd.s32 %v4979, 224
      %v5008 = vadd.s32 %v4979, 232
      %v5009 = vadd.s32 %v4979, 240
      %v5010 = vadd.s32 %v4979, 248
      %vm5011 = vcmp.lt.s32.totalorder %v4979, 255
      %vm5012 = vcmp.lt.s32.totalorder %v4980, 255
      %vm5013 = vcmp.lt.s32.totalorder %v4981, 255
      %vm5014 = vcmp.lt.s32.totalorder %v4982, 255
      %vm5015 = vcmp.lt.s32.totalorder %v4983, 255
      %vm5016 = vcmp.lt.s32.totalorder %v4984, 255
      %vm5017 = vcmp.lt.s32.totalorder %v4985, 255
      %vm5018 = vcmp.lt.s32.totalorder %v4986, 255
      %vm5019 = vcmp.lt.s32.totalorder %v4987, 255
      %vm5020 = vcmp.lt.s32.totalorder %v4988, 255
      %vm5021 = vcmp.lt.s32.totalorder %v4989, 255
      %vm5022 = vcmp.lt.s32.totalorder %v4990, 255
      %vm5023 = vcmp.lt.s32.totalorder %v4991, 255
      %vm5024 = vcmp.lt.s32.totalorder %v4992, 255
      %vm5025 = vcmp.lt.s32.totalorder %v4993, 255
      %vm5026 = vcmp.lt.s32.totalorder %v4994, 255
      %vm5027 = vcmp.lt.s32.totalorder %v4995, 255
      %vm5028 = vcmp.lt.s32.totalorder %v4996, 255
      %vm5029 = vcmp.lt.s32.totalorder %v4997, 255
      %vm5030 = vcmp.lt.s32.totalorder %v4998, 255
      %vm5031 = vcmp.lt.s32.totalorder %v4999, 255
      %vm5032 = vcmp.lt.s32.totalorder %v5000, 255
      %vm5033 = vcmp.lt.s32.totalorder %v5001, 255
      %vm5034 = vcmp.lt.s32.totalorder %v5002, 255
      %vm5035 = vcmp.lt.s32.totalorder %v5003, 255
      %vm5036 = vcmp.lt.s32.totalorder %v5004, 255
      %vm5037 = vcmp.lt.s32.totalorder %v5005, 255
      %vm5038 = vcmp.lt.s32.totalorder %v5006, 255
      %vm5039 = vcmp.lt.s32.totalorder %v5007, 255
      %vm5040 = vcmp.lt.s32.totalorder %v5008, 255
      %vm5041 = vcmp.lt.s32.totalorder %v5009, 255
      %vm5042 = vcmp.lt.s32.totalorder %v5010, 255
      %v5043 = vsel %vm5011, 1, 0
      %v5044 = vsel %vm5012, 1, 0
      %v5045 = vsel %vm5013, 1, 0
      %v5046 = vsel %vm5014, 1, 0
      %v5047 = vsel %vm5015, 1, 0
      %v5048 = vsel %vm5016, 1, 0
      %v5049 = vsel %vm5017, 1, 0
      %v5050 = vsel %vm5018, 1, 0
      %v5051 = vsel %vm5019, 1, 0
      %v5052 = vsel %vm5020, 1, 0
      %v5053 = vsel %vm5021, 1, 0
      %v5054 = vsel %vm5022, 1, 0
      %v5055 = vsel %vm5023, 1, 0
      %v5056 = vsel %vm5024, 1, 0
      %v5057 = vsel %vm5025, 1, 0
      %v5058 = vsel %vm5026, 1, 0
      %v5059 = vsel %vm5027, 1, 0
      %v5060 = vsel %vm5028, 1, 0
      %v5061 = vsel %vm5029, 1, 0
      %v5062 = vsel %vm5030, 1, 0
      %v5063 = vsel %vm5031, 1, 0
      %v5064 = vsel %vm5032, 1, 0
      %v5065 = vsel %vm5033, 1, 0
      %v5066 = vsel %vm5034, 1, 0
      %v5067 = vsel %vm5035, 1, 0
      %v5068 = vsel %vm5036, 1, 0
      %v5069 = vsel %vm5037, 1, 0
      %v5070 = vsel %vm5038, 1, 0
      %v5071 = vsel %vm5039, 1, 0
      %v5072 = vsel %vm5040, 1, 0
      %v5073 = vsel %vm5041, 1, 0
      %v5074 = vsel %vm5042, 1, 0
      %v5075 = vcvt.s32.f32 %v5043
      %v5076 = vcvt.s32.f32 %v5044
      %v5077 = vcvt.s32.f32 %v5045
      %v5078 = vcvt.s32.f32 %v5046
      %v5079 = vcvt.s32.f32 %v5047
      %v5080 = vcvt.s32.f32 %v5048
      %v5081 = vcvt.s32.f32 %v5049
      %v5082 = vcvt.s32.f32 %v5050
      %v5083 = vcvt.s32.f32 %v5051
      %v5084 = vcvt.s32.f32 %v5052
      %v5085 = vcvt.s32.f32 %v5053
      %v5086 = vcvt.s32.f32 %v5054
      %v5087 = vcvt.s32.f32 %v5055
      %v5088 = vcvt.s32.f32 %v5056
      %v5089 = vcvt.s32.f32 %v5057
      %v5090 = vcvt.s32.f32 %v5058
      %v5091 = vcvt.s32.f32 %v5059
      %v5092 = vcvt.s32.f32 %v5060
      %v5093 = vcvt.s32.f32 %v5061
      %v5094 = vcvt.s32.f32 %v5062
      %v5095 = vcvt.s32.f32 %v5063
      %v5096 = vcvt.s32.f32 %v5064
      %v5097 = vcvt.s32.f32 %v5065
      %v5098 = vcvt.s32.f32 %v5066
      %v5099 = vcvt.s32.f32 %v5067
      %v5100 = vcvt.s32.f32 %v5068
      %v5101 = vcvt.s32.f32 %v5069
      %v5102 = vcvt.s32.f32 %v5070
      %v5103 = vcvt.s32.f32 %v5071
      %v5104 = vcvt.s32.f32 %v5072
      %v5105 = vcvt.s32.f32 %v5073
      %v5106 = vcvt.s32.f32 %v5074
      %5108 = vset.pattern.permute.xlu0 0
      %5109 = vperm.xlu0 %5108, %v4882
      %v5110 = vpop.permute.xlu0 %5109
      %5113 = vset.pattern.permute.xlu0 0
      %5114 = vperm.xlu0 %5113, %v4883
      %v5115 = vpop.permute.xlu0 %5114
      %5118 = vset.pattern.permute.xlu0 0
      %5119 = vperm.xlu0 %5118, %v4884
      %v5120 = vpop.permute.xlu0 %5119
      %5123 = vset.pattern.permute.xlu0 0
      %5124 = vperm.xlu0 %5123, %v4885
      %v5125 = vpop.permute.xlu0 %5124
      %5128 = vset.pattern.permute.xlu0 0
      %5129 = vperm.xlu0 %5128, %v4886
      %v5130 = vpop.permute.xlu0 %5129
      %5133 = vset.pattern.permute.xlu0 0
      %5134 = vperm.xlu0 %5133, %v4887
      %v5135 = vpop.permute.xlu0 %5134
      %5138 = vset.pattern.permute.xlu0 0
      %5139 = vperm.xlu0 %5138, %v4888
      %v5140 = vpop.permute.xlu0 %5139
      %5143 = vset.pattern.permute.xlu0 0
      %5144 = vperm.xlu0 %5143, %v4889
      %v5145 = vpop.permute.xlu0 %5144
      %5148 = vset.pattern.permute.xlu0 0
      %5149 = vperm.xlu0 %5148, %v4890
      %v5150 = vpop.permute.xlu0 %5149
      %5153 = vset.pattern.permute.xlu0 0
      %5154 = vperm.xlu0 %5153, %v4891
      %v5155 = vpop.permute.xlu0 %5154
      %5158 = vset.pattern.permute.xlu0 0
      %5159 = vperm.xlu0 %5158, %v4892
      %v5160 = vpop.permute.xlu0 %5159
      %5163 = vset.pattern.permute.xlu0 0
      %5164 = vperm.xlu0 %5163, %v4893
      %v5165 = vpop.permute.xlu0 %5164
      %5168 = vset.pattern.permute.xlu0 0
      %5169 = vperm.xlu0 %5168, %v4894
      %v5170 = vpop.permute.xlu0 %5169
      %5173 = vset.pattern.permute.xlu0 0
      %5174 = vperm.xlu0 %5173, %v4895
      %v5175 = vpop.permute.xlu0 %5174
      %5178 = vset.pattern.permute.xlu0 0
      %5179 = vperm.xlu0 %5178, %v4896
      %v5180 = vpop.permute.xlu0 %5179
      %5183 = vset.pattern.permute.xlu0 0
      %5184 = vperm.xlu0 %5183, %v4897
      %v5185 = vpop.permute.xlu0 %5184
      %5188 = vset.pattern.permute.xlu0 0
      %5189 = vperm.xlu0 %5188, %v4898
      %v5190 = vpop.permute.xlu0 %5189
      %5193 = vset.pattern.permute.xlu0 0
      %5194 = vperm.xlu0 %5193, %v4899
      %v5195 = vpop.permute.xlu0 %5194
      %5198 = vset.pattern.permute.xlu0 0
      %5199 = vperm.xlu0 %5198, %v4900
      %v5200 = vpop.permute.xlu0 %5199
      %5203 = vset.pattern.permute.xlu0 0
      %5204 = vperm.xlu0 %5203, %v4901
      %v5205 = vpop.permute.xlu0 %5204
      %5208 = vset.pattern.permute.xlu0 0
      %5209 = vperm.xlu0 %5208, %v4902
      %v5210 = vpop.permute.xlu0 %5209
      %5213 = vset.pattern.permute.xlu0 0
      %5214 = vperm.xlu0 %5213, %v4903
      %v5215 = vpop.permute.xlu0 %5214
      %5218 = vset.pattern.permute.xlu0 0
      %5219 = vperm.xlu0 %5218, %v4904
      %v5220 = vpop.permute.xlu0 %5219
      %5223 = vset.pattern.permute.xlu0 0
      %5224 = vperm.xlu0 %5223, %v4905
      %v5225 = vpop.permute.xlu0 %5224
      %5228 = vset.pattern.permute.xlu0 0
      %5229 = vperm.xlu0 %5228, %v4906
      %v5230 = vpop.permute.xlu0 %5229
      %5233 = vset.pattern.permute.xlu0 0
      %5234 = vperm.xlu0 %5233, %v4907
      %v5235 = vpop.permute.xlu0 %5234
      %5238 = vset.pattern.permute.xlu0 0
      %5239 = vperm.xlu0 %5238, %v4908
      %v5240 = vpop.permute.xlu0 %5239
      %5243 = vset.pattern.permute.xlu0 0
      %5244 = vperm.xlu0 %5243, %v4909
      %v5245 = vpop.permute.xlu0 %5244
      %5248 = vset.pattern.permute.xlu0 0
      %5249 = vperm.xlu0 %5248, %v4910
      %v5250 = vpop.permute.xlu0 %5249
      %5253 = vset.pattern.permute.xlu0 0
      %5254 = vperm.xlu0 %5253, %v4911
      %v5255 = vpop.permute.xlu0 %5254
      %5258 = vset.pattern.permute.xlu0 0
      %5259 = vperm.xlu0 %5258, %v4912
      %v5260 = vpop.permute.xlu0 %5259
      %5263 = vset.pattern.permute.xlu0 0
      %5264 = vperm.xlu0 %5263, %v4913
      %v5265 = vpop.permute.xlu0 %5264
      %v5267 = vsub.f32 %v4914, %v5110
      %v5268 = vsub.f32 %v4915, %v5115
      %v5269 = vsub.f32 %v4916, %v5120
      %v5270 = vsub.f32 %v4917, %v5125
      %v5271 = vsub.f32 %v4918, %v5130
      %v5272 = vsub.f32 %v4919, %v5135
      %v5273 = vsub.f32 %v4920, %v5140
      %v5274 = vsub.f32 %v4921, %v5145
      %v5275 = vsub.f32 %v4922, %v5150
      %v5276 = vsub.f32 %v4923, %v5155
      %v5277 = vsub.f32 %v4924, %v5160
      %v5278 = vsub.f32 %v4925, %v5165
      %v5279 = vsub.f32 %v4926, %v5170
      %v5280 = vsub.f32 %v4927, %v5175
      %v5281 = vsub.f32 %v4928, %v5180
      %v5282 = vsub.f32 %v4929, %v5185
      %v5283 = vsub.f32 %v4930, %v5190
      %v5284 = vsub.f32 %v4931, %v5195
      %v5285 = vsub.f32 %v4932, %v5200
      %v5286 = vsub.f32 %v4933, %v5205
      %v5287 = vsub.f32 %v4934, %v5210
      %v5288 = vsub.f32 %v4935, %v5215
      %v5289 = vsub.f32 %v4936, %v5220
      %v5290 = vsub.f32 %v4937, %v5225
      %v5291 = vsub.f32 %v4938, %v5230
      %v5292 = vsub.f32 %v4939, %v5235
      %v5293 = vsub.f32 %v4940, %v5240
      %v5294 = vsub.f32 %v4941, %v5245
      %v5295 = vsub.f32 %v4942, %v5250
      %v5296 = vsub.f32 %v4943, %v5255
      %v5297 = vsub.f32 %v4944, %v5260
      %v5298 = vsub.f32 %v4945, %v5265
      %v5299 = vmul.f32 %v5267, %v5075
      %v5300 = vmul.f32 %v5268, %v5076
      %v5301 = vmul.f32 %v5269, %v5077
      %v5302 = vmul.f32 %v5270, %v5078
      %v5303 = vmul.f32 %v5271, %v5079
      %v5304 = vmul.f32 %v5272, %v5080
      %v5305 = vmul.f32 %v5273, %v5081
      %v5306 = vmul.f32 %v5274, %v5082
      %v5307 = vmul.f32 %v5275, %v5083
      %v5308 = vmul.f32 %v5276, %v5084
      %v5309 = vmul.f32 %v5277, %v5085
      %v5310 = vmul.f32 %v5278, %v5086
      %v5311 = vmul.f32 %v5279, %v5087
      %v5312 = vmul.f32 %v5280, %v5088
      %v5313 = vmul.f32 %v5281, %v5089
      %v5314 = vmul.f32 %v5282, %v5090
      %v5315 = vmul.f32 %v5283, %v5091
      %v5316 = vmul.f32 %v5284, %v5092
      %v5317 = vmul.f32 %v5285, %v5093
      %v5318 = vmul.f32 %v5286, %v5094
      %v5319 = vmul.f32 %v5287, %v5095
      %v5320 = vmul.f32 %v5288, %v5096
      %v5321 = vmul.f32 %v5289, %v5097
      %v5322 = vmul.f32 %v5290, %v5098
      %v5323 = vmul.f32 %v5291, %v5099
      %v5324 = vmul.f32 %v5292, %v5100
      %v5325 = vmul.f32 %v5293, %v5101
      %v5326 = vmul.f32 %v5294, %v5102
      %v5327 = vmul.f32 %v5295, %v5103
      %v5328 = vmul.f32 %v5296, %v5104
      %v5329 = vmul.f32 %v5297, %v5105
      %v5330 = vmul.f32 %v5298, %v5106
      %v5331 = vmul.f32 %v5299, %v5299
      %v5332 = vmul.f32 %v5300, %v5300
      %v5333 = vmul.f32 %v5301, %v5301
      %v5334 = vmul.f32 %v5302, %v5302
      %v5335 = vmul.f32 %v5303, %v5303
      %v5336 = vmul.f32 %v5304, %v5304
      %v5337 = vmul.f32 %v5305, %v5305
      %v5338 = vmul.f32 %v5306, %v5306
      %v5339 = vmul.f32 %v5307, %v5307
      %v5340 = vmul.f32 %v5308, %v5308
      %v5341 = vmul.f32 %v5309, %v5309
      %v5342 = vmul.f32 %v5310, %v5310
      %v5343 = vmul.f32 %v5311, %v5311
      %v5344 = vmul.f32 %v5312, %v5312
      %v5345 = vmul.f32 %v5313, %v5313
      %v5346 = vmul.f32 %v5314, %v5314
      %v5347 = vmul.f32 %v5315, %v5315
      %v5348 = vmul.f32 %v5316, %v5316
      %v5349 = vmul.f32 %v5317, %v5317
      %v5350 = vmul.f32 %v5318, %v5318
      %v5351 = vmul.f32 %v5319, %v5319
      %v5352 = vmul.f32 %v5320, %v5320
      %v5353 = vmul.f32 %v5321, %v5321
      %v5354 = vmul.f32 %v5322, %v5322
      %v5355 = vmul.f32 %v5323, %v5323
      %v5356 = vmul.f32 %v5324, %v5324
      %v5357 = vmul.f32 %v5325, %v5325
      %v5358 = vmul.f32 %v5326, %v5326
      %v5359 = vmul.f32 %v5327, %v5327
      %v5360 = vmul.f32 %v5328, %v5328
      %v5361 = vmul.f32 %v5329, %v5329
      %v5362 = vmul.f32 %v5330, %v5330
      %vm5363 = vcmask 15360
      %v5364 = vsel %vm5363, %v5331, 0.0
      %v5365 = vsel %vm5363, %v5332, 0.0
      %v5366 = vadd.f32 %v5364, %v5365
      %v5367 = vsel %vm5363, %v5333, 0.0
      %v5368 = vadd.f32 %v5366, %v5367
      %v5369 = vsel %vm5363, %v5334, 0.0
      %v5370 = vadd.f32 %v5368, %v5369
      %v5371 = vsel %vm5363, %v5335, 0.0
      %v5372 = vadd.f32 %v5370, %v5371
      %v5373 = vsel %vm5363, %v5336, 0.0
      %v5374 = vadd.f32 %v5372, %v5373
      %v5375 = vsel %vm5363, %v5337, 0.0
      %v5376 = vadd.f32 %v5374, %v5375
      %v5377 = vsel %vm5363, %v5338, 0.0
      %v5378 = vadd.f32 %v5376, %v5377
      %v5379 = vsel %vm5363, %v5339, 0.0
      %v5380 = vadd.f32 %v5378, %v5379
      %v5381 = vsel %vm5363, %v5340, 0.0
      %v5382 = vadd.f32 %v5380, %v5381
      %v5383 = vsel %vm5363, %v5341, 0.0
      %v5384 = vadd.f32 %v5382, %v5383
      %v5385 = vsel %vm5363, %v5342, 0.0
      %v5386 = vadd.f32 %v5384, %v5385
      %v5387 = vsel %vm5363, %v5343, 0.0
      %v5388 = vadd.f32 %v5386, %v5387
      %v5389 = vsel %vm5363, %v5344, 0.0
      %v5390 = vadd.f32 %v5388, %v5389
      %v5391 = vsel %vm5363, %v5345, 0.0
      %v5392 = vadd.f32 %v5390, %v5391
      %v5393 = vsel %vm5363, %v5346, 0.0
      %v5394 = vadd.f32 %v5392, %v5393
      %v5395 = vsel %vm5363, %v5347, 0.0
      %v5396 = vadd.f32 %v5394, %v5395
      %v5397 = vsel %vm5363, %v5348, 0.0
      %v5398 = vadd.f32 %v5396, %v5397
      %v5399 = vsel %vm5363, %v5349, 0.0
      %v5400 = vadd.f32 %v5398, %v5399
      %v5401 = vsel %vm5363, %v5350, 0.0
      %v5402 = vadd.f32 %v5400, %v5401
      %v5403 = vsel %vm5363, %v5351, 0.0
      %v5404 = vadd.f32 %v5402, %v5403
      %v5405 = vsel %vm5363, %v5352, 0.0
      %v5406 = vadd.f32 %v5404, %v5405
      %v5407 = vsel %vm5363, %v5353, 0.0
      %v5408 = vadd.f32 %v5406, %v5407
      %v5409 = vsel %vm5363, %v5354, 0.0
      %v5410 = vadd.f32 %v5408, %v5409
      %v5411 = vsel %vm5363, %v5355, 0.0
      %v5412 = vadd.f32 %v5410, %v5411
      %v5413 = vsel %vm5363, %v5356, 0.0
      %v5414 = vadd.f32 %v5412, %v5413
      %v5415 = vsel %vm5363, %v5357, 0.0
      %v5416 = vadd.f32 %v5414, %v5415
      %v5417 = vsel %vm5363, %v5358, 0.0
      %v5418 = vadd.f32 %v5416, %v5417
      %v5419 = vsel %vm5363, %v5359, 0.0
      %v5420 = vadd.f32 %v5418, %v5419
      %v5421 = vsel %vm5363, %v5360, 0.0
      %v5422 = vadd.f32 %v5420, %v5421
      %v5423 = vsel %vm5363, %v5361, 0.0
      %v5424 = vadd.f32 %v5422, %v5423
      %v5425 = vsel %vm5363, %v5362, 0.0
      %v5426 = vadd.f32 %v5424, %v5425
      %5427 = vadd.xlane.f32.xlu0 %v5426
      %v5428 = vpop.xlane.xlu0 %5427
      %v5429 = vrot.slane %v5428, 4
      %v5430 = vadd.f32 %v5428, %v5429
      %v5431 = vrot.slane %v5430, 2
      %v5432 = vadd.f32 %v5430, %v5431
      %v5433 = vrot.slane %v5432, 1
      %v5434 = vadd.f32 %v5432, %v5433
      %s5435 = vtos %v5434
      %v5436 = vrcp.pop 510.0
      %s5437 = vtos %v5436
      %s5438 = smul.f32 %s5435, %s5437
      %v5439 = vsub.f32 %v4946, %v4914
      %v5440 = vsub.f32 %v4947, %v4915
      %v5441 = vsub.f32 %v4948, %v4916
      %v5442 = vsub.f32 %v4949, %v4917
      %v5443 = vsub.f32 %v4950, %v4918
      %v5444 = vsub.f32 %v4951, %v4919
      %v5445 = vsub.f32 %v4952, %v4920
      %v5446 = vsub.f32 %v4953, %v4921
      %v5447 = vsub.f32 %v4954, %v4922
      %v5448 = vsub.f32 %v4955, %v4923
      %v5449 = vsub.f32 %v4956, %v4924
      %v5450 = vsub.f32 %v4957, %v4925
      %v5451 = vsub.f32 %v4958, %v4926
      %v5452 = vsub.f32 %v4959, %v4927
      %v5453 = vsub.f32 %v4960, %v4928
      %v5454 = vsub.f32 %v4961, %v4929
      %v5455 = vsub.f32 %v4962, %v4930
      %v5456 = vsub.f32 %v4963, %v4931
      %v5457 = vsub.f32 %v4964, %v4932
      %v5458 = vsub.f32 %v4965, %v4933
      %v5459 = vsub.f32 %v4966, %v4934
      %v5460 = vsub.f32 %v4967, %v4935
      %v5461 = vsub.f32 %v4968, %v4936
      %v5462 = vsub.f32 %v4969, %v4937
      %v5463 = vsub.f32 %v4970, %v4938
      %v5464 = vsub.f32 %v4971, %v4939
      %v5465 = vsub.f32 %v4972, %v4940
      %v5466 = vsub.f32 %v4973, %v4941
      %v5467 = vsub.f32 %v4974, %v4942
      %v5468 = vsub.f32 %v4975, %v4943
      %v5469 = vsub.f32 %v4976, %v4944
      %v5470 = vsub.f32 %v4977, %v4945
      %v5471 = vmul.f32 %v5439, %v5075
      %v5472 = vmul.f32 %v5440, %v5076
      %v5473 = vmul.f32 %v5441, %v5077
      %v5474 = vmul.f32 %v5442, %v5078
      %v5475 = vmul.f32 %v5443, %v5079
      %v5476 = vmul.f32 %v5444, %v5080
      %v5477 = vmul.f32 %v5445, %v5081
      %v5478 = vmul.f32 %v5446, %v5082
      %v5479 = vmul.f32 %v5447, %v5083
      %v5480 = vmul.f32 %v5448, %v5084
      %v5481 = vmul.f32 %v5449, %v5085
      %v5482 = vmul.f32 %v5450, %v5086
      %v5483 = vmul.f32 %v5451, %v5087
      %v5484 = vmul.f32 %v5452, %v5088
      %v5485 = vmul.f32 %v5453, %v5089
      %v5486 = vmul.f32 %v5454, %v5090
      %v5487 = vmul.f32 %v5455, %v5091
      %v5488 = vmul.f32 %v5456, %v5092
      %v5489 = vmul.f32 %v5457, %v5093
      %v5490 = vmul.f32 %v5458, %v5094
      %v5491 = vmul.f32 %v5459, %v5095
      %v5492 = vmul.f32 %v5460, %v5096
      %v5493 = vmul.f32 %v5461, %v5097
      %v5494 = vmul.f32 %v5462, %v5098
      %v5495 = vmul.f32 %v5463, %v5099
      %v5496 = vmul.f32 %v5464, %v5100
      %v5497 = vmul.f32 %v5465, %v5101
      %v5498 = vmul.f32 %v5466, %v5102
      %v5499 = vmul.f32 %v5467, %v5103
      %v5500 = vmul.f32 %v5468, %v5104
      %v5501 = vmul.f32 %v5469, %v5105
      %v5502 = vmul.f32 %v5470, %v5106
      %v5503 = vsub.f32 %v4946, %v5110
      %v5504 = vsub.f32 %v4947, %v5115
      %v5505 = vsub.f32 %v4948, %v5120
      %v5506 = vsub.f32 %v4949, %v5125
      %v5507 = vsub.f32 %v4950, %v5130
      %v5508 = vsub.f32 %v4951, %v5135
      %v5509 = vsub.f32 %v4952, %v5140
      %v5510 = vsub.f32 %v4953, %v5145
      %v5511 = vsub.f32 %v4954, %v5150
      %v5512 = vsub.f32 %v4955, %v5155
      %v5513 = vsub.f32 %v4956, %v5160
      %v5514 = vsub.f32 %v4957, %v5165
      %v5515 = vsub.f32 %v4958, %v5170
      %v5516 = vsub.f32 %v4959, %v5175
      %v5517 = vsub.f32 %v4960, %v5180
      %v5518 = vsub.f32 %v4961, %v5185
      %v5519 = vsub.f32 %v4962, %v5190
      %v5520 = vsub.f32 %v4963, %v5195
      %v5521 = vsub.f32 %v4964, %v5200
      %v5522 = vsub.f32 %v4965, %v5205
      %v5523 = vsub.f32 %v4966, %v5210
      %v5524 = vsub.f32 %v4967, %v5215
      %v5525 = vsub.f32 %v4968, %v5220
      %v5526 = vsub.f32 %v4969, %v5225
      %v5527 = vsub.f32 %v4970, %v5230
      %v5528 = vsub.f32 %v4971, %v5235
      %v5529 = vsub.f32 %v4972, %v5240
      %v5530 = vsub.f32 %v4973, %v5245
      %v5531 = vsub.f32 %v4974, %v5250
      %v5532 = vsub.f32 %v4975, %v5255
      %v5533 = vsub.f32 %v4976, %v5260
      %v5534 = vsub.f32 %v4977, %v5265
      %v5535 = vmul.f32 %v5503, %v5075
      %v5536 = vmul.f32 %v5504, %v5076
      %v5537 = vmul.f32 %v5505, %v5077
      %v5538 = vmul.f32 %v5506, %v5078
      %v5539 = vmul.f32 %v5507, %v5079
      %v5540 = vmul.f32 %v5508, %v5080
      %v5541 = vmul.f32 %v5509, %v5081
      %v5542 = vmul.f32 %v5510, %v5082
      %v5543 = vmul.f32 %v5511, %v5083
      %v5544 = vmul.f32 %v5512, %v5084
      %v5545 = vmul.f32 %v5513, %v5085
      %v5546 = vmul.f32 %v5514, %v5086
      %v5547 = vmul.f32 %v5515, %v5087
      %v5548 = vmul.f32 %v5516, %v5088
      %v5549 = vmul.f32 %v5517, %v5089
      %v5550 = vmul.f32 %v5518, %v5090
      %v5551 = vmul.f32 %v5519, %v5091
      %v5552 = vmul.f32 %v5520, %v5092
      %v5553 = vmul.f32 %v5521, %v5093
      %v5554 = vmul.f32 %v5522, %v5094
      %v5555 = vmul.f32 %v5523, %v5095
      %v5556 = vmul.f32 %v5524, %v5096
      %v5557 = vmul.f32 %v5525, %v5097
      %v5558 = vmul.f32 %v5526, %v5098
      %v5559 = vmul.f32 %v5527, %v5099
      %v5560 = vmul.f32 %v5528, %v5100
      %v5561 = vmul.f32 %v5529, %v5101
      %v5562 = vmul.f32 %v5530, %v5102
      %v5563 = vmul.f32 %v5531, %v5103
      %v5564 = vmul.f32 %v5532, %v5104
      %v5565 = vmul.f32 %v5533, %v5105
      %v5566 = vmul.f32 %v5534, %v5106
      %v5567 = vmul.f32 %v5471, %v5471
      %v5568 = vmul.f32 %v5472, %v5472
      %v5569 = vmul.f32 %v5473, %v5473
      %v5570 = vmul.f32 %v5474, %v5474
      %v5571 = vmul.f32 %v5475, %v5475
      %v5572 = vmul.f32 %v5476, %v5476
      %v5573 = vmul.f32 %v5477, %v5477
      %v5574 = vmul.f32 %v5478, %v5478
      %v5575 = vmul.f32 %v5479, %v5479
      %v5576 = vmul.f32 %v5480, %v5480
      %v5577 = vmul.f32 %v5481, %v5481
      %v5578 = vmul.f32 %v5482, %v5482
      %v5579 = vmul.f32 %v5483, %v5483
      %v5580 = vmul.f32 %v5484, %v5484
      %v5581 = vmul.f32 %v5485, %v5485
      %v5582 = vmul.f32 %v5486, %v5486
      %v5583 = vmul.f32 %v5487, %v5487
      %v5584 = vmul.f32 %v5488, %v5488
      %v5585 = vmul.f32 %v5489, %v5489
      %v5586 = vmul.f32 %v5490, %v5490
      %v5587 = vmul.f32 %v5491, %v5491
      %v5588 = vmul.f32 %v5492, %v5492
      %v5589 = vmul.f32 %v5493, %v5493
      %v5590 = vmul.f32 %v5494, %v5494
      %v5591 = vmul.f32 %v5495, %v5495
      %v5592 = vmul.f32 %v5496, %v5496
      %v5593 = vmul.f32 %v5497, %v5497
      %v5594 = vmul.f32 %v5498, %v5498
      %v5595 = vmul.f32 %v5499, %v5499
      %v5596 = vmul.f32 %v5500, %v5500
      %v5597 = vmul.f32 %v5501, %v5501
      %v5598 = vmul.f32 %v5502, %v5502
      %v5599 = vsel %vm5363, %v5567, 0.0
      %v5600 = vsel %vm5363, %v5568, 0.0
      %v5601 = vadd.f32 %v5599, %v5600
      %v5602 = vsel %vm5363, %v5569, 0.0
      %v5603 = vadd.f32 %v5601, %v5602
      %v5604 = vsel %vm5363, %v5570, 0.0
      %v5605 = vadd.f32 %v5603, %v5604
      %v5606 = vsel %vm5363, %v5571, 0.0
      %v5607 = vadd.f32 %v5605, %v5606
      %v5608 = vsel %vm5363, %v5572, 0.0
      %v5609 = vadd.f32 %v5607, %v5608
      %v5610 = vsel %vm5363, %v5573, 0.0
      %v5611 = vadd.f32 %v5609, %v5610
      %v5612 = vsel %vm5363, %v5574, 0.0
      %v5613 = vadd.f32 %v5611, %v5612
      %v5614 = vsel %vm5363, %v5575, 0.0
      %v5615 = vadd.f32 %v5613, %v5614
      %v5616 = vsel %vm5363, %v5576, 0.0
      %v5617 = vadd.f32 %v5615, %v5616
      %v5618 = vsel %vm5363, %v5577, 0.0
      %v5619 = vadd.f32 %v5617, %v5618
      %v5620 = vsel %vm5363, %v5578, 0.0
      %v5621 = vadd.f32 %v5619, %v5620
      %v5622 = vsel %vm5363, %v5579, 0.0
      %v5623 = vadd.f32 %v5621, %v5622
      %v5624 = vsel %vm5363, %v5580, 0.0
      %v5625 = vadd.f32 %v5623, %v5624
      %v5626 = vsel %vm5363, %v5581, 0.0
      %v5627 = vadd.f32 %v5625, %v5626
      %v5628 = vsel %vm5363, %v5582, 0.0
      %v5629 = vadd.f32 %v5627, %v5628
      %v5630 = vsel %vm5363, %v5583, 0.0
      %v5631 = vadd.f32 %v5629, %v5630
      %v5632 = vsel %vm5363, %v5584, 0.0
      %v5633 = vadd.f32 %v5631, %v5632
      %v5634 = vsel %vm5363, %v5585, 0.0
      %v5635 = vadd.f32 %v5633, %v5634
      %v5636 = vsel %vm5363, %v5586, 0.0
      %v5637 = vadd.f32 %v5635, %v5636
      %v5638 = vsel %vm5363, %v5587, 0.0
      %v5639 = vadd.f32 %v5637, %v5638
      %v5640 = vsel %vm5363, %v5588, 0.0
      %v5641 = vadd.f32 %v5639, %v5640
      %v5642 = vsel %vm5363, %v5589, 0.0
      %v5643 = vadd.f32 %v5641, %v5642
      %v5644 = vsel %vm5363, %v5590, 0.0
      %v5645 = vadd.f32 %v5643, %v5644
      %v5646 = vsel %vm5363, %v5591, 0.0
      %v5647 = vadd.f32 %v5645, %v5646
      %v5648 = vsel %vm5363, %v5592, 0.0
      %v5649 = vadd.f32 %v5647, %v5648
      %v5650 = vsel %vm5363, %v5593, 0.0
      %v5651 = vadd.f32 %v5649, %v5650
      %v5652 = vsel %vm5363, %v5594, 0.0
      %v5653 = vadd.f32 %v5651, %v5652
      %v5654 = vsel %vm5363, %v5595, 0.0
      %v5655 = vadd.f32 %v5653, %v5654
      %v5656 = vsel %vm5363, %v5596, 0.0
      %v5657 = vadd.f32 %v5655, %v5656
      %v5658 = vsel %vm5363, %v5597, 0.0
      %v5659 = vadd.f32 %v5657, %v5658
      %v5660 = vsel %vm5363, %v5598, 0.0
      %v5661 = vadd.f32 %v5659, %v5660
      %5662 = vadd.xlane.f32.xlu0 %v5661
      %v5663 = vpop.xlane.xlu0 %5662
      %v5664 = vrot.slane %v5663, 4
      %v5665 = vadd.f32 %v5663, %v5664
      %v5666 = vrot.slane %v5665, 2
      %v5667 = vadd.f32 %v5665, %v5666
      %v5668 = vrot.slane %v5667, 1
      %v5669 = vadd.f32 %v5667, %v5668
      %s5670 = vtos %v5669
      %v5671 = vmul.f32 %v5535, %v5535
      %v5672 = vmul.f32 %v5536, %v5536
      %v5673 = vmul.f32 %v5537, %v5537
      %v5674 = vmul.f32 %v5538, %v5538
      %v5675 = vmul.f32 %v5539, %v5539
      %v5676 = vmul.f32 %v5540, %v5540
      %v5677 = vmul.f32 %v5541, %v5541
      %v5678 = vmul.f32 %v5542, %v5542
      %v5679 = vmul.f32 %v5543, %v5543
      %v5680 = vmul.f32 %v5544, %v5544
      %v5681 = vmul.f32 %v5545, %v5545
      %v5682 = vmul.f32 %v5546, %v5546
      %v5683 = vmul.f32 %v5547, %v5547
      %v5684 = vmul.f32 %v5548, %v5548
      %v5685 = vmul.f32 %v5549, %v5549
      %v5686 = vmul.f32 %v5550, %v5550
      %v5687 = vmul.f32 %v5551, %v5551
      %v5688 = vmul.f32 %v5552, %v5552
      %v5689 = vmul.f32 %v5553, %v5553
      %v5690 = vmul.f32 %v5554, %v5554
      %v5691 = vmul.f32 %v5555, %v5555
      %v5692 = vmul.f32 %v5556, %v5556
      %v5693 = vmul.f32 %v5557, %v5557
      %v5694 = vmul.f32 %v5558, %v5558
      %v5695 = vmul.f32 %v5559, %v5559
      %v5696 = vmul.f32 %v5560, %v5560
      %v5697 = vmul.f32 %v5561, %v5561
      %v5698 = vmul.f32 %v5562, %v5562
      %v5699 = vmul.f32 %v5563, %v5563
      %v5700 = vmul.f32 %v5564, %v5564
      %v5701 = vmul.f32 %v5565, %v5565
      %v5702 = vmul.f32 %v5566, %v5566
      %v5703 = vsel %vm5363, %v5671, 0.0
      %v5704 = vsel %vm5363, %v5672, 0.0
      %v5705 = vadd.f32 %v5703, %v5704
      %v5706 = vsel %vm5363, %v5673, 0.0
      %v5707 = vadd.f32 %v5705, %v5706
      %v5708 = vsel %vm5363, %v5674, 0.0
      %v5709 = vadd.f32 %v5707, %v5708
      %v5710 = vsel %vm5363, %v5675, 0.0
      %v5711 = vadd.f32 %v5709, %v5710
      %v5712 = vsel %vm5363, %v5676, 0.0
      %v5713 = vadd.f32 %v5711, %v5712
      %v5714 = vsel %vm5363, %v5677, 0.0
      %v5715 = vadd.f32 %v5713, %v5714
      %v5716 = vsel %vm5363, %v5678, 0.0
      %v5717 = vadd.f32 %v5715, %v5716
      %v5718 = vsel %vm5363, %v5679, 0.0
      %v5719 = vadd.f32 %v5717, %v5718
      %v5720 = vsel %vm5363, %v5680, 0.0
      %v5721 = vadd.f32 %v5719, %v5720
      %v5722 = vsel %vm5363, %v5681, 0.0
      %v5723 = vadd.f32 %v5721, %v5722
      %v5724 = vsel %vm5363, %v5682, 0.0
      %v5725 = vadd.f32 %v5723, %v5724
      %v5726 = vsel %vm5363, %v5683, 0.0
      %v5727 = vadd.f32 %v5725, %v5726
      %v5728 = vsel %vm5363, %v5684, 0.0
      %v5729 = vadd.f32 %v5727, %v5728
      %v5730 = vsel %vm5363, %v5685, 0.0
      %v5731 = vadd.f32 %v5729, %v5730
      %v5732 = vsel %vm5363, %v5686, 0.0
      %v5733 = vadd.f32 %v5731, %v5732
      %v5734 = vsel %vm5363, %v5687, 0.0
      %v5735 = vadd.f32 %v5733, %v5734
      %v5736 = vsel %vm5363, %v5688, 0.0
      %v5737 = vadd.f32 %v5735, %v5736
      %v5738 = vsel %vm5363, %v5689, 0.0
      %v5739 = vadd.f32 %v5737, %v5738
      %v5740 = vsel %vm5363, %v5690, 0.0
      %v5741 = vadd.f32 %v5739, %v5740
      %v5742 = vsel %vm5363, %v5691, 0.0
      %v5743 = vadd.f32 %v5741, %v5742
      %v5744 = vsel %vm5363, %v5692, 0.0
      %v5745 = vadd.f32 %v5743, %v5744
      %v5746 = vsel %vm5363, %v5693, 0.0
      %v5747 = vadd.f32 %v5745, %v5746
      %v5748 = vsel %vm5363, %v5694, 0.0
      %v5749 = vadd.f32 %v5747, %v5748
      %v5750 = vsel %vm5363, %v5695, 0.0
      %v5751 = vadd.f32 %v5749, %v5750
      %v5752 = vsel %vm5363, %v5696, 0.0
      %v5753 = vadd.f32 %v5751, %v5752
      %v5754 = vsel %vm5363, %v5697, 0.0
      %v5755 = vadd.f32 %v5753, %v5754
      %v5756 = vsel %vm5363, %v5698, 0.0
      %v5757 = vadd.f32 %v5755, %v5756
      %v5758 = vsel %vm5363, %v5699, 0.0
      %v5759 = vadd.f32 %v5757, %v5758
      %v5760 = vsel %vm5363, %v5700, 0.0
      %v5761 = vadd.f32 %v5759, %v5760
      %v5762 = vsel %vm5363, %v5701, 0.0
      %v5763 = vadd.f32 %v5761, %v5762
      %v5764 = vsel %vm5363, %v5702, 0.0
      %v5765 = vadd.f32 %v5763, %v5764
      %5766 = vadd.xlane.f32.xlu0 %v5765
      %v5767 = vpop.xlane.xlu0 %5766
      %v5768 = vrot.slane %v5767, 4
      %v5769 = vadd.f32 %v5767, %v5768
      %v5770 = vrot.slane %v5769, 2
      %v5771 = vadd.f32 %v5769, %v5770
      %v5772 = vrot.slane %v5771, 1
      %v5773 = vadd.f32 %v5771, %v5772
      %s5774 = vtos %v5773
      %s5775 = smul.f32 %s5774, 0.01
      %s5776 = sadd.f32 %s5670, %s5775
      %v5777 = vrcp.pop 510.0
      %s5778 = vtos %v5777
      %s5779 = smul.f32 %s5776, %s5778
      %v5780 = vld [vmem:[%s3 + $0x1] sm:$0xff]
      %v5781 = vld [vmem:[%s3 + $0x9] sm:$0xff]
      %v5782 = vld [vmem:[%s3 + $0x11] sm:$0xff]
      %v5783 = vld [vmem:[%s3 + $0x19] sm:$0xff]
      %v5784 = vld [vmem:[%s3 + $0x21] sm:$0xff]
      %v5785 = vld [vmem:[%s3 + $0x29] sm:$0xff]
      %v5786 = vld [vmem:[%s3 + $0x31] sm:$0xff]
      %v5787 = vld [vmem:[%s3 + $0x39] sm:$0xff]
      %v5788 = vld [vmem:[%s3 + $0x41] sm:$0xff]
      %v5789 = vld [vmem:[%s3 + $0x49] sm:$0xff]
      %v5790 = vld [vmem:[%s3 + $0x51] sm:$0xff]
      %v5791 = vld [vmem:[%s3 + $0x59] sm:$0xff]
      %v5792 = vld [vmem:[%s3 + $0x61] sm:$0xff]
      %v5793 = vld [vmem:[%s3 + $0x69] sm:$0xff]
      %v5794 = vld [vmem:[%s3 + $0x71] sm:$0xff]
      %v5795 = vld [vmem:[%s3 + $0x79] sm:$0xff]
      %v5796 = vld [vmem:[%s3 + $0x81] sm:$0xff]
      %v5797 = vld [vmem:[%s3 + $0x89] sm:$0xff]
      %v5798 = vld [vmem:[%s3 + $0x91] sm:$0xff]
      %v5799 = vld [vmem:[%s3 + $0x99] sm:$0xff]
      %v5800 = vld [vmem:[%s3 + $0xa1] sm:$0xff]
      %v5801 = vld [vmem:[%s3 + $0xa9] sm:$0xff]
      %v5802 = vld [vmem:[%s3 + $0xb1] sm:$0xff]
      %v5803 = vld [vmem:[%s3 + $0xb9] sm:$0xff]
      %v5804 = vld [vmem:[%s3 + $0xc1] sm:$0xff]
      %v5805 = vld [vmem:[%s3 + $0xc9] sm:$0xff]
      %v5806 = vld [vmem:[%s3 + $0xd1] sm:$0xff]
      %v5807 = vld [vmem:[%s3 + $0xd9] sm:$0xff]
      %v5808 = vld [vmem:[%s3 + $0xe1] sm:$0xff]
      %v5809 = vld [vmem:[%s3 + $0xe9] sm:$0xff]
      %v5810 = vld [vmem:[%s3 + $0xf1] sm:$0xff]
      %v5811 = vld [vmem:[%s3 + $0xf9] sm:$0x3f]
      %v5812 = vld [vmem:[%s3] sm:$0xff]
      %v5813 = vld [vmem:[%s3 + $0x8] sm:$0xff]
      %v5814 = vld [vmem:[%s3 + $0x10] sm:$0xff]
      %v5815 = vld [vmem:[%s3 + $0x18] sm:$0xff]
      %v5816 = vld [vmem:[%s3 + $0x20] sm:$0xff]
      %v5817 = vld [vmem:[%s3 + $0x28] sm:$0xff]
      %v5818 = vld [vmem:[%s3 + $0x30] sm:$0xff]
      %v5819 = vld [vmem:[%s3 + $0x38] sm:$0xff]
      %v5820 = vld [vmem:[%s3 + $0x40] sm:$0xff]
      %v5821 = vld [vmem:[%s3 + $0x48] sm:$0xff]
      %v5822 = vld [vmem:[%s3 + $0x50] sm:$0xff]
      %v5823 = vld [vmem:[%s3 + $0x58] sm:$0xff]
      %v5824 = vld [vmem:[%s3 + $0x60] sm:$0xff]
      %v5825 = vld [vmem:[%s3 + $0x68] sm:$0xff]
      %v5826 = vld [vmem:[%s3 + $0x70] sm:$0xff]
      %v5827 = vld [vmem:[%s3 + $0x78] sm:$0xff]
      %v5828 = vld [vmem:[%s3 + $0x80] sm:$0xff]
      %v5829 = vld [vmem:[%s3 + $0x88] sm:$0xff]
      %v5830 = vld [vmem:[%s3 + $0x90] sm:$0xff]
      %v5831 = vld [vmem:[%s3 + $0x98] sm:$0xff]
      %v5832 = vld [vmem:[%s3 + $0xa0] sm:$0xff]
      %v5833 = vld [vmem:[%s3 + $0xa8] sm:$0xff]
      %v5834 = vld [vmem:[%s3 + $0xb0] sm:$0xff]
      %v5835 = vld [vmem:[%s3 + $0xb8] sm:$0xff]
      %v5836 = vld [vmem:[%s3 + $0xc0] sm:$0xff]
      %v5837 = vld [vmem:[%s3 + $0xc8] sm:$0xff]
      %v5838 = vld [vmem:[%s3 + $0xd0] sm:$0xff]
      %v5839 = vld [vmem:[%s3 + $0xd8] sm:$0xff]
      %v5840 = vld [vmem:[%s3 + $0xe0] sm:$0xff]
      %v5841 = vld [vmem:[%s3 + $0xe8] sm:$0xff]
      %v5842 = vld [vmem:[%s3 + $0xf0] sm:$0xff]
      %v5843 = vld [vmem:[%s3 + $0xf8] sm:$0x3f]
      %v5844 = vsub.f32 %v5780, %v5812
      %v5845 = vsub.f32 %v5781, %v5813
      %v5846 = vsub.f32 %v5782, %v5814
      %v5847 = vsub.f32 %v5783, %v5815
      %v5848 = vsub.f32 %v5784, %v5816
      %v5849 = vsub.f32 %v5785, %v5817
      %v5850 = vsub.f32 %v5786, %v5818
      %v5851 = vsub.f32 %v5787, %v5819
      %v5852 = vsub.f32 %v5788, %v5820
      %v5853 = vsub.f32 %v5789, %v5821
      %v5854 = vsub.f32 %v5790, %v5822
      %v5855 = vsub.f32 %v5791, %v5823
      %v5856 = vsub.f32 %v5792, %v5824
      %v5857 = vsub.f32 %v5793, %v5825
      %v5858 = vsub.f32 %v5794, %v5826
      %v5859 = vsub.f32 %v5795, %v5827
      %v5860 = vsub.f32 %v5796, %v5828
      %v5861 = vsub.f32 %v5797, %v5829
      %v5862 = vsub.f32 %v5798, %v5830
      %v5863 = vsub.f32 %v5799, %v5831
      %v5864 = vsub.f32 %v5800, %v5832
      %v5865 = vsub.f32 %v5801, %v5833
      %v5866 = vsub.f32 %v5802, %v5834
      %v5867 = vsub.f32 %v5803, %v5835
      %v5868 = vsub.f32 %v5804, %v5836
      %v5869 = vsub.f32 %v5805, %v5837
      %v5870 = vsub.f32 %v5806, %v5838
      %v5871 = vsub.f32 %v5807, %v5839
      %v5872 = vsub.f32 %v5808, %v5840
      %v5873 = vsub.f32 %v5809, %v5841
      %v5874 = vsub.f32 %v5810, %v5842
      %v5875 = vsub.f32 %v5811, %v5843
      %v5876 = vmul.f32 %v5844, %v5844
      %v5877 = vmul.f32 %v5845, %v5845
      %v5878 = vmul.f32 %v5846, %v5846
      %v5879 = vmul.f32 %v5847, %v5847
      %v5880 = vmul.f32 %v5848, %v5848
      %v5881 = vmul.f32 %v5849, %v5849
      %v5882 = vmul.f32 %v5850, %v5850
      %v5883 = vmul.f32 %v5851, %v5851
      %v5884 = vmul.f32 %v5852, %v5852
      %v5885 = vmul.f32 %v5853, %v5853
      %v5886 = vmul.f32 %v5854, %v5854
      %v5887 = vmul.f32 %v5855, %v5855
      %v5888 = vmul.f32 %v5856, %v5856
      %v5889 = vmul.f32 %v5857, %v5857
      %v5890 = vmul.f32 %v5858, %v5858
      %v5891 = vmul.f32 %v5859, %v5859
      %v5892 = vmul.f32 %v5860, %v5860
      %v5893 = vmul.f32 %v5861, %v5861
      %v5894 = vmul.f32 %v5862, %v5862
      %v5895 = vmul.f32 %v5863, %v5863
      %v5896 = vmul.f32 %v5864, %v5864
      %v5897 = vmul.f32 %v5865, %v5865
      %v5898 = vmul.f32 %v5866, %v5866
      %v5899 = vmul.f32 %v5867, %v5867
      %v5900 = vmul.f32 %v5868, %v5868
      %v5901 = vmul.f32 %v5869, %v5869
      %v5902 = vmul.f32 %v5870, %v5870
      %v5903 = vmul.f32 %v5871, %v5871
      %v5904 = vmul.f32 %v5872, %v5872
      %v5905 = vmul.f32 %v5873, %v5873
      %v5906 = vmul.f32 %v5874, %v5874
      %v5907 = vmul.f32 %v5875, %v5875
      %v5908 = vsel %vm5363, %v5876, 0.0
      %v5909 = vsel %vm5363, %v5877, 0.0
      %v5910 = vadd.f32 %v5908, %v5909
      %v5911 = vsel %vm5363, %v5878, 0.0
      %v5912 = vadd.f32 %v5910, %v5911
      %v5913 = vsel %vm5363, %v5879, 0.0
      %v5914 = vadd.f32 %v5912, %v5913
      %v5915 = vsel %vm5363, %v5880, 0.0
      %v5916 = vadd.f32 %v5914, %v5915
      %v5917 = vsel %vm5363, %v5881, 0.0
      %v5918 = vadd.f32 %v5916, %v5917
      %v5919 = vsel %vm5363, %v5882, 0.0
      %v5920 = vadd.f32 %v5918, %v5919
      %v5921 = vsel %vm5363, %v5883, 0.0
      %v5922 = vadd.f32 %v5920, %v5921
      %v5923 = vsel %vm5363, %v5884, 0.0
      %v5924 = vadd.f32 %v5922, %v5923
      %v5925 = vsel %vm5363, %v5885, 0.0
      %v5926 = vadd.f32 %v5924, %v5925
      %v5927 = vsel %vm5363, %v5886, 0.0
      %v5928 = vadd.f32 %v5926, %v5927
      %v5929 = vsel %vm5363, %v5887, 0.0
      %v5930 = vadd.f32 %v5928, %v5929
      %v5931 = vsel %vm5363, %v5888, 0.0
      %v5932 = vadd.f32 %v5930, %v5931
      %v5933 = vsel %vm5363, %v5889, 0.0
      %v5934 = vadd.f32 %v5932, %v5933
      %v5935 = vsel %vm5363, %v5890, 0.0
      %v5936 = vadd.f32 %v5934, %v5935
      %v5937 = vsel %vm5363, %v5891, 0.0
      %v5938 = vadd.f32 %v5936, %v5937
      %v5939 = vsel %vm5363, %v5892, 0.0
      %v5940 = vadd.f32 %v5938, %v5939
      %v5941 = vsel %vm5363, %v5893, 0.0
      %v5942 = vadd.f32 %v5940, %v5941
      %v5943 = vsel %vm5363, %v5894, 0.0
      %v5944 = vadd.f32 %v5942, %v5943
      %v5945 = vsel %vm5363, %v5895, 0.0
      %v5946 = vadd.f32 %v5944, %v5945
      %v5947 = vsel %vm5363, %v5896, 0.0
      %v5948 = vadd.f32 %v5946, %v5947
      %v5949 = vsel %vm5363, %v5897, 0.0
      %v5950 = vadd.f32 %v5948, %v5949
      %v5951 = vsel %vm5363, %v5898, 0.0
      %v5952 = vadd.f32 %v5950, %v5951
      %v5953 = vsel %vm5363, %v5899, 0.0
      %v5954 = vadd.f32 %v5952, %v5953
      %v5955 = vsel %vm5363, %v5900, 0.0
      %v5956 = vadd.f32 %v5954, %v5955
      %v5957 = vsel %vm5363, %v5901, 0.0
      %v5958 = vadd.f32 %v5956, %v5957
      %v5959 = vsel %vm5363, %v5902, 0.0
      %v5960 = vadd.f32 %v5958, %v5959
      %v5961 = vsel %vm5363, %v5903, 0.0
      %v5962 = vadd.f32 %v5960, %v5961
      %v5963 = vsel %vm5363, %v5904, 0.0
      %v5964 = vadd.f32 %v5962, %v5963
      %v5965 = vsel %vm5363, %v5905, 0.0
      %v5966 = vadd.f32 %v5964, %v5965
      %v5967 = vsel %vm5363, %v5906, 0.0
      %v5968 = vadd.f32 %v5966, %v5967
      %vm5969 = vcmask 13312
      %v5970 = vsel %vm5969, %v5907, 0.0
      %v5971 = vadd.f32 %v5968, %v5970
      %5972 = vadd.xlane.f32.xlu0 %v5971
      %v5973 = vpop.xlane.xlu0 %5972
      %v5974 = vrot.slane %v5973, 4
      %v5975 = vadd.f32 %v5973, %v5974
      %v5976 = vrot.slane %v5975, 2
      %v5977 = vadd.f32 %v5975, %v5976
      %v5978 = vrot.slane %v5977, 1
      %v5979 = vadd.f32 %v5977, %v5978
      %s5980 = vtos %v5979
      %v5981 = vrcp.pop 508.0
      %s5982 = vtos %v5981
      %s5983 = smul.f32 %s5980, %s5982
      %s5984 = sld [smem:[#allocation5]]
      %p5985 = scmp.ge.s32.totalorder %s5984, 3000
      %s5986 = scalar_select %p5985, 0.1, 1.0
      %s5987 = smul.f32 %s5986, %s5438
      %s5988 = smul.f32 %s5983, 0.1
      %s5989 = sadd.f32 %s5987, %s5988
      %s5990 = smul.f32 %s5779, 0.5
      %s5991 = sadd.f32 %s5989, %s5990
      %s5992 = scalar_lea.smem [#allocation6], 0
      %5993 = sst [smem:[%s5992]] %s5991
    $region25: #{histogram_prior_loss.1} parent=1 // pred_fallthru
      _
    // Predicated region
    $region26: #{histogram_prior_loss.1} parent=1 // pred_check
      _
    $region27: #{histogram_prior_loss.1} parent=1 // pred_check_branch
      %5995 = sbr.rel (0) target = $region29
    $region28: #{histogram_prior_loss.1} parent=1 // pred_region
      %s5997 = ssub.s32 16, 16
      %5998 = vsyncadd [#allocation7], %s5997
      %6001 = dma.smem_to_hbm [#allocation6], 16, %s5, [#allocation7]
    $region29: #{histogram_prior_loss.1} parent=1 // pred_fallthru
      _
    // Predicated region
    $region30: #{histogram_prior_loss.1} parent=1 // pred_check
      _
    $region31: #{histogram_prior_loss.1} parent=1 // pred_check_branch
      %6003 = sbr.rel (0) target = $region33
    $region32: #{histogram_prior_loss.1} parent=1 // pred_region
      %6004 = dma.done [#allocation7], 16
    $region33: #{histogram_prior_loss.1} parent=1 // pred_fallthru
      _
    %6005 = sfence
    %6006 = vsyncpa [#allocation7], 1

</llo_original>
